<compile_context>
chip_gen: v6e
topology: v6e:2x2x1
jax: 0.10.0
libtpu: 0.0.40
codegen_flags: <defaults>
</compile_context>

<pallas_src>
import functools

import jax
import jax.numpy as jnp
from jax.experimental import pallas as pl
from jax.experimental.pallas import tpu as pltpu


# ---------------------------------------------------------------- kernel ----

def _bottleneck_kernel(x_hbm, wcat_ref, w2_ref, w3_ref, sb_ref,
                       o_ref, xbuf, sem, y1_scr, xd_scr):
    """Fused c1 + c2(3x3) + c3 + downsample + residual ReLU for one row tile.

    x_hbm   : (B, Hs+2, Ws, Cin_p) bf16 in HBM (manual DMA, pl.ANY)
    wcat_ref: (Cin_p, Cmid_p + Cout_p) bf16   [w1 | wd]
    w2_ref  : (9, Cmid_p, Cmid_p) bf16        3x3 taps
    w3_ref  : (Cmid_p, Cout_p)  bf16
    sb_ref  : (8, Cmax_p) f32  rows = [s1, b1, s2, b2, s3, b3, bd, 0]
    o_ref   : (TH, Ws, Cout_p)  bf16 output row tile
    xbuf    : (2, TH+2, Ws, Cin_p) bf16 double-buffered x tile
    sem     : DMA semaphores (2,)
    y1_scr  : (TH+2, Ws+2, Cmid_p) bf16 halo scratch for y1
    xd_scr  : (TH*Ws, Cout_p) f32 downsample-residual spill
    """
    b = pl.program_id(0)
    t = pl.program_id(1)
    nt = pl.num_programs(1)

    th_h = xbuf.shape[1]                  # TH + 2
    th = th_h - 2
    w = xbuf.shape[2]
    cin_p = xbuf.shape[3]
    cmid_p = w3_ref.shape[0]
    cout_p = o_ref.shape[-1]

    slot = t % 2

    def copy_desc(tt, ss):
        return pltpu.make_async_copy(
            x_hbm.at[b, pl.ds(tt * th, th_h)], xbuf.at[ss], sem.at[ss])

    # Prime the pipeline at the first row tile of every batch element
    # (megacore-safe: the chain never crosses the "parallel" batch axis).
    @pl.when(t == 0)
    def _():
        copy_desc(0, 0).start()

    # Prefetch the next row tile into the other slot (overlaps with compute).
    @pl.when(t + 1 < nt)
    def _():
        copy_desc(t + 1, 1 - slot).start()

    # Wait for the current tile.
    copy_desc(t, slot).wait()

    # ---- c1 (1x1 + BN + relu) fused with the downsample matmul -------------
    xf = xbuf[slot].reshape(th_h * w, cin_p)
    zcat = jnp.dot(xf, wcat_ref[...], preferred_element_type=jnp.float32)

    s1 = sb_ref[0:1, :cmid_p]
    b1 = sb_ref[1:2, :cmid_p]
    y1 = jnp.maximum(zcat[:, :cmid_p] * s1 + b1, 0.0)

    # downsample residual: only the TH center rows; spill to VMEM scratch so
    # it does not stay live in vregs across the 3x3 conv + c3.
    xd_scr[...] = zcat[w:(th + 1) * w, cmid_p:] + sb_ref[6:7, :cout_p]

    # ---- stage y1 into the halo scratch -------------------------------------
    y1_scr[:, 1:w + 1, :] = y1.reshape(th_h, w, cmid_p).astype(y1_scr.dtype)
    # Only the left/right border columns need zeros (cheap, every step).
    y1_scr[:, 0:1, :] = jnp.zeros((th_h, 1, cmid_p), y1_scr.dtype)
    y1_scr[:, w + 1:w + 2, :] = jnp.zeros((th_h, 1, cmid_p), y1_scr.dtype)

    # At the true image top/bottom the halo row is conv2 zero-padding.
    @pl.when(t == 0)
    def _():
        y1_scr[0:1, :, :] = jnp.zeros((1, w + 2, cmid_p), y1_scr.dtype)

    @pl.when(t == nt - 1)
    def _():
        y1_scr[th + 1:th + 2, :, :] = jnp.zeros((1, w + 2, cmid_p),
                                                y1_scr.dtype)

    # ---- c2: 3x3 conv as 9 accumulating matmuls (no im2col buffer) ----------
    z2 = None
    for dy in range(3):
        for dx in range(3):
            tap = y1_scr[dy:dy + th, dx:dx + w, :].reshape(th * w, cmid_p)
            part = jnp.dot(tap, w2_ref[dy * 3 + dx],
                           preferred_element_type=jnp.float32)
            z2 = part if z2 is None else z2 + part

    s2 = sb_ref[2:3, :cmid_p]
    b2 = sb_ref[3:4, :cmid_p]
    y2 = jnp.maximum(z2 * s2 + b2, 0.0)

    # ---- c3 (1x1 + BN) + residual add + relu --------------------------------
    z3 = jnp.dot(y2.astype(w3_ref.dtype), w3_ref[...],
                 preferred_element_type=jnp.float32)
    s3 = sb_ref[4:5, :cout_p]
    b3 = sb_ref[5:6, :cout_p]
    out = jnp.maximum(z3 * s3 + b3 + xd_scr[...], 0.0)
    o_ref[...] = out.reshape(th, w, cout_p).astype(o_ref.dtype)


# ------------------------------------------------------------------ glue ----

def _round_up(x, m):
    return (x + m - 1) // m * m


def _pick_th(hs, ws, cin_p, cmid_p, cout_p, budget_bytes=24 * 1024 * 1024):
    """Largest divisor of hs whose per-step working set fits the VMEM budget
    (conservative enough for v7x's 64 MiB physical VMEM)."""
    def usage(th):
        x_buf = 2 * (th + 2) * ws * cin_p * 2            # double-buffered x
        y1 = (th + 2) * (ws + 2) * cmid_p * 2            # halo scratch
        out = 2 * th * ws * cout_p * 2                   # pipelined output
        xd = th * ws * cout_p * 4                        # residual spill
        zcat = (th + 2) * ws * (cmid_p + cout_p) * 4     # f32 intermediates
        z23 = th * ws * (cmid_p + cout_p) * 4
        return x_buf + y1 + out + xd + zcat + z23
    divisors = sorted((d for d in range(1, hs + 1) if hs % d == 0),
                      reverse=True)
    for th in divisors:
        if usage(th) <= budget_bytes:
            return th
    return divisors[-1]                                  # degenerate fallback


@functools.partial(jax.jit, static_argnames=("strides",))
def residual_bottle_pallas(x_nchw, p, strides=1, eps=1e-5):
    # NCHW -> NHWC, cast to bf16 first so all wrapper passes touch half bytes.
    x = jnp.transpose(x_nchw, (0, 2, 3, 1)).astype(jnp.bfloat16)
    xs = x[:, ::strides, ::strides, :]              # stride of the 1x1 convs
    B, Hs, Ws, Cin = xs.shape
    Cmid = p['w1'].shape[0]
    Cout = p['w3'].shape[0]

    # Lane-dense channel padding (multiple of 128).
    Cin_p = _round_up(max(Cin, 1), 128)
    Cmid_p = _round_up(max(Cmid, 1), 128)
    Cout_p = _round_up(max(Cout, 1), 128)
    Cmax_p = max(Cmid_p, Cout_p)

    TH = _pick_th(Hs, Ws, Cin_p, Cmid_p, Cout_p)
    T = Hs // TH

    # --- fold eval-mode BN (+ conv bias) into per-channel scale / bias -------
    def fold(gamma, beta, mean, var, conv_b):
        scale = gamma / jnp.sqrt(var + eps)
        bias = (conv_b - mean) * scale + beta
        return (jnp.pad(scale, (0, Cmax_p - scale.shape[0])),
                jnp.pad(bias, (0, Cmax_p - bias.shape[0])))

    s1, fb1 = fold(p['g1'], p['be1'], p['m1'], p['v1'], p['b1'])
    s2, fb2 = fold(p['g2'], p['be2'], p['m2'], p['v2'], p['b2'])
    s3, fb3 = fold(p['g3'], p['be3'], p['m3'], p['v3'], p['b3'])
    bd = jnp.pad(p['bd'], (0, Cmax_p - Cout))
    zero = jnp.zeros((Cmax_p,), jnp.float32)
    sb = jnp.stack([s1, fb1, s2, fb2, s3, fb3, bd, zero],
                   axis=0).astype(jnp.float32)          # (8, Cmax_p)

    # --- weights: torch OIHW -> matmul layout, padded, bf16 ------------------
    def pad2(w2d, r, c):
        return jnp.pad(w2d, ((0, r - w2d.shape[0]), (0, c - w2d.shape[1])))

    w1 = pad2(p['w1'][:, :, 0, 0].T, Cin_p, Cmid_p)            # (Cin_p, Cmid_p)
    wd = pad2(p['wd'][:, :, 0, 0].T, Cin_p, Cout_p)            # (Cin_p, Cout_p)
    wcat = jnp.concatenate([w1, wd], axis=1).astype(jnp.bfloat16)

    w2 = jnp.stack(
        [pad2(p['w2'][:, :, kh, kw].T, Cmid_p, Cmid_p)
         for kh in range(3) for kw in range(3)],
        axis=0).astype(jnp.bfloat16)                           # (9, Cmid_p, Cmid_p)
    w3 = pad2(p['w3'][:, :, 0, 0].T, Cmid_p, Cout_p).astype(jnp.bfloat16)

    # --- input: pad channels + one zero halo row top/bottom (bf16, one pass) -
    xs_p = jnp.pad(xs, ((0, 0), (1, 1), (0, 0), (0, Cin_p - Cin)))

    out = pl.pallas_call(
        _bottleneck_kernel,
        out_shape=jax.ShapeDtypeStruct((B, Hs, Ws, Cout_p), jnp.bfloat16),
        grid=(B, T),
        in_specs=[
            pl.BlockSpec(memory_space=pl.ANY),                 # x stays in HBM
            pl.BlockSpec(wcat.shape, lambda b, t: (0, 0)),
            pl.BlockSpec(w2.shape, lambda b, t: (0, 0, 0)),
            pl.BlockSpec(w3.shape, lambda b, t: (0, 0)),
            pl.BlockSpec(sb.shape, lambda b, t: (0, 0)),
        ],
        out_specs=pl.BlockSpec((None, TH, Ws, Cout_p),
                               lambda b, t: (b, t, 0, 0)),
        scratch_shapes=[
            pltpu.VMEM((2, TH + 2, Ws, Cin_p), jnp.bfloat16),  # x double buffer
            pltpu.SemaphoreType.DMA((2,)),
            pltpu.VMEM((TH + 2, Ws + 2, Cmid_p), jnp.bfloat16),
            pltpu.VMEM((TH * Ws, Cout_p), jnp.float32),
        ],
        compiler_params=pltpu.CompilerParams(
            dimension_semantics=("parallel", "arbitrary"),
            vmem_limit_bytes=48 * 1024 * 1024),
    )(xs_p, wcat, w2, w3, sb)

    # crop padded channels, back to NCHW f32 (single fused XLA pass).
    out = out[..., :Cout].astype(jnp.float32)
    return jnp.transpose(out, (0, 3, 1, 2))


# ---------------------------------------------------- pure-JAX reference ----

def residual_bottle_reference(x, p, strides=1, eps=1e-5):
    def conv(x, w, b, stride=1, pad=0):
        y = jax.lax.conv_general_dilated(
            x, w, (stride, stride), [(pad, pad), (pad, pad)],
            dimension_numbers=('NCHW', 'OIHW', 'NCHW'))
        return y + b[None, :, None, None]

    def bn(x, g, be, m, v):
        return ((x - m[None, :, None, None])
                * (g / jnp.sqrt(v + eps))[None, :, None, None]
                + be[None, :, None, None])

    y = jax.nn.relu(bn(conv(x, p['w1'], p['b1'], strides),
                       p['g1'], p['be1'], p['m1'], p['v1']))
    y = jax.nn.relu(bn(conv(y, p['w2'], p['b2'], 1, 1),
                       p['g2'], p['be2'], p['m2'], p['v2']))
    y = bn(conv(y, p['w3'], p['b3']), p['g3'], p['be3'], p['m3'], p['v3'])
    xd = conv(x, p['wd'], p['bd'], strides)
    return jax.nn.relu(y + xd)


# ------------------------------------------------------------------- main ---

if __name__ == "__main__":
    B, Cin, H, W = 2, 8, 16, 16
    num_channels = 16
    Cmid, Cout = num_channels // 4, num_channels

    key = jax.random.PRNGKey(0)
    ks = jax.random.split(key, 24)

    def rn(k, shape, scale=0.1):
        return jax.random.normal(k, shape, jnp.float32) * scale

    params = {
        'w1': rn(ks[0], (Cmid, Cin, 1, 1)),  'b1': rn(ks[1], (Cmid,)),
        'w2': rn(ks[2], (Cmid, Cmid, 3, 3)), 'b2': rn(ks[3], (Cmid,)),
        'w3': rn(ks[4], (Cout, Cmid, 1, 1)), 'b3': rn(ks[5], (Cout,)),
        'wd': rn(ks[6], (Cout, Cin, 1, 1)),  'bd': rn(ks[7], (Cout,)),
        'g1': 1.0 + rn(ks[8], (Cmid,)),  'be1': rn(ks[9], (Cmid,)),
        'm1': rn(ks[10], (Cmid,)),       'v1': 1.0 + jnp.abs(rn(ks[11], (Cmid,))),
        'g2': 1.0 + rn(ks[12], (Cmid,)), 'be2': rn(ks[13], (Cmid,)),
        'm2': rn(ks[14], (Cmid,)),       'v2': 1.0 + jnp.abs(rn(ks[15], (Cmid,))),
        'g3': 1.0 + rn(ks[16], (Cout,)), 'be3': rn(ks[17], (Cout,)),
        'm3': rn(ks[18], (Cout,)),       'v3': 1.0 + jnp.abs(rn(ks[19], (Cout,))),
    }

    x = jax.random.normal(ks[20], (B, Cin, H, W), jnp.float32)

    for strides in (1, 2):
        out = residual_bottle_pallas(x, params, strides=strides)
        out = jax.block_until_ready(out)
        ref = residual_bottle_reference(x, params, strides=strides)
        assert out.shape == (B, Cout, H // strides, W // strides)
        max_err = float(jnp.max(jnp.abs(out - ref)))
        # bf16 matmul inputs + bf16 output (fp32 accumulation) -> loose tol.
        assert jnp.allclose(out, ref, atol=2e-2, rtol=2e-2), \
            f"mismatch vs reference (strides={strides}, max_err={max_err})"

    print("KERNEL_OK")
</pallas_src>

<mosaic_0001>
module attributes {stable_mosaic.version = 11 : i64} {
  func.func @_bottleneck_kernel(%arg0: i32, %arg1: i32, %arg2: memref<2x18x16x128xbf16, #tpu.memory_space<any>>, %arg3: memref<128x256xbf16, #tpu.memory_space<vmem>>, %arg4: memref<9x128x128xbf16, #tpu.memory_space<vmem>>, %arg5: memref<128x128xbf16, #tpu.memory_space<vmem>>, %arg6: memref<8x128xf32, #tpu.memory_space<vmem>>, %arg7: memref<1x16x16x128xbf16, #tpu.memory_space<vmem>>, %arg8: memref<2x18x16x128xbf16, #tpu.memory_space<vmem>>, %arg9: memref<2x!tpu.dma_semaphore, #tpu.memory_space<semaphore_mem>>, %arg10: memref<18x18x128xbf16, #tpu.memory_space<vmem>>, %arg11: memref<256x128xf32, #tpu.memory_space<vmem>>) attributes {dimension_semantics = [#tpu.dimension_semantics<parallel>, #tpu.dimension_semantics<arbitrary>], iteration_bounds = array<i64: 2, 1>, scalar_prefetch = 0 : i64, scratch_operands = 4 : i64, tpu.core_type = #tpu.core_type<tc>, window_params = [{}, {pipeline_mode = #tpu.pipeline_mode<synchronous>, transform_indices = @transform_1, window_bounds = array<i64: 128, 256>}, {pipeline_mode = #tpu.pipeline_mode<synchronous>, transform_indices = @transform_2, window_bounds = array<i64: 9, 128, 128>}, {pipeline_mode = #tpu.pipeline_mode<synchronous>, transform_indices = @transform_3, window_bounds = array<i64: 128, 128>}, {pipeline_mode = #tpu.pipeline_mode<synchronous>, transform_indices = @transform_4, window_bounds = array<i64: 8, 128>}, {transform_indices = @transform_5, window_bounds = array<i64: 1, 16, 16, 128>}]} {
    %c2_i32 = arith.constant 2 : i32
    %c0_i32 = arith.constant 0 : i32
    %0 = arith.cmpi eq, %c2_i32, %c0_i32 : i32
    %c1_i32 = arith.constant 1 : i32
    %1 = arith.select %0, %c1_i32, %c2_i32 : i32
    %2 = arith.remsi %arg1, %1 : i32
    %c0_i32_0 = arith.constant 0 : i32
    %3 = arith.cmpi ne, %2, %c0_i32_0 : i32
    %c0_i32_1 = arith.constant 0 : i32
    %4 = arith.cmpi slt, %2, %c0_i32_1 : i32
    %c0_i32_2 = arith.constant 0 : i32
    %5 = arith.cmpi slt, %1, %c0_i32_2 : i32
    %6 = arith.xori %4, %5 : i1
    %7 = arith.andi %6, %3 : i1
    %8 = arith.addi %2, %1 : i32
    %9 = arith.select %7, %8, %2 : i32
    %c0_i32_3 = arith.constant 0 : i32
    %10 = arith.cmpi eq, %arg1, %c0_i32_3 : i32
    %11 = arith.extui %10 : i1 to i32
    %c0_i32_4 = arith.constant 0 : i32
    %12 = arith.cmpi ne, %11, %c0_i32_4 : i32
    scf.if %12 {
      %c0_i32_114 = arith.constant 0 : i32
      %c0_i32_115 = arith.constant 0 : i32
      %c0_i32_116 = arith.constant 0 : i32
      %c0_i32_117 = arith.constant 0 : i32
      %c0_i32_118 = arith.constant 0 : i32
      %136 = tpu.memref_slice %arg2[%arg0, %c0_i32_116, %c0_i32_117, %c0_i32_118] : memref<2x18x16x128xbf16, #tpu.memory_space<any>> -> memref<1x18x16x128xbf16, #tpu.memory_space<any>>
      %137 = tpu.memref_squeeze %136 : memref<1x18x16x128xbf16, #tpu.memory_space<any>> -> memref<18x16x128xbf16, #tpu.memory_space<any>>
      %c0_i32_119 = arith.constant 0 : i32
      %c0_i32_120 = arith.constant 0 : i32
      %c0_i32_121 = arith.constant 0 : i32
      %138 = tpu.memref_slice %arg8[%c0_i32_114, %c0_i32_119, %c0_i32_120, %c0_i32_121] : memref<2x18x16x128xbf16, #tpu.memory_space<vmem>> -> memref<1x18x16x128xbf16, #tpu.memory_space<vmem>>
      %139 = tpu.memref_squeeze %138 : memref<1x18x16x128xbf16, #tpu.memory_space<vmem>> -> memref<18x16x128xbf16, #tpu.memory_space<vmem>>
      %140 = tpu.memref_slice %arg9[%c0_i32_115] : memref<2x!tpu.dma_semaphore, #tpu.memory_space<semaphore_mem>> -> memref<1x!tpu.dma_semaphore, #tpu.memory_space<semaphore_mem>>
      %141 = tpu.memref_squeeze %140 : memref<1x!tpu.dma_semaphore, #tpu.memory_space<semaphore_mem>> -> memref<!tpu.dma_semaphore, #tpu.memory_space<semaphore_mem>>
      tpu.enqueue_dma source(%137 : memref<18x16x128xbf16, #tpu.memory_space<any>>) target(%139 : memref<18x16x128xbf16, #tpu.memory_space<vmem>>) target_semaphore(%141 : memref<!tpu.dma_semaphore, #tpu.memory_space<semaphore_mem>>)
    } else {
    }
    %c1_i32_5 = arith.constant 1 : i32
    %13 = arith.addi %arg1, %c1_i32_5 : i32
    %c1_i32_6 = arith.constant 1 : i32
    %14 = arith.cmpi slt, %13, %c1_i32_6 : i32
    %15 = arith.extui %14 : i1 to i32
    %c0_i32_7 = arith.constant 0 : i32
    %16 = arith.cmpi ne, %15, %c0_i32_7 : i32
    scf.if %16 {
      %c1_i32_114 = arith.constant 1 : i32
      %136 = arith.addi %arg1, %c1_i32_114 : i32
      %c1_i32_115 = arith.constant 1 : i32
      %137 = arith.subi %c1_i32_115, %9 : i32
      %c16_i32_116 = arith.constant 16 : i32
      %138 = arith.muli %136, %c16_i32_116 : i32
      %c0_i32_117 = arith.constant 0 : i32
      %c0_i32_118 = arith.constant 0 : i32
      %139 = tpu.memref_slice %arg2[%arg0, %138, %c0_i32_117, %c0_i32_118] : memref<2x18x16x128xbf16, #tpu.memory_space<any>> -> memref<1x18x16x128xbf16, #tpu.memory_space<any>>
      %140 = tpu.memref_squeeze %139 : memref<1x18x16x128xbf16, #tpu.memory_space<any>> -> memref<18x16x128xbf16, #tpu.memory_space<any>>
      %c0_i32_119 = arith.constant 0 : i32
      %c0_i32_120 = arith.constant 0 : i32
      %c0_i32_121 = arith.constant 0 : i32
      %141 = tpu.memref_slice %arg8[%137, %c0_i32_119, %c0_i32_120, %c0_i32_121] : memref<2x18x16x128xbf16, #tpu.memory_space<vmem>> -> memref<1x18x16x128xbf16, #tpu.memory_space<vmem>>
      %142 = tpu.memref_squeeze %141 : memref<1x18x16x128xbf16, #tpu.memory_space<vmem>> -> memref<18x16x128xbf16, #tpu.memory_space<vmem>>
      %143 = tpu.memref_slice %arg9[%137] : memref<2x!tpu.dma_semaphore, #tpu.memory_space<semaphore_mem>> -> memref<1x!tpu.dma_semaphore, #tpu.memory_space<semaphore_mem>>
      %144 = tpu.memref_squeeze %143 : memref<1x!tpu.dma_semaphore, #tpu.memory_space<semaphore_mem>> -> memref<!tpu.dma_semaphore, #tpu.memory_space<semaphore_mem>>
      tpu.enqueue_dma source(%140 : memref<18x16x128xbf16, #tpu.memory_space<any>>) target(%142 : memref<18x16x128xbf16, #tpu.memory_space<vmem>>) target_semaphore(%144 : memref<!tpu.dma_semaphore, #tpu.memory_space<semaphore_mem>>)
    } else {
    }
    %c16_i32 = arith.constant 16 : i32
    %17 = arith.muli %arg1, %c16_i32 : i32
    %c0_i32_8 = arith.constant 0 : i32
    %c0_i32_9 = arith.constant 0 : i32
    %18 = tpu.memref_slice %arg2[%arg0, %17, %c0_i32_8, %c0_i32_9] : memref<2x18x16x128xbf16, #tpu.memory_space<any>> -> memref<1x18x16x128xbf16, #tpu.memory_space<any>>
    %19 = tpu.memref_squeeze %18 : memref<1x18x16x128xbf16, #tpu.memory_space<any>> -> memref<18x16x128xbf16, #tpu.memory_space<any>>
    %c0_i32_10 = arith.constant 0 : i32
    %c0_i32_11 = arith.constant 0 : i32
    %c0_i32_12 = arith.constant 0 : i32
    %20 = tpu.memref_slice %arg8[%9, %c0_i32_10, %c0_i32_11, %c0_i32_12] : memref<2x18x16x128xbf16, #tpu.memory_space<vmem>> -> memref<1x18x16x128xbf16, #tpu.memory_space<vmem>>
    %21 = tpu.memref_squeeze %20 : memref<1x18x16x128xbf16, #tpu.memory_space<vmem>> -> memref<18x16x128xbf16, #tpu.memory_space<vmem>>
    %22 = tpu.memref_slice %arg9[%9] : memref<2x!tpu.dma_semaphore, #tpu.memory_space<semaphore_mem>> -> memref<1x!tpu.dma_semaphore, #tpu.memory_space<semaphore_mem>>
    %23 = tpu.memref_squeeze %22 : memref<1x!tpu.dma_semaphore, #tpu.memory_space<semaphore_mem>> -> memref<!tpu.dma_semaphore, #tpu.memory_space<semaphore_mem>>
    tpu.wait_dma2 semaphore(%23 : memref<!tpu.dma_semaphore, #tpu.memory_space<semaphore_mem>>) src(%19 : memref<18x16x128xbf16, #tpu.memory_space<any>>) dst(%21 : memref<18x16x128xbf16, #tpu.memory_space<vmem>>)
    %24 = arith.index_cast %9 : i32 to index
    %c0 = arith.constant 0 : index
    %c0_13 = arith.constant 0 : index
    %c0_14 = arith.constant 0 : index
    %25 = vector.load %arg8[%24, %c0, %c0_13, %c0_14] : memref<2x18x16x128xbf16, #tpu.memory_space<vmem>>, vector<1x18x16x128xbf16>
    %26 = vector.shape_cast %25 : vector<1x18x16x128xbf16> to vector<18x16x128xbf16>
    %27 = vector.shape_cast %26 : vector<18x16x128xbf16> to vector<288x128xbf16>
    %c0_15 = arith.constant 0 : index
    %c0_16 = arith.constant 0 : index
    %28 = vector.load %arg3[%c0_15, %c0_16] : memref<128x256xbf16, #tpu.memory_space<vmem>>, vector<128x256xbf16>
    %cst = arith.constant dense<0.000000e+00> : vector<288x256xf32>
    %29 = tpu.matmul %27, %28, %cst {dimension_numbers = #tpu.dot_dimension_numbers<[1], [0], [0], [1], [0, 0, 1, 1], [], []>} : vector<288x128xbf16>, vector<128x256xbf16>, vector<288x256xf32> -> vector<288x256xf32>
    %c0_17 = arith.constant 0 : index
    %c0_18 = arith.constant 0 : index
    %30 = vector.load %arg6[%c0_17, %c0_18] : memref<8x128xf32, #tpu.memory_space<vmem>>, vector<1x128xf32>
    %c1 = arith.constant 1 : index
    %c0_19 = arith.constant 0 : index
    %31 = vector.load %arg6[%c1, %c0_19] : memref<8x128xf32, #tpu.memory_space<vmem>>, vector<1x128xf32>
    %32 = vector.extract_strided_slice %29 {offsets = [0, 0], sizes = [288, 128], strides = [1, 1]} : vector<288x256xf32> to vector<288x128xf32>
    %33 = vector.broadcast %30 : vector<1x128xf32> to vector<288x128xf32>
    %34 = arith.mulf %32, %33 : vector<288x128xf32>
    %35 = vector.broadcast %31 : vector<1x128xf32> to vector<288x128xf32>
    %36 = arith.addf %34, %35 : vector<288x128xf32>
    %cst_20 = arith.constant 0.000000e+00 : f32
    %37 = vector.broadcast %cst_20 : f32 to vector<288x128xf32>
    %38 = arith.maximumf %36, %37 : vector<288x128xf32>
    %39 = vector.extract_strided_slice %29 {offsets = [16, 128], sizes = [256, 128], strides = [1, 1]} : vector<288x256xf32> to vector<256x128xf32>
    %c6 = arith.constant 6 : index
    %c0_21 = arith.constant 0 : index
    %40 = vector.load %arg6[%c6, %c0_21] : memref<8x128xf32, #tpu.memory_space<vmem>>, vector<1x128xf32>
    %41 = vector.broadcast %40 : vector<1x128xf32> to vector<256x128xf32>
    %42 = arith.addf %39, %41 : vector<256x128xf32>
    %c0_22 = arith.constant 0 : index
    %c0_23 = arith.constant 0 : index
    %43 = vector.load %arg11[%c0_22, %c0_23] : memref<256x128xf32, #tpu.memory_space<vmem>>, vector<256x128xf32>
    tpu.vector_store %arg11[%c0_22, %c0_23], %42 {strides = array<i32>} : memref<256x128xf32, #tpu.memory_space<vmem>>, vector<256x128xf32>,
    %44 = vector.shape_cast %38 : vector<288x128xf32> to vector<18x16x128xf32>
    %45 = arith.truncf %44 : vector<18x16x128xf32> to vector<18x16x128xbf16>
    %c0_24 = arith.constant 0 : index
    %c1_25 = arith.constant 1 : index
    %c0_26 = arith.constant 0 : index
    %46 = vector.load %arg10[%c0_24, %c1_25, %c0_26] : memref<18x18x128xbf16, #tpu.memory_space<vmem>>, vector<18x16x128xbf16>
    tpu.vector_store %arg10[%c0_24, %c1_25, %c0_26], %45 {strides = array<i32>} : memref<18x18x128xbf16, #tpu.memory_space<vmem>>, vector<18x16x128xbf16>,
    %cst_27 = arith.constant 0.000000e+00 : bf16
    %47 = vector.broadcast %cst_27 : bf16 to vector<18x1x128xbf16>
    %c0_28 = arith.constant 0 : index
    %c0_29 = arith.constant 0 : index
    %c0_30 = arith.constant 0 : index
    %48 = vector.load %arg10[%c0_28, %c0_29, %c0_30] : memref<18x18x128xbf16, #tpu.memory_space<vmem>>, vector<18x1x128xbf16>
    tpu.vector_store %arg10[%c0_28, %c0_29, %c0_30], %47 {strides = array<i32>} : memref<18x18x128xbf16, #tpu.memory_space<vmem>>, vector<18x1x128xbf16>,
    %cst_31 = arith.constant 0.000000e+00 : bf16
    %49 = vector.broadcast %cst_31 : bf16 to vector<18x1x128xbf16>
    %c0_32 = arith.constant 0 : index
    %c17 = arith.constant 17 : index
    %c0_33 = arith.constant 0 : index
    %50 = vector.load %arg10[%c0_32, %c17, %c0_33] : memref<18x18x128xbf16, #tpu.memory_space<vmem>>, vector<18x1x128xbf16>
    tpu.vector_store %arg10[%c0_32, %c17, %c0_33], %49 {strides = array<i32>} : memref<18x18x128xbf16, #tpu.memory_space<vmem>>, vector<18x1x128xbf16>,
    %c0_i32_34 = arith.constant 0 : i32
    %51 = arith.cmpi eq, %arg1, %c0_i32_34 : i32
    %52 = arith.extui %51 : i1 to i32
    %c0_i32_35 = arith.constant 0 : i32
    %53 = arith.cmpi ne, %52, %c0_i32_35 : i32
    scf.if %53 {
      %cst_114 = arith.constant 0.000000e+00 : bf16
      %136 = vector.broadcast %cst_114 : bf16 to vector<1x18x128xbf16>
      %c0_115 = arith.constant 0 : index
      %c0_116 = arith.constant 0 : index
      %c0_117 = arith.constant 0 : index
      %137 = vector.load %arg10[%c0_115, %c0_116, %c0_117] : memref<18x18x128xbf16, #tpu.memory_space<vmem>>, vector<1x18x128xbf16>
      tpu.vector_store %arg10[%c0_115, %c0_116, %c0_117], %136 {strides = array<i32>} : memref<18x18x128xbf16, #tpu.memory_space<vmem>>, vector<1x18x128xbf16>,
    } else {
    }
    %c0_i32_36 = arith.constant 0 : i32
    %54 = arith.cmpi eq, %arg1, %c0_i32_36 : i32
    %55 = arith.extui %54 : i1 to i32
    %c0_i32_37 = arith.constant 0 : i32
    %56 = arith.cmpi ne, %55, %c0_i32_37 : i32
    scf.if %56 {
      %cst_114 = arith.constant 0.000000e+00 : bf16
      %136 = vector.broadcast %cst_114 : bf16 to vector<1x18x128xbf16>
      %c17_115 = arith.constant 17 : index
      %c0_116 = arith.constant 0 : index
      %c0_117 = arith.constant 0 : index
      %137 = vector.load %arg10[%c17_115, %c0_116, %c0_117] : memref<18x18x128xbf16, #tpu.memory_space<vmem>>, vector<1x18x128xbf16>
      tpu.vector_store %arg10[%c17_115, %c0_116, %c0_117], %136 {strides = array<i32>} : memref<18x18x128xbf16, #tpu.memory_space<vmem>>, vector<1x18x128xbf16>,
    } else {
    }
    %c0_38 = arith.constant 0 : index
    %c0_39 = arith.constant 0 : index
    %c0_40 = arith.constant 0 : index
    %57 = vector.load %arg10[%c0_38, %c0_39, %c0_40] : memref<18x18x128xbf16, #tpu.memory_space<vmem>>, vector<16x16x128xbf16>
    %58 = vector.shape_cast %57 : vector<16x16x128xbf16> to vector<256x128xbf16>
    %c0_41 = arith.constant 0 : index
    %c0_42 = arith.constant 0 : index
    %c0_43 = arith.constant 0 : index
    %59 = vector.load %arg4[%c0_41, %c0_42, %c0_43] : memref<9x128x128xbf16, #tpu.memory_space<vmem>>, vector<1x128x128xbf16>
    %60 = vector.shape_cast %59 : vector<1x128x128xbf16> to vector<128x128xbf16>
    %cst_44 = arith.constant dense<0.000000e+00> : vector<256x128xf32>
    %61 = tpu.matmul %58, %60, %cst_44 {dimension_numbers = #tpu.dot_dimension_numbers<[1], [0], [0], [1], [0, 0, 1, 1], [], []>} : vector<256x128xbf16>, vector<128x128xbf16>, vector<256x128xf32> -> vector<256x128xf32>
    %c0_45 = arith.constant 0 : index
    %c1_46 = arith.constant 1 : index
    %c0_47 = arith.constant 0 : index
    %62 = vector.load %arg10[%c0_45, %c1_46, %c0_47] : memref<18x18x128xbf16, #tpu.memory_space<vmem>>, vector<16x16x128xbf16>
    %63 = vector.shape_cast %62 : vector<16x16x128xbf16> to vector<256x128xbf16>
    %c1_48 = arith.constant 1 : index
    %c0_49 = arith.constant 0 : index
    %c0_50 = arith.constant 0 : index
    %64 = vector.load %arg4[%c1_48, %c0_49, %c0_50] : memref<9x128x128xbf16, #tpu.memory_space<vmem>>, vector<1x128x128xbf16>
    %65 = vector.shape_cast %64 : vector<1x128x128xbf16> to vector<128x128xbf16>
    %cst_51 = arith.constant dense<0.000000e+00> : vector<256x128xf32>
    %66 = tpu.matmul %63, %65, %cst_51 {dimension_numbers = #tpu.dot_dimension_numbers<[1], [0], [0], [1], [0, 0, 1, 1], [], []>} : vector<256x128xbf16>, vector<128x128xbf16>, vector<256x128xf32> -> vector<256x128xf32>
    %67 = arith.addf %61, %66 : vector<256x128xf32>
    %c0_52 = arith.constant 0 : index
    %c2 = arith.constant 2 : index
    %c0_53 = arith.constant 0 : index
    %68 = vector.load %arg10[%c0_52, %c2, %c0_53] : memref<18x18x128xbf16, #tpu.memory_space<vmem>>, vector<16x16x128xbf16>
    %69 = vector.shape_cast %68 : vector<16x16x128xbf16> to vector<256x128xbf16>
    %c2_54 = arith.constant 2 : index
    %c0_55 = arith.constant 0 : index
    %c0_56 = arith.constant 0 : index
    %70 = vector.load %arg4[%c2_54, %c0_55, %c0_56] : memref<9x128x128xbf16, #tpu.memory_space<vmem>>, vector<1x128x128xbf16>
    %71 = vector.shape_cast %70 : vector<1x128x128xbf16> to vector<128x128xbf16>
    %cst_57 = arith.constant dense<0.000000e+00> : vector<256x128xf32>
    %72 = tpu.matmul %69, %71, %cst_57 {dimension_numbers = #tpu.dot_dimension_numbers<[1], [0], [0], [1], [0, 0, 1, 1], [], []>} : vector<256x128xbf16>, vector<128x128xbf16>, vector<256x128xf32> -> vector<256x128xf32>
    %73 = arith.addf %67, %72 : vector<256x128xf32>
    %c1_58 = arith.constant 1 : index
    %c0_59 = arith.constant 0 : index
    %c0_60 = arith.constant 0 : index
    %74 = vector.load %arg10[%c1_58, %c0_59, %c0_60] : memref<18x18x128xbf16, #tpu.memory_space<vmem>>, vector<16x16x128xbf16>
    %75 = vector.shape_cast %74 : vector<16x16x128xbf16> to vector<256x128xbf16>
    %c3 = arith.constant 3 : index
    %c0_61 = arith.constant 0 : index
    %c0_62 = arith.constant 0 : index
    %76 = vector.load %arg4[%c3, %c0_61, %c0_62] : memref<9x128x128xbf16, #tpu.memory_space<vmem>>, vector<1x128x128xbf16>
    %77 = vector.shape_cast %76 : vector<1x128x128xbf16> to vector<128x128xbf16>
    %cst_63 = arith.constant dense<0.000000e+00> : vector<256x128xf32>
    %78 = tpu.matmul %75, %77, %cst_63 {dimension_numbers = #tpu.dot_dimension_numbers<[1], [0], [0], [1], [0, 0, 1, 1], [], []>} : vector<256x128xbf16>, vector<128x128xbf16>, vector<256x128xf32> -> vector<256x128xf32>
    %79 = arith.addf %73, %78 : vector<256x128xf32>
    %c1_64 = arith.constant 1 : index
    %c1_65 = arith.constant 1 : index
    %c0_66 = arith.constant 0 : index
    %80 = vector.load %arg10[%c1_64, %c1_65, %c0_66] : memref<18x18x128xbf16, #tpu.memory_space<vmem>>, vector<16x16x128xbf16>
    %81 = vector.shape_cast %80 : vector<16x16x128xbf16> to vector<256x128xbf16>
    %c4 = arith.constant 4 : index
    %c0_67 = arith.constant 0 : index
    %c0_68 = arith.constant 0 : index
    %82 = vector.load %arg4[%c4, %c0_67, %c0_68] : memref<9x128x128xbf16, #tpu.memory_space<vmem>>, vector<1x128x128xbf16>
    %83 = vector.shape_cast %82 : vector<1x128x128xbf16> to vector<128x128xbf16>
    %cst_69 = arith.constant dense<0.000000e+00> : vector<256x128xf32>
    %84 = tpu.matmul %81, %83, %cst_69 {dimension_numbers = #tpu.dot_dimension_numbers<[1], [0], [0], [1], [0, 0, 1, 1], [], []>} : vector<256x128xbf16>, vector<128x128xbf16>, vector<256x128xf32> -> vector<256x128xf32>
    %85 = arith.addf %79, %84 : vector<256x128xf32>
    %c1_70 = arith.constant 1 : index
    %c2_71 = arith.constant 2 : index
    %c0_72 = arith.constant 0 : index
    %86 = vector.load %arg10[%c1_70, %c2_71, %c0_72] : memref<18x18x128xbf16, #tpu.memory_space<vmem>>, vector<16x16x128xbf16>
    %87 = vector.shape_cast %86 : vector<16x16x128xbf16> to vector<256x128xbf16>
    %c5 = arith.constant 5 : index
    %c0_73 = arith.constant 0 : index
    %c0_74 = arith.constant 0 : index
    %88 = vector.load %arg4[%c5, %c0_73, %c0_74] : memref<9x128x128xbf16, #tpu.memory_space<vmem>>, vector<1x128x128xbf16>
    %89 = vector.shape_cast %88 : vector<1x128x128xbf16> to vector<128x128xbf16>
    %cst_75 = arith.constant dense<0.000000e+00> : vector<256x128xf32>
    %90 = tpu.matmul %87, %89, %cst_75 {dimension_numbers = #tpu.dot_dimension_numbers<[1], [0], [0], [1], [0, 0, 1, 1], [], []>} : vector<256x128xbf16>, vector<128x128xbf16>, vector<256x128xf32> -> vector<256x128xf32>
    %91 = arith.addf %85, %90 : vector<256x128xf32>
    %c2_76 = arith.constant 2 : index
    %c0_77 = arith.constant 0 : index
    %c0_78 = arith.constant 0 : index
    %92 = vector.load %arg10[%c2_76, %c0_77, %c0_78] : memref<18x18x128xbf16, #tpu.memory_space<vmem>>, vector<16x16x128xbf16>
    %93 = vector.shape_cast %92 : vector<16x16x128xbf16> to vector<256x128xbf16>
    %c6_79 = arith.constant 6 : index
    %c0_80 = arith.constant 0 : index
    %c0_81 = arith.constant 0 : index
    %94 = vector.load %arg4[%c6_79, %c0_80, %c0_81] : memref<9x128x128xbf16, #tpu.memory_space<vmem>>, vector<1x128x128xbf16>
    %95 = vector.shape_cast %94 : vector<1x128x128xbf16> to vector<128x128xbf16>
    %cst_82 = arith.constant dense<0.000000e+00> : vector<256x128xf32>
    %96 = tpu.matmul %93, %95, %cst_82 {dimension_numbers = #tpu.dot_dimension_numbers<[1], [0], [0], [1], [0, 0, 1, 1], [], []>} : vector<256x128xbf16>, vector<128x128xbf16>, vector<256x128xf32> -> vector<256x128xf32>
    %97 = arith.addf %91, %96 : vector<256x128xf32>
    %c2_83 = arith.constant 2 : index
    %c1_84 = arith.constant 1 : index
    %c0_85 = arith.constant 0 : index
    %98 = vector.load %arg10[%c2_83, %c1_84, %c0_85] : memref<18x18x128xbf16, #tpu.memory_space<vmem>>, vector<16x16x128xbf16>
    %99 = vector.shape_cast %98 : vector<16x16x128xbf16> to vector<256x128xbf16>
    %c7 = arith.constant 7 : index
    %c0_86 = arith.constant 0 : index
    %c0_87 = arith.constant 0 : index
    %100 = vector.load %arg4[%c7, %c0_86, %c0_87] : memref<9x128x128xbf16, #tpu.memory_space<vmem>>, vector<1x128x128xbf16>
    %101 = vector.shape_cast %100 : vector<1x128x128xbf16> to vector<128x128xbf16>
    %cst_88 = arith.constant dense<0.000000e+00> : vector<256x128xf32>
    %102 = tpu.matmul %99, %101, %cst_88 {dimension_numbers = #tpu.dot_dimension_numbers<[1], [0], [0], [1], [0, 0, 1, 1], [], []>} : vector<256x128xbf16>, vector<128x128xbf16>, vector<256x128xf32> -> vector<256x128xf32>
    %103 = arith.addf %97, %102 : vector<256x128xf32>
    %c2_89 = arith.constant 2 : index
    %c2_90 = arith.constant 2 : index
    %c0_91 = arith.constant 0 : index
    %104 = vector.load %arg10[%c2_89, %c2_90, %c0_91] : memref<18x18x128xbf16, #tpu.memory_space<vmem>>, vector<16x16x128xbf16>
    %105 = vector.shape_cast %104 : vector<16x16x128xbf16> to vector<256x128xbf16>
    %c8 = arith.constant 8 : index
    %c0_92 = arith.constant 0 : index
    %c0_93 = arith.constant 0 : index
    %106 = vector.load %arg4[%c8, %c0_92, %c0_93] : memref<9x128x128xbf16, #tpu.memory_space<vmem>>, vector<1x128x128xbf16>
    %107 = vector.shape_cast %106 : vector<1x128x128xbf16> to vector<128x128xbf16>
    %cst_94 = arith.constant dense<0.000000e+00> : vector<256x128xf32>
    %108 = tpu.matmul %105, %107, %cst_94 {dimension_numbers = #tpu.dot_dimension_numbers<[1], [0], [0], [1], [0, 0, 1, 1], [], []>} : vector<256x128xbf16>, vector<128x128xbf16>, vector<256x128xf32> -> vector<256x128xf32>
    %109 = arith.addf %103, %108 : vector<256x128xf32>
    %c2_95 = arith.constant 2 : index
    %c0_96 = arith.constant 0 : index
    %110 = vector.load %arg6[%c2_95, %c0_96] : memref<8x128xf32, #tpu.memory_space<vmem>>, vector<1x128xf32>
    %c3_97 = arith.constant 3 : index
    %c0_98 = arith.constant 0 : index
    %111 = vector.load %arg6[%c3_97, %c0_98] : memref<8x128xf32, #tpu.memory_space<vmem>>, vector<1x128xf32>
    %112 = vector.broadcast %110 : vector<1x128xf32> to vector<256x128xf32>
    %113 = arith.mulf %109, %112 : vector<256x128xf32>
    %114 = vector.broadcast %111 : vector<1x128xf32> to vector<256x128xf32>
    %115 = arith.addf %113, %114 : vector<256x128xf32>
    %cst_99 = arith.constant 0.000000e+00 : f32
    %116 = vector.broadcast %cst_99 : f32 to vector<256x128xf32>
    %117 = arith.maximumf %115, %116 : vector<256x128xf32>
    %118 = arith.truncf %117 : vector<256x128xf32> to vector<256x128xbf16>
    %c0_100 = arith.constant 0 : index
    %c0_101 = arith.constant 0 : index
    %119 = vector.load %arg5[%c0_100, %c0_101] : memref<128x128xbf16, #tpu.memory_space<vmem>>, vector<128x128xbf16>
    %cst_102 = arith.constant dense<0.000000e+00> : vector<256x128xf32>
    %120 = tpu.matmul %118, %119, %cst_102 {dimension_numbers = #tpu.dot_dimension_numbers<[1], [0], [0], [1], [0, 0, 1, 1], [], []>} : vector<256x128xbf16>, vector<128x128xbf16>, vector<256x128xf32> -> vector<256x128xf32>
    %c4_103 = arith.constant 4 : index
    %c0_104 = arith.constant 0 : index
    %121 = vector.load %arg6[%c4_103, %c0_104] : memref<8x128xf32, #tpu.memory_space<vmem>>, vector<1x128xf32>
    %c5_105 = arith.constant 5 : index
    %c0_106 = arith.constant 0 : index
    %122 = vector.load %arg6[%c5_105, %c0_106] : memref<8x128xf32, #tpu.memory_space<vmem>>, vector<1x128xf32>
    %123 = vector.broadcast %121 : vector<1x128xf32> to vector<256x128xf32>
    %124 = arith.mulf %120, %123 : vector<256x128xf32>
    %125 = vector.broadcast %122 : vector<1x128xf32> to vector<256x128xf32>
    %126 = arith.addf %124, %125 : vector<256x128xf32>
    %c0_107 = arith.constant 0 : index
    %c0_108 = arith.constant 0 : index
    %127 = vector.load %arg11[%c0_107, %c0_108] : memref<256x128xf32, #tpu.memory_space<vmem>>, vector<256x128xf32>
    %128 = arith.addf %126, %127 : vector<256x128xf32>
    %cst_109 = arith.constant 0.000000e+00 : f32
    %129 = vector.broadcast %cst_109 : f32 to vector<256x128xf32>
    %130 = arith.maximumf %128, %129 : vector<256x128xf32>
    %131 = vector.shape_cast %130 : vector<256x128xf32> to vector<16x16x128xf32>
    %132 = arith.truncf %131 : vector<16x16x128xf32> to vector<16x16x128xbf16>
    %c0_110 = arith.constant 0 : index
    %c0_111 = arith.constant 0 : index
    %c0_112 = arith.constant 0 : index
    %c0_113 = arith.constant 0 : index
    %133 = vector.load %arg7[%c0_110, %c0_111, %c0_112, %c0_113] : memref<1x16x16x128xbf16, #tpu.memory_space<vmem>>, vector<1x16x16x128xbf16>
    %134 = vector.shape_cast %133 : vector<1x16x16x128xbf16> to vector<16x16x128xbf16>
    %135 = vector.shape_cast %132 : vector<16x16x128xbf16> to vector<1x16x16x128xbf16>
    tpu.vector_store %arg7[%c0_110, %c0_111, %c0_112, %c0_113], %135 {strides = array<i32>} : memref<1x16x16x128xbf16, #tpu.memory_space<vmem>>, vector<1x16x16x128xbf16>,
    return
  }
  func.func @transform_1(%arg0: i32, %arg1: i32) -> (i32, i32) {
    %c0_i32 = arith.constant 0 : i32
    %c0_i32_0 = arith.constant 0 : i32
    %c0_i32_1 = arith.constant 0 : i32
    return %c0_i32, %c0_i32_0 : i32, i32
  }
  func.func @transform_2(%arg0: i32, %arg1: i32) -> (i32, i32, i32) {
    %c0_i32 = arith.constant 0 : i32
    %c0_i32_0 = arith.constant 0 : i32
    %c0_i32_1 = arith.constant 0 : i32
    %c0_i32_2 = arith.constant 0 : i32
    return %c0_i32, %c0_i32_0, %c0_i32_1 : i32, i32, i32
  }
  func.func @transform_3(%arg0: i32, %arg1: i32) -> (i32, i32) {
    %c0_i32 = arith.constant 0 : i32
    %c0_i32_0 = arith.constant 0 : i32
    %c0_i32_1 = arith.constant 0 : i32
    return %c0_i32, %c0_i32_0 : i32, i32
  }
  func.func @transform_4(%arg0: i32, %arg1: i32) -> (i32, i32) {
    %c0_i32 = arith.constant 0 : i32
    %c0_i32_0 = arith.constant 0 : i32
    %c0_i32_1 = arith.constant 0 : i32
    return %c0_i32, %c0_i32_0 : i32, i32
  }
  func.func @transform_5(%arg0: i32, %arg1: i32) -> (i32, i32, i32, i32) {
    %c0_i32 = arith.constant 0 : i32
    %c0_i32_0 = arith.constant 0 : i32
    %c0_i32_1 = arith.constant 0 : i32
    return %arg0, %arg1, %c0_i32, %c0_i32_0 : i32, i32, i32, i32
  }
}

</mosaic_0001>

<llo_original>
// kernel: residual_bottle_pallas.1
$region0: #{residual_bottle_pallas.1}
  #allocation0 [shape = 'u32[]', space=smem, size = 0x4, offset = 0x4, fixed_abs, tag = 'smem constant byte address 0x4 - core index']
  #allocation1 [shape = 'u32[144,128]{1,0:T(1,128)}', space=vmem, size = 0x12000, scoped, tag = 'internal scratch']
  #allocation2 [shape = 'bf16[2,18,16,128]{3,2,1,0:T(8,128)(2,1)}', space=vmem, size = 0x24000, scoped, tag = 'scratch operand']
  #allocation3 [shape = 's32[2]{0}', space=sflag, size = 0x8, scoped, tag = 'scratch operand']
  #allocation4 [shape = 'bf16[18,18,128]{2,1,0:T(8,128)(2,1)}', space=vmem, size = 0x1b000, scoped, tag = 'scratch operand']
  #allocation5 [shape = 'f32[256,128]{1,0:T(8,128)}', space=vmem, size = 0x20000, scoped, tag = 'scratch operand']
  #allocation6 [shape = 's32[]', space=sflag, size = 0x4, offset = 0, fixed_abs, tag = 'sflag constant byte address 0x0 - dummy sync flag']
  #allocation7 [shape = 's32[]', space=sflag, size = 0x4, offset = 0, fixed_abs, tag = 'sflag constant byte address 0x0 - dummy sync flag']
  %s0 = inlined_call_operand.vmem [shape: bf16[2,18,16,128], index: 0, kind: input, shape index: {}]
  %s1 = inlined_call_operand.vmem [shape: bf16[128,256], index: 1, kind: input, shape index: {}]
  %s2 = inlined_call_operand.vmem [shape: bf16[9,128,128], index: 2, kind: input, shape index: {}]
  %s3 = inlined_call_operand.vmem [shape: bf16[128,128], index: 3, kind: input, shape index: {}]
  %s4 = inlined_call_operand.vmem [shape: f32[8,128], index: 4, kind: input, shape index: {}]
  %s5 = inlined_call_operand.vmem [shape: bf16[2,16,16,128], index: 5, kind: output, shape index: {}]
  %s6 = sld [smem:[#allocation0]]
  $region129: #{residual_bottle_pallas.1} parent=0
    _
  %s8 = ssub.s32 1, %s6
  %s9 = scalar_select 0, %s8, %s6
  loop: start=0, step=1, limit=4
  $region2: #{residual_bottle_pallas.1} parent=0 // loop_pre_header
    _
  $region3: #{residual_bottle_pallas.1} parent=0 // loop_header
    %s11 = sphi 0, %s15
    %p12 = scmp.ge.s32.totalorder %s11, 4
    %s18 = sphi 0, %s30
    %s19 = sphi 0, %s26
    %s20 = sphi 0, %s18
    %s21 = sphi 0, %s19
    %s22 = sphi 0, %s20
    %s23 = sphi 0, %s21
    %s31 = sphi 0, %s31
    %s33 = sphi 0, %s31
    %s34 = sphi 0, %s33
    %s48 = sphi 0, %s34
    %s52 = sphi 0, %s52
    %s54 = sphi 0, %s52
    %s55 = sphi 0, %s54
    %s69 = sphi 0, %s55
    %s73 = sphi 0, %s73
    %s75 = sphi 0, %s73
    %s76 = sphi 0, %s75
    %s90 = sphi 0, %s76
    %s94 = sphi 0, %s94
    %s96 = sphi 0, %s94
    %s97 = sphi 0, %s96
    %s111 = sphi 0, %s97
    %s119 = sphi 0, %s121
    %s122 = sphi 0, %s119
    %s123 = sphi 0, %s122
    %s139 = sphi 0, %s123
  $region4: #{residual_bottle_pallas.1} parent=0 // loop_header_branch
    %14 = sbr.rel (%p12) target = $region8
  $region5: #{residual_bottle_pallas.1} parent=0 // loop_body
    %s16 = ssub.s32 %s11, 1
    %s17 = ssub.s32 %s11, 2
    %s24 = sadd.s32 1, %s19
    %p25 = scmp.ge.s32.totalorder %s24, 1
    %s26 = scalar_select %p25, 0, %s24
    %s27 = sadd.s32 1, %s18
    %s28 = scalar_select %p25, %s27, %s18
    %p29 = scmp.ge.s32.totalorder %s28, 2
    %s30 = scalar_select %p29, 0, %s28
    %s32 = sadd.s32 %s31, 1
    %p35 = scmp.eq.s32.totalorder %s11, 1
    %p36 = scmp.ne.s32.totalorder %s31, %s33
    %p37 = scmp.eq.s32.totalorder %s11, 0
    %p38 = por %p36, %p37
    %p39 = scmp.ne.s32.totalorder %s31, %s33
    %p40 = scmp.eq.s32.totalorder %s16, 1
    %p41 = por %p39, %p40
    %p42 = scmp.ne.s32.totalorder %s33, %s34
    %p43 = scmp.eq.s32.totalorder %s16, 0
    %p44 = por %p42, %p43
    %p45 = scmp.ne.s32.totalorder %s33, %s34
    %p46 = scmp.eq.s32.totalorder %s17, 1
    %p47 = por %p45, %p46
    %p49 = scmp.ne.s32.totalorder %s34, %s48
    %p50 = scmp.eq.s32.totalorder %s17, 0
    %p51 = por %p49, %p50
    %s53 = sadd.s32 %s52, 1
    %p56 = scmp.eq.s32.totalorder %s11, 1
    %p57 = scmp.ne.s32.totalorder %s52, %s54
    %p58 = scmp.eq.s32.totalorder %s11, 0
    %p59 = por %p57, %p58
    %p60 = scmp.ne.s32.totalorder %s52, %s54
    %p61 = scmp.eq.s32.totalorder %s16, 1
    %p62 = por %p60, %p61
    %p63 = scmp.ne.s32.totalorder %s54, %s55
    %p64 = scmp.eq.s32.totalorder %s16, 0
    %p65 = por %p63, %p64
    %p66 = scmp.ne.s32.totalorder %s54, %s55
    %p67 = scmp.eq.s32.totalorder %s17, 1
    %p68 = por %p66, %p67
    %p70 = scmp.ne.s32.totalorder %s55, %s69
    %p71 = scmp.eq.s32.totalorder %s17, 0
    %p72 = por %p70, %p71
    %s74 = sadd.s32 %s73, 1
    %p77 = scmp.eq.s32.totalorder %s11, 1
    %p78 = scmp.ne.s32.totalorder %s73, %s75
    %p79 = scmp.eq.s32.totalorder %s11, 0
    %p80 = por %p78, %p79
    %p81 = scmp.ne.s32.totalorder %s73, %s75
    %p82 = scmp.eq.s32.totalorder %s16, 1
    %p83 = por %p81, %p82
    %p84 = scmp.ne.s32.totalorder %s75, %s76
    %p85 = scmp.eq.s32.totalorder %s16, 0
    %p86 = por %p84, %p85
    %p87 = scmp.ne.s32.totalorder %s75, %s76
    %p88 = scmp.eq.s32.totalorder %s17, 1
    %p89 = por %p87, %p88
    %p91 = scmp.ne.s32.totalorder %s76, %s90
    %p92 = scmp.eq.s32.totalorder %s17, 0
    %p93 = por %p91, %p92
    %s95 = sadd.s32 %s94, 1
    %p98 = scmp.eq.s32.totalorder %s11, 1
    %p99 = scmp.ne.s32.totalorder %s94, %s96
    %p100 = scmp.eq.s32.totalorder %s11, 0
    %p101 = por %p99, %p100
    %p102 = scmp.ne.s32.totalorder %s94, %s96
    %p103 = scmp.eq.s32.totalorder %s16, 1
    %p104 = por %p102, %p103
    %p105 = scmp.ne.s32.totalorder %s96, %s97
    %p106 = scmp.eq.s32.totalorder %s16, 0
    %p107 = por %p105, %p106
    %p108 = scmp.ne.s32.totalorder %s96, %s97
    %p109 = scmp.eq.s32.totalorder %s17, 1
    %p110 = por %p108, %p109
    %p112 = scmp.ne.s32.totalorder %s97, %s111
    %p113 = scmp.eq.s32.totalorder %s17, 0
    %p114 = por %p112, %p113
    %s115 = ssub.s32 %s18, %s30
    %s116 = ssub.s32 %s19, %s26
    %s117 = sor.u32 %s115, %s116
    %p118 = scmp.eq.s32.totalorder %s117, 0
    %s120 = sadd.s32 %s119, 1
    %s121 = scalar_select %p118, %s119, %s120
    %p124 = pneg %p118
    %p125 = scmp.eq.s32.totalorder %s11, 1
    %p126 = por %p124, %p125
    %p127 = scmp.ne.s32.totalorder %s119, %s122
    %p128 = scmp.eq.s32.totalorder %s11, 0
    %p129 = por %p127, %p128
    %p130 = scmp.ne.s32.totalorder %s119, %s122
    %p131 = scmp.eq.s32.totalorder %s16, 1
    %p132 = por %p130, %p131
    %p133 = scmp.ne.s32.totalorder %s122, %s123
    %p134 = scmp.eq.s32.totalorder %s16, 0
    %p135 = por %p133, %p134
    %p136 = scmp.ne.s32.totalorder %s122, %s123
    %p137 = scmp.eq.s32.totalorder %s17, 1
    %p138 = por %p136, %p137
    %p140 = scmp.ne.s32.totalorder %s123, %s139
    %p141 = scmp.eq.s32.totalorder %s17, 0
    %p142 = por %p140, %p141
    %p143 = scmp.le.s32.totalorder 1, %s11
    %p144 = scmp.lt.s32.totalorder %s11, 3
    %p145 = pnand %p143, %p144
    %p146 = pneg %p145
    // Predicated region
    $region9: #{residual_bottle_pallas.1} parent=5 // pred_check
      _
    $region10: #{residual_bottle_pallas.1} parent=5 // pred_check_branch
      %148 = sbr.rel (%p145) target = $region12
    $region11: #{residual_bottle_pallas.1} parent=5 // pred_region
      %s149 = ssub.s32 %s11, 1
      // Predicated region
      $region13: #{residual_bottle_pallas.1} parent=11 // pred_check
        %p150 = pneg %p44
      $region14: #{residual_bottle_pallas.1} parent=11 // pred_check_branch
        %152 = sbr.rel (%p150) target = $region16
      $region15: #{residual_bottle_pallas.1} parent=11 // pred_region
        _
      $region16: #{residual_bottle_pallas.1} parent=11 // pred_fallthru
        _
      // Predicated region
      $region17: #{residual_bottle_pallas.1} parent=11 // pred_check
        %p153 = pneg %p65
      $region18: #{residual_bottle_pallas.1} parent=11 // pred_check_branch
        %155 = sbr.rel (%p153) target = $region20
      $region19: #{residual_bottle_pallas.1} parent=11 // pred_region
        _
      $region20: #{residual_bottle_pallas.1} parent=11 // pred_fallthru
        _
      // Predicated region
      $region21: #{residual_bottle_pallas.1} parent=11 // pred_check
        %p156 = pneg %p86
      $region22: #{residual_bottle_pallas.1} parent=11 // pred_check_branch
        %158 = sbr.rel (%p156) target = $region24
      $region23: #{residual_bottle_pallas.1} parent=11 // pred_region
        _
      $region24: #{residual_bottle_pallas.1} parent=11 // pred_fallthru
        _
      // Predicated region
      $region25: #{residual_bottle_pallas.1} parent=11 // pred_check
        %p159 = pneg %p107
      $region26: #{residual_bottle_pallas.1} parent=11 // pred_check_branch
        %161 = sbr.rel (%p159) target = $region28
      $region27: #{residual_bottle_pallas.1} parent=11 // pred_region
        _
      $region28: #{residual_bottle_pallas.1} parent=11 // pred_fallthru
        _
    $region12: #{residual_bottle_pallas.1} parent=5 // pred_fallthru
      _
    %p162 = scmp.lt.s32.totalorder %s11, 2
    // Predicated region
    $region29: #{residual_bottle_pallas.1} parent=5 // pred_check
      %p163 = pneg %p162
    $region30: #{residual_bottle_pallas.1} parent=5 // pred_check_branch
      %165 = sbr.rel (%p163) target = $region32
    $region31: #{residual_bottle_pallas.1} parent=5 // pred_region
      _
    $region32: #{residual_bottle_pallas.1} parent=5 // pred_fallthru
      _
    %p166 = scmp.le.s32.totalorder 1, %s11
    %p167 = scmp.lt.s32.totalorder %s11, 3
    %p168 = pnand %p166, %p167
    %p169 = pneg %p168
    // Predicated region
    $region33: #{residual_bottle_pallas.1} parent=5 // pred_check
      _
    $region34: #{residual_bottle_pallas.1} parent=5 // pred_check_branch
      %171 = sbr.rel (%p168) target = $region36
    $region35: #{residual_bottle_pallas.1} parent=5 // pred_region
      %s172 = ssub.s32 %s11, 1
      %p173 = pneg %p44
      %p174 = pneg %p41
      %p175 = pneg %p65
      %p176 = pneg %p62
      %p177 = pneg %p86
      %p178 = pneg %p83
      %p179 = pneg %p107
      %p180 = pneg %p104
      %p181 = pneg %p135
      %p182 = pneg %p132
      %s183 = smul.u32 16, %s21
      %p184 = scmp.lt.s32.totalorder %s20, 1
      %s185 = scalar_select %p184, %s20, 1
      %p186 = scmp.lt.s32.totalorder %s183, 15
      %s187 = scalar_select %p186, %s183, 15
      %s188 = smul.addr %s187, 2
      %s189 = smul.addr %s185, 32
      %s190 = sadd.s32 %s188, %s189
      %s191 = smul.addr %s190, 4
      %s192 = scalar_lea.vmem %s5, %s191
      %s193 = smul.u32 16, %s21
      %p194 = scmp.lt.s32.totalorder %s20, 1
      %s195 = scalar_select %p194, %s20, 1
      %p196 = scmp.lt.s32.totalorder %s193, 15
      %s197 = scalar_select %p196, %s193, 15
      %s198 = smul.addr %s197, 2
      %s199 = smul.addr %s195, 32
      %s200 = sadd.s32 %s198, %s199
      %s201 = smul.addr %s200, 4
      %s202 = scalar_lea.vmem %s5, %s201
      %s203 = smul.u32 16, %s21
      %p205 = scmp.lt.s32.totalorder %s21, 0
      %s206 = ssub.s32 0, %s21
      %s207 = scalar_select %p205, %s206, %s21
      %s208 = sand.u32 %s207, 1
      %s209 = ssub.s32 0, %s208
      %s210 = scalar_select %p205, %s209, %s208
      %p211 = scmp.ne.s32.totalorder %s210, 0
      %p212 = scmp.lt.s32.totalorder %s210, 0
      %p213 = pnand %p212, %p211
      %p214 = pneg %p213
      %s215 = sadd.s32 %s210, 2
      %s216 = scalar_select %p214, %s215, %s210
      %p217 = scmp.eq.s32.totalorder %s21, 0
      // Predicated region
      $region37: #{residual_bottle_pallas.1} parent=35 // pred_check
        %p218 = pneg %p217
      $region38: #{residual_bottle_pallas.1} parent=35 // pred_check_branch
        %220 = sbr.rel (%p218) target = $region40
      $region39: #{residual_bottle_pallas.1} parent=35 // pred_region
        %s221 = smul.u32 %s20, 36
        %s222 = smul.addr %s221, 4
        %s223 = scalar_lea.vmem %s0, %s222
        %p225 = scmp.lt.u32.totalorder 144, 8
        %p226 = pneg %p225
        // Predicated region
        $region41: #{residual_bottle_pallas.1} parent=39 // pred_check
          _
        $region42: #{residual_bottle_pallas.1} parent=39 // pred_check_branch
          %228 = sbr.rel (%p225) target = $region44
        $region43: #{residual_bottle_pallas.1} parent=39 // pred_region
          %s244 = sand.u32 144, 7
          %p245 = scmp.eq.s32.totalorder %s244, 0
          // Predicated region
          $region56: #{residual_bottle_pallas.1} parent=43 // pred_check
            %p246 = pneg %p245
          $region57: #{residual_bottle_pallas.1} parent=43 // pred_check_branch
            %248 = sbr.rel (%p246) target = $region59
          $region58: #{residual_bottle_pallas.1} parent=43 // pred_region
            loop: start=0, step=1, limit=1
            $region60: #{residual_bottle_pallas.1} parent=58 // loop_pre_header
              _
            $region61: #{residual_bottle_pallas.1} parent=58 // loop_header
              %s250 = sphi 0, %s254
              %p251 = scmp.ge.s32.totalorder %s250, 1
              %s255 = sphi %s223, %s223
              %s256 = sphi [#allocation2], [#allocation2]
            $region62: #{residual_bottle_pallas.1} parent=58 // loop_header_branch
              %253 = sbr.rel (%p251) target = $region66
            $region63: #{residual_bottle_pallas.1} parent=58 // loop_body
              %v257 = vld [vmem:[%s255] sm:$0xff]
              %258 = vst [vmem:[%s256] sm:$0xff] %v257
              %v259 = vld [vmem:[%s255 + $0x8] sm:$0xff]
              %260 = vst [vmem:[%s256 + $0x8] sm:$0xff] %v259
              %v261 = vld [vmem:[%s255 + $0x10] sm:$0xff]
              %262 = vst [vmem:[%s256 + $0x10] sm:$0xff] %v261
              %v263 = vld [vmem:[%s255 + $0x18] sm:$0xff]
              %264 = vst [vmem:[%s256 + $0x18] sm:$0xff] %v263
              %v265 = vld [vmem:[%s255 + $0x20] sm:$0xff]
              %266 = vst [vmem:[%s256 + $0x20] sm:$0xff] %v265
              %v267 = vld [vmem:[%s255 + $0x28] sm:$0xff]
              %268 = vst [vmem:[%s256 + $0x28] sm:$0xff] %v267
              %v269 = vld [vmem:[%s255 + $0x30] sm:$0xff]
              %270 = vst [vmem:[%s256 + $0x30] sm:$0xff] %v269
              %v271 = vld [vmem:[%s255 + $0x38] sm:$0xff]
              %272 = vst [vmem:[%s256 + $0x38] sm:$0xff] %v271
              %v273 = vld [vmem:[%s255 + $0x40] sm:$0xff]
              %274 = vst [vmem:[%s256 + $0x40] sm:$0xff] %v273
              %v275 = vld [vmem:[%s255 + $0x48] sm:$0xff]
              %276 = vst [vmem:[%s256 + $0x48] sm:$0xff] %v275
              %v277 = vld [vmem:[%s255 + $0x50] sm:$0xff]
              %278 = vst [vmem:[%s256 + $0x50] sm:$0xff] %v277
              %v279 = vld [vmem:[%s255 + $0x58] sm:$0xff]
              %280 = vst [vmem:[%s256 + $0x58] sm:$0xff] %v279
              %v281 = vld [vmem:[%s255 + $0x60] sm:$0xff]
              %282 = vst [vmem:[%s256 + $0x60] sm:$0xff] %v281
              %v283 = vld [vmem:[%s255 + $0x68] sm:$0xff]
              %284 = vst [vmem:[%s256 + $0x68] sm:$0xff] %v283
              %v285 = vld [vmem:[%s255 + $0x70] sm:$0xff]
              %286 = vst [vmem:[%s256 + $0x70] sm:$0xff] %v285
              %v287 = vld [vmem:[%s255 + $0x78] sm:$0xff]
              %288 = vst [vmem:[%s256 + $0x78] sm:$0xff] %v287
              %v289 = vld [vmem:[%s255 + $0x80] sm:$0xff]
              %290 = vst [vmem:[%s256 + $0x80] sm:$0xff] %v289
              %v291 = vld [vmem:[%s255 + $0x88] sm:$0xff]
              %292 = vst [vmem:[%s256 + $0x88] sm:$0xff] %v291
            $region64: #{residual_bottle_pallas.1} parent=58 // loop_footer
              %s254 = sadd.s32 1, %s250
            $region65: #{residual_bottle_pallas.1} parent=58 // loop_footer_branch
              %249 = sbr.rel target = $region61
            $region66: #{residual_bottle_pallas.1} parent=58 // loop_exit
              _
          $region59: #{residual_bottle_pallas.1} parent=43 // pred_fallthru
            _
          %p293 = pneg %p245
          // Predicated region
          $region67: #{residual_bottle_pallas.1} parent=43 // pred_check
            _
          $region68: #{residual_bottle_pallas.1} parent=43 // pred_check_branch
            %295 = sbr.rel (%p245) target = $region70
          $region69: #{residual_bottle_pallas.1} parent=43 // pred_region
            %s296 = sand.u32 144, 7
          $region70: #{residual_bottle_pallas.1} parent=43 // pred_fallthru
            _
        $region44: #{residual_bottle_pallas.1} parent=39 // pred_fallthru
          _
        // Predicated region
        $region45: #{residual_bottle_pallas.1} parent=39 // pred_check
          %p229 = pneg %p225
        $region46: #{residual_bottle_pallas.1} parent=39 // pred_check_branch
          %231 = sbr.rel (%p229) target = $region48
        $region47: #{residual_bottle_pallas.1} parent=39 // pred_region
          %s232 = sshll.u32 1, 144
          %s233 = ssub.s32 %s232, 1
          loop: start=0, step=1, limit=1
          $region49: #{residual_bottle_pallas.1} parent=47 // loop_pre_header
            _
          $region50: #{residual_bottle_pallas.1} parent=47 // loop_header
            %s235 = sphi 0, %s239
            %p236 = scmp.ge.s32.totalorder %s235, 1
            %s240 = sphi %s223, %s223
            %s241 = sphi [#allocation2], [#allocation2]
          $region51: #{residual_bottle_pallas.1} parent=47 // loop_header_branch
            %238 = sbr.rel (%p236) target = $region55
          $region52: #{residual_bottle_pallas.1} parent=47 // loop_body
            %v242 = vld [vmem:[%s240] sm:%s233]
            %243 = vst [vmem:[%s241] sm:%s233] %v242
          $region53: #{residual_bottle_pallas.1} parent=47 // loop_footer
            %s239 = sadd.s32 1, %s235
          $region54: #{residual_bottle_pallas.1} parent=47 // loop_footer_branch
            %234 = sbr.rel target = $region50
          $region55: #{residual_bottle_pallas.1} parent=47 // loop_exit
            _
        $region48: #{residual_bottle_pallas.1} parent=39 // pred_fallthru
          _
        // Predicated region
        $region71: #{residual_bottle_pallas.1} parent=39 // pred_check
          _
        $region72: #{residual_bottle_pallas.1} parent=39 // pred_check_branch
          %299 = sbr.rel (0) target = $region74
        $region73: #{residual_bottle_pallas.1} parent=39 // pred_region
          %300 = vsyncadd [#allocation3], 2304
        $region74: #{residual_bottle_pallas.1} parent=39 // pred_fallthru
          _
      $region40: #{residual_bottle_pallas.1} parent=35 // pred_fallthru
        _
      %s301 = sadd.s32 %s21, 1
      %p302 = scmp.lt.s32.totalorder %s301, 1
      // Predicated region
      $region75: #{residual_bottle_pallas.1} parent=35 // pred_check
        %p303 = pneg %p302
      $region76: #{residual_bottle_pallas.1} parent=35 // pred_check_branch
        %305 = sbr.rel (%p303) target = $region78
      $region77: #{residual_bottle_pallas.1} parent=35 // pred_region
        %s306 = ssub.s32 1, %s216
        %s307 = smul.u32 %s301, 16
        %s308 = smul.u32 %s307, 2
        %s309 = smul.u32 %s20, 36
        %s310 = sadd.s32 %s308, %s309
        %s311 = smul.addr %s310, 4
        %s312 = scalar_lea.vmem %s0, %s311
        %s313 = smul.u32 %s306, 36
        %s314 = smul.addr %s313, 4
        %s315 = scalar_lea.vmem [#allocation2], %s314
        %s316 = scalar_lea.sflag [#allocation3], %s306
        %p318 = scmp.lt.u32.totalorder 144, 8
        %p319 = pneg %p318
        // Predicated region
        $region79: #{residual_bottle_pallas.1} parent=77 // pred_check
          _
        $region80: #{residual_bottle_pallas.1} parent=77 // pred_check_branch
          %321 = sbr.rel (%p318) target = $region82
        $region81: #{residual_bottle_pallas.1} parent=77 // pred_region
          %s337 = sand.u32 144, 7
          %p338 = scmp.eq.s32.totalorder %s337, 0
          // Predicated region
          $region94: #{residual_bottle_pallas.1} parent=81 // pred_check
            %p339 = pneg %p338
          $region95: #{residual_bottle_pallas.1} parent=81 // pred_check_branch
            %341 = sbr.rel (%p339) target = $region97
          $region96: #{residual_bottle_pallas.1} parent=81 // pred_region
            loop: start=0, step=1, limit=1
            $region98: #{residual_bottle_pallas.1} parent=96 // loop_pre_header
              _
            $region99: #{residual_bottle_pallas.1} parent=96 // loop_header
              %s343 = sphi 0, %s347
              %p344 = scmp.ge.s32.totalorder %s343, 1
              %s348 = sphi %s312, %s312
              %s349 = sphi %s315, %s315
            $region100: #{residual_bottle_pallas.1} parent=96 // loop_header_branch
              %346 = sbr.rel (%p344) target = $region104
            $region101: #{residual_bottle_pallas.1} parent=96 // loop_body
              %v350 = vld [vmem:[%s348] sm:$0xff]
              %351 = vst [vmem:[%s349] sm:$0xff] %v350
              %v352 = vld [vmem:[%s348 + $0x8] sm:$0xff]
              %353 = vst [vmem:[%s349 + $0x8] sm:$0xff] %v352
              %v354 = vld [vmem:[%s348 + $0x10] sm:$0xff]
              %355 = vst [vmem:[%s349 + $0x10] sm:$0xff] %v354
              %v356 = vld [vmem:[%s348 + $0x18] sm:$0xff]
              %357 = vst [vmem:[%s349 + $0x18] sm:$0xff] %v356
              %v358 = vld [vmem:[%s348 + $0x20] sm:$0xff]
              %359 = vst [vmem:[%s349 + $0x20] sm:$0xff] %v358
              %v360 = vld [vmem:[%s348 + $0x28] sm:$0xff]
              %361 = vst [vmem:[%s349 + $0x28] sm:$0xff] %v360
              %v362 = vld [vmem:[%s348 + $0x30] sm:$0xff]
              %363 = vst [vmem:[%s349 + $0x30] sm:$0xff] %v362
              %v364 = vld [vmem:[%s348 + $0x38] sm:$0xff]
              %365 = vst [vmem:[%s349 + $0x38] sm:$0xff] %v364
              %v366 = vld [vmem:[%s348 + $0x40] sm:$0xff]
              %367 = vst [vmem:[%s349 + $0x40] sm:$0xff] %v366
              %v368 = vld [vmem:[%s348 + $0x48] sm:$0xff]
              %369 = vst [vmem:[%s349 + $0x48] sm:$0xff] %v368
              %v370 = vld [vmem:[%s348 + $0x50] sm:$0xff]
              %371 = vst [vmem:[%s349 + $0x50] sm:$0xff] %v370
              %v372 = vld [vmem:[%s348 + $0x58] sm:$0xff]
              %373 = vst [vmem:[%s349 + $0x58] sm:$0xff] %v372
              %v374 = vld [vmem:[%s348 + $0x60] sm:$0xff]
              %375 = vst [vmem:[%s349 + $0x60] sm:$0xff] %v374
              %v376 = vld [vmem:[%s348 + $0x68] sm:$0xff]
              %377 = vst [vmem:[%s349 + $0x68] sm:$0xff] %v376
              %v378 = vld [vmem:[%s348 + $0x70] sm:$0xff]
              %379 = vst [vmem:[%s349 + $0x70] sm:$0xff] %v378
              %v380 = vld [vmem:[%s348 + $0x78] sm:$0xff]
              %381 = vst [vmem:[%s349 + $0x78] sm:$0xff] %v380
              %v382 = vld [vmem:[%s348 + $0x80] sm:$0xff]
              %383 = vst [vmem:[%s349 + $0x80] sm:$0xff] %v382
              %v384 = vld [vmem:[%s348 + $0x88] sm:$0xff]
              %385 = vst [vmem:[%s349 + $0x88] sm:$0xff] %v384
            $region102: #{residual_bottle_pallas.1} parent=96 // loop_footer
              %s347 = sadd.s32 1, %s343
            $region103: #{residual_bottle_pallas.1} parent=96 // loop_footer_branch
              %342 = sbr.rel target = $region99
            $region104: #{residual_bottle_pallas.1} parent=96 // loop_exit
              _
          $region97: #{residual_bottle_pallas.1} parent=81 // pred_fallthru
            _
          %p386 = pneg %p338
          // Predicated region
          $region105: #{residual_bottle_pallas.1} parent=81 // pred_check
            _
          $region106: #{residual_bottle_pallas.1} parent=81 // pred_check_branch
            %388 = sbr.rel (%p338) target = $region108
          $region107: #{residual_bottle_pallas.1} parent=81 // pred_region
            %s389 = sand.u32 144, 7
          $region108: #{residual_bottle_pallas.1} parent=81 // pred_fallthru
            _
        $region82: #{residual_bottle_pallas.1} parent=77 // pred_fallthru
          _
        // Predicated region
        $region83: #{residual_bottle_pallas.1} parent=77 // pred_check
          %p322 = pneg %p318
        $region84: #{residual_bottle_pallas.1} parent=77 // pred_check_branch
          %324 = sbr.rel (%p322) target = $region86
        $region85: #{residual_bottle_pallas.1} parent=77 // pred_region
          %s325 = sshll.u32 1, 144
          %s326 = ssub.s32 %s325, 1
          loop: start=0, step=1, limit=1
          $region87: #{residual_bottle_pallas.1} parent=85 // loop_pre_header
            _
          $region88: #{residual_bottle_pallas.1} parent=85 // loop_header
            %s328 = sphi 0, %s332
            %p329 = scmp.ge.s32.totalorder %s328, 1
            %s333 = sphi %s312, %s312
            %s334 = sphi %s315, %s315
          $region89: #{residual_bottle_pallas.1} parent=85 // loop_header_branch
            %331 = sbr.rel (%p329) target = $region93
          $region90: #{residual_bottle_pallas.1} parent=85 // loop_body
            %v335 = vld [vmem:[%s333] sm:%s326]
            %336 = vst [vmem:[%s334] sm:%s326] %v335
          $region91: #{residual_bottle_pallas.1} parent=85 // loop_footer
            %s332 = sadd.s32 1, %s328
          $region92: #{residual_bottle_pallas.1} parent=85 // loop_footer_branch
            %327 = sbr.rel target = $region88
          $region93: #{residual_bottle_pallas.1} parent=85 // loop_exit
            _
        $region86: #{residual_bottle_pallas.1} parent=77 // pred_fallthru
          _
        // Predicated region
        $region109: #{residual_bottle_pallas.1} parent=77 // pred_check
          _
        $region110: #{residual_bottle_pallas.1} parent=77 // pred_check_branch
          %392 = sbr.rel (0) target = $region112
        $region111: #{residual_bottle_pallas.1} parent=77 // pred_region
          %393 = vsyncadd %s316, 2304
        $region112: #{residual_bottle_pallas.1} parent=77 // pred_fallthru
          _
      $region78: #{residual_bottle_pallas.1} parent=35 // pred_fallthru
        _
      %s394 = smul.u32 %s216, 36
      %s395 = smul.addr %s394, 4
      %s396 = scalar_lea.vmem [#allocation2], %s395
      %s397 = scalar_lea.sflag [#allocation3], %s216
      %s398 = smul.u32 4, 18
      %s399 = smul.u32 %s398, 2
      %s400 = smul.u32 %s399, 1
      %s401 = sshll.u32 %s400, 4
      %402 = dma.done %s397, %s401
      %v403 = vld [vmem:[%s396] sm:$0xf]
      %v404 = vld [vmem:[%s396 + $0x4] sm:$0xf]
      %v405 = vld [vmem:[%s396 + $0x8] sm:$0xf]
      %v406 = vld [vmem:[%s396 + $0xc] sm:$0xf]
      %v407 = vld [vmem:[%s396 + $0x10] sm:$0xf]
      %v408 = vld [vmem:[%s396 + $0x14] sm:$0xf]
      %v409 = vld [vmem:[%s396 + $0x18] sm:$0xf]
      %v410 = vld [vmem:[%s396 + $0x1c] sm:$0xf]
      %v411 = vld [vmem:[%s396 + $0x20] sm:$0xf]
      %v412 = vld [vmem:[%s396 + $0x24] sm:$0xf]
      %v413 = vld [vmem:[%s396 + $0x28] sm:$0xf]
      %v414 = vld [vmem:[%s396 + $0x2c] sm:$0xf]
      %v415 = vld [vmem:[%s396 + $0x30] sm:$0xf]
      %v416 = vld [vmem:[%s396 + $0x34] sm:$0xf]
      %v417 = vld [vmem:[%s396 + $0x38] sm:$0xf]
      %v418 = vld [vmem:[%s396 + $0x3c] sm:$0xf]
      %v419 = vld [vmem:[%s396 + $0x40] sm:$0xf]
      %v420 = vld [vmem:[%s396 + $0x44] sm:$0xf]
      %v421 = vld [vmem:[%s396 + $0x48] sm:$0xf]
      %v422 = vld [vmem:[%s396 + $0x4c] sm:$0xf]
      %v423 = vld [vmem:[%s396 + $0x50] sm:$0xf]
      %v424 = vld [vmem:[%s396 + $0x54] sm:$0xf]
      %v425 = vld [vmem:[%s396 + $0x58] sm:$0xf]
      %v426 = vld [vmem:[%s396 + $0x5c] sm:$0xf]
      %v427 = vld [vmem:[%s396 + $0x60] sm:$0xf]
      %v428 = vld [vmem:[%s396 + $0x64] sm:$0xf]
      %v429 = vld [vmem:[%s396 + $0x68] sm:$0xf]
      %v430 = vld [vmem:[%s396 + $0x6c] sm:$0xf]
      %v431 = vld [vmem:[%s396 + $0x70] sm:$0xf]
      %v432 = vld [vmem:[%s396 + $0x74] sm:$0xf]
      %v433 = vld [vmem:[%s396 + $0x78] sm:$0xf]
      %v434 = vld [vmem:[%s396 + $0x7c] sm:$0xf]
      %v435 = vld [vmem:[%s396 + $0x80] sm:$0xf]
      %v436 = vld [vmem:[%s396 + $0x84] sm:$0xf]
      %v437 = vld [vmem:[%s396 + $0x88] sm:$0xf]
      %v438 = vld [vmem:[%s396 + $0x8c] sm:$0xf]
      %v439 = vld [vmem:[%s1] sm:$0xff]
      %v440 = vld [vmem:[%s1 + $0x8] sm:$0xff]
      %v441 = vld [vmem:[%s1 + $0x10] sm:$0xff]
      %v442 = vld [vmem:[%s1 + $0x18] sm:$0xff]
      %v443 = vld [vmem:[%s1 + $0x20] sm:$0xff]
      %v444 = vld [vmem:[%s1 + $0x28] sm:$0xff]
      %v445 = vld [vmem:[%s1 + $0x30] sm:$0xff]
      %v446 = vld [vmem:[%s1 + $0x38] sm:$0xff]
      %v447 = vld [vmem:[%s1 + $0x40] sm:$0xff]
      %v448 = vld [vmem:[%s1 + $0x48] sm:$0xff]
      %v449 = vld [vmem:[%s1 + $0x50] sm:$0xff]
      %v450 = vld [vmem:[%s1 + $0x58] sm:$0xff]
      %v451 = vld [vmem:[%s1 + $0x60] sm:$0xff]
      %v452 = vld [vmem:[%s1 + $0x68] sm:$0xff]
      %v453 = vld [vmem:[%s1 + $0x70] sm:$0xff]
      %v454 = vld [vmem:[%s1 + $0x78] sm:$0xff]
      %v491 = vunpack.c.l.b16 %v403
      %v492 = vunpack.c.l.b16 %v404
      %v493 = vunpack.c.l.b16 %v405
      %v494 = vunpack.c.l.b16 %v406
      %v495 = vunpack.c.l.b16 %v407
      %v496 = vunpack.c.l.b16 %v408
      %v497 = vunpack.c.l.b16 %v409
      %v498 = vunpack.c.l.b16 %v410
      %v499 = vunpack.c.l.b16 %v411
      %v500 = vunpack.c.l.b16 %v412
      %v501 = vunpack.c.l.b16 %v413
      %v502 = vunpack.c.l.b16 %v414
      %v503 = vunpack.c.l.b16 %v415
      %v504 = vunpack.c.l.b16 %v416
      %v505 = vunpack.c.l.b16 %v417
      %v506 = vunpack.c.l.b16 %v418
      %v507 = vunpack.c.l.b16 %v419
      %v508 = vunpack.c.l.b16 %v420
      %v509 = vunpack.c.l.b16 %v421
      %v510 = vunpack.c.l.b16 %v422
      %v511 = vunpack.c.l.b16 %v423
      %v512 = vunpack.c.l.b16 %v424
      %v513 = vunpack.c.l.b16 %v425
      %v514 = vunpack.c.l.b16 %v426
      %v515 = vunpack.c.l.b16 %v427
      %v516 = vunpack.c.l.b16 %v428
      %v517 = vunpack.c.l.b16 %v429
      %v518 = vunpack.c.l.b16 %v430
      %v519 = vunpack.c.l.b16 %v431
      %v520 = vunpack.c.l.b16 %v432
      %v521 = vunpack.c.l.b16 %v433
      %v522 = vunpack.c.l.b16 %v434
      %v523 = vunpack.c.l.b16 %v435
      %v524 = vunpack.c.l.b16 %v436
      %v525 = vunpack.c.l.b16 %v437
      %v526 = vunpack.c.l.b16 %v438
      %v527 = vpack.c.b16 %v492, %v491
      %v528 = vpack.c.b16 %v494, %v493
      %v529 = vpack.c.b16 %v496, %v495
      %v530 = vpack.c.b16 %v498, %v497
      %v531 = vpack.c.b16 %v500, %v499
      %v532 = vpack.c.b16 %v502, %v501
      %v533 = vpack.c.b16 %v504, %v503
      %v534 = vpack.c.b16 %v506, %v505
      %v535 = vpack.c.b16 %v508, %v507
      %v536 = vpack.c.b16 %v510, %v509
      %v537 = vpack.c.b16 %v512, %v511
      %v538 = vpack.c.b16 %v514, %v513
      %v539 = vpack.c.b16 %v516, %v515
      %v540 = vpack.c.b16 %v518, %v517
      %v541 = vpack.c.b16 %v520, %v519
      %v542 = vpack.c.b16 %v522, %v521
      %v543 = vpack.c.b16 %v524, %v523
      %v544 = vpack.c.b16 %v526, %v525
      %v579 = vunpack.c.l.b16 %v439
      %v580 = vunpack.c.h.b16 %v439
      %v581 = vunpack.c.l.b16 %v440
      %v582 = vunpack.c.h.b16 %v440
      %v583 = vunpack.c.l.b16 %v441
      %v584 = vunpack.c.h.b16 %v441
      %v585 = vunpack.c.l.b16 %v442
      %v586 = vunpack.c.h.b16 %v442
      %v587 = vunpack.c.l.b16 %v443
      %v588 = vunpack.c.h.b16 %v443
      %v589 = vunpack.c.l.b16 %v444
      %v590 = vunpack.c.h.b16 %v444
      %v591 = vunpack.c.l.b16 %v445
      %v592 = vunpack.c.h.b16 %v445
      %v593 = vunpack.c.l.b16 %v446
      %v594 = vunpack.c.h.b16 %v446
      %v595 = vunpack.c.l.b16 %v447
      %v596 = vunpack.c.h.b16 %v447
      %v597 = vunpack.c.l.b16 %v448
      %v598 = vunpack.c.h.b16 %v448
      %v599 = vunpack.c.l.b16 %v449
      %v600 = vunpack.c.h.b16 %v449
      %v601 = vunpack.c.l.b16 %v450
      %v602 = vunpack.c.h.b16 %v450
      %v603 = vunpack.c.l.b16 %v451
      %v604 = vunpack.c.h.b16 %v451
      %v605 = vunpack.c.l.b16 %v452
      %v606 = vunpack.c.h.b16 %v452
      %v607 = vunpack.c.l.b16 %v453
      %v608 = vunpack.c.h.b16 %v453
      %v609 = vunpack.c.l.b16 %v454
      %v610 = vunpack.c.h.b16 %v454
      %v611 = vpack.c.b16 %v581, %v579
      %v612 = vpack.c.b16 %v582, %v580
      %v613 = vpack.c.b16 %v585, %v583
      %v614 = vpack.c.b16 %v586, %v584
      %v615 = vpack.c.b16 %v589, %v587
      %v616 = vpack.c.b16 %v590, %v588
      %v617 = vpack.c.b16 %v593, %v591
      %v618 = vpack.c.b16 %v594, %v592
      %v619 = vpack.c.b16 %v597, %v595
      %v620 = vpack.c.b16 %v598, %v596
      %v621 = vpack.c.b16 %v601, %v599
      %v622 = vpack.c.b16 %v602, %v600
      %v623 = vpack.c.b16 %v605, %v603
      %v624 = vpack.c.b16 %v606, %v604
      %v625 = vpack.c.b16 %v609, %v607
      %v626 = vpack.c.b16 %v610, %v608
      %643 = vmatprep.subr.bf16.mxu0 %v626
      %644 = vmatpush1.bf16.msra.mxu0 %v625
      %645 = vmatprep.subr.bf16.mxu0 %v624
      %646 = vmatpush1.bf16.msra.mxu0 %v623
      %647 = vmatprep.subr.bf16.mxu0 %v622
      %648 = vmatpush1.bf16.msra.mxu0 %v621
      %649 = vmatprep.subr.bf16.mxu0 %v620
      %650 = vmatpush1.bf16.msra.mxu0 %v619
      %651 = vmatprep.subr.bf16.mxu0 %v618
      %652 = vmatpush1.bf16.msra.mxu0 %v617
      %653 = vmatprep.subr.bf16.mxu0 %v616
      %654 = vmatpush1.bf16.msra.mxu0 %v615
      %655 = vmatprep.subr.bf16.mxu0 %v614
      %656 = vmatpush1.bf16.msra.mxu0 %v613
      %657 = vmatprep.subr.bf16.mxu0 %v612
      %658 = vmatpush1.bf16.msra.mxu0 %v611
      %659 = vmatprep.subr.bf16.mxu0 0
      %660 = vmatpush2.bf16.msra.mxu0 0
      %661 = vmatprep.subr.bf16.mxu0 0
      %662 = vmatpush2.bf16.msra.mxu0 0
      %663 = vmatprep.subr.bf16.mxu0 0
      %664 = vmatpush2.bf16.msra.mxu0 0
      %665 = vmatprep.subr.bf16.mxu0 0
      %666 = vmatpush2.bf16.msra.mxu0 0
      %667 = vmatprep.subr.bf16.mxu0 0
      %668 = vmatpush2.bf16.msra.mxu0 0
      %669 = vmatprep.subr.bf16.mxu0 0
      %670 = vmatpush2.bf16.msra.mxu0 0
      %671 = vmatprep.subr.bf16.mxu0 0
      %672 = vmatpush2.bf16.msra.mxu0 0
      %673 = vmatprep.subr.bf16.mxu0 0
      %674 = vmatpush2.bf16.msra.mxu0 0
      %675 = vmatprep.mubr.bf16.mxu0 0
      %676 = vmatmul.mubr.bf16.gmra.mxu0 %v527
      %v677 = vpop.f32.mrf.mxu0
      %v678 = vadd.f32 0.0, %v677
      %v679 = vpop.f32.mrf.mxu0
      %v680 = vpop.f32.mrf.mxu0
      %v681 = vadd.f32 0.0, %v680
      %v682 = vpop.f32.mrf.mxu0
      %683 = vmatprep.mubr.bf16.mxu0 0
      %684 = vmatmul.mubr.bf16.gmra.mxu0 %v528
      %v685 = vpop.f32.mrf.mxu0
      %v686 = vadd.f32 0.0, %v685
      %v687 = vpop.f32.mrf.mxu0
      %v688 = vadd.f32 0.0, %v687
      %v689 = vpop.f32.mrf.mxu0
      %v690 = vadd.f32 0.0, %v689
      %v691 = vpop.f32.mrf.mxu0
      %v692 = vadd.f32 0.0, %v691
      %693 = vmatprep.mubr.bf16.mxu0 0
      %694 = vmatmul.mubr.bf16.gmra.mxu0 %v529
      %v695 = vpop.f32.mrf.mxu0
      %v696 = vadd.f32 0.0, %v695
      %v697 = vpop.f32.mrf.mxu0
      %v698 = vadd.f32 0.0, %v697
      %v699 = vpop.f32.mrf.mxu0
      %v700 = vadd.f32 0.0, %v699
      %v701 = vpop.f32.mrf.mxu0
      %v702 = vadd.f32 0.0, %v701
      %703 = vmatprep.mubr.bf16.mxu0 0
      %704 = vmatmul.mubr.bf16.gmra.mxu0 %v530
      %v705 = vpop.f32.mrf.mxu0
      %v706 = vadd.f32 0.0, %v705
      %v707 = vpop.f32.mrf.mxu0
      %v708 = vadd.f32 0.0, %v707
      %v709 = vpop.f32.mrf.mxu0
      %v710 = vadd.f32 0.0, %v709
      %v711 = vpop.f32.mrf.mxu0
      %v712 = vadd.f32 0.0, %v711
      %713 = vmatprep.mubr.bf16.mxu0 0
      %714 = vmatmul.mubr.bf16.gmra.mxu0 %v531
      %v715 = vpop.f32.mrf.mxu0
      %v716 = vadd.f32 0.0, %v715
      %v717 = vpop.f32.mrf.mxu0
      %v718 = vadd.f32 0.0, %v717
      %v719 = vpop.f32.mrf.mxu0
      %v720 = vadd.f32 0.0, %v719
      %v721 = vpop.f32.mrf.mxu0
      %v722 = vadd.f32 0.0, %v721
      %723 = vmatprep.mubr.bf16.mxu0 0
      %724 = vmatmul.mubr.bf16.gmra.mxu0 %v532
      %v725 = vpop.f32.mrf.mxu0
      %v726 = vadd.f32 0.0, %v725
      %v727 = vpop.f32.mrf.mxu0
      %v728 = vadd.f32 0.0, %v727
      %v729 = vpop.f32.mrf.mxu0
      %v730 = vadd.f32 0.0, %v729
      %v731 = vpop.f32.mrf.mxu0
      %v732 = vadd.f32 0.0, %v731
      %733 = vmatprep.mubr.bf16.mxu0 0
      %734 = vmatmul.mubr.bf16.gmra.mxu0 %v533
      %v735 = vpop.f32.mrf.mxu0
      %v736 = vadd.f32 0.0, %v735
      %v737 = vpop.f32.mrf.mxu0
      %v738 = vadd.f32 0.0, %v737
      %v739 = vpop.f32.mrf.mxu0
      %v740 = vadd.f32 0.0, %v739
      %v741 = vpop.f32.mrf.mxu0
      %v742 = vadd.f32 0.0, %v741
      %743 = vmatprep.mubr.bf16.mxu0 0
      %744 = vmatmul.mubr.bf16.gmra.mxu0 %v534
      %v745 = vpop.f32.mrf.mxu0
      %v746 = vadd.f32 0.0, %v745
      %v747 = vpop.f32.mrf.mxu0
      %v748 = vadd.f32 0.0, %v747
      %v749 = vpop.f32.mrf.mxu0
      %v750 = vadd.f32 0.0, %v749
      %v751 = vpop.f32.mrf.mxu0
      %v752 = vadd.f32 0.0, %v751
      %753 = vmatprep.mubr.bf16.mxu0 0
      %754 = vmatmul.mubr.bf16.gmra.mxu0 %v535
      %v755 = vpop.f32.mrf.mxu0
      %v756 = vadd.f32 0.0, %v755
      %v757 = vpop.f32.mrf.mxu0
      %v758 = vadd.f32 0.0, %v757
      %v759 = vpop.f32.mrf.mxu0
      %v760 = vadd.f32 0.0, %v759
      %v761 = vpop.f32.mrf.mxu0
      %v762 = vadd.f32 0.0, %v761
      %763 = vmatprep.mubr.bf16.mxu0 0
      %764 = vmatmul.mubr.bf16.gmra.mxu0 %v536
      %v765 = vpop.f32.mrf.mxu0
      %v766 = vadd.f32 0.0, %v765
      %v767 = vpop.f32.mrf.mxu0
      %v768 = vadd.f32 0.0, %v767
      %v769 = vpop.f32.mrf.mxu0
      %v770 = vadd.f32 0.0, %v769
      %v771 = vpop.f32.mrf.mxu0
      %v772 = vadd.f32 0.0, %v771
      %773 = vmatprep.mubr.bf16.mxu0 0
      %774 = vmatmul.mubr.bf16.gmra.mxu0 %v537
      %v775 = vpop.f32.mrf.mxu0
      %v776 = vadd.f32 0.0, %v775
      %v777 = vpop.f32.mrf.mxu0
      %v778 = vadd.f32 0.0, %v777
      %v779 = vpop.f32.mrf.mxu0
      %v780 = vadd.f32 0.0, %v779
      %v781 = vpop.f32.mrf.mxu0
      %v782 = vadd.f32 0.0, %v781
      %783 = vmatprep.mubr.bf16.mxu0 0
      %784 = vmatmul.mubr.bf16.gmra.mxu0 %v538
      %v785 = vpop.f32.mrf.mxu0
      %v786 = vadd.f32 0.0, %v785
      %v787 = vpop.f32.mrf.mxu0
      %v788 = vadd.f32 0.0, %v787
      %v789 = vpop.f32.mrf.mxu0
      %v790 = vadd.f32 0.0, %v789
      %v791 = vpop.f32.mrf.mxu0
      %v792 = vadd.f32 0.0, %v791
      %793 = vmatprep.mubr.bf16.mxu0 0
      %794 = vmatmul.mubr.bf16.gmra.mxu0 %v539
      %v795 = vpop.f32.mrf.mxu0
      %v796 = vadd.f32 0.0, %v795
      %v797 = vpop.f32.mrf.mxu0
      %v798 = vadd.f32 0.0, %v797
      %v799 = vpop.f32.mrf.mxu0
      %v800 = vadd.f32 0.0, %v799
      %v801 = vpop.f32.mrf.mxu0
      %v802 = vadd.f32 0.0, %v801
      %803 = vmatprep.mubr.bf16.mxu0 0
      %804 = vmatmul.mubr.bf16.gmra.mxu0 %v540
      %v805 = vpop.f32.mrf.mxu0
      %v806 = vadd.f32 0.0, %v805
      %v807 = vpop.f32.mrf.mxu0
      %v808 = vadd.f32 0.0, %v807
      %v809 = vpop.f32.mrf.mxu0
      %v810 = vadd.f32 0.0, %v809
      %v811 = vpop.f32.mrf.mxu0
      %v812 = vadd.f32 0.0, %v811
      %813 = vmatprep.mubr.bf16.mxu0 0
      %814 = vmatmul.mubr.bf16.gmra.mxu0 %v541
      %v815 = vpop.f32.mrf.mxu0
      %v816 = vadd.f32 0.0, %v815
      %v817 = vpop.f32.mrf.mxu0
      %v818 = vadd.f32 0.0, %v817
      %v819 = vpop.f32.mrf.mxu0
      %v820 = vadd.f32 0.0, %v819
      %v821 = vpop.f32.mrf.mxu0
      %v822 = vadd.f32 0.0, %v821
      %823 = vmatprep.mubr.bf16.mxu0 0
      %824 = vmatmul.mubr.bf16.gmra.mxu0 %v542
      %v825 = vpop.f32.mrf.mxu0
      %v826 = vadd.f32 0.0, %v825
      %v827 = vpop.f32.mrf.mxu0
      %v828 = vadd.f32 0.0, %v827
      %v829 = vpop.f32.mrf.mxu0
      %v830 = vadd.f32 0.0, %v829
      %v831 = vpop.f32.mrf.mxu0
      %v832 = vadd.f32 0.0, %v831
      %833 = vmatprep.mubr.bf16.mxu0 0
      %834 = vmatmul.mubr.bf16.gmra.mxu0 %v543
      %v835 = vpop.f32.mrf.mxu0
      %v836 = vadd.f32 0.0, %v835
      %v837 = vpop.f32.mrf.mxu0
      %v838 = vadd.f32 0.0, %v837
      %v839 = vpop.f32.mrf.mxu0
      %v840 = vadd.f32 0.0, %v839
      %v841 = vpop.f32.mrf.mxu0
      %v842 = vadd.f32 0.0, %v841
      %843 = vmatprep.mubr.bf16.mxu0 0
      %844 = vmatmul.mubr.bf16.gmra.mxu0 %v544
      %v845 = vpop.f32.mrf.mxu0
      %v846 = vadd.f32 0.0, %v845
      %v847 = vpop.f32.mrf.mxu0
      %v848 = vpop.f32.mrf.mxu0
      %v849 = vadd.f32 0.0, %v848
      %v850 = vpop.f32.mrf.mxu0
      %851 = vdwg.mxu0
      %v852 = vld [vmem:[%s4] sm:$0x1]
      %v853 = vld [vmem:[%s4 + $0x1] sm:$0x1]
      %v854 = vlaneseq
      %v855 = vshrl.u32 %v854, 7
      %v856 = vsub.s32 0, %v855
      %v857 = vrot.slane %v852, %v856
      %v858 = vmul.f32 %v678, %v857
      %v859 = vmul.f32 %v681, %v857
      %v860 = vmul.f32 %v686, %v857
      %v861 = vmul.f32 %v690, %v857
      %v862 = vmul.f32 %v696, %v857
      %v863 = vmul.f32 %v700, %v857
      %v864 = vmul.f32 %v706, %v857
      %v865 = vmul.f32 %v710, %v857
      %v866 = vmul.f32 %v716, %v857
      %v867 = vmul.f32 %v720, %v857
      %v868 = vmul.f32 %v726, %v857
      %v869 = vmul.f32 %v730, %v857
      %v870 = vmul.f32 %v736, %v857
      %v871 = vmul.f32 %v740, %v857
      %v872 = vmul.f32 %v746, %v857
      %v873 = vmul.f32 %v750, %v857
      %v874 = vmul.f32 %v756, %v857
      %v875 = vmul.f32 %v760, %v857
      %v876 = vmul.f32 %v766, %v857
      %v877 = vmul.f32 %v770, %v857
      %v878 = vmul.f32 %v776, %v857
      %v879 = vmul.f32 %v780, %v857
      %v880 = vmul.f32 %v786, %v857
      %v881 = vmul.f32 %v790, %v857
      %v882 = vmul.f32 %v796, %v857
      %v883 = vmul.f32 %v800, %v857
      %v884 = vmul.f32 %v806, %v857
      %v885 = vmul.f32 %v810, %v857
      %v886 = vmul.f32 %v816, %v857
      %v887 = vmul.f32 %v820, %v857
      %v888 = vmul.f32 %v826, %v857
      %v889 = vmul.f32 %v830, %v857
      %v890 = vmul.f32 %v836, %v857
      %v891 = vmul.f32 %v840, %v857
      %v892 = vmul.f32 %v846, %v857
      %v893 = vmul.f32 %v849, %v857
      %v894 = vlaneseq
      %v895 = vshrl.u32 %v894, 7
      %v896 = vsub.s32 0, %v895
      %v897 = vrot.slane %v853, %v896
      %v898 = vadd.f32 %v858, %v897
      %v899 = vadd.f32 %v859, %v897
      %v900 = vadd.f32 %v860, %v897
      %v901 = vadd.f32 %v861, %v897
      %v902 = vadd.f32 %v862, %v897
      %v903 = vadd.f32 %v863, %v897
      %v904 = vadd.f32 %v864, %v897
      %v905 = vadd.f32 %v865, %v897
      %v906 = vadd.f32 %v866, %v897
      %v907 = vadd.f32 %v867, %v897
      %v908 = vadd.f32 %v868, %v897
      %v909 = vadd.f32 %v869, %v897
      %v910 = vadd.f32 %v870, %v897
      %v911 = vadd.f32 %v871, %v897
      %v912 = vadd.f32 %v872, %v897
      %v913 = vadd.f32 %v873, %v897
      %v914 = vadd.f32 %v874, %v897
      %v915 = vadd.f32 %v875, %v897
      %v916 = vadd.f32 %v876, %v897
      %v917 = vadd.f32 %v877, %v897
      %v918 = vadd.f32 %v878, %v897
      %v919 = vadd.f32 %v879, %v897
      %v920 = vadd.f32 %v880, %v897
      %v921 = vadd.f32 %v881, %v897
      %v922 = vadd.f32 %v882, %v897
      %v923 = vadd.f32 %v883, %v897
      %v924 = vadd.f32 %v884, %v897
      %v925 = vadd.f32 %v885, %v897
      %v926 = vadd.f32 %v886, %v897
      %v927 = vadd.f32 %v887, %v897
      %v928 = vadd.f32 %v888, %v897
      %v929 = vadd.f32 %v889, %v897
      %v930 = vadd.f32 %v890, %v897
      %v931 = vadd.f32 %v891, %v897
      %v932 = vadd.f32 %v892, %v897
      %v933 = vadd.f32 %v893, %v897
      %v934 = vmax.f32 %v898, 0.0
      %v935 = vmax.f32 %v899, 0.0
      %v936 = vmax.f32 %v900, 0.0
      %v937 = vmax.f32 %v901, 0.0
      %v938 = vmax.f32 %v902, 0.0
      %v939 = vmax.f32 %v903, 0.0
      %v940 = vmax.f32 %v904, 0.0
      %v941 = vmax.f32 %v905, 0.0
      %v942 = vmax.f32 %v906, 0.0
      %v943 = vmax.f32 %v907, 0.0
      %v944 = vmax.f32 %v908, 0.0
      %v945 = vmax.f32 %v909, 0.0
      %v946 = vmax.f32 %v910, 0.0
      %v947 = vmax.f32 %v911, 0.0
      %v948 = vmax.f32 %v912, 0.0
      %v949 = vmax.f32 %v913, 0.0
      %v950 = vmax.f32 %v914, 0.0
      %v951 = vmax.f32 %v915, 0.0
      %v952 = vmax.f32 %v916, 0.0
      %v953 = vmax.f32 %v917, 0.0
      %v954 = vmax.f32 %v918, 0.0
      %v955 = vmax.f32 %v919, 0.0
      %v956 = vmax.f32 %v920, 0.0
      %v957 = vmax.f32 %v921, 0.0
      %v958 = vmax.f32 %v922, 0.0
      %v959 = vmax.f32 %v923, 0.0
      %v960 = vmax.f32 %v924, 0.0
      %v961 = vmax.f32 %v925, 0.0
      %v962 = vmax.f32 %v926, 0.0
      %v963 = vmax.f32 %v927, 0.0
      %v964 = vmax.f32 %v928, 0.0
      %v965 = vmax.f32 %v929, 0.0
      %v966 = vmax.f32 %v930, 0.0
      %v967 = vmax.f32 %v931, 0.0
      %v968 = vmax.f32 %v932, 0.0
      %v969 = vmax.f32 %v933, 0.0
      %v970 = vld [vmem:[%s4 + $0x6] sm:$0x1]
      %v971 = vlaneseq
      %v972 = vshrl.u32 %v971, 7
      %v973 = vsub.s32 0, %v972
      %v974 = vrot.slane %v970, %v973
      %v975 = vadd.f32 %v688, %v974
      %v976 = vadd.f32 %v692, %v974
      %v977 = vadd.f32 %v698, %v974
      %v978 = vadd.f32 %v702, %v974
      %v979 = vadd.f32 %v708, %v974
      %v980 = vadd.f32 %v712, %v974
      %v981 = vadd.f32 %v718, %v974
      %v982 = vadd.f32 %v722, %v974
      %v983 = vadd.f32 %v728, %v974
      %v984 = vadd.f32 %v732, %v974
      %v985 = vadd.f32 %v738, %v974
      %v986 = vadd.f32 %v742, %v974
      %v987 = vadd.f32 %v748, %v974
      %v988 = vadd.f32 %v752, %v974
      %v989 = vadd.f32 %v758, %v974
      %v990 = vadd.f32 %v762, %v974
      %v991 = vadd.f32 %v768, %v974
      %v992 = vadd.f32 %v772, %v974
      %v993 = vadd.f32 %v778, %v974
      %v994 = vadd.f32 %v782, %v974
      %v995 = vadd.f32 %v788, %v974
      %v996 = vadd.f32 %v792, %v974
      %v997 = vadd.f32 %v798, %v974
      %v998 = vadd.f32 %v802, %v974
      %v999 = vadd.f32 %v808, %v974
      %v1000 = vadd.f32 %v812, %v974
      %v1001 = vadd.f32 %v818, %v974
      %v1002 = vadd.f32 %v822, %v974
      %v1003 = vadd.f32 %v828, %v974
      %v1004 = vadd.f32 %v832, %v974
      %v1005 = vadd.f32 %v838, %v974
      %v1006 = vadd.f32 %v842, %v974
      %1007 = vst [vmem:[#allocation5] sm:$0xff] %v975
      %1008 = vst [vmem:[#allocation5 + $0x8] sm:$0xff] %v976
      %1009 = vst [vmem:[#allocation5 + $0x10] sm:$0xff] %v977
      %1010 = vst [vmem:[#allocation5 + $0x18] sm:$0xff] %v978
      %1011 = vst [vmem:[#allocation5 + $0x20] sm:$0xff] %v979
      %1012 = vst [vmem:[#allocation5 + $0x28] sm:$0xff] %v980
      %1013 = vst [vmem:[#allocation5 + $0x30] sm:$0xff] %v981
      %1014 = vst [vmem:[#allocation5 + $0x38] sm:$0xff] %v982
      %1015 = vst [vmem:[#allocation5 + $0x40] sm:$0xff] %v983
      %1016 = vst [vmem:[#allocation5 + $0x48] sm:$0xff] %v984
      %1017 = vst [vmem:[#allocation5 + $0x50] sm:$0xff] %v985
      %1018 = vst [vmem:[#allocation5 + $0x58] sm:$0xff] %v986
      %1019 = vst [vmem:[#allocation5 + $0x60] sm:$0xff] %v987
      %1020 = vst [vmem:[#allocation5 + $0x68] sm:$0xff] %v988
      %1021 = vst [vmem:[#allocation5 + $0x70] sm:$0xff] %v989
      %1022 = vst [vmem:[#allocation5 + $0x78] sm:$0xff] %v990
      %1023 = vst [vmem:[#allocation5 + $0x80] sm:$0xff] %v991
      %1024 = vst [vmem:[#allocation5 + $0x88] sm:$0xff] %v992
      %1025 = vst [vmem:[#allocation5 + $0x90] sm:$0xff] %v993
      %1026 = vst [vmem:[#allocation5 + $0x98] sm:$0xff] %v994
      %1027 = vst [vmem:[#allocation5 + $0xa0] sm:$0xff] %v995
      %1028 = vst [vmem:[#allocation5 + $0xa8] sm:$0xff] %v996
      %1029 = vst [vmem:[#allocation5 + $0xb0] sm:$0xff] %v997
      %1030 = vst [vmem:[#allocation5 + $0xb8] sm:$0xff] %v998
      %1031 = vst [vmem:[#allocation5 + $0xc0] sm:$0xff] %v999
      %1032 = vst [vmem:[#allocation5 + $0xc8] sm:$0xff] %v1000
      %1033 = vst [vmem:[#allocation5 + $0xd0] sm:$0xff] %v1001
      %1034 = vst [vmem:[#allocation5 + $0xd8] sm:$0xff] %v1002
      %1035 = vst [vmem:[#allocation5 + $0xe0] sm:$0xff] %v1003
      %1036 = vst [vmem:[#allocation5 + $0xe8] sm:$0xff] %v1004
      %1037 = vst [vmem:[#allocation5 + $0xf0] sm:$0xff] %v1005
      %1038 = vst [vmem:[#allocation5 + $0xf8] sm:$0xff] %v1006
      %v1039 = vpack.c.bf16 %v935, %v934
      %v1040 = vpack.c.bf16 %v937, %v936
      %v1041 = vpack.c.bf16 %v939, %v938
      %v1042 = vpack.c.bf16 %v941, %v940
      %v1043 = vpack.c.bf16 %v943, %v942
      %v1044 = vpack.c.bf16 %v945, %v944
      %v1045 = vpack.c.bf16 %v947, %v946
      %v1046 = vpack.c.bf16 %v949, %v948
      %v1047 = vpack.c.bf16 %v951, %v950
      %v1048 = vpack.c.bf16 %v953, %v952
      %v1049 = vpack.c.bf16 %v955, %v954
      %v1050 = vpack.c.bf16 %v957, %v956
      %v1051 = vpack.c.bf16 %v959, %v958
      %v1052 = vpack.c.bf16 %v961, %v960
      %v1053 = vpack.c.bf16 %v963, %v962
      %v1054 = vpack.c.bf16 %v965, %v964
      %v1055 = vpack.c.bf16 %v967, %v966
      %v1056 = vpack.c.bf16 %v969, %v968
      %v1075 = vunpack.c.l.b16 %v1039
      %v1076 = vunpack.c.h.b16 %v1039
      %v1077 = vunpack.c.l.b16 %v1040
      %v1078 = vunpack.c.h.b16 %v1040
      %v1079 = vunpack.c.l.b16 %v1041
      %v1080 = vunpack.c.h.b16 %v1041
      %v1081 = vunpack.c.l.b16 %v1042
      %v1082 = vunpack.c.h.b16 %v1042
      %v1083 = vunpack.c.l.b16 %v1043
      %v1084 = vunpack.c.h.b16 %v1043
      %v1085 = vunpack.c.l.b16 %v1044
      %v1086 = vunpack.c.h.b16 %v1044
      %v1087 = vunpack.c.l.b16 %v1045
      %v1088 = vunpack.c.h.b16 %v1045
      %v1089 = vunpack.c.l.b16 %v1046
      %v1090 = vunpack.c.h.b16 %v1046
      %v1091 = vunpack.c.l.b16 %v1047
      %v1092 = vunpack.c.h.b16 %v1047
      %v1093 = vunpack.c.l.b16 %v1048
      %v1094 = vunpack.c.h.b16 %v1048
      %v1095 = vunpack.c.l.b16 %v1049
      %v1096 = vunpack.c.h.b16 %v1049
      %v1097 = vunpack.c.l.b16 %v1050
      %v1098 = vunpack.c.h.b16 %v1050
      %v1099 = vunpack.c.l.b16 %v1051
      %v1100 = vunpack.c.h.b16 %v1051
      %v1101 = vunpack.c.l.b16 %v1052
      %v1102 = vunpack.c.h.b16 %v1052
      %v1103 = vunpack.c.l.b16 %v1053
      %v1104 = vunpack.c.h.b16 %v1053
      %v1105 = vunpack.c.l.b16 %v1054
      %v1106 = vunpack.c.h.b16 %v1054
      %v1107 = vunpack.c.l.b16 %v1055
      %v1108 = vunpack.c.h.b16 %v1055
      %v1109 = vunpack.c.l.b16 %v1056
      %v1110 = vunpack.c.h.b16 %v1056
      %v1111 = vpack.c.b16 %v1075, %v1075
      %v1112 = vpack.c.b16 %v1076, %v1076
      %v1113 = vpack.c.b16 %v1077, %v1077
      %v1114 = vpack.c.b16 %v1078, %v1078
      %v1115 = vpack.c.b16 %v1079, %v1079
      %v1116 = vpack.c.b16 %v1080, %v1080
      %v1117 = vpack.c.b16 %v1081, %v1081
      %v1118 = vpack.c.b16 %v1082, %v1082
      %v1119 = vpack.c.b16 %v1083, %v1083
      %v1120 = vpack.c.b16 %v1084, %v1084
      %v1121 = vpack.c.b16 %v1085, %v1085
      %v1122 = vpack.c.b16 %v1086, %v1086
      %v1123 = vpack.c.b16 %v1087, %v1087
      %v1124 = vpack.c.b16 %v1088, %v1088
      %v1125 = vpack.c.b16 %v1089, %v1089
      %v1126 = vpack.c.b16 %v1090, %v1090
      %v1127 = vpack.c.b16 %v1091, %v1091
      %v1128 = vpack.c.b16 %v1092, %v1092
      %v1129 = vpack.c.b16 %v1093, %v1093
      %v1130 = vpack.c.b16 %v1094, %v1094
      %v1131 = vpack.c.b16 %v1095, %v1095
      %v1132 = vpack.c.b16 %v1096, %v1096
      %v1133 = vpack.c.b16 %v1097, %v1097
      %v1134 = vpack.c.b16 %v1098, %v1098
      %v1135 = vpack.c.b16 %v1099, %v1099
      %v1136 = vpack.c.b16 %v1100, %v1100
      %v1137 = vpack.c.b16 %v1101, %v1101
      %v1138 = vpack.c.b16 %v1102, %v1102
      %v1139 = vpack.c.b16 %v1103, %v1103
      %v1140 = vpack.c.b16 %v1104, %v1104
      %v1141 = vpack.c.b16 %v1105, %v1105
      %v1142 = vpack.c.b16 %v1106, %v1106
      %v1143 = vpack.c.b16 %v1107, %v1107
      %v1144 = vpack.c.b16 %v1108, %v1108
      %v1145 = vpack.c.b16 %v1109, %v1109
      %v1146 = vpack.c.b16 %v1110, %v1110
      %vm1147 = vsmask.f32 256
      %vm1148 = vsmask.f32 4368
      %vm1149 = vmor %vm1147, %vm1148
      %v1151 = vshrl.u32 %v1111, 16
      %v1153 = vrot.slane %v1151, 7
      %v1154 = vshll.u32 %v1111, 16
      %v1156 = vor.u32 %v1153, %v1154
      %v1157 = vrot.slane %v1153, 4
      %v1159 = vshrl.u32 %v1112, 16
      %v1161 = vrot.slane %v1159, 7
      %v1162 = vshll.u32 %v1112, 16
      %v1164 = vor.u32 %v1161, %v1162
      %v1165 = vsel %vm1149, %v1157, %v1164
      %v1166 = vrot.slane %v1161, 4
      %v1168 = vshrl.u32 %v1113, 16
      %v1170 = vrot.slane %v1168, 7
      %v1171 = vshll.u32 %v1113, 16
      %v1173 = vor.u32 %v1170, %v1171
      %v1174 = vrot.slane %v1170, 4
      %v1176 = vshrl.u32 %v1114, 16
      %v1178 = vrot.slane %v1176, 7
      %v1179 = vshll.u32 %v1114, 16
      %v1181 = vor.u32 %v1178, %v1179
      %v1182 = vsel %vm1149, %v1174, %v1181
      %v1183 = vrot.slane %v1178, 4
      %v1185 = vshrl.u32 %v1115, 16
      %v1187 = vrot.slane %v1185, 7
      %v1188 = vshll.u32 %v1115, 16
      %v1190 = vor.u32 %v1187, %v1188
      %v1191 = vrot.slane %v1187, 4
      %v1193 = vshrl.u32 %v1116, 16
      %v1195 = vrot.slane %v1193, 7
      %v1196 = vshll.u32 %v1116, 16
      %v1198 = vor.u32 %v1195, %v1196
      %v1199 = vsel %vm1149, %v1191, %v1198
      %v1200 = vrot.slane %v1195, 4
      %v1202 = vshrl.u32 %v1117, 16
      %v1204 = vrot.slane %v1202, 7
      %v1205 = vshll.u32 %v1117, 16
      %v1207 = vor.u32 %v1204, %v1205
      %v1208 = vrot.slane %v1204, 4
      %v1210 = vshrl.u32 %v1118, 16
      %v1212 = vrot.slane %v1210, 7
      %v1213 = vshll.u32 %v1118, 16
      %v1215 = vor.u32 %v1212, %v1213
      %v1216 = vsel %vm1149, %v1208, %v1215
      %v1217 = vrot.slane %v1212, 4
      %v1219 = vshrl.u32 %v1119, 16
      %v1221 = vrot.slane %v1219, 7
      %v1222 = vshll.u32 %v1119, 16
      %v1224 = vor.u32 %v1221, %v1222
      %v1225 = vrot.slane %v1221, 4
      %v1227 = vshrl.u32 %v1120, 16
      %v1229 = vrot.slane %v1227, 7
      %v1230 = vshll.u32 %v1120, 16
      %v1232 = vor.u32 %v1229, %v1230
      %v1233 = vsel %vm1149, %v1225, %v1232
      %v1234 = vrot.slane %v1229, 4
      %v1236 = vshrl.u32 %v1121, 16
      %v1238 = vrot.slane %v1236, 7
      %v1239 = vshll.u32 %v1121, 16
      %v1241 = vor.u32 %v1238, %v1239
      %v1242 = vrot.slane %v1238, 4
      %v1244 = vshrl.u32 %v1122, 16
      %v1246 = vrot.slane %v1244, 7
      %v1247 = vshll.u32 %v1122, 16
      %v1249 = vor.u32 %v1246, %v1247
      %v1250 = vsel %vm1149, %v1242, %v1249
      %v1251 = vrot.slane %v1246, 4
      %v1253 = vshrl.u32 %v1123, 16
      %v1255 = vrot.slane %v1253, 7
      %v1256 = vshll.u32 %v1123, 16
      %v1258 = vor.u32 %v1255, %v1256
      %v1259 = vrot.slane %v1255, 4
      %v1261 = vshrl.u32 %v1124, 16
      %v1263 = vrot.slane %v1261, 7
      %v1264 = vshll.u32 %v1124, 16
      %v1266 = vor.u32 %v1263, %v1264
      %v1267 = vsel %vm1149, %v1259, %v1266
      %v1268 = vrot.slane %v1263, 4
      %v1270 = vshrl.u32 %v1125, 16
      %v1272 = vrot.slane %v1270, 7
      %v1273 = vshll.u32 %v1125, 16
      %v1275 = vor.u32 %v1272, %v1273
      %v1276 = vrot.slane %v1272, 4
      %v1278 = vshrl.u32 %v1126, 16
      %v1280 = vrot.slane %v1278, 7
      %v1281 = vshll.u32 %v1126, 16
      %v1283 = vor.u32 %v1280, %v1281
      %v1284 = vsel %vm1149, %v1276, %v1283
      %v1285 = vrot.slane %v1280, 4
      %v1287 = vshrl.u32 %v1127, 16
      %v1289 = vrot.slane %v1287, 7
      %v1290 = vshll.u32 %v1127, 16
      %v1292 = vor.u32 %v1289, %v1290
      %v1293 = vrot.slane %v1289, 4
      %v1295 = vshrl.u32 %v1128, 16
      %v1297 = vrot.slane %v1295, 7
      %v1298 = vshll.u32 %v1128, 16
      %v1300 = vor.u32 %v1297, %v1298
      %v1301 = vsel %vm1149, %v1293, %v1300
      %v1302 = vrot.slane %v1297, 4
      %v1304 = vshrl.u32 %v1129, 16
      %v1306 = vrot.slane %v1304, 7
      %v1307 = vshll.u32 %v1129, 16
      %v1309 = vor.u32 %v1306, %v1307
      %v1310 = vrot.slane %v1306, 4
      %v1312 = vshrl.u32 %v1130, 16
      %v1314 = vrot.slane %v1312, 7
      %v1315 = vshll.u32 %v1130, 16
      %v1317 = vor.u32 %v1314, %v1315
      %v1318 = vsel %vm1149, %v1310, %v1317
      %v1319 = vrot.slane %v1314, 4
      %v1321 = vshrl.u32 %v1131, 16
      %v1323 = vrot.slane %v1321, 7
      %v1324 = vshll.u32 %v1131, 16
      %v1326 = vor.u32 %v1323, %v1324
      %v1327 = vrot.slane %v1323, 4
      %v1329 = vshrl.u32 %v1132, 16
      %v1331 = vrot.slane %v1329, 7
      %v1332 = vshll.u32 %v1132, 16
      %v1334 = vor.u32 %v1331, %v1332
      %v1335 = vsel %vm1149, %v1327, %v1334
      %v1336 = vrot.slane %v1331, 4
      %v1338 = vshrl.u32 %v1133, 16
      %v1340 = vrot.slane %v1338, 7
      %v1341 = vshll.u32 %v1133, 16
      %v1343 = vor.u32 %v1340, %v1341
      %v1344 = vrot.slane %v1340, 4
      %v1346 = vshrl.u32 %v1134, 16
      %v1348 = vrot.slane %v1346, 7
      %v1349 = vshll.u32 %v1134, 16
      %v1351 = vor.u32 %v1348, %v1349
      %v1352 = vsel %vm1149, %v1344, %v1351
      %v1353 = vrot.slane %v1348, 4
      %v1355 = vshrl.u32 %v1135, 16
      %v1357 = vrot.slane %v1355, 7
      %v1358 = vshll.u32 %v1135, 16
      %v1360 = vor.u32 %v1357, %v1358
      %v1361 = vrot.slane %v1357, 4
      %v1363 = vshrl.u32 %v1136, 16
      %v1365 = vrot.slane %v1363, 7
      %v1366 = vshll.u32 %v1136, 16
      %v1368 = vor.u32 %v1365, %v1366
      %v1369 = vsel %vm1149, %v1361, %v1368
      %v1370 = vrot.slane %v1365, 4
      %v1372 = vshrl.u32 %v1137, 16
      %v1374 = vrot.slane %v1372, 7
      %v1375 = vshll.u32 %v1137, 16
      %v1377 = vor.u32 %v1374, %v1375
      %v1378 = vrot.slane %v1374, 4
      %v1380 = vshrl.u32 %v1138, 16
      %v1382 = vrot.slane %v1380, 7
      %v1383 = vshll.u32 %v1138, 16
      %v1385 = vor.u32 %v1382, %v1383
      %v1386 = vsel %vm1149, %v1378, %v1385
      %v1387 = vrot.slane %v1382, 4
      %v1389 = vshrl.u32 %v1139, 16
      %v1391 = vrot.slane %v1389, 7
      %v1392 = vshll.u32 %v1139, 16
      %v1394 = vor.u32 %v1391, %v1392
      %v1395 = vrot.slane %v1391, 4
      %v1397 = vshrl.u32 %v1140, 16
      %v1399 = vrot.slane %v1397, 7
      %v1400 = vshll.u32 %v1140, 16
      %v1402 = vor.u32 %v1399, %v1400
      %v1403 = vsel %vm1149, %v1395, %v1402
      %v1404 = vrot.slane %v1399, 4
      %v1406 = vshrl.u32 %v1141, 16
      %v1408 = vrot.slane %v1406, 7
      %v1409 = vshll.u32 %v1141, 16
      %v1411 = vor.u32 %v1408, %v1409
      %v1412 = vrot.slane %v1408, 4
      %v1414 = vshrl.u32 %v1142, 16
      %v1416 = vrot.slane %v1414, 7
      %v1417 = vshll.u32 %v1142, 16
      %v1419 = vor.u32 %v1416, %v1417
      %v1420 = vsel %vm1149, %v1412, %v1419
      %v1421 = vrot.slane %v1416, 4
      %v1423 = vshrl.u32 %v1143, 16
      %v1425 = vrot.slane %v1423, 7
      %v1426 = vshll.u32 %v1143, 16
      %v1428 = vor.u32 %v1425, %v1426
      %v1429 = vrot.slane %v1425, 4
      %v1431 = vshrl.u32 %v1144, 16
      %v1433 = vrot.slane %v1431, 7
      %v1434 = vshll.u32 %v1144, 16
      %v1436 = vor.u32 %v1433, %v1434
      %v1437 = vsel %vm1149, %v1429, %v1436
      %v1438 = vrot.slane %v1433, 4
      %v1440 = vshrl.u32 %v1145, 16
      %v1442 = vrot.slane %v1440, 7
      %v1443 = vshll.u32 %v1145, 16
      %v1445 = vor.u32 %v1442, %v1443
      %v1446 = vrot.slane %v1442, 4
      %v1448 = vshrl.u32 %v1146, 16
      %v1450 = vrot.slane %v1448, 7
      %v1451 = vshll.u32 %v1146, 16
      %v1453 = vor.u32 %v1450, %v1451
      %v1454 = vsel %vm1149, %v1446, %v1453
      %v1455 = vrot.slane %v1450, 4
      %vm1510 = vcmask 1043456
      %vm1511 = vsmask.f32 7938
      %vm1512 = vmand %vm1510, %vm1511
      %v1513 = vld [vmem:[#allocation4] sm:$0xf]
      %v1514 = vsel %vm1512, %v1156, %v1513
      %1515 = vst [vmem:[#allocation4] sm:$0xf] %v1514
      %1516 = vst [vmem:[#allocation4 + $0x4] sm:$0xf] %v1165
      %vm1517 = vcmask 1040384
      %vm1518 = vmand %vm1517, %vm1147
      %v1519 = vld [vmem:[#allocation4 + $0x8] sm:$0x1]
      %v1520 = vsel %vm1518, %v1166, %v1519
      %1521 = vst [vmem:[#allocation4 + $0x8] sm:$0x1] %v1520
      %v1522 = vld [vmem:[#allocation4 + $0xc] sm:$0xf]
      %v1523 = vsel %vm1512, %v1173, %v1522
      %1524 = vst [vmem:[#allocation4 + $0xc] sm:$0xf] %v1523
      %1525 = vst [vmem:[#allocation4 + $0x10] sm:$0xf] %v1182
      %v1526 = vld [vmem:[#allocation4 + $0x14] sm:$0x1]
      %v1527 = vsel %vm1518, %v1183, %v1526
      %1528 = vst [vmem:[#allocation4 + $0x14] sm:$0x1] %v1527
      %v1529 = vld [vmem:[#allocation4 + $0x18] sm:$0xf]
      %v1530 = vsel %vm1512, %v1190, %v1529
      %1531 = vst [vmem:[#allocation4 + $0x18] sm:$0xf] %v1530
      %1532 = vst [vmem:[#allocation4 + $0x1c] sm:$0xf] %v1199
      %v1533 = vld [vmem:[#allocation4 + $0x20] sm:$0x1]
      %v1534 = vsel %vm1518, %v1200, %v1533
      %1535 = vst [vmem:[#allocation4 + $0x20] sm:$0x1] %v1534
      %v1536 = vld [vmem:[#allocation4 + $0x24] sm:$0xf]
      %v1537 = vsel %vm1512, %v1207, %v1536
      %1538 = vst [vmem:[#allocation4 + $0x24] sm:$0xf] %v1537
      %1539 = vst [vmem:[#allocation4 + $0x28] sm:$0xf] %v1216
      %v1540 = vld [vmem:[#allocation4 + $0x2c] sm:$0x1]
      %v1541 = vsel %vm1518, %v1217, %v1540
      %1542 = vst [vmem:[#allocation4 + $0x2c] sm:$0x1] %v1541
      %v1543 = vld [vmem:[#allocation4 + $0x30] sm:$0xf]
      %v1544 = vsel %vm1512, %v1224, %v1543
      %1545 = vst [vmem:[#allocation4 + $0x30] sm:$0xf] %v1544
      %1546 = vst [vmem:[#allocation4 + $0x34] sm:$0xf] %v1233
      %v1547 = vld [vmem:[#allocation4 + $0x38] sm:$0x1]
      %v1548 = vsel %vm1518, %v1234, %v1547
      %1549 = vst [vmem:[#allocation4 + $0x38] sm:$0x1] %v1548
      %v1550 = vld [vmem:[#allocation4 + $0x3c] sm:$0xf]
      %v1551 = vsel %vm1512, %v1241, %v1550
      %1552 = vst [vmem:[#allocation4 + $0x3c] sm:$0xf] %v1551
      %1553 = vst [vmem:[#allocation4 + $0x40] sm:$0xf] %v1250
      %v1554 = vld [vmem:[#allocation4 + $0x44] sm:$0x1]
      %v1555 = vsel %vm1518, %v1251, %v1554
      %1556 = vst [vmem:[#allocation4 + $0x44] sm:$0x1] %v1555
      %v1557 = vld [vmem:[#allocation4 + $0x48] sm:$0xf]
      %v1558 = vsel %vm1512, %v1258, %v1557
      %1559 = vst [vmem:[#allocation4 + $0x48] sm:$0xf] %v1558
      %1560 = vst [vmem:[#allocation4 + $0x4c] sm:$0xf] %v1267
      %v1561 = vld [vmem:[#allocation4 + $0x50] sm:$0x1]
      %v1562 = vsel %vm1518, %v1268, %v1561
      %1563 = vst [vmem:[#allocation4 + $0x50] sm:$0x1] %v1562
      %v1564 = vld [vmem:[#allocation4 + $0x54] sm:$0xf]
      %v1565 = vsel %vm1512, %v1275, %v1564
      %1566 = vst [vmem:[#allocation4 + $0x54] sm:$0xf] %v1565
      %1567 = vst [vmem:[#allocation4 + $0x58] sm:$0xf] %v1284
      %v1568 = vld [vmem:[#allocation4 + $0x5c] sm:$0x1]
      %v1569 = vsel %vm1518, %v1285, %v1568
      %1570 = vst [vmem:[#allocation4 + $0x5c] sm:$0x1] %v1569
      %v1571 = vld [vmem:[#allocation4 + $0x60] sm:$0xf]
      %v1572 = vsel %vm1512, %v1292, %v1571
      %1573 = vst [vmem:[#allocation4 + $0x60] sm:$0xf] %v1572
      %1574 = vst [vmem:[#allocation4 + $0x64] sm:$0xf] %v1301
      %v1575 = vld [vmem:[#allocation4 + $0x68] sm:$0x1]
      %v1576 = vsel %vm1518, %v1302, %v1575
      %1577 = vst [vmem:[#allocation4 + $0x68] sm:$0x1] %v1576
      %v1578 = vld [vmem:[#allocation4 + $0x6c] sm:$0xf]
      %v1579 = vsel %vm1512, %v1309, %v1578
      %1580 = vst [vmem:[#allocation4 + $0x6c] sm:$0xf] %v1579
      %1581 = vst [vmem:[#allocation4 + $0x70] sm:$0xf] %v1318
      %v1582 = vld [vmem:[#allocation4 + $0x74] sm:$0x1]
      %v1583 = vsel %vm1518, %v1319, %v1582
      %1584 = vst [vmem:[#allocation4 + $0x74] sm:$0x1] %v1583
      %v1585 = vld [vmem:[#allocation4 + $0x78] sm:$0xf]
      %v1586 = vsel %vm1512, %v1326, %v1585
      %1587 = vst [vmem:[#allocation4 + $0x78] sm:$0xf] %v1586
      %1588 = vst [vmem:[#allocation4 + $0x7c] sm:$0xf] %v1335
      %v1589 = vld [vmem:[#allocation4 + $0x80] sm:$0x1]
      %v1590 = vsel %vm1518, %v1336, %v1589
      %1591 = vst [vmem:[#allocation4 + $0x80] sm:$0x1] %v1590
      %v1592 = vld [vmem:[#allocation4 + $0x84] sm:$0xf]
      %v1593 = vsel %vm1512, %v1343, %v1592
      %1594 = vst [vmem:[#allocation4 + $0x84] sm:$0xf] %v1593
      %1595 = vst [vmem:[#allocation4 + $0x88] sm:$0xf] %v1352
      %v1596 = vld [vmem:[#allocation4 + $0x8c] sm:$0x1]
      %v1597 = vsel %vm1518, %v1353, %v1596
      %1598 = vst [vmem:[#allocation4 + $0x8c] sm:$0x1] %v1597
      %v1599 = vld [vmem:[#allocation4 + $0x90] sm:$0xf]
      %v1600 = vsel %vm1512, %v1360, %v1599
      %1601 = vst [vmem:[#allocation4 + $0x90] sm:$0xf] %v1600
      %1602 = vst [vmem:[#allocation4 + $0x94] sm:$0xf] %v1369
      %v1603 = vld [vmem:[#allocation4 + $0x98] sm:$0x1]
      %v1604 = vsel %vm1518, %v1370, %v1603
      %1605 = vst [vmem:[#allocation4 + $0x98] sm:$0x1] %v1604
      %v1606 = vld [vmem:[#allocation4 + $0x9c] sm:$0xf]
      %v1607 = vsel %vm1512, %v1377, %v1606
      %1608 = vst [vmem:[#allocation4 + $0x9c] sm:$0xf] %v1607
      %1609 = vst [vmem:[#allocation4 + $0xa0] sm:$0xf] %v1386
      %v1610 = vld [vmem:[#allocation4 + $0xa4] sm:$0x1]
      %v1611 = vsel %vm1518, %v1387, %v1610
      %1612 = vst [vmem:[#allocation4 + $0xa4] sm:$0x1] %v1611
      %v1613 = vld [vmem:[#allocation4 + $0xa8] sm:$0xf]
      %v1614 = vsel %vm1512, %v1394, %v1613
      %1615 = vst [vmem:[#allocation4 + $0xa8] sm:$0xf] %v1614
      %1616 = vst [vmem:[#allocation4 + $0xac] sm:$0xf] %v1403
      %v1617 = vld [vmem:[#allocation4 + $0xb0] sm:$0x1]
      %v1618 = vsel %vm1518, %v1404, %v1617
      %1619 = vst [vmem:[#allocation4 + $0xb0] sm:$0x1] %v1618
      %v1620 = vld [vmem:[#allocation4 + $0xb4] sm:$0xf]
      %v1621 = vsel %vm1512, %v1411, %v1620
      %1622 = vst [vmem:[#allocation4 + $0xb4] sm:$0xf] %v1621
      %1623 = vst [vmem:[#allocation4 + $0xb8] sm:$0xf] %v1420
      %v1624 = vld [vmem:[#allocation4 + $0xbc] sm:$0x1]
      %v1625 = vsel %vm1518, %v1421, %v1624
      %1626 = vst [vmem:[#allocation4 + $0xbc] sm:$0x1] %v1625
      %v1627 = vld [vmem:[#allocation4 + $0xc0] sm:$0xf]
      %v1628 = vsel %vm1512, %v1428, %v1627
      %1629 = vst [vmem:[#allocation4 + $0xc0] sm:$0xf] %v1628
      %1630 = vst [vmem:[#allocation4 + $0xc4] sm:$0xf] %v1437
      %v1631 = vld [vmem:[#allocation4 + $0xc8] sm:$0x1]
      %v1632 = vsel %vm1518, %v1438, %v1631
      %1633 = vst [vmem:[#allocation4 + $0xc8] sm:$0x1] %v1632
      %v1634 = vld [vmem:[#allocation4 + $0xcc] sm:$0xf]
      %v1635 = vsel %vm1512, %v1445, %v1634
      %1636 = vst [vmem:[#allocation4 + $0xcc] sm:$0xf] %v1635
      %1637 = vst [vmem:[#allocation4 + $0xd0] sm:$0xf] %v1454
      %v1638 = vld [vmem:[#allocation4 + $0xd4] sm:$0x1]
      %v1639 = vsel %vm1518, %v1455, %v1638
      %1640 = vst [vmem:[#allocation4 + $0xd4] sm:$0x1] %v1639
      %v1641 = vld [vmem:[#allocation4] sm:$0x1]
      %v1642 = vsel %vm1518, 0, %v1641
      %1643 = vst [vmem:[#allocation4] sm:$0x1] %v1642
      %v1644 = vld [vmem:[#allocation4 + $0xc] sm:$0x1]
      %v1645 = vsel %vm1518, 0, %v1644
      %1646 = vst [vmem:[#allocation4 + $0xc] sm:$0x1] %v1645
      %v1647 = vld [vmem:[#allocation4 + $0x18] sm:$0x1]
      %v1648 = vsel %vm1518, 0, %v1647
      %1649 = vst [vmem:[#allocation4 + $0x18] sm:$0x1] %v1648
      %v1650 = vld [vmem:[#allocation4 + $0x24] sm:$0x1]
      %v1651 = vsel %vm1518, 0, %v1650
      %1652 = vst [vmem:[#allocation4 + $0x24] sm:$0x1] %v1651
      %v1653 = vld [vmem:[#allocation4 + $0x30] sm:$0x1]
      %v1654 = vsel %vm1518, 0, %v1653
      %1655 = vst [vmem:[#allocation4 + $0x30] sm:$0x1] %v1654
      %v1656 = vld [vmem:[#allocation4 + $0x3c] sm:$0x1]
      %v1657 = vsel %vm1518, 0, %v1656
      %1658 = vst [vmem:[#allocation4 + $0x3c] sm:$0x1] %v1657
      %v1659 = vld [vmem:[#allocation4 + $0x48] sm:$0x1]
      %v1660 = vsel %vm1518, 0, %v1659
      %1661 = vst [vmem:[#allocation4 + $0x48] sm:$0x1] %v1660
      %v1662 = vld [vmem:[#allocation4 + $0x54] sm:$0x1]
      %v1663 = vsel %vm1518, 0, %v1662
      %1664 = vst [vmem:[#allocation4 + $0x54] sm:$0x1] %v1663
      %v1665 = vld [vmem:[#allocation4 + $0x60] sm:$0x1]
      %v1666 = vsel %vm1518, 0, %v1665
      %1667 = vst [vmem:[#allocation4 + $0x60] sm:$0x1] %v1666
      %v1668 = vld [vmem:[#allocation4 + $0x6c] sm:$0x1]
      %v1669 = vsel %vm1518, 0, %v1668
      %1670 = vst [vmem:[#allocation4 + $0x6c] sm:$0x1] %v1669
      %v1671 = vld [vmem:[#allocation4 + $0x78] sm:$0x1]
      %v1672 = vsel %vm1518, 0, %v1671
      %1673 = vst [vmem:[#allocation4 + $0x78] sm:$0x1] %v1672
      %v1674 = vld [vmem:[#allocation4 + $0x84] sm:$0x1]
      %v1675 = vsel %vm1518, 0, %v1674
      %1676 = vst [vmem:[#allocation4 + $0x84] sm:$0x1] %v1675
      %v1677 = vld [vmem:[#allocation4 + $0x90] sm:$0x1]
      %v1678 = vsel %vm1518, 0, %v1677
      %1679 = vst [vmem:[#allocation4 + $0x90] sm:$0x1] %v1678
      %v1680 = vld [vmem:[#allocation4 + $0x9c] sm:$0x1]
      %v1681 = vsel %vm1518, 0, %v1680
      %1682 = vst [vmem:[#allocation4 + $0x9c] sm:$0x1] %v1681
      %v1683 = vld [vmem:[#allocation4 + $0xa8] sm:$0x1]
      %v1684 = vsel %vm1518, 0, %v1683
      %1685 = vst [vmem:[#allocation4 + $0xa8] sm:$0x1] %v1684
      %v1686 = vld [vmem:[#allocation4 + $0xb4] sm:$0x1]
      %v1687 = vsel %vm1518, 0, %v1686
      %1688 = vst [vmem:[#allocation4 + $0xb4] sm:$0x1] %v1687
      %v1689 = vld [vmem:[#allocation4 + $0xc0] sm:$0x1]
      %v1690 = vsel %vm1518, 0, %v1689
      %1691 = vst [vmem:[#allocation4 + $0xc0] sm:$0x1] %v1690
      %v1692 = vld [vmem:[#allocation4 + $0xcc] sm:$0x1]
      %v1693 = vsel %vm1518, 0, %v1692
      %1694 = vst [vmem:[#allocation4 + $0xcc] sm:$0x1] %v1693
      %vm1695 = vmand %vm1517, %vm1511
      %v1696 = vld [vmem:[#allocation4 + $0x8] sm:$0x1]
      %v1697 = vsel %vm1695, 0, %v1696
      %1698 = vst [vmem:[#allocation4 + $0x8] sm:$0x1] %v1697
      %v1699 = vld [vmem:[#allocation4 + $0x14] sm:$0x1]
      %v1700 = vsel %vm1695, 0, %v1699
      %1701 = vst [vmem:[#allocation4 + $0x14] sm:$0x1] %v1700
      %v1702 = vld [vmem:[#allocation4 + $0x20] sm:$0x1]
      %v1703 = vsel %vm1695, 0, %v1702
      %1704 = vst [vmem:[#allocation4 + $0x20] sm:$0x1] %v1703
      %v1705 = vld [vmem:[#allocation4 + $0x2c] sm:$0x1]
      %v1706 = vsel %vm1695, 0, %v1705
      %1707 = vst [vmem:[#allocation4 + $0x2c] sm:$0x1] %v1706
      %v1708 = vld [vmem:[#allocation4 + $0x38] sm:$0x1]
      %v1709 = vsel %vm1695, 0, %v1708
      %1710 = vst [vmem:[#allocation4 + $0x38] sm:$0x1] %v1709
      %v1711 = vld [vmem:[#allocation4 + $0x44] sm:$0x1]
      %v1712 = vsel %vm1695, 0, %v1711
      %1713 = vst [vmem:[#allocation4 + $0x44] sm:$0x1] %v1712
      %v1714 = vld [vmem:[#allocation4 + $0x50] sm:$0x1]
      %v1715 = vsel %vm1695, 0, %v1714
      %1716 = vst [vmem:[#allocation4 + $0x50] sm:$0x1] %v1715
      %v1717 = vld [vmem:[#allocation4 + $0x5c] sm:$0x1]
      %v1718 = vsel %vm1695, 0, %v1717
      %1719 = vst [vmem:[#allocation4 + $0x5c] sm:$0x1] %v1718
      %v1720 = vld [vmem:[#allocation4 + $0x68] sm:$0x1]
      %v1721 = vsel %vm1695, 0, %v1720
      %1722 = vst [vmem:[#allocation4 + $0x68] sm:$0x1] %v1721
      %v1723 = vld [vmem:[#allocation4 + $0x74] sm:$0x1]
      %v1724 = vsel %vm1695, 0, %v1723
      %1725 = vst [vmem:[#allocation4 + $0x74] sm:$0x1] %v1724
      %v1726 = vld [vmem:[#allocation4 + $0x80] sm:$0x1]
      %v1727 = vsel %vm1695, 0, %v1726
      %1728 = vst [vmem:[#allocation4 + $0x80] sm:$0x1] %v1727
      %v1729 = vld [vmem:[#allocation4 + $0x8c] sm:$0x1]
      %v1730 = vsel %vm1695, 0, %v1729
      %1731 = vst [vmem:[#allocation4 + $0x8c] sm:$0x1] %v1730
      %v1732 = vld [vmem:[#allocation4 + $0x98] sm:$0x1]
      %v1733 = vsel %vm1695, 0, %v1732
      %1734 = vst [vmem:[#allocation4 + $0x98] sm:$0x1] %v1733
      %v1735 = vld [vmem:[#allocation4 + $0xa4] sm:$0x1]
      %v1736 = vsel %vm1695, 0, %v1735
      %1737 = vst [vmem:[#allocation4 + $0xa4] sm:$0x1] %v1736
      %v1738 = vld [vmem:[#allocation4 + $0xb0] sm:$0x1]
      %v1739 = vsel %vm1695, 0, %v1738
      %1740 = vst [vmem:[#allocation4 + $0xb0] sm:$0x1] %v1739
      %v1741 = vld [vmem:[#allocation4 + $0xbc] sm:$0x1]
      %v1742 = vsel %vm1695, 0, %v1741
      %1743 = vst [vmem:[#allocation4 + $0xbc] sm:$0x1] %v1742
      %v1744 = vld [vmem:[#allocation4 + $0xc8] sm:$0x1]
      %v1745 = vsel %vm1695, 0, %v1744
      %1746 = vst [vmem:[#allocation4 + $0xc8] sm:$0x1] %v1745
      %v1747 = vld [vmem:[#allocation4 + $0xd4] sm:$0x1]
      %v1748 = vsel %vm1695, 0, %v1747
      %1749 = vst [vmem:[#allocation4 + $0xd4] sm:$0x1] %v1748
      // Predicated region
      $region113: #{residual_bottle_pallas.1} parent=35 // pred_check
        %p1750 = pneg %p217
      $region114: #{residual_bottle_pallas.1} parent=35 // pred_check_branch
        %1752 = sbr.rel (%p1750) target = $region116
      $region115: #{residual_bottle_pallas.1} parent=35 // pred_region
        %1753 = vst [vmem:[#allocation4] sm:$0xf] 0
        %1754 = vst [vmem:[#allocation4 + $0x4] sm:$0xf] 0
        %1755 = vst [vmem:[#allocation4 + $0x8] sm:$0x1] 0
        %s1756 = scalar_lea.vmem [#allocation4], 204
        %1757 = vst [vmem:[%s1756] sm:$0xf] 0
        %1758 = vst [vmem:[%s1756 + $0x4] sm:$0xf] 0
        %1759 = vst [vmem:[%s1756 + $0x8] sm:$0x1] 0
      $region116: #{residual_bottle_pallas.1} parent=35 // pred_fallthru
        _
      %v1760 = vld [vmem:[#allocation4] sm:$0xf]
      %v1761 = vld [vmem:[#allocation4 + $0x4] sm:$0xf]
      %v1762 = vld [vmem:[#allocation4 + $0xc] sm:$0xf]
      %v1763 = vld [vmem:[#allocation4 + $0x10] sm:$0xf]
      %v1764 = vld [vmem:[#allocation4 + $0x18] sm:$0xf]
      %v1765 = vld [vmem:[#allocation4 + $0x1c] sm:$0xf]
      %v1766 = vld [vmem:[#allocation4 + $0x24] sm:$0xf]
      %v1767 = vld [vmem:[#allocation4 + $0x28] sm:$0xf]
      %v1768 = vld [vmem:[#allocation4 + $0x30] sm:$0xf]
      %v1769 = vld [vmem:[#allocation4 + $0x34] sm:$0xf]
      %v1770 = vld [vmem:[#allocation4 + $0x3c] sm:$0xf]
      %v1771 = vld [vmem:[#allocation4 + $0x40] sm:$0xf]
      %v1772 = vld [vmem:[#allocation4 + $0x48] sm:$0xf]
      %v1773 = vld [vmem:[#allocation4 + $0x4c] sm:$0xf]
      %v1774 = vld [vmem:[#allocation4 + $0x54] sm:$0xf]
      %v1775 = vld [vmem:[#allocation4 + $0x58] sm:$0xf]
      %v1776 = vld [vmem:[#allocation4 + $0x60] sm:$0xf]
      %v1777 = vld [vmem:[#allocation4 + $0x64] sm:$0xf]
      %v1778 = vld [vmem:[#allocation4 + $0x6c] sm:$0xf]
      %v1779 = vld [vmem:[#allocation4 + $0x70] sm:$0xf]
      %v1780 = vld [vmem:[#allocation4 + $0x78] sm:$0xf]
      %v1781 = vld [vmem:[#allocation4 + $0x7c] sm:$0xf]
      %v1782 = vld [vmem:[#allocation4 + $0x84] sm:$0xf]
      %v1783 = vld [vmem:[#allocation4 + $0x88] sm:$0xf]
      %v1784 = vld [vmem:[#allocation4 + $0x90] sm:$0xf]
      %v1785 = vld [vmem:[#allocation4 + $0x94] sm:$0xf]
      %v1786 = vld [vmem:[#allocation4 + $0x9c] sm:$0xf]
      %v1787 = vld [vmem:[#allocation4 + $0xa0] sm:$0xf]
      %v1788 = vld [vmem:[#allocation4 + $0xa8] sm:$0xf]
      %v1789 = vld [vmem:[#allocation4 + $0xac] sm:$0xf]
      %v1790 = vld [vmem:[#allocation4 + $0xb4] sm:$0xf]
      %v1791 = vld [vmem:[#allocation4 + $0xb8] sm:$0xf]
      %v1792 = vld [vmem:[%s2] sm:$0xf]
      %v1793 = vld [vmem:[%s2 + $0x4] sm:$0xf]
      %v1794 = vld [vmem:[%s2 + $0x8] sm:$0xf]
      %v1795 = vld [vmem:[%s2 + $0xc] sm:$0xf]
      %v1796 = vld [vmem:[%s2 + $0x10] sm:$0xf]
      %v1797 = vld [vmem:[%s2 + $0x14] sm:$0xf]
      %v1798 = vld [vmem:[%s2 + $0x18] sm:$0xf]
      %v1799 = vld [vmem:[%s2 + $0x1c] sm:$0xf]
      %v1800 = vld [vmem:[%s2 + $0x20] sm:$0xf]
      %v1801 = vld [vmem:[%s2 + $0x24] sm:$0xf]
      %v1802 = vld [vmem:[%s2 + $0x28] sm:$0xf]
      %v1803 = vld [vmem:[%s2 + $0x2c] sm:$0xf]
      %v1804 = vld [vmem:[%s2 + $0x30] sm:$0xf]
      %v1805 = vld [vmem:[%s2 + $0x34] sm:$0xf]
      %v1806 = vld [vmem:[%s2 + $0x38] sm:$0xf]
      %v1807 = vld [vmem:[%s2 + $0x3c] sm:$0xf]
      %v1808 = vld [vmem:[#allocation4 + $0x8] sm:$0x1]
      %v1809 = vld [vmem:[#allocation4 + $0x14] sm:$0x1]
      %v1810 = vld [vmem:[#allocation4 + $0x20] sm:$0x1]
      %v1811 = vld [vmem:[#allocation4 + $0x2c] sm:$0x1]
      %v1812 = vld [vmem:[#allocation4 + $0x38] sm:$0x1]
      %v1813 = vld [vmem:[#allocation4 + $0x44] sm:$0x1]
      %v1814 = vld [vmem:[#allocation4 + $0x50] sm:$0x1]
      %v1815 = vld [vmem:[#allocation4 + $0x5c] sm:$0x1]
      %v1816 = vld [vmem:[#allocation4 + $0x68] sm:$0x1]
      %v1817 = vld [vmem:[#allocation4 + $0x74] sm:$0x1]
      %v1818 = vld [vmem:[#allocation4 + $0x80] sm:$0x1]
      %v1819 = vld [vmem:[#allocation4 + $0x8c] sm:$0x1]
      %v1820 = vld [vmem:[#allocation4 + $0x98] sm:$0x1]
      %v1821 = vld [vmem:[#allocation4 + $0xa4] sm:$0x1]
      %v1822 = vld [vmem:[#allocation4 + $0xb0] sm:$0x1]
      %v1823 = vld [vmem:[#allocation4 + $0xbc] sm:$0x1]
      %vm1824 = vsmask.f32 3328
      %vm1825 = vsmask.f32 7440
      %vm1826 = vmor %vm1824, %vm1825
      %v1828 = vshrl.u32 %v1760, 16
      %v1830 = vrot.slane %v1828, 4
      %v1831 = vshll.u32 %v1760, 16
      %v1833 = vrot.slane %v1831, 5
      %v1834 = vor.u32 %v1830, %v1833
      %v1835 = vrot.slane %v1834, 4
      %v1837 = vshll.u32 %v1761, 16
      %v1839 = vrot.slane %v1837, 5
      %v1840 = vsel %vm1826, %v1835, %v1839
      %v1841 = vshrl.u32 %v1761, 16
      %v1843 = vrot.slane %v1841, 4
      %v1844 = vor.u32 %v1843, %v1839
      %v1845 = vrot.slane %v1844, 4
      %v1847 = vshll.u32 %v1808, 16
      %v1849 = vrot.slane %v1847, 5
      %v1850 = vsel %vm1826, %v1845, %v1849
      %v1852 = vshrl.u32 %v1762, 16
      %v1854 = vrot.slane %v1852, 4
      %v1855 = vshll.u32 %v1762, 16
      %v1857 = vrot.slane %v1855, 5
      %v1858 = vor.u32 %v1854, %v1857
      %v1859 = vrot.slane %v1858, 4
      %v1861 = vshll.u32 %v1763, 16
      %v1863 = vrot.slane %v1861, 5
      %v1864 = vsel %vm1826, %v1859, %v1863
      %v1865 = vshrl.u32 %v1763, 16
      %v1867 = vrot.slane %v1865, 4
      %v1868 = vor.u32 %v1867, %v1863
      %v1869 = vrot.slane %v1868, 4
      %v1871 = vshll.u32 %v1809, 16
      %v1873 = vrot.slane %v1871, 5
      %v1874 = vsel %vm1826, %v1869, %v1873
      %v1876 = vshrl.u32 %v1764, 16
      %v1878 = vrot.slane %v1876, 4
      %v1879 = vshll.u32 %v1764, 16
      %v1881 = vrot.slane %v1879, 5
      %v1882 = vor.u32 %v1878, %v1881
      %v1883 = vrot.slane %v1882, 4
      %v1885 = vshll.u32 %v1765, 16
      %v1887 = vrot.slane %v1885, 5
      %v1888 = vsel %vm1826, %v1883, %v1887
      %v1889 = vshrl.u32 %v1765, 16
      %v1891 = vrot.slane %v1889, 4
      %v1892 = vor.u32 %v1891, %v1887
      %v1893 = vrot.slane %v1892, 4
      %v1895 = vshll.u32 %v1810, 16
      %v1897 = vrot.slane %v1895, 5
      %v1898 = vsel %vm1826, %v1893, %v1897
      %v1900 = vshrl.u32 %v1766, 16
      %v1902 = vrot.slane %v1900, 4
      %v1903 = vshll.u32 %v1766, 16
      %v1905 = vrot.slane %v1903, 5
      %v1906 = vor.u32 %v1902, %v1905
      %v1907 = vrot.slane %v1906, 4
      %v1909 = vshll.u32 %v1767, 16
      %v1911 = vrot.slane %v1909, 5
      %v1912 = vsel %vm1826, %v1907, %v1911
      %v1913 = vshrl.u32 %v1767, 16
      %v1915 = vrot.slane %v1913, 4
      %v1916 = vor.u32 %v1915, %v1911
      %v1917 = vrot.slane %v1916, 4
      %v1919 = vshll.u32 %v1811, 16
      %v1921 = vrot.slane %v1919, 5
      %v1922 = vsel %vm1826, %v1917, %v1921
      %v1924 = vshrl.u32 %v1768, 16
      %v1926 = vrot.slane %v1924, 4
      %v1927 = vshll.u32 %v1768, 16
      %v1929 = vrot.slane %v1927, 5
      %v1930 = vor.u32 %v1926, %v1929
      %v1931 = vrot.slane %v1930, 4
      %v1933 = vshll.u32 %v1769, 16
      %v1935 = vrot.slane %v1933, 5
      %v1936 = vsel %vm1826, %v1931, %v1935
      %v1937 = vshrl.u32 %v1769, 16
      %v1939 = vrot.slane %v1937, 4
      %v1940 = vor.u32 %v1939, %v1935
      %v1941 = vrot.slane %v1940, 4
      %v1943 = vshll.u32 %v1812, 16
      %v1945 = vrot.slane %v1943, 5
      %v1946 = vsel %vm1826, %v1941, %v1945
      %v1948 = vshrl.u32 %v1770, 16
      %v1950 = vrot.slane %v1948, 4
      %v1951 = vshll.u32 %v1770, 16
      %v1953 = vrot.slane %v1951, 5
      %v1954 = vor.u32 %v1950, %v1953
      %v1955 = vrot.slane %v1954, 4
      %v1957 = vshll.u32 %v1771, 16
      %v1959 = vrot.slane %v1957, 5
      %v1960 = vsel %vm1826, %v1955, %v1959
      %v1961 = vshrl.u32 %v1771, 16
      %v1963 = vrot.slane %v1961, 4
      %v1964 = vor.u32 %v1963, %v1959
      %v1965 = vrot.slane %v1964, 4
      %v1967 = vshll.u32 %v1813, 16
      %v1969 = vrot.slane %v1967, 5
      %v1970 = vsel %vm1826, %v1965, %v1969
      %v1972 = vshrl.u32 %v1772, 16
      %v1974 = vrot.slane %v1972, 4
      %v1975 = vshll.u32 %v1772, 16
      %v1977 = vrot.slane %v1975, 5
      %v1978 = vor.u32 %v1974, %v1977
      %v1979 = vrot.slane %v1978, 4
      %v1981 = vshll.u32 %v1773, 16
      %v1983 = vrot.slane %v1981, 5
      %v1984 = vsel %vm1826, %v1979, %v1983
      %v1985 = vshrl.u32 %v1773, 16
      %v1987 = vrot.slane %v1985, 4
      %v1988 = vor.u32 %v1987, %v1983
      %v1989 = vrot.slane %v1988, 4
      %v1991 = vshll.u32 %v1814, 16
      %v1993 = vrot.slane %v1991, 5
      %v1994 = vsel %vm1826, %v1989, %v1993
      %v1996 = vshrl.u32 %v1774, 16
      %v1998 = vrot.slane %v1996, 4
      %v1999 = vshll.u32 %v1774, 16
      %v2001 = vrot.slane %v1999, 5
      %v2002 = vor.u32 %v1998, %v2001
      %v2003 = vrot.slane %v2002, 4
      %v2005 = vshll.u32 %v1775, 16
      %v2007 = vrot.slane %v2005, 5
      %v2008 = vsel %vm1826, %v2003, %v2007
      %v2009 = vshrl.u32 %v1775, 16
      %v2011 = vrot.slane %v2009, 4
      %v2012 = vor.u32 %v2011, %v2007
      %v2013 = vrot.slane %v2012, 4
      %v2015 = vshll.u32 %v1815, 16
      %v2017 = vrot.slane %v2015, 5
      %v2018 = vsel %vm1826, %v2013, %v2017
      %v2020 = vshrl.u32 %v1776, 16
      %v2022 = vrot.slane %v2020, 4
      %v2023 = vshll.u32 %v1776, 16
      %v2025 = vrot.slane %v2023, 5
      %v2026 = vor.u32 %v2022, %v2025
      %v2027 = vrot.slane %v2026, 4
      %v2029 = vshll.u32 %v1777, 16
      %v2031 = vrot.slane %v2029, 5
      %v2032 = vsel %vm1826, %v2027, %v2031
      %v2033 = vshrl.u32 %v1777, 16
      %v2035 = vrot.slane %v2033, 4
      %v2036 = vor.u32 %v2035, %v2031
      %v2037 = vrot.slane %v2036, 4
      %v2039 = vshll.u32 %v1816, 16
      %v2041 = vrot.slane %v2039, 5
      %v2042 = vsel %vm1826, %v2037, %v2041
      %v2044 = vshrl.u32 %v1778, 16
      %v2046 = vrot.slane %v2044, 4
      %v2047 = vshll.u32 %v1778, 16
      %v2049 = vrot.slane %v2047, 5
      %v2050 = vor.u32 %v2046, %v2049
      %v2051 = vrot.slane %v2050, 4
      %v2053 = vshll.u32 %v1779, 16
      %v2055 = vrot.slane %v2053, 5
      %v2056 = vsel %vm1826, %v2051, %v2055
      %v2057 = vshrl.u32 %v1779, 16
      %v2059 = vrot.slane %v2057, 4
      %v2060 = vor.u32 %v2059, %v2055
      %v2061 = vrot.slane %v2060, 4
      %v2063 = vshll.u32 %v1817, 16
      %v2065 = vrot.slane %v2063, 5
      %v2066 = vsel %vm1826, %v2061, %v2065
      %v2068 = vshrl.u32 %v1780, 16
      %v2070 = vrot.slane %v2068, 4
      %v2071 = vshll.u32 %v1780, 16
      %v2073 = vrot.slane %v2071, 5
      %v2074 = vor.u32 %v2070, %v2073
      %v2075 = vrot.slane %v2074, 4
      %v2077 = vshll.u32 %v1781, 16
      %v2079 = vrot.slane %v2077, 5
      %v2080 = vsel %vm1826, %v2075, %v2079
      %v2081 = vshrl.u32 %v1781, 16
      %v2083 = vrot.slane %v2081, 4
      %v2084 = vor.u32 %v2083, %v2079
      %v2085 = vrot.slane %v2084, 4
      %v2087 = vshll.u32 %v1818, 16
      %v2089 = vrot.slane %v2087, 5
      %v2090 = vsel %vm1826, %v2085, %v2089
      %v2092 = vshrl.u32 %v1782, 16
      %v2094 = vrot.slane %v2092, 4
      %v2095 = vshll.u32 %v1782, 16
      %v2097 = vrot.slane %v2095, 5
      %v2098 = vor.u32 %v2094, %v2097
      %v2099 = vrot.slane %v2098, 4
      %v2101 = vshll.u32 %v1783, 16
      %v2103 = vrot.slane %v2101, 5
      %v2104 = vsel %vm1826, %v2099, %v2103
      %v2105 = vshrl.u32 %v1783, 16
      %v2107 = vrot.slane %v2105, 4
      %v2108 = vor.u32 %v2107, %v2103
      %v2109 = vrot.slane %v2108, 4
      %v2111 = vshll.u32 %v1819, 16
      %v2113 = vrot.slane %v2111, 5
      %v2114 = vsel %vm1826, %v2109, %v2113
      %v2116 = vshrl.u32 %v1784, 16
      %v2118 = vrot.slane %v2116, 4
      %v2119 = vshll.u32 %v1784, 16
      %v2121 = vrot.slane %v2119, 5
      %v2122 = vor.u32 %v2118, %v2121
      %v2123 = vrot.slane %v2122, 4
      %v2125 = vshll.u32 %v1785, 16
      %v2127 = vrot.slane %v2125, 5
      %v2128 = vsel %vm1826, %v2123, %v2127
      %v2129 = vshrl.u32 %v1785, 16
      %v2131 = vrot.slane %v2129, 4
      %v2132 = vor.u32 %v2131, %v2127
      %v2133 = vrot.slane %v2132, 4
      %v2135 = vshll.u32 %v1820, 16
      %v2137 = vrot.slane %v2135, 5
      %v2138 = vsel %vm1826, %v2133, %v2137
      %v2140 = vshrl.u32 %v1786, 16
      %v2142 = vrot.slane %v2140, 4
      %v2143 = vshll.u32 %v1786, 16
      %v2145 = vrot.slane %v2143, 5
      %v2146 = vor.u32 %v2142, %v2145
      %v2147 = vrot.slane %v2146, 4
      %v2149 = vshll.u32 %v1787, 16
      %v2151 = vrot.slane %v2149, 5
      %v2152 = vsel %vm1826, %v2147, %v2151
      %v2153 = vshrl.u32 %v1787, 16
      %v2155 = vrot.slane %v2153, 4
      %v2156 = vor.u32 %v2155, %v2151
      %v2157 = vrot.slane %v2156, 4
      %v2159 = vshll.u32 %v1821, 16
      %v2161 = vrot.slane %v2159, 5
      %v2162 = vsel %vm1826, %v2157, %v2161
      %v2164 = vshrl.u32 %v1788, 16
      %v2166 = vrot.slane %v2164, 4
      %v2167 = vshll.u32 %v1788, 16
      %v2169 = vrot.slane %v2167, 5
      %v2170 = vor.u32 %v2166, %v2169
      %v2171 = vrot.slane %v2170, 4
      %v2173 = vshll.u32 %v1789, 16
      %v2175 = vrot.slane %v2173, 5
      %v2176 = vsel %vm1826, %v2171, %v2175
      %v2177 = vshrl.u32 %v1789, 16
      %v2179 = vrot.slane %v2177, 4
      %v2180 = vor.u32 %v2179, %v2175
      %v2181 = vrot.slane %v2180, 4
      %v2183 = vshll.u32 %v1822, 16
      %v2185 = vrot.slane %v2183, 5
      %v2186 = vsel %vm1826, %v2181, %v2185
      %v2188 = vshrl.u32 %v1790, 16
      %v2190 = vrot.slane %v2188, 4
      %v2191 = vshll.u32 %v1790, 16
      %v2193 = vrot.slane %v2191, 5
      %v2194 = vor.u32 %v2190, %v2193
      %v2195 = vrot.slane %v2194, 4
      %v2197 = vshll.u32 %v1791, 16
      %v2199 = vrot.slane %v2197, 5
      %v2200 = vsel %vm1826, %v2195, %v2199
      %v2201 = vshrl.u32 %v1791, 16
      %v2203 = vrot.slane %v2201, 4
      %v2204 = vor.u32 %v2203, %v2199
      %v2205 = vrot.slane %v2204, 4
      %v2207 = vshll.u32 %v1823, 16
      %v2209 = vrot.slane %v2207, 5
      %v2210 = vsel %vm1826, %v2205, %v2209
      %s2211 = scalar_lea.vmem %s2, 64
      %v2212 = vld [vmem:[%s2211] sm:$0xf]
      %v2213 = vld [vmem:[%s2211 + $0x4] sm:$0xf]
      %v2214 = vld [vmem:[%s2211 + $0x8] sm:$0xf]
      %v2215 = vld [vmem:[%s2211 + $0xc] sm:$0xf]
      %v2216 = vld [vmem:[%s2211 + $0x10] sm:$0xf]
      %v2217 = vld [vmem:[%s2211 + $0x14] sm:$0xf]
      %v2218 = vld [vmem:[%s2211 + $0x18] sm:$0xf]
      %v2219 = vld [vmem:[%s2211 + $0x1c] sm:$0xf]
      %v2220 = vld [vmem:[%s2211 + $0x20] sm:$0xf]
      %v2221 = vld [vmem:[%s2211 + $0x24] sm:$0xf]
      %v2222 = vld [vmem:[%s2211 + $0x28] sm:$0xf]
      %v2223 = vld [vmem:[%s2211 + $0x2c] sm:$0xf]
      %v2224 = vld [vmem:[%s2211 + $0x30] sm:$0xf]
      %v2225 = vld [vmem:[%s2211 + $0x34] sm:$0xf]
      %v2226 = vld [vmem:[%s2211 + $0x38] sm:$0xf]
      %v2227 = vld [vmem:[%s2211 + $0x3c] sm:$0xf]
      %v2228 = vunpack.c.l.b16 %v1840
      %v2229 = vunpack.c.l.b16 %v1850
      %v2230 = vunpack.c.l.b16 %v1864
      %v2231 = vunpack.c.l.b16 %v1874
      %v2232 = vunpack.c.l.b16 %v1888
      %v2233 = vunpack.c.l.b16 %v1898
      %v2234 = vunpack.c.l.b16 %v1912
      %v2235 = vunpack.c.l.b16 %v1922
      %v2236 = vunpack.c.l.b16 %v1936
      %v2237 = vunpack.c.l.b16 %v1946
      %v2238 = vunpack.c.l.b16 %v1960
      %v2239 = vunpack.c.l.b16 %v1970
      %v2240 = vunpack.c.l.b16 %v1984
      %v2241 = vunpack.c.l.b16 %v1994
      %v2242 = vunpack.c.l.b16 %v2008
      %v2243 = vunpack.c.l.b16 %v2018
      %v2244 = vunpack.c.l.b16 %v2032
      %v2245 = vunpack.c.l.b16 %v2042
      %v2246 = vunpack.c.l.b16 %v2056
      %v2247 = vunpack.c.l.b16 %v2066
      %v2248 = vunpack.c.l.b16 %v2080
      %v2249 = vunpack.c.l.b16 %v2090
      %v2250 = vunpack.c.l.b16 %v2104
      %v2251 = vunpack.c.l.b16 %v2114
      %v2252 = vunpack.c.l.b16 %v2128
      %v2253 = vunpack.c.l.b16 %v2138
      %v2254 = vunpack.c.l.b16 %v2152
      %v2255 = vunpack.c.l.b16 %v2162
      %v2256 = vunpack.c.l.b16 %v2176
      %v2257 = vunpack.c.l.b16 %v2186
      %v2258 = vunpack.c.l.b16 %v2200
      %v2259 = vunpack.c.l.b16 %v2210
      %v2260 = vpack.c.b16 %v2229, %v2228
      %v2261 = vpack.c.b16 %v2231, %v2230
      %v2262 = vpack.c.b16 %v2233, %v2232
      %v2263 = vpack.c.b16 %v2235, %v2234
      %v2264 = vpack.c.b16 %v2237, %v2236
      %v2265 = vpack.c.b16 %v2239, %v2238
      %v2266 = vpack.c.b16 %v2241, %v2240
      %v2267 = vpack.c.b16 %v2243, %v2242
      %v2268 = vpack.c.b16 %v2245, %v2244
      %v2269 = vpack.c.b16 %v2247, %v2246
      %v2270 = vpack.c.b16 %v2249, %v2248
      %v2271 = vpack.c.b16 %v2251, %v2250
      %v2272 = vpack.c.b16 %v2253, %v2252
      %v2273 = vpack.c.b16 %v2255, %v2254
      %v2274 = vpack.c.b16 %v2257, %v2256
      %v2275 = vpack.c.b16 %v2259, %v2258
      %v2308 = vunpack.c.l.b16 %v2212
      %v2309 = vunpack.c.l.b16 %v2213
      %v2310 = vunpack.c.l.b16 %v2214
      %v2311 = vunpack.c.l.b16 %v2215
      %v2312 = vunpack.c.l.b16 %v2216
      %v2313 = vunpack.c.l.b16 %v2217
      %v2314 = vunpack.c.l.b16 %v2218
      %v2315 = vunpack.c.l.b16 %v2219
      %v2316 = vunpack.c.l.b16 %v2220
      %v2317 = vunpack.c.l.b16 %v2221
      %v2318 = vunpack.c.l.b16 %v2222
      %v2319 = vunpack.c.l.b16 %v2223
      %v2320 = vunpack.c.l.b16 %v2224
      %v2321 = vunpack.c.l.b16 %v2225
      %v2322 = vunpack.c.l.b16 %v2226
      %v2323 = vunpack.c.l.b16 %v2227
      %v2324 = vpack.c.b16 %v2309, %v2308
      %v2325 = vpack.c.b16 %v2311, %v2310
      %v2326 = vpack.c.b16 %v2313, %v2312
      %v2327 = vpack.c.b16 %v2315, %v2314
      %v2328 = vpack.c.b16 %v2317, %v2316
      %v2329 = vpack.c.b16 %v2319, %v2318
      %v2330 = vpack.c.b16 %v2321, %v2320
      %v2331 = vpack.c.b16 %v2323, %v2322
      %2340 = vmatprep.subr.bf16.mxu0 0
      %2341 = vmatpush1.bf16.msra.mxu0 %v2331
      %2342 = vmatprep.subr.bf16.mxu0 0
      %2343 = vmatpush1.bf16.msra.mxu0 %v2330
      %2344 = vmatprep.subr.bf16.mxu0 0
      %2345 = vmatpush1.bf16.msra.mxu0 %v2329
      %2346 = vmatprep.subr.bf16.mxu0 0
      %2347 = vmatpush1.bf16.msra.mxu0 %v2328
      %2348 = vmatprep.subr.bf16.mxu0 0
      %2349 = vmatpush1.bf16.msra.mxu0 %v2327
      %2350 = vmatprep.subr.bf16.mxu0 0
      %2351 = vmatpush1.bf16.msra.mxu0 %v2326
      %2352 = vmatprep.subr.bf16.mxu0 0
      %2353 = vmatpush1.bf16.msra.mxu0 %v2325
      %2354 = vmatprep.subr.bf16.mxu0 0
      %2355 = vmatpush1.bf16.msra.mxu0 %v2324
      %2356 = vmatprep.subr.bf16.mxu0 0
      %2357 = vmatpush2.bf16.msra.mxu0 0
      %2358 = vmatprep.subr.bf16.mxu0 0
      %2359 = vmatpush2.bf16.msra.mxu0 0
      %2360 = vmatprep.subr.bf16.mxu0 0
      %2361 = vmatpush2.bf16.msra.mxu0 0
      %2362 = vmatprep.subr.bf16.mxu0 0
      %2363 = vmatpush2.bf16.msra.mxu0 0
      %2364 = vmatprep.subr.bf16.mxu0 0
      %2365 = vmatpush2.bf16.msra.mxu0 0
      %2366 = vmatprep.subr.bf16.mxu0 0
      %2367 = vmatpush2.bf16.msra.mxu0 0
      %2368 = vmatprep.subr.bf16.mxu0 0
      %2369 = vmatpush2.bf16.msra.mxu0 0
      %2370 = vmatprep.subr.bf16.mxu0 0
      %2371 = vmatpush2.bf16.msra.mxu0 0
      %2372 = vmatprep.mubr.bf16.mxu0 0
      %2373 = vmatmul.mubr.bf16.gmra.mxu0 %v2260
      %v2374 = vpop.f32.mrf.mxu0
      %v2375 = vadd.f32 0.0, %v2374
      %v2376 = vpop.f32.mrf.mxu0
      %v2377 = vpop.f32.mrf.mxu0
      %v2378 = vadd.f32 0.0, %v2377
      %v2379 = vpop.f32.mrf.mxu0
      %2380 = vmatprep.mubr.bf16.mxu0 0
      %2381 = vmatmul.mubr.bf16.gmra.mxu0 %v2261
      %v2382 = vpop.f32.mrf.mxu0
      %v2383 = vadd.f32 0.0, %v2382
      %v2384 = vpop.f32.mrf.mxu0
      %v2385 = vpop.f32.mrf.mxu0
      %v2386 = vadd.f32 0.0, %v2385
      %v2387 = vpop.f32.mrf.mxu0
      %2388 = vmatprep.mubr.bf16.mxu0 0
      %2389 = vmatmul.mubr.bf16.gmra.mxu0 %v2262
      %v2390 = vpop.f32.mrf.mxu0
      %v2391 = vadd.f32 0.0, %v2390
      %v2392 = vpop.f32.mrf.mxu0
      %v2393 = vpop.f32.mrf.mxu0
      %v2394 = vadd.f32 0.0, %v2393
      %v2395 = vpop.f32.mrf.mxu0
      %2396 = vmatprep.mubr.bf16.mxu0 0
      %2397 = vmatmul.mubr.bf16.gmra.mxu0 %v2263
      %v2398 = vpop.f32.mrf.mxu0
      %v2399 = vadd.f32 0.0, %v2398
      %v2400 = vpop.f32.mrf.mxu0
      %v2401 = vpop.f32.mrf.mxu0
      %v2402 = vadd.f32 0.0, %v2401
      %v2403 = vpop.f32.mrf.mxu0
      %2404 = vmatprep.mubr.bf16.mxu0 0
      %2405 = vmatmul.mubr.bf16.gmra.mxu0 %v2264
      %v2406 = vpop.f32.mrf.mxu0
      %v2407 = vadd.f32 0.0, %v2406
      %v2408 = vpop.f32.mrf.mxu0
      %v2409 = vpop.f32.mrf.mxu0
      %v2410 = vadd.f32 0.0, %v2409
      %v2411 = vpop.f32.mrf.mxu0
      %2412 = vmatprep.mubr.bf16.mxu0 0
      %2413 = vmatmul.mubr.bf16.gmra.mxu0 %v2265
      %v2414 = vpop.f32.mrf.mxu0
      %v2415 = vadd.f32 0.0, %v2414
      %v2416 = vpop.f32.mrf.mxu0
      %v2417 = vpop.f32.mrf.mxu0
      %v2418 = vadd.f32 0.0, %v2417
      %v2419 = vpop.f32.mrf.mxu0
      %2420 = vmatprep.mubr.bf16.mxu0 0
      %2421 = vmatmul.mubr.bf16.gmra.mxu0 %v2266
      %v2422 = vpop.f32.mrf.mxu0
      %v2423 = vadd.f32 0.0, %v2422
      %v2424 = vpop.f32.mrf.mxu0
      %v2425 = vpop.f32.mrf.mxu0
      %v2426 = vadd.f32 0.0, %v2425
      %v2427 = vpop.f32.mrf.mxu0
      %2428 = vmatprep.mubr.bf16.mxu0 0
      %2429 = vmatmul.mubr.bf16.gmra.mxu0 %v2267
      %v2430 = vpop.f32.mrf.mxu0
      %v2431 = vadd.f32 0.0, %v2430
      %v2432 = vpop.f32.mrf.mxu0
      %v2433 = vpop.f32.mrf.mxu0
      %v2434 = vadd.f32 0.0, %v2433
      %v2435 = vpop.f32.mrf.mxu0
      %2436 = vmatprep.mubr.bf16.mxu0 0
      %2437 = vmatmul.mubr.bf16.gmra.mxu0 %v2268
      %v2438 = vpop.f32.mrf.mxu0
      %v2439 = vadd.f32 0.0, %v2438
      %v2440 = vpop.f32.mrf.mxu0
      %v2441 = vpop.f32.mrf.mxu0
      %v2442 = vadd.f32 0.0, %v2441
      %v2443 = vpop.f32.mrf.mxu0
      %2444 = vmatprep.mubr.bf16.mxu0 0
      %2445 = vmatmul.mubr.bf16.gmra.mxu0 %v2269
      %v2446 = vpop.f32.mrf.mxu0
      %v2447 = vadd.f32 0.0, %v2446
      %v2448 = vpop.f32.mrf.mxu0
      %v2449 = vpop.f32.mrf.mxu0
      %v2450 = vadd.f32 0.0, %v2449
      %v2451 = vpop.f32.mrf.mxu0
      %2452 = vmatprep.mubr.bf16.mxu0 0
      %2453 = vmatmul.mubr.bf16.gmra.mxu0 %v2270
      %v2454 = vpop.f32.mrf.mxu0
      %v2455 = vadd.f32 0.0, %v2454
      %v2456 = vpop.f32.mrf.mxu0
      %v2457 = vpop.f32.mrf.mxu0
      %v2458 = vadd.f32 0.0, %v2457
      %v2459 = vpop.f32.mrf.mxu0
      %2460 = vmatprep.mubr.bf16.mxu0 0
      %2461 = vmatmul.mubr.bf16.gmra.mxu0 %v2271
      %v2462 = vpop.f32.mrf.mxu0
      %v2463 = vadd.f32 0.0, %v2462
      %v2464 = vpop.f32.mrf.mxu0
      %v2465 = vpop.f32.mrf.mxu0
      %v2466 = vadd.f32 0.0, %v2465
      %v2467 = vpop.f32.mrf.mxu0
      %2468 = vmatprep.mubr.bf16.mxu0 0
      %2469 = vmatmul.mubr.bf16.gmra.mxu0 %v2272
      %v2470 = vpop.f32.mrf.mxu0
      %v2471 = vadd.f32 0.0, %v2470
      %v2472 = vpop.f32.mrf.mxu0
      %v2473 = vpop.f32.mrf.mxu0
      %v2474 = vadd.f32 0.0, %v2473
      %v2475 = vpop.f32.mrf.mxu0
      %2476 = vmatprep.mubr.bf16.mxu0 0
      %2477 = vmatmul.mubr.bf16.gmra.mxu0 %v2273
      %v2478 = vpop.f32.mrf.mxu0
      %v2479 = vadd.f32 0.0, %v2478
      %v2480 = vpop.f32.mrf.mxu0
      %v2481 = vpop.f32.mrf.mxu0
      %v2482 = vadd.f32 0.0, %v2481
      %v2483 = vpop.f32.mrf.mxu0
      %2484 = vmatprep.mubr.bf16.mxu0 0
      %2485 = vmatmul.mubr.bf16.gmra.mxu0 %v2274
      %v2486 = vpop.f32.mrf.mxu0
      %v2487 = vadd.f32 0.0, %v2486
      %v2488 = vpop.f32.mrf.mxu0
      %v2489 = vpop.f32.mrf.mxu0
      %v2490 = vadd.f32 0.0, %v2489
      %v2491 = vpop.f32.mrf.mxu0
      %2492 = vmatprep.mubr.bf16.mxu0 0
      %2493 = vmatmul.mubr.bf16.gmra.mxu0 %v2275
      %v2494 = vpop.f32.mrf.mxu0
      %v2495 = vadd.f32 0.0, %v2494
      %v2496 = vpop.f32.mrf.mxu0
      %v2497 = vpop.f32.mrf.mxu0
      %v2498 = vadd.f32 0.0, %v2497
      %v2499 = vpop.f32.mrf.mxu0
      %2500 = vdwg.mxu0
      %v2533 = vunpack.c.l.b16 %v1760
      %v2534 = vunpack.c.l.b16 %v1761
      %v2535 = vunpack.c.l.b16 %v1762
      %v2536 = vunpack.c.l.b16 %v1763
      %v2537 = vunpack.c.l.b16 %v1764
      %v2538 = vunpack.c.l.b16 %v1765
      %v2539 = vunpack.c.l.b16 %v1766
      %v2540 = vunpack.c.l.b16 %v1767
      %v2541 = vunpack.c.l.b16 %v1768
      %v2542 = vunpack.c.l.b16 %v1769
      %v2543 = vunpack.c.l.b16 %v1770
      %v2544 = vunpack.c.l.b16 %v1771
      %v2545 = vunpack.c.l.b16 %v1772
      %v2546 = vunpack.c.l.b16 %v1773
      %v2547 = vunpack.c.l.b16 %v1774
      %v2548 = vunpack.c.l.b16 %v1775
      %v2549 = vunpack.c.l.b16 %v1776
      %v2550 = vunpack.c.l.b16 %v1777
      %v2551 = vunpack.c.l.b16 %v1778
      %v2552 = vunpack.c.l.b16 %v1779
      %v2553 = vunpack.c.l.b16 %v1780
      %v2554 = vunpack.c.l.b16 %v1781
      %v2555 = vunpack.c.l.b16 %v1782
      %v2556 = vunpack.c.l.b16 %v1783
      %v2557 = vunpack.c.l.b16 %v1784
      %v2558 = vunpack.c.l.b16 %v1785
      %v2559 = vunpack.c.l.b16 %v1786
      %v2560 = vunpack.c.l.b16 %v1787
      %v2561 = vunpack.c.l.b16 %v1788
      %v2562 = vunpack.c.l.b16 %v1789
      %v2563 = vunpack.c.l.b16 %v1790
      %v2564 = vunpack.c.l.b16 %v1791
      %v2565 = vpack.c.b16 %v2534, %v2533
      %v2566 = vpack.c.b16 %v2536, %v2535
      %v2567 = vpack.c.b16 %v2538, %v2537
      %v2568 = vpack.c.b16 %v2540, %v2539
      %v2569 = vpack.c.b16 %v2542, %v2541
      %v2570 = vpack.c.b16 %v2544, %v2543
      %v2571 = vpack.c.b16 %v2546, %v2545
      %v2572 = vpack.c.b16 %v2548, %v2547
      %v2573 = vpack.c.b16 %v2550, %v2549
      %v2574 = vpack.c.b16 %v2552, %v2551
      %v2575 = vpack.c.b16 %v2554, %v2553
      %v2576 = vpack.c.b16 %v2556, %v2555
      %v2577 = vpack.c.b16 %v2558, %v2557
      %v2578 = vpack.c.b16 %v2560, %v2559
      %v2579 = vpack.c.b16 %v2562, %v2561
      %v2580 = vpack.c.b16 %v2564, %v2563
      %v2613 = vunpack.c.l.b16 %v1792
      %v2614 = vunpack.c.l.b16 %v1793
      %v2615 = vunpack.c.l.b16 %v1794
      %v2616 = vunpack.c.l.b16 %v1795
      %v2617 = vunpack.c.l.b16 %v1796
      %v2618 = vunpack.c.l.b16 %v1797
      %v2619 = vunpack.c.l.b16 %v1798
      %v2620 = vunpack.c.l.b16 %v1799
      %v2621 = vunpack.c.l.b16 %v1800
      %v2622 = vunpack.c.l.b16 %v1801
      %v2623 = vunpack.c.l.b16 %v1802
      %v2624 = vunpack.c.l.b16 %v1803
      %v2625 = vunpack.c.l.b16 %v1804
      %v2626 = vunpack.c.l.b16 %v1805
      %v2627 = vunpack.c.l.b16 %v1806
      %v2628 = vunpack.c.l.b16 %v1807
      %v2629 = vpack.c.b16 %v2614, %v2613
      %v2630 = vpack.c.b16 %v2616, %v2615
      %v2631 = vpack.c.b16 %v2618, %v2617
      %v2632 = vpack.c.b16 %v2620, %v2619
      %v2633 = vpack.c.b16 %v2622, %v2621
      %v2634 = vpack.c.b16 %v2624, %v2623
      %v2635 = vpack.c.b16 %v2626, %v2625
      %v2636 = vpack.c.b16 %v2628, %v2627
      %2645 = vmatprep.subr.bf16.mxu0 0
      %2646 = vmatpush1.bf16.msra.mxu0 %v2636
      %2647 = vmatprep.subr.bf16.mxu0 0
      %2648 = vmatpush1.bf16.msra.mxu0 %v2635
      %2649 = vmatprep.subr.bf16.mxu0 0
      %2650 = vmatpush1.bf16.msra.mxu0 %v2634
      %2651 = vmatprep.subr.bf16.mxu0 0
      %2652 = vmatpush1.bf16.msra.mxu0 %v2633
      %2653 = vmatprep.subr.bf16.mxu0 0
      %2654 = vmatpush1.bf16.msra.mxu0 %v2632
      %2655 = vmatprep.subr.bf16.mxu0 0
      %2656 = vmatpush1.bf16.msra.mxu0 %v2631
      %2657 = vmatprep.subr.bf16.mxu0 0
      %2658 = vmatpush1.bf16.msra.mxu0 %v2630
      %2659 = vmatprep.subr.bf16.mxu0 0
      %2660 = vmatpush1.bf16.msra.mxu0 %v2629
      %2661 = vmatprep.subr.bf16.mxu0 0
      %2662 = vmatpush2.bf16.msra.mxu0 0
      %2663 = vmatprep.subr.bf16.mxu0 0
      %2664 = vmatpush2.bf16.msra.mxu0 0
      %2665 = vmatprep.subr.bf16.mxu0 0
      %2666 = vmatpush2.bf16.msra.mxu0 0
      %2667 = vmatprep.subr.bf16.mxu0 0
      %2668 = vmatpush2.bf16.msra.mxu0 0
      %2669 = vmatprep.subr.bf16.mxu0 0
      %2670 = vmatpush2.bf16.msra.mxu0 0
      %2671 = vmatprep.subr.bf16.mxu0 0
      %2672 = vmatpush2.bf16.msra.mxu0 0
      %2673 = vmatprep.subr.bf16.mxu0 0
      %2674 = vmatpush2.bf16.msra.mxu0 0
      %2675 = vmatprep.subr.bf16.mxu0 0
      %2676 = vmatpush2.bf16.msra.mxu0 0
      %2677 = vmatprep.mubr.bf16.mxu0 0
      %2678 = vmatmul.mubr.bf16.gmra.mxu0 %v2565
      %v2679 = vpop.f32.mrf.mxu0
      %v2680 = vadd.f32 %v2375, %v2679
      %v2681 = vpop.f32.mrf.mxu0
      %v2682 = vpop.f32.mrf.mxu0
      %v2683 = vadd.f32 %v2378, %v2682
      %v2684 = vpop.f32.mrf.mxu0
      %2685 = vmatprep.mubr.bf16.mxu0 0
      %2686 = vmatmul.mubr.bf16.gmra.mxu0 %v2566
      %v2687 = vpop.f32.mrf.mxu0
      %v2688 = vadd.f32 %v2383, %v2687
      %v2689 = vpop.f32.mrf.mxu0
      %v2690 = vpop.f32.mrf.mxu0
      %v2691 = vadd.f32 %v2386, %v2690
      %v2692 = vpop.f32.mrf.mxu0
      %2693 = vmatprep.mubr.bf16.mxu0 0
      %2694 = vmatmul.mubr.bf16.gmra.mxu0 %v2567
      %v2695 = vpop.f32.mrf.mxu0
      %v2696 = vadd.f32 %v2391, %v2695
      %v2697 = vpop.f32.mrf.mxu0
      %v2698 = vpop.f32.mrf.mxu0
      %v2699 = vadd.f32 %v2394, %v2698
      %v2700 = vpop.f32.mrf.mxu0
      %2701 = vmatprep.mubr.bf16.mxu0 0
      %2702 = vmatmul.mubr.bf16.gmra.mxu0 %v2568
      %v2703 = vpop.f32.mrf.mxu0
      %v2704 = vadd.f32 %v2399, %v2703
      %v2705 = vpop.f32.mrf.mxu0
      %v2706 = vpop.f32.mrf.mxu0
      %v2707 = vadd.f32 %v2402, %v2706
      %v2708 = vpop.f32.mrf.mxu0
      %2709 = vmatprep.mubr.bf16.mxu0 0
      %2710 = vmatmul.mubr.bf16.gmra.mxu0 %v2569
      %v2711 = vpop.f32.mrf.mxu0
      %v2712 = vadd.f32 %v2407, %v2711
      %v2713 = vpop.f32.mrf.mxu0
      %v2714 = vpop.f32.mrf.mxu0
      %v2715 = vadd.f32 %v2410, %v2714
      %v2716 = vpop.f32.mrf.mxu0
      %2717 = vmatprep.mubr.bf16.mxu0 0
      %2718 = vmatmul.mubr.bf16.gmra.mxu0 %v2570
      %v2719 = vpop.f32.mrf.mxu0
      %v2720 = vadd.f32 %v2415, %v2719
      %v2721 = vpop.f32.mrf.mxu0
      %v2722 = vpop.f32.mrf.mxu0
      %v2723 = vadd.f32 %v2418, %v2722
      %v2724 = vpop.f32.mrf.mxu0
      %2725 = vmatprep.mubr.bf16.mxu0 0
      %2726 = vmatmul.mubr.bf16.gmra.mxu0 %v2571
      %v2727 = vpop.f32.mrf.mxu0
      %v2728 = vadd.f32 %v2423, %v2727
      %v2729 = vpop.f32.mrf.mxu0
      %v2730 = vpop.f32.mrf.mxu0
      %v2731 = vadd.f32 %v2426, %v2730
      %v2732 = vpop.f32.mrf.mxu0
      %2733 = vmatprep.mubr.bf16.mxu0 0
      %2734 = vmatmul.mubr.bf16.gmra.mxu0 %v2572
      %v2735 = vpop.f32.mrf.mxu0
      %v2736 = vadd.f32 %v2431, %v2735
      %v2737 = vpop.f32.mrf.mxu0
      %v2738 = vpop.f32.mrf.mxu0
      %v2739 = vadd.f32 %v2434, %v2738
      %v2740 = vpop.f32.mrf.mxu0
      %2741 = vmatprep.mubr.bf16.mxu0 0
      %2742 = vmatmul.mubr.bf16.gmra.mxu0 %v2573
      %v2743 = vpop.f32.mrf.mxu0
      %v2744 = vadd.f32 %v2439, %v2743
      %v2745 = vpop.f32.mrf.mxu0
      %v2746 = vpop.f32.mrf.mxu0
      %v2747 = vadd.f32 %v2442, %v2746
      %v2748 = vpop.f32.mrf.mxu0
      %2749 = vmatprep.mubr.bf16.mxu0 0
      %2750 = vmatmul.mubr.bf16.gmra.mxu0 %v2574
      %v2751 = vpop.f32.mrf.mxu0
      %v2752 = vadd.f32 %v2447, %v2751
      %v2753 = vpop.f32.mrf.mxu0
      %v2754 = vpop.f32.mrf.mxu0
      %v2755 = vadd.f32 %v2450, %v2754
      %v2756 = vpop.f32.mrf.mxu0
      %2757 = vmatprep.mubr.bf16.mxu0 0
      %2758 = vmatmul.mubr.bf16.gmra.mxu0 %v2575
      %v2759 = vpop.f32.mrf.mxu0
      %v2760 = vadd.f32 %v2455, %v2759
      %v2761 = vpop.f32.mrf.mxu0
      %v2762 = vpop.f32.mrf.mxu0
      %v2763 = vadd.f32 %v2458, %v2762
      %v2764 = vpop.f32.mrf.mxu0
      %2765 = vmatprep.mubr.bf16.mxu0 0
      %2766 = vmatmul.mubr.bf16.gmra.mxu0 %v2576
      %v2767 = vpop.f32.mrf.mxu0
      %v2768 = vadd.f32 %v2463, %v2767
      %v2769 = vpop.f32.mrf.mxu0
      %v2770 = vpop.f32.mrf.mxu0
      %v2771 = vadd.f32 %v2466, %v2770
      %v2772 = vpop.f32.mrf.mxu0
      %2773 = vmatprep.mubr.bf16.mxu0 0
      %2774 = vmatmul.mubr.bf16.gmra.mxu0 %v2577
      %v2775 = vpop.f32.mrf.mxu0
      %v2776 = vadd.f32 %v2471, %v2775
      %v2777 = vpop.f32.mrf.mxu0
      %v2778 = vpop.f32.mrf.mxu0
      %v2779 = vadd.f32 %v2474, %v2778
      %v2780 = vpop.f32.mrf.mxu0
      %2781 = vmatprep.mubr.bf16.mxu0 0
      %2782 = vmatmul.mubr.bf16.gmra.mxu0 %v2578
      %v2783 = vpop.f32.mrf.mxu0
      %v2784 = vadd.f32 %v2479, %v2783
      %v2785 = vpop.f32.mrf.mxu0
      %v2786 = vpop.f32.mrf.mxu0
      %v2787 = vadd.f32 %v2482, %v2786
      %v2788 = vpop.f32.mrf.mxu0
      %2789 = vmatprep.mubr.bf16.mxu0 0
      %2790 = vmatmul.mubr.bf16.gmra.mxu0 %v2579
      %v2791 = vpop.f32.mrf.mxu0
      %v2792 = vadd.f32 %v2487, %v2791
      %v2793 = vpop.f32.mrf.mxu0
      %v2794 = vpop.f32.mrf.mxu0
      %v2795 = vadd.f32 %v2490, %v2794
      %v2796 = vpop.f32.mrf.mxu0
      %2797 = vmatprep.mubr.bf16.mxu0 0
      %2798 = vmatmul.mubr.bf16.gmra.mxu0 %v2580
      %v2799 = vpop.f32.mrf.mxu0
      %v2800 = vadd.f32 %v2495, %v2799
      %v2801 = vpop.f32.mrf.mxu0
      %v2802 = vpop.f32.mrf.mxu0
      %v2803 = vadd.f32 %v2498, %v2802
      %v2804 = vpop.f32.mrf.mxu0
      %2805 = vdwg.mxu0
      %v2806 = vld [vmem:[#allocation4] sm:$0xe]
      %v2807 = vld [vmem:[#allocation4 + $0xc] sm:$0xe]
      %v2808 = vld [vmem:[#allocation4 + $0x18] sm:$0xe]
      %v2809 = vld [vmem:[#allocation4 + $0x24] sm:$0xe]
      %v2810 = vld [vmem:[#allocation4 + $0x30] sm:$0xe]
      %v2811 = vld [vmem:[#allocation4 + $0x3c] sm:$0xe]
      %v2812 = vld [vmem:[#allocation4 + $0x48] sm:$0xe]
      %v2813 = vld [vmem:[#allocation4 + $0x54] sm:$0xe]
      %v2814 = vld [vmem:[#allocation4 + $0x60] sm:$0xe]
      %v2815 = vld [vmem:[#allocation4 + $0x6c] sm:$0xe]
      %v2816 = vld [vmem:[#allocation4 + $0x78] sm:$0xe]
      %v2817 = vld [vmem:[#allocation4 + $0x84] sm:$0xe]
      %v2818 = vld [vmem:[#allocation4 + $0x90] sm:$0xe]
      %v2819 = vld [vmem:[#allocation4 + $0x9c] sm:$0xe]
      %v2820 = vld [vmem:[#allocation4 + $0xa8] sm:$0xe]
      %v2821 = vld [vmem:[#allocation4 + $0xb4] sm:$0xe]
      %vm2854 = vcmask 1042432
      %vm2855 = vcmask 1046532
      %vm2856 = vmor %vm2854, %vm2855
      %v2857 = vrot.slane %v2806, 5
      %v2858 = vrot.slane %v2857, 4
      %v2859 = vrot.slane %v1761, 5
      %v2860 = vsel %vm2856, %v2858, %v2859
      %v2861 = vrot.slane %v2859, 4
      %v2862 = vrot.slane %v1808, 5
      %v2863 = vsel %vm2856, %v2861, %v2862
      %v2864 = vrot.slane %v2807, 5
      %v2865 = vrot.slane %v2864, 4
      %v2866 = vrot.slane %v1763, 5
      %v2867 = vsel %vm2856, %v2865, %v2866
      %v2868 = vrot.slane %v2866, 4
      %v2869 = vrot.slane %v1809, 5
      %v2870 = vsel %vm2856, %v2868, %v2869
      %v2871 = vrot.slane %v2808, 5
      %v2872 = vrot.slane %v2871, 4
      %v2873 = vrot.slane %v1765, 5
      %v2874 = vsel %vm2856, %v2872, %v2873
      %v2875 = vrot.slane %v2873, 4
      %v2876 = vrot.slane %v1810, 5
      %v2877 = vsel %vm2856, %v2875, %v2876
      %v2878 = vrot.slane %v2809, 5
      %v2879 = vrot.slane %v2878, 4
      %v2880 = vrot.slane %v1767, 5
      %v2881 = vsel %vm2856, %v2879, %v2880
      %v2882 = vrot.slane %v2880, 4
      %v2883 = vrot.slane %v1811, 5
      %v2884 = vsel %vm2856, %v2882, %v2883
      %v2885 = vrot.slane %v2810, 5
      %v2886 = vrot.slane %v2885, 4
      %v2887 = vrot.slane %v1769, 5
      %v2888 = vsel %vm2856, %v2886, %v2887
      %v2889 = vrot.slane %v2887, 4
      %v2890 = vrot.slane %v1812, 5
      %v2891 = vsel %vm2856, %v2889, %v2890
      %v2892 = vrot.slane %v2811, 5
      %v2893 = vrot.slane %v2892, 4
      %v2894 = vrot.slane %v1771, 5
      %v2895 = vsel %vm2856, %v2893, %v2894
      %v2896 = vrot.slane %v2894, 4
      %v2897 = vrot.slane %v1813, 5
      %v2898 = vsel %vm2856, %v2896, %v2897
      %v2899 = vrot.slane %v2812, 5
      %v2900 = vrot.slane %v2899, 4
      %v2901 = vrot.slane %v1773, 5
      %v2902 = vsel %vm2856, %v2900, %v2901
      %v2903 = vrot.slane %v2901, 4
      %v2904 = vrot.slane %v1814, 5
      %v2905 = vsel %vm2856, %v2903, %v2904
      %v2906 = vrot.slane %v2813, 5
      %v2907 = vrot.slane %v2906, 4
      %v2908 = vrot.slane %v1775, 5
      %v2909 = vsel %vm2856, %v2907, %v2908
      %v2910 = vrot.slane %v2908, 4
      %v2911 = vrot.slane %v1815, 5
      %v2912 = vsel %vm2856, %v2910, %v2911
      %v2913 = vrot.slane %v2814, 5
      %v2914 = vrot.slane %v2913, 4
      %v2915 = vrot.slane %v1777, 5
      %v2916 = vsel %vm2856, %v2914, %v2915
      %v2917 = vrot.slane %v2915, 4
      %v2918 = vrot.slane %v1816, 5
      %v2919 = vsel %vm2856, %v2917, %v2918
      %v2920 = vrot.slane %v2815, 5
      %v2921 = vrot.slane %v2920, 4
      %v2922 = vrot.slane %v1779, 5
      %v2923 = vsel %vm2856, %v2921, %v2922
      %v2924 = vrot.slane %v2922, 4
      %v2925 = vrot.slane %v1817, 5
      %v2926 = vsel %vm2856, %v2924, %v2925
      %v2927 = vrot.slane %v2816, 5
      %v2928 = vrot.slane %v2927, 4
      %v2929 = vrot.slane %v1781, 5
      %v2930 = vsel %vm2856, %v2928, %v2929
      %v2931 = vrot.slane %v2929, 4
      %v2932 = vrot.slane %v1818, 5
      %v2933 = vsel %vm2856, %v2931, %v2932
      %v2934 = vrot.slane %v2817, 5
      %v2935 = vrot.slane %v2934, 4
      %v2936 = vrot.slane %v1783, 5
      %v2937 = vsel %vm2856, %v2935, %v2936
      %v2938 = vrot.slane %v2936, 4
      %v2939 = vrot.slane %v1819, 5
      %v2940 = vsel %vm2856, %v2938, %v2939
      %v2941 = vrot.slane %v2818, 5
      %v2942 = vrot.slane %v2941, 4
      %v2943 = vrot.slane %v1785, 5
      %v2944 = vsel %vm2856, %v2942, %v2943
      %v2945 = vrot.slane %v2943, 4
      %v2946 = vrot.slane %v1820, 5
      %v2947 = vsel %vm2856, %v2945, %v2946
      %v2948 = vrot.slane %v2819, 5
      %v2949 = vrot.slane %v2948, 4
      %v2950 = vrot.slane %v1787, 5
      %v2951 = vsel %vm2856, %v2949, %v2950
      %v2952 = vrot.slane %v2950, 4
      %v2953 = vrot.slane %v1821, 5
      %v2954 = vsel %vm2856, %v2952, %v2953
      %v2955 = vrot.slane %v2820, 5
      %v2956 = vrot.slane %v2955, 4
      %v2957 = vrot.slane %v1789, 5
      %v2958 = vsel %vm2856, %v2956, %v2957
      %v2959 = vrot.slane %v2957, 4
      %v2960 = vrot.slane %v1822, 5
      %v2961 = vsel %vm2856, %v2959, %v2960
      %v2962 = vrot.slane %v2821, 5
      %v2963 = vrot.slane %v2962, 4
      %v2964 = vrot.slane %v1791, 5
      %v2965 = vsel %vm2856, %v2963, %v2964
      %v2966 = vrot.slane %v2964, 4
      %v2967 = vrot.slane %v1823, 5
      %v2968 = vsel %vm2856, %v2966, %v2967
      %s2969 = scalar_lea.vmem %s2, 128
      %v2970 = vld [vmem:[%s2969] sm:$0xf]
      %v2971 = vld [vmem:[%s2969 + $0x4] sm:$0xf]
      %v2972 = vld [vmem:[%s2969 + $0x8] sm:$0xf]
      %v2973 = vld [vmem:[%s2969 + $0xc] sm:$0xf]
      %v2974 = vld [vmem:[%s2969 + $0x10] sm:$0xf]
      %v2975 = vld [vmem:[%s2969 + $0x14] sm:$0xf]
      %v2976 = vld [vmem:[%s2969 + $0x18] sm:$0xf]
      %v2977 = vld [vmem:[%s2969 + $0x1c] sm:$0xf]
      %v2978 = vld [vmem:[%s2969 + $0x20] sm:$0xf]
      %v2979 = vld [vmem:[%s2969 + $0x24] sm:$0xf]
      %v2980 = vld [vmem:[%s2969 + $0x28] sm:$0xf]
      %v2981 = vld [vmem:[%s2969 + $0x2c] sm:$0xf]
      %v2982 = vld [vmem:[%s2969 + $0x30] sm:$0xf]
      %v2983 = vld [vmem:[%s2969 + $0x34] sm:$0xf]
      %v2984 = vld [vmem:[%s2969 + $0x38] sm:$0xf]
      %v2985 = vld [vmem:[%s2969 + $0x3c] sm:$0xf]
      %v2986 = vunpack.c.l.b16 %v2860
      %v2987 = vunpack.c.l.b16 %v2863
      %v2988 = vunpack.c.l.b16 %v2867
      %v2989 = vunpack.c.l.b16 %v2870
      %v2990 = vunpack.c.l.b16 %v2874
      %v2991 = vunpack.c.l.b16 %v2877
      %v2992 = vunpack.c.l.b16 %v2881
      %v2993 = vunpack.c.l.b16 %v2884
      %v2994 = vunpack.c.l.b16 %v2888
      %v2995 = vunpack.c.l.b16 %v2891
      %v2996 = vunpack.c.l.b16 %v2895
      %v2997 = vunpack.c.l.b16 %v2898
      %v2998 = vunpack.c.l.b16 %v2902
      %v2999 = vunpack.c.l.b16 %v2905
      %v3000 = vunpack.c.l.b16 %v2909
      %v3001 = vunpack.c.l.b16 %v2912
      %v3002 = vunpack.c.l.b16 %v2916
      %v3003 = vunpack.c.l.b16 %v2919
      %v3004 = vunpack.c.l.b16 %v2923
      %v3005 = vunpack.c.l.b16 %v2926
      %v3006 = vunpack.c.l.b16 %v2930
      %v3007 = vunpack.c.l.b16 %v2933
      %v3008 = vunpack.c.l.b16 %v2937
      %v3009 = vunpack.c.l.b16 %v2940
      %v3010 = vunpack.c.l.b16 %v2944
      %v3011 = vunpack.c.l.b16 %v2947
      %v3012 = vunpack.c.l.b16 %v2951
      %v3013 = vunpack.c.l.b16 %v2954
      %v3014 = vunpack.c.l.b16 %v2958
      %v3015 = vunpack.c.l.b16 %v2961
      %v3016 = vunpack.c.l.b16 %v2965
      %v3017 = vunpack.c.l.b16 %v2968
      %v3018 = vpack.c.b16 %v2987, %v2986
      %v3019 = vpack.c.b16 %v2989, %v2988
      %v3020 = vpack.c.b16 %v2991, %v2990
      %v3021 = vpack.c.b16 %v2993, %v2992
      %v3022 = vpack.c.b16 %v2995, %v2994
      %v3023 = vpack.c.b16 %v2997, %v2996
      %v3024 = vpack.c.b16 %v2999, %v2998
      %v3025 = vpack.c.b16 %v3001, %v3000
      %v3026 = vpack.c.b16 %v3003, %v3002
      %v3027 = vpack.c.b16 %v3005, %v3004
      %v3028 = vpack.c.b16 %v3007, %v3006
      %v3029 = vpack.c.b16 %v3009, %v3008
      %v3030 = vpack.c.b16 %v3011, %v3010
      %v3031 = vpack.c.b16 %v3013, %v3012
      %v3032 = vpack.c.b16 %v3015, %v3014
      %v3033 = vpack.c.b16 %v3017, %v3016
      %v3066 = vunpack.c.l.b16 %v2970
      %v3067 = vunpack.c.l.b16 %v2971
      %v3068 = vunpack.c.l.b16 %v2972
      %v3069 = vunpack.c.l.b16 %v2973
      %v3070 = vunpack.c.l.b16 %v2974
      %v3071 = vunpack.c.l.b16 %v2975
      %v3072 = vunpack.c.l.b16 %v2976
      %v3073 = vunpack.c.l.b16 %v2977
      %v3074 = vunpack.c.l.b16 %v2978
      %v3075 = vunpack.c.l.b16 %v2979
      %v3076 = vunpack.c.l.b16 %v2980
      %v3077 = vunpack.c.l.b16 %v2981
      %v3078 = vunpack.c.l.b16 %v2982
      %v3079 = vunpack.c.l.b16 %v2983
      %v3080 = vunpack.c.l.b16 %v2984
      %v3081 = vunpack.c.l.b16 %v2985
      %v3082 = vpack.c.b16 %v3067, %v3066
      %v3083 = vpack.c.b16 %v3069, %v3068
      %v3084 = vpack.c.b16 %v3071, %v3070
      %v3085 = vpack.c.b16 %v3073, %v3072
      %v3086 = vpack.c.b16 %v3075, %v3074
      %v3087 = vpack.c.b16 %v3077, %v3076
      %v3088 = vpack.c.b16 %v3079, %v3078
      %v3089 = vpack.c.b16 %v3081, %v3080
      %3098 = vmatprep.subr.bf16.mxu0 0
      %3099 = vmatpush1.bf16.msra.mxu0 %v3089
      %3100 = vmatprep.subr.bf16.mxu0 0
      %3101 = vmatpush1.bf16.msra.mxu0 %v3088
      %3102 = vmatprep.subr.bf16.mxu0 0
      %3103 = vmatpush1.bf16.msra.mxu0 %v3087
      %3104 = vmatprep.subr.bf16.mxu0 0
      %3105 = vmatpush1.bf16.msra.mxu0 %v3086
      %3106 = vmatprep.subr.bf16.mxu0 0
      %3107 = vmatpush1.bf16.msra.mxu0 %v3085
      %3108 = vmatprep.subr.bf16.mxu0 0
      %3109 = vmatpush1.bf16.msra.mxu0 %v3084
      %3110 = vmatprep.subr.bf16.mxu0 0
      %3111 = vmatpush1.bf16.msra.mxu0 %v3083
      %3112 = vmatprep.subr.bf16.mxu0 0
      %3113 = vmatpush1.bf16.msra.mxu0 %v3082
      %3114 = vmatprep.subr.bf16.mxu0 0
      %3115 = vmatpush2.bf16.msra.mxu0 0
      %3116 = vmatprep.subr.bf16.mxu0 0
      %3117 = vmatpush2.bf16.msra.mxu0 0
      %3118 = vmatprep.subr.bf16.mxu0 0
      %3119 = vmatpush2.bf16.msra.mxu0 0
      %3120 = vmatprep.subr.bf16.mxu0 0
      %3121 = vmatpush2.bf16.msra.mxu0 0
      %3122 = vmatprep.subr.bf16.mxu0 0
      %3123 = vmatpush2.bf16.msra.mxu0 0
      %3124 = vmatprep.subr.bf16.mxu0 0
      %3125 = vmatpush2.bf16.msra.mxu0 0
      %3126 = vmatprep.subr.bf16.mxu0 0
      %3127 = vmatpush2.bf16.msra.mxu0 0
      %3128 = vmatprep.subr.bf16.mxu0 0
      %3129 = vmatpush2.bf16.msra.mxu0 0
      %3130 = vmatprep.mubr.bf16.mxu0 0
      %3131 = vmatmul.mubr.bf16.gmra.mxu0 %v3018
      %v3132 = vpop.f32.mrf.mxu0
      %v3133 = vadd.f32 0.0, %v3132
      %v3134 = vpop.f32.mrf.mxu0
      %v3135 = vpop.f32.mrf.mxu0
      %v3136 = vadd.f32 0.0, %v3135
      %v3137 = vpop.f32.mrf.mxu0
      %3138 = vmatprep.mubr.bf16.mxu0 0
      %3139 = vmatmul.mubr.bf16.gmra.mxu0 %v3019
      %v3140 = vpop.f32.mrf.mxu0
      %v3141 = vadd.f32 0.0, %v3140
      %v3142 = vpop.f32.mrf.mxu0
      %v3143 = vpop.f32.mrf.mxu0
      %v3144 = vadd.f32 0.0, %v3143
      %v3145 = vpop.f32.mrf.mxu0
      %3146 = vmatprep.mubr.bf16.mxu0 0
      %3147 = vmatmul.mubr.bf16.gmra.mxu0 %v3020
      %v3148 = vpop.f32.mrf.mxu0
      %v3149 = vadd.f32 0.0, %v3148
      %v3150 = vpop.f32.mrf.mxu0
      %v3151 = vpop.f32.mrf.mxu0
      %v3152 = vadd.f32 0.0, %v3151
      %v3153 = vpop.f32.mrf.mxu0
      %3154 = vmatprep.mubr.bf16.mxu0 0
      %3155 = vmatmul.mubr.bf16.gmra.mxu0 %v3021
      %v3156 = vpop.f32.mrf.mxu0
      %v3157 = vadd.f32 0.0, %v3156
      %v3158 = vpop.f32.mrf.mxu0
      %v3159 = vpop.f32.mrf.mxu0
      %v3160 = vadd.f32 0.0, %v3159
      %v3161 = vpop.f32.mrf.mxu0
      %3162 = vmatprep.mubr.bf16.mxu0 0
      %3163 = vmatmul.mubr.bf16.gmra.mxu0 %v3022
      %v3164 = vpop.f32.mrf.mxu0
      %v3165 = vadd.f32 0.0, %v3164
      %v3166 = vpop.f32.mrf.mxu0
      %v3167 = vpop.f32.mrf.mxu0
      %v3168 = vadd.f32 0.0, %v3167
      %v3169 = vpop.f32.mrf.mxu0
      %3170 = vmatprep.mubr.bf16.mxu0 0
      %3171 = vmatmul.mubr.bf16.gmra.mxu0 %v3023
      %v3172 = vpop.f32.mrf.mxu0
      %v3173 = vadd.f32 0.0, %v3172
      %v3174 = vpop.f32.mrf.mxu0
      %v3175 = vpop.f32.mrf.mxu0
      %v3176 = vadd.f32 0.0, %v3175
      %v3177 = vpop.f32.mrf.mxu0
      %3178 = vmatprep.mubr.bf16.mxu0 0
      %3179 = vmatmul.mubr.bf16.gmra.mxu0 %v3024
      %v3180 = vpop.f32.mrf.mxu0
      %v3181 = vadd.f32 0.0, %v3180
      %v3182 = vpop.f32.mrf.mxu0
      %v3183 = vpop.f32.mrf.mxu0
      %v3184 = vadd.f32 0.0, %v3183
      %v3185 = vpop.f32.mrf.mxu0
      %3186 = vmatprep.mubr.bf16.mxu0 0
      %3187 = vmatmul.mubr.bf16.gmra.mxu0 %v3025
      %v3188 = vpop.f32.mrf.mxu0
      %v3189 = vadd.f32 0.0, %v3188
      %v3190 = vpop.f32.mrf.mxu0
      %v3191 = vpop.f32.mrf.mxu0
      %v3192 = vadd.f32 0.0, %v3191
      %v3193 = vpop.f32.mrf.mxu0
      %3194 = vmatprep.mubr.bf16.mxu0 0
      %3195 = vmatmul.mubr.bf16.gmra.mxu0 %v3026
      %v3196 = vpop.f32.mrf.mxu0
      %v3197 = vadd.f32 0.0, %v3196
      %v3198 = vpop.f32.mrf.mxu0
      %v3199 = vpop.f32.mrf.mxu0
      %v3200 = vadd.f32 0.0, %v3199
      %v3201 = vpop.f32.mrf.mxu0
      %3202 = vmatprep.mubr.bf16.mxu0 0
      %3203 = vmatmul.mubr.bf16.gmra.mxu0 %v3027
      %v3204 = vpop.f32.mrf.mxu0
      %v3205 = vadd.f32 0.0, %v3204
      %v3206 = vpop.f32.mrf.mxu0
      %v3207 = vpop.f32.mrf.mxu0
      %v3208 = vadd.f32 0.0, %v3207
      %v3209 = vpop.f32.mrf.mxu0
      %3210 = vmatprep.mubr.bf16.mxu0 0
      %3211 = vmatmul.mubr.bf16.gmra.mxu0 %v3028
      %v3212 = vpop.f32.mrf.mxu0
      %v3213 = vadd.f32 0.0, %v3212
      %v3214 = vpop.f32.mrf.mxu0
      %v3215 = vpop.f32.mrf.mxu0
      %v3216 = vadd.f32 0.0, %v3215
      %v3217 = vpop.f32.mrf.mxu0
      %3218 = vmatprep.mubr.bf16.mxu0 0
      %3219 = vmatmul.mubr.bf16.gmra.mxu0 %v3029
      %v3220 = vpop.f32.mrf.mxu0
      %v3221 = vadd.f32 0.0, %v3220
      %v3222 = vpop.f32.mrf.mxu0
      %v3223 = vpop.f32.mrf.mxu0
      %v3224 = vadd.f32 0.0, %v3223
      %v3225 = vpop.f32.mrf.mxu0
      %3226 = vmatprep.mubr.bf16.mxu0 0
      %3227 = vmatmul.mubr.bf16.gmra.mxu0 %v3030
      %v3228 = vpop.f32.mrf.mxu0
      %v3229 = vadd.f32 0.0, %v3228
      %v3230 = vpop.f32.mrf.mxu0
      %v3231 = vpop.f32.mrf.mxu0
      %v3232 = vadd.f32 0.0, %v3231
      %v3233 = vpop.f32.mrf.mxu0
      %3234 = vmatprep.mubr.bf16.mxu0 0
      %3235 = vmatmul.mubr.bf16.gmra.mxu0 %v3031
      %v3236 = vpop.f32.mrf.mxu0
      %v3237 = vadd.f32 0.0, %v3236
      %v3238 = vpop.f32.mrf.mxu0
      %v3239 = vpop.f32.mrf.mxu0
      %v3240 = vadd.f32 0.0, %v3239
      %v3241 = vpop.f32.mrf.mxu0
      %3242 = vmatprep.mubr.bf16.mxu0 0
      %3243 = vmatmul.mubr.bf16.gmra.mxu0 %v3032
      %v3244 = vpop.f32.mrf.mxu0
      %v3245 = vadd.f32 0.0, %v3244
      %v3246 = vpop.f32.mrf.mxu0
      %v3247 = vpop.f32.mrf.mxu0
      %v3248 = vadd.f32 0.0, %v3247
      %v3249 = vpop.f32.mrf.mxu0
      %3250 = vmatprep.mubr.bf16.mxu0 0
      %3251 = vmatmul.mubr.bf16.gmra.mxu0 %v3033
      %v3252 = vpop.f32.mrf.mxu0
      %v3253 = vadd.f32 0.0, %v3252
      %v3254 = vpop.f32.mrf.mxu0
      %v3255 = vpop.f32.mrf.mxu0
      %v3256 = vadd.f32 0.0, %v3255
      %v3257 = vpop.f32.mrf.mxu0
      %3258 = vdwg.mxu0
      %v3259 = vadd.f32 %v2680, %v3133
      %v3260 = vadd.f32 %v2683, %v3136
      %v3261 = vadd.f32 %v2688, %v3141
      %v3262 = vadd.f32 %v2691, %v3144
      %v3263 = vadd.f32 %v2696, %v3149
      %v3264 = vadd.f32 %v2699, %v3152
      %v3265 = vadd.f32 %v2704, %v3157
      %v3266 = vadd.f32 %v2707, %v3160
      %v3267 = vadd.f32 %v2712, %v3165
      %v3268 = vadd.f32 %v2715, %v3168
      %v3269 = vadd.f32 %v2720, %v3173
      %v3270 = vadd.f32 %v2723, %v3176
      %v3271 = vadd.f32 %v2728, %v3181
      %v3272 = vadd.f32 %v2731, %v3184
      %v3273 = vadd.f32 %v2736, %v3189
      %v3274 = vadd.f32 %v2739, %v3192
      %v3275 = vadd.f32 %v2744, %v3197
      %v3276 = vadd.f32 %v2747, %v3200
      %v3277 = vadd.f32 %v2752, %v3205
      %v3278 = vadd.f32 %v2755, %v3208
      %v3279 = vadd.f32 %v2760, %v3213
      %v3280 = vadd.f32 %v2763, %v3216
      %v3281 = vadd.f32 %v2768, %v3221
      %v3282 = vadd.f32 %v2771, %v3224
      %v3283 = vadd.f32 %v2776, %v3229
      %v3284 = vadd.f32 %v2779, %v3232
      %v3285 = vadd.f32 %v2784, %v3237
      %v3286 = vadd.f32 %v2787, %v3240
      %v3287 = vadd.f32 %v2792, %v3245
      %v3288 = vadd.f32 %v2795, %v3248
      %v3289 = vadd.f32 %v2800, %v3253
      %v3290 = vadd.f32 %v2803, %v3256
      %s3291 = scalar_lea.vmem [#allocation4], 12
      %v3292 = vld [vmem:[%s3291] sm:$0xf]
      %v3293 = vld [vmem:[%s3291 + $0x4] sm:$0xf]
      %v3294 = vld [vmem:[%s3291 + $0xc] sm:$0xf]
      %v3295 = vld [vmem:[%s3291 + $0x10] sm:$0xf]
      %v3296 = vld [vmem:[%s3291 + $0x18] sm:$0xf]
      %v3297 = vld [vmem:[%s3291 + $0x1c] sm:$0xf]
      %v3298 = vld [vmem:[%s3291 + $0x24] sm:$0xf]
      %v3299 = vld [vmem:[%s3291 + $0x28] sm:$0xf]
      %v3300 = vld [vmem:[%s3291 + $0x30] sm:$0xf]
      %v3301 = vld [vmem:[%s3291 + $0x34] sm:$0xf]
      %v3302 = vld [vmem:[%s3291 + $0x3c] sm:$0xf]
      %v3303 = vld [vmem:[%s3291 + $0x40] sm:$0xf]
      %v3304 = vld [vmem:[%s3291 + $0x48] sm:$0xf]
      %v3305 = vld [vmem:[%s3291 + $0x4c] sm:$0xf]
      %v3306 = vld [vmem:[%s3291 + $0x54] sm:$0xf]
      %v3307 = vld [vmem:[%s3291 + $0x58] sm:$0xf]
      %v3308 = vld [vmem:[%s3291 + $0x60] sm:$0xf]
      %v3309 = vld [vmem:[%s3291 + $0x64] sm:$0xf]
      %v3310 = vld [vmem:[%s3291 + $0x6c] sm:$0xf]
      %v3311 = vld [vmem:[%s3291 + $0x70] sm:$0xf]
      %v3312 = vld [vmem:[%s3291 + $0x78] sm:$0xf]
      %v3313 = vld [vmem:[%s3291 + $0x7c] sm:$0xf]
      %v3314 = vld [vmem:[%s3291 + $0x84] sm:$0xf]
      %v3315 = vld [vmem:[%s3291 + $0x88] sm:$0xf]
      %v3316 = vld [vmem:[%s3291 + $0x90] sm:$0xf]
      %v3317 = vld [vmem:[%s3291 + $0x94] sm:$0xf]
      %v3318 = vld [vmem:[%s3291 + $0x9c] sm:$0xf]
      %v3319 = vld [vmem:[%s3291 + $0xa0] sm:$0xf]
      %v3320 = vld [vmem:[%s3291 + $0xa8] sm:$0xf]
      %v3321 = vld [vmem:[%s3291 + $0xac] sm:$0xf]
      %v3322 = vld [vmem:[%s3291 + $0xb4] sm:$0xf]
      %v3323 = vld [vmem:[%s3291 + $0xb8] sm:$0xf]
      %s3324 = scalar_lea.vmem %s2, 192
      %v3325 = vld [vmem:[%s3324] sm:$0xf]
      %v3326 = vld [vmem:[%s3324 + $0x4] sm:$0xf]
      %v3327 = vld [vmem:[%s3324 + $0x8] sm:$0xf]
      %v3328 = vld [vmem:[%s3324 + $0xc] sm:$0xf]
      %v3329 = vld [vmem:[%s3324 + $0x10] sm:$0xf]
      %v3330 = vld [vmem:[%s3324 + $0x14] sm:$0xf]
      %v3331 = vld [vmem:[%s3324 + $0x18] sm:$0xf]
      %v3332 = vld [vmem:[%s3324 + $0x1c] sm:$0xf]
      %v3333 = vld [vmem:[%s3324 + $0x20] sm:$0xf]
      %v3334 = vld [vmem:[%s3324 + $0x24] sm:$0xf]
      %v3335 = vld [vmem:[%s3324 + $0x28] sm:$0xf]
      %v3336 = vld [vmem:[%s3324 + $0x2c] sm:$0xf]
      %v3337 = vld [vmem:[%s3324 + $0x30] sm:$0xf]
      %v3338 = vld [vmem:[%s3324 + $0x34] sm:$0xf]
      %v3339 = vld [vmem:[%s3324 + $0x38] sm:$0xf]
      %v3340 = vld [vmem:[%s3324 + $0x3c] sm:$0xf]
      %v3373 = vunpack.c.l.b16 %v3292
      %v3374 = vunpack.c.l.b16 %v3293
      %v3375 = vunpack.c.l.b16 %v3294
      %v3376 = vunpack.c.l.b16 %v3295
      %v3377 = vunpack.c.l.b16 %v3296
      %v3378 = vunpack.c.l.b16 %v3297
      %v3379 = vunpack.c.l.b16 %v3298
      %v3380 = vunpack.c.l.b16 %v3299
      %v3381 = vunpack.c.l.b16 %v3300
      %v3382 = vunpack.c.l.b16 %v3301
      %v3383 = vunpack.c.l.b16 %v3302
      %v3384 = vunpack.c.l.b16 %v3303
      %v3385 = vunpack.c.l.b16 %v3304
      %v3386 = vunpack.c.l.b16 %v3305
      %v3387 = vunpack.c.l.b16 %v3306
      %v3388 = vunpack.c.l.b16 %v3307
      %v3389 = vunpack.c.l.b16 %v3308
      %v3390 = vunpack.c.l.b16 %v3309
      %v3391 = vunpack.c.l.b16 %v3310
      %v3392 = vunpack.c.l.b16 %v3311
      %v3393 = vunpack.c.l.b16 %v3312
      %v3394 = vunpack.c.l.b16 %v3313
      %v3395 = vunpack.c.l.b16 %v3314
      %v3396 = vunpack.c.l.b16 %v3315
      %v3397 = vunpack.c.l.b16 %v3316
      %v3398 = vunpack.c.l.b16 %v3317
      %v3399 = vunpack.c.l.b16 %v3318
      %v3400 = vunpack.c.l.b16 %v3319
      %v3401 = vunpack.c.l.b16 %v3320
      %v3402 = vunpack.c.l.b16 %v3321
      %v3403 = vunpack.c.l.b16 %v3322
      %v3404 = vunpack.c.l.b16 %v3323
      %v3405 = vpack.c.b16 %v3374, %v3373
      %v3406 = vpack.c.b16 %v3376, %v3375
      %v3407 = vpack.c.b16 %v3378, %v3377
      %v3408 = vpack.c.b16 %v3380, %v3379
      %v3409 = vpack.c.b16 %v3382, %v3381
      %v3410 = vpack.c.b16 %v3384, %v3383
      %v3411 = vpack.c.b16 %v3386, %v3385
      %v3412 = vpack.c.b16 %v3388, %v3387
      %v3413 = vpack.c.b16 %v3390, %v3389
      %v3414 = vpack.c.b16 %v3392, %v3391
      %v3415 = vpack.c.b16 %v3394, %v3393
      %v3416 = vpack.c.b16 %v3396, %v3395
      %v3417 = vpack.c.b16 %v3398, %v3397
      %v3418 = vpack.c.b16 %v3400, %v3399
      %v3419 = vpack.c.b16 %v3402, %v3401
      %v3420 = vpack.c.b16 %v3404, %v3403
      %v3453 = vunpack.c.l.b16 %v3325
      %v3454 = vunpack.c.l.b16 %v3326
      %v3455 = vunpack.c.l.b16 %v3327
      %v3456 = vunpack.c.l.b16 %v3328
      %v3457 = vunpack.c.l.b16 %v3329
      %v3458 = vunpack.c.l.b16 %v3330
      %v3459 = vunpack.c.l.b16 %v3331
      %v3460 = vunpack.c.l.b16 %v3332
      %v3461 = vunpack.c.l.b16 %v3333
      %v3462 = vunpack.c.l.b16 %v3334
      %v3463 = vunpack.c.l.b16 %v3335
      %v3464 = vunpack.c.l.b16 %v3336
      %v3465 = vunpack.c.l.b16 %v3337
      %v3466 = vunpack.c.l.b16 %v3338
      %v3467 = vunpack.c.l.b16 %v3339
      %v3468 = vunpack.c.l.b16 %v3340
      %v3469 = vpack.c.b16 %v3454, %v3453
      %v3470 = vpack.c.b16 %v3456, %v3455
      %v3471 = vpack.c.b16 %v3458, %v3457
      %v3472 = vpack.c.b16 %v3460, %v3459
      %v3473 = vpack.c.b16 %v3462, %v3461
      %v3474 = vpack.c.b16 %v3464, %v3463
      %v3475 = vpack.c.b16 %v3466, %v3465
      %v3476 = vpack.c.b16 %v3468, %v3467
      %3485 = vmatprep.subr.bf16.mxu0 0
      %3486 = vmatpush1.bf16.msra.mxu0 %v3476
      %3487 = vmatprep.subr.bf16.mxu0 0
      %3488 = vmatpush1.bf16.msra.mxu0 %v3475
      %3489 = vmatprep.subr.bf16.mxu0 0
      %3490 = vmatpush1.bf16.msra.mxu0 %v3474
      %3491 = vmatprep.subr.bf16.mxu0 0
      %3492 = vmatpush1.bf16.msra.mxu0 %v3473
      %3493 = vmatprep.subr.bf16.mxu0 0
      %3494 = vmatpush1.bf16.msra.mxu0 %v3472
      %3495 = vmatprep.subr.bf16.mxu0 0
      %3496 = vmatpush1.bf16.msra.mxu0 %v3471
      %3497 = vmatprep.subr.bf16.mxu0 0
      %3498 = vmatpush1.bf16.msra.mxu0 %v3470
      %3499 = vmatprep.subr.bf16.mxu0 0
      %3500 = vmatpush1.bf16.msra.mxu0 %v3469
      %3501 = vmatprep.subr.bf16.mxu0 0
      %3502 = vmatpush2.bf16.msra.mxu0 0
      %3503 = vmatprep.subr.bf16.mxu0 0
      %3504 = vmatpush2.bf16.msra.mxu0 0
      %3505 = vmatprep.subr.bf16.mxu0 0
      %3506 = vmatpush2.bf16.msra.mxu0 0
      %3507 = vmatprep.subr.bf16.mxu0 0
      %3508 = vmatpush2.bf16.msra.mxu0 0
      %3509 = vmatprep.subr.bf16.mxu0 0
      %3510 = vmatpush2.bf16.msra.mxu0 0
      %3511 = vmatprep.subr.bf16.mxu0 0
      %3512 = vmatpush2.bf16.msra.mxu0 0
      %3513 = vmatprep.subr.bf16.mxu0 0
      %3514 = vmatpush2.bf16.msra.mxu0 0
      %3515 = vmatprep.subr.bf16.mxu0 0
      %3516 = vmatpush2.bf16.msra.mxu0 0
      %3517 = vmatprep.mubr.bf16.mxu0 0
      %3518 = vmatmul.mubr.bf16.gmra.mxu0 %v3405
      %v3519 = vpop.f32.mrf.mxu0
      %v3520 = vadd.f32 0.0, %v3519
      %v3521 = vpop.f32.mrf.mxu0
      %v3522 = vpop.f32.mrf.mxu0
      %v3523 = vadd.f32 0.0, %v3522
      %v3524 = vpop.f32.mrf.mxu0
      %3525 = vmatprep.mubr.bf16.mxu0 0
      %3526 = vmatmul.mubr.bf16.gmra.mxu0 %v3406
      %v3527 = vpop.f32.mrf.mxu0
      %v3528 = vadd.f32 0.0, %v3527
      %v3529 = vpop.f32.mrf.mxu0
      %v3530 = vpop.f32.mrf.mxu0
      %v3531 = vadd.f32 0.0, %v3530
      %v3532 = vpop.f32.mrf.mxu0
      %3533 = vmatprep.mubr.bf16.mxu0 0
      %3534 = vmatmul.mubr.bf16.gmra.mxu0 %v3407
      %v3535 = vpop.f32.mrf.mxu0
      %v3536 = vadd.f32 0.0, %v3535
      %v3537 = vpop.f32.mrf.mxu0
      %v3538 = vpop.f32.mrf.mxu0
      %v3539 = vadd.f32 0.0, %v3538
      %v3540 = vpop.f32.mrf.mxu0
      %3541 = vmatprep.mubr.bf16.mxu0 0
      %3542 = vmatmul.mubr.bf16.gmra.mxu0 %v3408
      %v3543 = vpop.f32.mrf.mxu0
      %v3544 = vadd.f32 0.0, %v3543
      %v3545 = vpop.f32.mrf.mxu0
      %v3546 = vpop.f32.mrf.mxu0
      %v3547 = vadd.f32 0.0, %v3546
      %v3548 = vpop.f32.mrf.mxu0
      %3549 = vmatprep.mubr.bf16.mxu0 0
      %3550 = vmatmul.mubr.bf16.gmra.mxu0 %v3409
      %v3551 = vpop.f32.mrf.mxu0
      %v3552 = vadd.f32 0.0, %v3551
      %v3553 = vpop.f32.mrf.mxu0
      %v3554 = vpop.f32.mrf.mxu0
      %v3555 = vadd.f32 0.0, %v3554
      %v3556 = vpop.f32.mrf.mxu0
      %3557 = vmatprep.mubr.bf16.mxu0 0
      %3558 = vmatmul.mubr.bf16.gmra.mxu0 %v3410
      %v3559 = vpop.f32.mrf.mxu0
      %v3560 = vadd.f32 0.0, %v3559
      %v3561 = vpop.f32.mrf.mxu0
      %v3562 = vpop.f32.mrf.mxu0
      %v3563 = vadd.f32 0.0, %v3562
      %v3564 = vpop.f32.mrf.mxu0
      %3565 = vmatprep.mubr.bf16.mxu0 0
      %3566 = vmatmul.mubr.bf16.gmra.mxu0 %v3411
      %v3567 = vpop.f32.mrf.mxu0
      %v3568 = vadd.f32 0.0, %v3567
      %v3569 = vpop.f32.mrf.mxu0
      %v3570 = vpop.f32.mrf.mxu0
      %v3571 = vadd.f32 0.0, %v3570
      %v3572 = vpop.f32.mrf.mxu0
      %3573 = vmatprep.mubr.bf16.mxu0 0
      %3574 = vmatmul.mubr.bf16.gmra.mxu0 %v3412
      %v3575 = vpop.f32.mrf.mxu0
      %v3576 = vadd.f32 0.0, %v3575
      %v3577 = vpop.f32.mrf.mxu0
      %v3578 = vpop.f32.mrf.mxu0
      %v3579 = vadd.f32 0.0, %v3578
      %v3580 = vpop.f32.mrf.mxu0
      %3581 = vmatprep.mubr.bf16.mxu0 0
      %3582 = vmatmul.mubr.bf16.gmra.mxu0 %v3413
      %v3583 = vpop.f32.mrf.mxu0
      %v3584 = vadd.f32 0.0, %v3583
      %v3585 = vpop.f32.mrf.mxu0
      %v3586 = vpop.f32.mrf.mxu0
      %v3587 = vadd.f32 0.0, %v3586
      %v3588 = vpop.f32.mrf.mxu0
      %3589 = vmatprep.mubr.bf16.mxu0 0
      %3590 = vmatmul.mubr.bf16.gmra.mxu0 %v3414
      %v3591 = vpop.f32.mrf.mxu0
      %v3592 = vadd.f32 0.0, %v3591
      %v3593 = vpop.f32.mrf.mxu0
      %v3594 = vpop.f32.mrf.mxu0
      %v3595 = vadd.f32 0.0, %v3594
      %v3596 = vpop.f32.mrf.mxu0
      %3597 = vmatprep.mubr.bf16.mxu0 0
      %3598 = vmatmul.mubr.bf16.gmra.mxu0 %v3415
      %v3599 = vpop.f32.mrf.mxu0
      %v3600 = vadd.f32 0.0, %v3599
      %v3601 = vpop.f32.mrf.mxu0
      %v3602 = vpop.f32.mrf.mxu0
      %v3603 = vadd.f32 0.0, %v3602
      %v3604 = vpop.f32.mrf.mxu0
      %3605 = vmatprep.mubr.bf16.mxu0 0
      %3606 = vmatmul.mubr.bf16.gmra.mxu0 %v3416
      %v3607 = vpop.f32.mrf.mxu0
      %v3608 = vadd.f32 0.0, %v3607
      %v3609 = vpop.f32.mrf.mxu0
      %v3610 = vpop.f32.mrf.mxu0
      %v3611 = vadd.f32 0.0, %v3610
      %v3612 = vpop.f32.mrf.mxu0
      %3613 = vmatprep.mubr.bf16.mxu0 0
      %3614 = vmatmul.mubr.bf16.gmra.mxu0 %v3417
      %v3615 = vpop.f32.mrf.mxu0
      %v3616 = vadd.f32 0.0, %v3615
      %v3617 = vpop.f32.mrf.mxu0
      %v3618 = vpop.f32.mrf.mxu0
      %v3619 = vadd.f32 0.0, %v3618
      %v3620 = vpop.f32.mrf.mxu0
      %3621 = vmatprep.mubr.bf16.mxu0 0
      %3622 = vmatmul.mubr.bf16.gmra.mxu0 %v3418
      %v3623 = vpop.f32.mrf.mxu0
      %v3624 = vadd.f32 0.0, %v3623
      %v3625 = vpop.f32.mrf.mxu0
      %v3626 = vpop.f32.mrf.mxu0
      %v3627 = vadd.f32 0.0, %v3626
      %v3628 = vpop.f32.mrf.mxu0
      %3629 = vmatprep.mubr.bf16.mxu0 0
      %3630 = vmatmul.mubr.bf16.gmra.mxu0 %v3419
      %v3631 = vpop.f32.mrf.mxu0
      %v3632 = vadd.f32 0.0, %v3631
      %v3633 = vpop.f32.mrf.mxu0
      %v3634 = vpop.f32.mrf.mxu0
      %v3635 = vadd.f32 0.0, %v3634
      %v3636 = vpop.f32.mrf.mxu0
      %3637 = vmatprep.mubr.bf16.mxu0 0
      %3638 = vmatmul.mubr.bf16.gmra.mxu0 %v3420
      %v3639 = vpop.f32.mrf.mxu0
      %v3640 = vadd.f32 0.0, %v3639
      %v3641 = vpop.f32.mrf.mxu0
      %v3642 = vpop.f32.mrf.mxu0
      %v3643 = vadd.f32 0.0, %v3642
      %v3644 = vpop.f32.mrf.mxu0
      %3645 = vdwg.mxu0
      %v3646 = vadd.f32 %v3259, %v3520
      %v3647 = vadd.f32 %v3260, %v3523
      %v3648 = vadd.f32 %v3261, %v3528
      %v3649 = vadd.f32 %v3262, %v3531
      %v3650 = vadd.f32 %v3263, %v3536
      %v3651 = vadd.f32 %v3264, %v3539
      %v3652 = vadd.f32 %v3265, %v3544
      %v3653 = vadd.f32 %v3266, %v3547
      %v3654 = vadd.f32 %v3267, %v3552
      %v3655 = vadd.f32 %v3268, %v3555
      %v3656 = vadd.f32 %v3269, %v3560
      %v3657 = vadd.f32 %v3270, %v3563
      %v3658 = vadd.f32 %v3271, %v3568
      %v3659 = vadd.f32 %v3272, %v3571
      %v3660 = vadd.f32 %v3273, %v3576
      %v3661 = vadd.f32 %v3274, %v3579
      %v3662 = vadd.f32 %v3275, %v3584
      %v3663 = vadd.f32 %v3276, %v3587
      %v3664 = vadd.f32 %v3277, %v3592
      %v3665 = vadd.f32 %v3278, %v3595
      %v3666 = vadd.f32 %v3279, %v3600
      %v3667 = vadd.f32 %v3280, %v3603
      %v3668 = vadd.f32 %v3281, %v3608
      %v3669 = vadd.f32 %v3282, %v3611
      %v3670 = vadd.f32 %v3283, %v3616
      %v3671 = vadd.f32 %v3284, %v3619
      %v3672 = vadd.f32 %v3285, %v3624
      %v3673 = vadd.f32 %v3286, %v3627
      %v3674 = vadd.f32 %v3287, %v3632
      %v3675 = vadd.f32 %v3288, %v3635
      %v3676 = vadd.f32 %v3289, %v3640
      %v3677 = vadd.f32 %v3290, %v3643
      %v3678 = vld [vmem:[%s3291] sm:$0xf]
      %v3679 = vld [vmem:[%s3291 + $0x4] sm:$0xf]
      %v3680 = vld [vmem:[%s3291 + $0x8] sm:$0x1]
      %v3681 = vld [vmem:[%s3291 + $0xc] sm:$0xf]
      %v3682 = vld [vmem:[%s3291 + $0x10] sm:$0xf]
      %v3683 = vld [vmem:[%s3291 + $0x14] sm:$0x1]
      %v3684 = vld [vmem:[%s3291 + $0x18] sm:$0xf]
      %v3685 = vld [vmem:[%s3291 + $0x1c] sm:$0xf]
      %v3686 = vld [vmem:[%s3291 + $0x20] sm:$0x1]
      %v3687 = vld [vmem:[%s3291 + $0x24] sm:$0xf]
      %v3688 = vld [vmem:[%s3291 + $0x28] sm:$0xf]
      %v3689 = vld [vmem:[%s3291 + $0x2c] sm:$0x1]
      %v3690 = vld [vmem:[%s3291 + $0x30] sm:$0xf]
      %v3691 = vld [vmem:[%s3291 + $0x34] sm:$0xf]
      %v3692 = vld [vmem:[%s3291 + $0x38] sm:$0x1]
      %v3693 = vld [vmem:[%s3291 + $0x3c] sm:$0xf]
      %v3694 = vld [vmem:[%s3291 + $0x40] sm:$0xf]
      %v3695 = vld [vmem:[%s3291 + $0x44] sm:$0x1]
      %v3696 = vld [vmem:[%s3291 + $0x48] sm:$0xf]
      %v3697 = vld [vmem:[%s3291 + $0x4c] sm:$0xf]
      %v3698 = vld [vmem:[%s3291 + $0x50] sm:$0x1]
      %v3699 = vld [vmem:[%s3291 + $0x54] sm:$0xf]
      %v3700 = vld [vmem:[%s3291 + $0x58] sm:$0xf]
      %v3701 = vld [vmem:[%s3291 + $0x5c] sm:$0x1]
      %v3702 = vld [vmem:[%s3291 + $0x60] sm:$0xf]
      %v3703 = vld [vmem:[%s3291 + $0x64] sm:$0xf]
      %v3704 = vld [vmem:[%s3291 + $0x68] sm:$0x1]
      %v3705 = vld [vmem:[%s3291 + $0x6c] sm:$0xf]
      %v3706 = vld [vmem:[%s3291 + $0x70] sm:$0xf]
      %v3707 = vld [vmem:[%s3291 + $0x74] sm:$0x1]
      %v3708 = vld [vmem:[%s3291 + $0x78] sm:$0xf]
      %v3709 = vld [vmem:[%s3291 + $0x7c] sm:$0xf]
      %v3710 = vld [vmem:[%s3291 + $0x80] sm:$0x1]
      %v3711 = vld [vmem:[%s3291 + $0x84] sm:$0xf]
      %v3712 = vld [vmem:[%s3291 + $0x88] sm:$0xf]
      %v3713 = vld [vmem:[%s3291 + $0x8c] sm:$0x1]
      %v3714 = vld [vmem:[%s3291 + $0x90] sm:$0xf]
      %v3715 = vld [vmem:[%s3291 + $0x94] sm:$0xf]
      %v3716 = vld [vmem:[%s3291 + $0x98] sm:$0x1]
      %v3717 = vld [vmem:[%s3291 + $0x9c] sm:$0xf]
      %v3718 = vld [vmem:[%s3291 + $0xa0] sm:$0xf]
      %v3719 = vld [vmem:[%s3291 + $0xa4] sm:$0x1]
      %v3720 = vld [vmem:[%s3291 + $0xa8] sm:$0xf]
      %v3721 = vld [vmem:[%s3291 + $0xac] sm:$0xf]
      %v3722 = vld [vmem:[%s3291 + $0xb0] sm:$0x1]
      %v3723 = vld [vmem:[%s3291 + $0xb4] sm:$0xf]
      %v3724 = vld [vmem:[%s3291 + $0xb8] sm:$0xf]
      %v3725 = vld [vmem:[%s3291 + $0xbc] sm:$0x1]
      %v3727 = vshrl.u32 %v3678, 16
      %v3729 = vrot.slane %v3727, 4
      %v3730 = vshll.u32 %v3678, 16
      %v3732 = vrot.slane %v3730, 5
      %v3733 = vor.u32 %v3729, %v3732
      %v3734 = vrot.slane %v3733, 4
      %v3736 = vshll.u32 %v3679, 16
      %v3738 = vrot.slane %v3736, 5
      %v3739 = vsel %vm1826, %v3734, %v3738
      %v3740 = vshrl.u32 %v3679, 16
      %v3742 = vrot.slane %v3740, 4
      %v3743 = vor.u32 %v3742, %v3738
      %v3744 = vrot.slane %v3743, 4
      %v3746 = vshll.u32 %v3680, 16
      %v3748 = vrot.slane %v3746, 5
      %v3749 = vsel %vm1826, %v3744, %v3748
      %v3751 = vshrl.u32 %v3681, 16
      %v3753 = vrot.slane %v3751, 4
      %v3754 = vshll.u32 %v3681, 16
      %v3756 = vrot.slane %v3754, 5
      %v3757 = vor.u32 %v3753, %v3756
      %v3758 = vrot.slane %v3757, 4
      %v3760 = vshll.u32 %v3682, 16
      %v3762 = vrot.slane %v3760, 5
      %v3763 = vsel %vm1826, %v3758, %v3762
      %v3764 = vshrl.u32 %v3682, 16
      %v3766 = vrot.slane %v3764, 4
      %v3767 = vor.u32 %v3766, %v3762
      %v3768 = vrot.slane %v3767, 4
      %v3770 = vshll.u32 %v3683, 16
      %v3772 = vrot.slane %v3770, 5
      %v3773 = vsel %vm1826, %v3768, %v3772
      %v3775 = vshrl.u32 %v3684, 16
      %v3777 = vrot.slane %v3775, 4
      %v3778 = vshll.u32 %v3684, 16
      %v3780 = vrot.slane %v3778, 5
      %v3781 = vor.u32 %v3777, %v3780
      %v3782 = vrot.slane %v3781, 4
      %v3784 = vshll.u32 %v3685, 16
      %v3786 = vrot.slane %v3784, 5
      %v3787 = vsel %vm1826, %v3782, %v3786
      %v3788 = vshrl.u32 %v3685, 16
      %v3790 = vrot.slane %v3788, 4
      %v3791 = vor.u32 %v3790, %v3786
      %v3792 = vrot.slane %v3791, 4
      %v3794 = vshll.u32 %v3686, 16
      %v3796 = vrot.slane %v3794, 5
      %v3797 = vsel %vm1826, %v3792, %v3796
      %v3799 = vshrl.u32 %v3687, 16
      %v3801 = vrot.slane %v3799, 4
      %v3802 = vshll.u32 %v3687, 16
      %v3804 = vrot.slane %v3802, 5
      %v3805 = vor.u32 %v3801, %v3804
      %v3806 = vrot.slane %v3805, 4
      %v3808 = vshll.u32 %v3688, 16
      %v3810 = vrot.slane %v3808, 5
      %v3811 = vsel %vm1826, %v3806, %v3810
      %v3812 = vshrl.u32 %v3688, 16
      %v3814 = vrot.slane %v3812, 4
      %v3815 = vor.u32 %v3814, %v3810
      %v3816 = vrot.slane %v3815, 4
      %v3818 = vshll.u32 %v3689, 16
      %v3820 = vrot.slane %v3818, 5
      %v3821 = vsel %vm1826, %v3816, %v3820
      %v3823 = vshrl.u32 %v3690, 16
      %v3825 = vrot.slane %v3823, 4
      %v3826 = vshll.u32 %v3690, 16
      %v3828 = vrot.slane %v3826, 5
      %v3829 = vor.u32 %v3825, %v3828
      %v3830 = vrot.slane %v3829, 4
      %v3832 = vshll.u32 %v3691, 16
      %v3834 = vrot.slane %v3832, 5
      %v3835 = vsel %vm1826, %v3830, %v3834
      %v3836 = vshrl.u32 %v3691, 16
      %v3838 = vrot.slane %v3836, 4
      %v3839 = vor.u32 %v3838, %v3834
      %v3840 = vrot.slane %v3839, 4
      %v3842 = vshll.u32 %v3692, 16
      %v3844 = vrot.slane %v3842, 5
      %v3845 = vsel %vm1826, %v3840, %v3844
      %v3847 = vshrl.u32 %v3693, 16
      %v3849 = vrot.slane %v3847, 4
      %v3850 = vshll.u32 %v3693, 16
      %v3852 = vrot.slane %v3850, 5
      %v3853 = vor.u32 %v3849, %v3852
      %v3854 = vrot.slane %v3853, 4
      %v3856 = vshll.u32 %v3694, 16
      %v3858 = vrot.slane %v3856, 5
      %v3859 = vsel %vm1826, %v3854, %v3858
      %v3860 = vshrl.u32 %v3694, 16
      %v3862 = vrot.slane %v3860, 4
      %v3863 = vor.u32 %v3862, %v3858
      %v3864 = vrot.slane %v3863, 4
      %v3866 = vshll.u32 %v3695, 16
      %v3868 = vrot.slane %v3866, 5
      %v3869 = vsel %vm1826, %v3864, %v3868
      %v3871 = vshrl.u32 %v3696, 16
      %v3873 = vrot.slane %v3871, 4
      %v3874 = vshll.u32 %v3696, 16
      %v3876 = vrot.slane %v3874, 5
      %v3877 = vor.u32 %v3873, %v3876
      %v3878 = vrot.slane %v3877, 4
      %v3880 = vshll.u32 %v3697, 16
      %v3882 = vrot.slane %v3880, 5
      %v3883 = vsel %vm1826, %v3878, %v3882
      %v3884 = vshrl.u32 %v3697, 16
      %v3886 = vrot.slane %v3884, 4
      %v3887 = vor.u32 %v3886, %v3882
      %v3888 = vrot.slane %v3887, 4
      %v3890 = vshll.u32 %v3698, 16
      %v3892 = vrot.slane %v3890, 5
      %v3893 = vsel %vm1826, %v3888, %v3892
      %v3895 = vshrl.u32 %v3699, 16
      %v3897 = vrot.slane %v3895, 4
      %v3898 = vshll.u32 %v3699, 16
      %v3900 = vrot.slane %v3898, 5
      %v3901 = vor.u32 %v3897, %v3900
      %v3902 = vrot.slane %v3901, 4
      %v3904 = vshll.u32 %v3700, 16
      %v3906 = vrot.slane %v3904, 5
      %v3907 = vsel %vm1826, %v3902, %v3906
      %v3908 = vshrl.u32 %v3700, 16
      %v3910 = vrot.slane %v3908, 4
      %v3911 = vor.u32 %v3910, %v3906
      %v3912 = vrot.slane %v3911, 4
      %v3914 = vshll.u32 %v3701, 16
      %v3916 = vrot.slane %v3914, 5
      %v3917 = vsel %vm1826, %v3912, %v3916
      %v3919 = vshrl.u32 %v3702, 16
      %v3921 = vrot.slane %v3919, 4
      %v3922 = vshll.u32 %v3702, 16
      %v3924 = vrot.slane %v3922, 5
      %v3925 = vor.u32 %v3921, %v3924
      %v3926 = vrot.slane %v3925, 4
      %v3928 = vshll.u32 %v3703, 16
      %v3930 = vrot.slane %v3928, 5
      %v3931 = vsel %vm1826, %v3926, %v3930
      %v3932 = vshrl.u32 %v3703, 16
      %v3934 = vrot.slane %v3932, 4
      %v3935 = vor.u32 %v3934, %v3930
      %v3936 = vrot.slane %v3935, 4
      %v3938 = vshll.u32 %v3704, 16
      %v3940 = vrot.slane %v3938, 5
      %v3941 = vsel %vm1826, %v3936, %v3940
      %v3943 = vshrl.u32 %v3705, 16
      %v3945 = vrot.slane %v3943, 4
      %v3946 = vshll.u32 %v3705, 16
      %v3948 = vrot.slane %v3946, 5
      %v3949 = vor.u32 %v3945, %v3948
      %v3950 = vrot.slane %v3949, 4
      %v3952 = vshll.u32 %v3706, 16
      %v3954 = vrot.slane %v3952, 5
      %v3955 = vsel %vm1826, %v3950, %v3954
      %v3956 = vshrl.u32 %v3706, 16
      %v3958 = vrot.slane %v3956, 4
      %v3959 = vor.u32 %v3958, %v3954
      %v3960 = vrot.slane %v3959, 4
      %v3962 = vshll.u32 %v3707, 16
      %v3964 = vrot.slane %v3962, 5
      %v3965 = vsel %vm1826, %v3960, %v3964
      %v3967 = vshrl.u32 %v3708, 16
      %v3969 = vrot.slane %v3967, 4
      %v3970 = vshll.u32 %v3708, 16
      %v3972 = vrot.slane %v3970, 5
      %v3973 = vor.u32 %v3969, %v3972
      %v3974 = vrot.slane %v3973, 4
      %v3976 = vshll.u32 %v3709, 16
      %v3978 = vrot.slane %v3976, 5
      %v3979 = vsel %vm1826, %v3974, %v3978
      %v3980 = vshrl.u32 %v3709, 16
      %v3982 = vrot.slane %v3980, 4
      %v3983 = vor.u32 %v3982, %v3978
      %v3984 = vrot.slane %v3983, 4
      %v3986 = vshll.u32 %v3710, 16
      %v3988 = vrot.slane %v3986, 5
      %v3989 = vsel %vm1826, %v3984, %v3988
      %v3991 = vshrl.u32 %v3711, 16
      %v3993 = vrot.slane %v3991, 4
      %v3994 = vshll.u32 %v3711, 16
      %v3996 = vrot.slane %v3994, 5
      %v3997 = vor.u32 %v3993, %v3996
      %v3998 = vrot.slane %v3997, 4
      %v4000 = vshll.u32 %v3712, 16
      %v4002 = vrot.slane %v4000, 5
      %v4003 = vsel %vm1826, %v3998, %v4002
      %v4004 = vshrl.u32 %v3712, 16
      %v4006 = vrot.slane %v4004, 4
      %v4007 = vor.u32 %v4006, %v4002
      %v4008 = vrot.slane %v4007, 4
      %v4010 = vshll.u32 %v3713, 16
      %v4012 = vrot.slane %v4010, 5
      %v4013 = vsel %vm1826, %v4008, %v4012
      %v4015 = vshrl.u32 %v3714, 16
      %v4017 = vrot.slane %v4015, 4
      %v4018 = vshll.u32 %v3714, 16
      %v4020 = vrot.slane %v4018, 5
      %v4021 = vor.u32 %v4017, %v4020
      %v4022 = vrot.slane %v4021, 4
      %v4024 = vshll.u32 %v3715, 16
      %v4026 = vrot.slane %v4024, 5
      %v4027 = vsel %vm1826, %v4022, %v4026
      %v4028 = vshrl.u32 %v3715, 16
      %v4030 = vrot.slane %v4028, 4
      %v4031 = vor.u32 %v4030, %v4026
      %v4032 = vrot.slane %v4031, 4
      %v4034 = vshll.u32 %v3716, 16
      %v4036 = vrot.slane %v4034, 5
      %v4037 = vsel %vm1826, %v4032, %v4036
      %v4039 = vshrl.u32 %v3717, 16
      %v4041 = vrot.slane %v4039, 4
      %v4042 = vshll.u32 %v3717, 16
      %v4044 = vrot.slane %v4042, 5
      %v4045 = vor.u32 %v4041, %v4044
      %v4046 = vrot.slane %v4045, 4
      %v4048 = vshll.u32 %v3718, 16
      %v4050 = vrot.slane %v4048, 5
      %v4051 = vsel %vm1826, %v4046, %v4050
      %v4052 = vshrl.u32 %v3718, 16
      %v4054 = vrot.slane %v4052, 4
      %v4055 = vor.u32 %v4054, %v4050
      %v4056 = vrot.slane %v4055, 4
      %v4058 = vshll.u32 %v3719, 16
      %v4060 = vrot.slane %v4058, 5
      %v4061 = vsel %vm1826, %v4056, %v4060
      %v4063 = vshrl.u32 %v3720, 16
      %v4065 = vrot.slane %v4063, 4
      %v4066 = vshll.u32 %v3720, 16
      %v4068 = vrot.slane %v4066, 5
      %v4069 = vor.u32 %v4065, %v4068
      %v4070 = vrot.slane %v4069, 4
      %v4072 = vshll.u32 %v3721, 16
      %v4074 = vrot.slane %v4072, 5
      %v4075 = vsel %vm1826, %v4070, %v4074
      %v4076 = vshrl.u32 %v3721, 16
      %v4078 = vrot.slane %v4076, 4
      %v4079 = vor.u32 %v4078, %v4074
      %v4080 = vrot.slane %v4079, 4
      %v4082 = vshll.u32 %v3722, 16
      %v4084 = vrot.slane %v4082, 5
      %v4085 = vsel %vm1826, %v4080, %v4084
      %v4087 = vshrl.u32 %v3723, 16
      %v4089 = vrot.slane %v4087, 4
      %v4090 = vshll.u32 %v3723, 16
      %v4092 = vrot.slane %v4090, 5
      %v4093 = vor.u32 %v4089, %v4092
      %v4094 = vrot.slane %v4093, 4
      %v4096 = vshll.u32 %v3724, 16
      %v4098 = vrot.slane %v4096, 5
      %v4099 = vsel %vm1826, %v4094, %v4098
      %v4100 = vshrl.u32 %v3724, 16
      %v4102 = vrot.slane %v4100, 4
      %v4103 = vor.u32 %v4102, %v4098
      %v4104 = vrot.slane %v4103, 4
      %v4106 = vshll.u32 %v3725, 16
      %v4108 = vrot.slane %v4106, 5
      %v4109 = vsel %vm1826, %v4104, %v4108
      %s4110 = scalar_lea.vmem %s2, 256
      %v4111 = vld [vmem:[%s4110] sm:$0xf]
      %v4112 = vld [vmem:[%s4110 + $0x4] sm:$0xf]
      %v4113 = vld [vmem:[%s4110 + $0x8] sm:$0xf]
      %v4114 = vld [vmem:[%s4110 + $0xc] sm:$0xf]
      %v4115 = vld [vmem:[%s4110 + $0x10] sm:$0xf]
      %v4116 = vld [vmem:[%s4110 + $0x14] sm:$0xf]
      %v4117 = vld [vmem:[%s4110 + $0x18] sm:$0xf]
      %v4118 = vld [vmem:[%s4110 + $0x1c] sm:$0xf]
      %v4119 = vld [vmem:[%s4110 + $0x20] sm:$0xf]
      %v4120 = vld [vmem:[%s4110 + $0x24] sm:$0xf]
      %v4121 = vld [vmem:[%s4110 + $0x28] sm:$0xf]
      %v4122 = vld [vmem:[%s4110 + $0x2c] sm:$0xf]
      %v4123 = vld [vmem:[%s4110 + $0x30] sm:$0xf]
      %v4124 = vld [vmem:[%s4110 + $0x34] sm:$0xf]
      %v4125 = vld [vmem:[%s4110 + $0x38] sm:$0xf]
      %v4126 = vld [vmem:[%s4110 + $0x3c] sm:$0xf]
      %v4127 = vunpack.c.l.b16 %v3739
      %v4128 = vunpack.c.l.b16 %v3749
      %v4129 = vunpack.c.l.b16 %v3763
      %v4130 = vunpack.c.l.b16 %v3773
      %v4131 = vunpack.c.l.b16 %v3787
      %v4132 = vunpack.c.l.b16 %v3797
      %v4133 = vunpack.c.l.b16 %v3811
      %v4134 = vunpack.c.l.b16 %v3821
      %v4135 = vunpack.c.l.b16 %v3835
      %v4136 = vunpack.c.l.b16 %v3845
      %v4137 = vunpack.c.l.b16 %v3859
      %v4138 = vunpack.c.l.b16 %v3869
      %v4139 = vunpack.c.l.b16 %v3883
      %v4140 = vunpack.c.l.b16 %v3893
      %v4141 = vunpack.c.l.b16 %v3907
      %v4142 = vunpack.c.l.b16 %v3917
      %v4143 = vunpack.c.l.b16 %v3931
      %v4144 = vunpack.c.l.b16 %v3941
      %v4145 = vunpack.c.l.b16 %v3955
      %v4146 = vunpack.c.l.b16 %v3965
      %v4147 = vunpack.c.l.b16 %v3979
      %v4148 = vunpack.c.l.b16 %v3989
      %v4149 = vunpack.c.l.b16 %v4003
      %v4150 = vunpack.c.l.b16 %v4013
      %v4151 = vunpack.c.l.b16 %v4027
      %v4152 = vunpack.c.l.b16 %v4037
      %v4153 = vunpack.c.l.b16 %v4051
      %v4154 = vunpack.c.l.b16 %v4061
      %v4155 = vunpack.c.l.b16 %v4075
      %v4156 = vunpack.c.l.b16 %v4085
      %v4157 = vunpack.c.l.b16 %v4099
      %v4158 = vunpack.c.l.b16 %v4109
      %v4159 = vpack.c.b16 %v4128, %v4127
      %v4160 = vpack.c.b16 %v4130, %v4129
      %v4161 = vpack.c.b16 %v4132, %v4131
      %v4162 = vpack.c.b16 %v4134, %v4133
      %v4163 = vpack.c.b16 %v4136, %v4135
      %v4164 = vpack.c.b16 %v4138, %v4137
      %v4165 = vpack.c.b16 %v4140, %v4139
      %v4166 = vpack.c.b16 %v4142, %v4141
      %v4167 = vpack.c.b16 %v4144, %v4143
      %v4168 = vpack.c.b16 %v4146, %v4145
      %v4169 = vpack.c.b16 %v4148, %v4147
      %v4170 = vpack.c.b16 %v4150, %v4149
      %v4171 = vpack.c.b16 %v4152, %v4151
      %v4172 = vpack.c.b16 %v4154, %v4153
      %v4173 = vpack.c.b16 %v4156, %v4155
      %v4174 = vpack.c.b16 %v4158, %v4157
      %v4207 = vunpack.c.l.b16 %v4111
      %v4208 = vunpack.c.l.b16 %v4112
      %v4209 = vunpack.c.l.b16 %v4113
      %v4210 = vunpack.c.l.b16 %v4114
      %v4211 = vunpack.c.l.b16 %v4115
      %v4212 = vunpack.c.l.b16 %v4116
      %v4213 = vunpack.c.l.b16 %v4117
      %v4214 = vunpack.c.l.b16 %v4118
      %v4215 = vunpack.c.l.b16 %v4119
      %v4216 = vunpack.c.l.b16 %v4120
      %v4217 = vunpack.c.l.b16 %v4121
      %v4218 = vunpack.c.l.b16 %v4122
      %v4219 = vunpack.c.l.b16 %v4123
      %v4220 = vunpack.c.l.b16 %v4124
      %v4221 = vunpack.c.l.b16 %v4125
      %v4222 = vunpack.c.l.b16 %v4126
      %v4223 = vpack.c.b16 %v4208, %v4207
      %v4224 = vpack.c.b16 %v4210, %v4209
      %v4225 = vpack.c.b16 %v4212, %v4211
      %v4226 = vpack.c.b16 %v4214, %v4213
      %v4227 = vpack.c.b16 %v4216, %v4215
      %v4228 = vpack.c.b16 %v4218, %v4217
      %v4229 = vpack.c.b16 %v4220, %v4219
      %v4230 = vpack.c.b16 %v4222, %v4221
      %4239 = vmatprep.subr.bf16.mxu0 0
      %4240 = vmatpush1.bf16.msra.mxu0 %v4230
      %4241 = vmatprep.subr.bf16.mxu0 0
      %4242 = vmatpush1.bf16.msra.mxu0 %v4229
      %4243 = vmatprep.subr.bf16.mxu0 0
      %4244 = vmatpush1.bf16.msra.mxu0 %v4228
      %4245 = vmatprep.subr.bf16.mxu0 0
      %4246 = vmatpush1.bf16.msra.mxu0 %v4227
      %4247 = vmatprep.subr.bf16.mxu0 0
      %4248 = vmatpush1.bf16.msra.mxu0 %v4226
      %4249 = vmatprep.subr.bf16.mxu0 0
      %4250 = vmatpush1.bf16.msra.mxu0 %v4225
      %4251 = vmatprep.subr.bf16.mxu0 0
      %4252 = vmatpush1.bf16.msra.mxu0 %v4224
      %4253 = vmatprep.subr.bf16.mxu0 0
      %4254 = vmatpush1.bf16.msra.mxu0 %v4223
      %4255 = vmatprep.subr.bf16.mxu0 0
      %4256 = vmatpush2.bf16.msra.mxu0 0
      %4257 = vmatprep.subr.bf16.mxu0 0
      %4258 = vmatpush2.bf16.msra.mxu0 0
      %4259 = vmatprep.subr.bf16.mxu0 0
      %4260 = vmatpush2.bf16.msra.mxu0 0
      %4261 = vmatprep.subr.bf16.mxu0 0
      %4262 = vmatpush2.bf16.msra.mxu0 0
      %4263 = vmatprep.subr.bf16.mxu0 0
      %4264 = vmatpush2.bf16.msra.mxu0 0
      %4265 = vmatprep.subr.bf16.mxu0 0
      %4266 = vmatpush2.bf16.msra.mxu0 0
      %4267 = vmatprep.subr.bf16.mxu0 0
      %4268 = vmatpush2.bf16.msra.mxu0 0
      %4269 = vmatprep.subr.bf16.mxu0 0
      %4270 = vmatpush2.bf16.msra.mxu0 0
      %4271 = vmatprep.mubr.bf16.mxu0 0
      %4272 = vmatmul.mubr.bf16.gmra.mxu0 %v4159
      %v4273 = vpop.f32.mrf.mxu0
      %v4274 = vadd.f32 0.0, %v4273
      %v4275 = vpop.f32.mrf.mxu0
      %v4276 = vpop.f32.mrf.mxu0
      %v4277 = vadd.f32 0.0, %v4276
      %v4278 = vpop.f32.mrf.mxu0
      %4279 = vmatprep.mubr.bf16.mxu0 0
      %4280 = vmatmul.mubr.bf16.gmra.mxu0 %v4160
      %v4281 = vpop.f32.mrf.mxu0
      %v4282 = vadd.f32 0.0, %v4281
      %v4283 = vpop.f32.mrf.mxu0
      %v4284 = vpop.f32.mrf.mxu0
      %v4285 = vadd.f32 0.0, %v4284
      %v4286 = vpop.f32.mrf.mxu0
      %4287 = vmatprep.mubr.bf16.mxu0 0
      %4288 = vmatmul.mubr.bf16.gmra.mxu0 %v4161
      %v4289 = vpop.f32.mrf.mxu0
      %v4290 = vadd.f32 0.0, %v4289
      %v4291 = vpop.f32.mrf.mxu0
      %v4292 = vpop.f32.mrf.mxu0
      %v4293 = vadd.f32 0.0, %v4292
      %v4294 = vpop.f32.mrf.mxu0
      %4295 = vmatprep.mubr.bf16.mxu0 0
      %4296 = vmatmul.mubr.bf16.gmra.mxu0 %v4162
      %v4297 = vpop.f32.mrf.mxu0
      %v4298 = vadd.f32 0.0, %v4297
      %v4299 = vpop.f32.mrf.mxu0
      %v4300 = vpop.f32.mrf.mxu0
      %v4301 = vadd.f32 0.0, %v4300
      %v4302 = vpop.f32.mrf.mxu0
      %4303 = vmatprep.mubr.bf16.mxu0 0
      %4304 = vmatmul.mubr.bf16.gmra.mxu0 %v4163
      %v4305 = vpop.f32.mrf.mxu0
      %v4306 = vadd.f32 0.0, %v4305
      %v4307 = vpop.f32.mrf.mxu0
      %v4308 = vpop.f32.mrf.mxu0
      %v4309 = vadd.f32 0.0, %v4308
      %v4310 = vpop.f32.mrf.mxu0
      %4311 = vmatprep.mubr.bf16.mxu0 0
      %4312 = vmatmul.mubr.bf16.gmra.mxu0 %v4164
      %v4313 = vpop.f32.mrf.mxu0
      %v4314 = vadd.f32 0.0, %v4313
      %v4315 = vpop.f32.mrf.mxu0
      %v4316 = vpop.f32.mrf.mxu0
      %v4317 = vadd.f32 0.0, %v4316
      %v4318 = vpop.f32.mrf.mxu0
      %4319 = vmatprep.mubr.bf16.mxu0 0
      %4320 = vmatmul.mubr.bf16.gmra.mxu0 %v4165
      %v4321 = vpop.f32.mrf.mxu0
      %v4322 = vadd.f32 0.0, %v4321
      %v4323 = vpop.f32.mrf.mxu0
      %v4324 = vpop.f32.mrf.mxu0
      %v4325 = vadd.f32 0.0, %v4324
      %v4326 = vpop.f32.mrf.mxu0
      %4327 = vmatprep.mubr.bf16.mxu0 0
      %4328 = vmatmul.mubr.bf16.gmra.mxu0 %v4166
      %v4329 = vpop.f32.mrf.mxu0
      %v4330 = vadd.f32 0.0, %v4329
      %v4331 = vpop.f32.mrf.mxu0
      %v4332 = vpop.f32.mrf.mxu0
      %v4333 = vadd.f32 0.0, %v4332
      %v4334 = vpop.f32.mrf.mxu0
      %4335 = vmatprep.mubr.bf16.mxu0 0
      %4336 = vmatmul.mubr.bf16.gmra.mxu0 %v4167
      %v4337 = vpop.f32.mrf.mxu0
      %v4338 = vadd.f32 0.0, %v4337
      %v4339 = vpop.f32.mrf.mxu0
      %v4340 = vpop.f32.mrf.mxu0
      %v4341 = vadd.f32 0.0, %v4340
      %v4342 = vpop.f32.mrf.mxu0
      %4343 = vmatprep.mubr.bf16.mxu0 0
      %4344 = vmatmul.mubr.bf16.gmra.mxu0 %v4168
      %v4345 = vpop.f32.mrf.mxu0
      %v4346 = vadd.f32 0.0, %v4345
      %v4347 = vpop.f32.mrf.mxu0
      %v4348 = vpop.f32.mrf.mxu0
      %v4349 = vadd.f32 0.0, %v4348
      %v4350 = vpop.f32.mrf.mxu0
      %4351 = vmatprep.mubr.bf16.mxu0 0
      %4352 = vmatmul.mubr.bf16.gmra.mxu0 %v4169
      %v4353 = vpop.f32.mrf.mxu0
      %v4354 = vadd.f32 0.0, %v4353
      %v4355 = vpop.f32.mrf.mxu0
      %v4356 = vpop.f32.mrf.mxu0
      %v4357 = vadd.f32 0.0, %v4356
      %v4358 = vpop.f32.mrf.mxu0
      %4359 = vmatprep.mubr.bf16.mxu0 0
      %4360 = vmatmul.mubr.bf16.gmra.mxu0 %v4170
      %v4361 = vpop.f32.mrf.mxu0
      %v4362 = vadd.f32 0.0, %v4361
      %v4363 = vpop.f32.mrf.mxu0
      %v4364 = vpop.f32.mrf.mxu0
      %v4365 = vadd.f32 0.0, %v4364
      %v4366 = vpop.f32.mrf.mxu0
      %4367 = vmatprep.mubr.bf16.mxu0 0
      %4368 = vmatmul.mubr.bf16.gmra.mxu0 %v4171
      %v4369 = vpop.f32.mrf.mxu0
      %v4370 = vadd.f32 0.0, %v4369
      %v4371 = vpop.f32.mrf.mxu0
      %v4372 = vpop.f32.mrf.mxu0
      %v4373 = vadd.f32 0.0, %v4372
      %v4374 = vpop.f32.mrf.mxu0
      %4375 = vmatprep.mubr.bf16.mxu0 0
      %4376 = vmatmul.mubr.bf16.gmra.mxu0 %v4172
      %v4377 = vpop.f32.mrf.mxu0
      %v4378 = vadd.f32 0.0, %v4377
      %v4379 = vpop.f32.mrf.mxu0
      %v4380 = vpop.f32.mrf.mxu0
      %v4381 = vadd.f32 0.0, %v4380
      %v4382 = vpop.f32.mrf.mxu0
      %4383 = vmatprep.mubr.bf16.mxu0 0
      %4384 = vmatmul.mubr.bf16.gmra.mxu0 %v4173
      %v4385 = vpop.f32.mrf.mxu0
      %v4386 = vadd.f32 0.0, %v4385
      %v4387 = vpop.f32.mrf.mxu0
      %v4388 = vpop.f32.mrf.mxu0
      %v4389 = vadd.f32 0.0, %v4388
      %v4390 = vpop.f32.mrf.mxu0
      %4391 = vmatprep.mubr.bf16.mxu0 0
      %4392 = vmatmul.mubr.bf16.gmra.mxu0 %v4174
      %v4393 = vpop.f32.mrf.mxu0
      %v4394 = vadd.f32 0.0, %v4393
      %v4395 = vpop.f32.mrf.mxu0
      %v4396 = vpop.f32.mrf.mxu0
      %v4397 = vadd.f32 0.0, %v4396
      %v4398 = vpop.f32.mrf.mxu0
      %4399 = vdwg.mxu0
      %v4400 = vadd.f32 %v3646, %v4274
      %v4401 = vadd.f32 %v3647, %v4277
      %v4402 = vadd.f32 %v3648, %v4282
      %v4403 = vadd.f32 %v3649, %v4285
      %v4404 = vadd.f32 %v3650, %v4290
      %v4405 = vadd.f32 %v3651, %v4293
      %v4406 = vadd.f32 %v3652, %v4298
      %v4407 = vadd.f32 %v3653, %v4301
      %v4408 = vadd.f32 %v3654, %v4306
      %v4409 = vadd.f32 %v3655, %v4309
      %v4410 = vadd.f32 %v3656, %v4314
      %v4411 = vadd.f32 %v3657, %v4317
      %v4412 = vadd.f32 %v3658, %v4322
      %v4413 = vadd.f32 %v3659, %v4325
      %v4414 = vadd.f32 %v3660, %v4330
      %v4415 = vadd.f32 %v3661, %v4333
      %v4416 = vadd.f32 %v3662, %v4338
      %v4417 = vadd.f32 %v3663, %v4341
      %v4418 = vadd.f32 %v3664, %v4346
      %v4419 = vadd.f32 %v3665, %v4349
      %v4420 = vadd.f32 %v3666, %v4354
      %v4421 = vadd.f32 %v3667, %v4357
      %v4422 = vadd.f32 %v3668, %v4362
      %v4423 = vadd.f32 %v3669, %v4365
      %v4424 = vadd.f32 %v3670, %v4370
      %v4425 = vadd.f32 %v3671, %v4373
      %v4426 = vadd.f32 %v3672, %v4378
      %v4427 = vadd.f32 %v3673, %v4381
      %v4428 = vadd.f32 %v3674, %v4386
      %v4429 = vadd.f32 %v3675, %v4389
      %v4430 = vadd.f32 %v3676, %v4394
      %v4431 = vadd.f32 %v3677, %v4397
      %v4432 = vld [vmem:[%s3291] sm:$0xe]
      %v4433 = vld [vmem:[%s3291 + $0xc] sm:$0xe]
      %v4434 = vld [vmem:[%s3291 + $0x18] sm:$0xe]
      %v4435 = vld [vmem:[%s3291 + $0x24] sm:$0xe]
      %v4436 = vld [vmem:[%s3291 + $0x30] sm:$0xe]
      %v4437 = vld [vmem:[%s3291 + $0x3c] sm:$0xe]
      %v4438 = vld [vmem:[%s3291 + $0x48] sm:$0xe]
      %v4439 = vld [vmem:[%s3291 + $0x54] sm:$0xe]
      %v4440 = vld [vmem:[%s3291 + $0x60] sm:$0xe]
      %v4441 = vld [vmem:[%s3291 + $0x6c] sm:$0xe]
      %v4442 = vld [vmem:[%s3291 + $0x78] sm:$0xe]
      %v4443 = vld [vmem:[%s3291 + $0x84] sm:$0xe]
      %v4444 = vld [vmem:[%s3291 + $0x90] sm:$0xe]
      %v4445 = vld [vmem:[%s3291 + $0x9c] sm:$0xe]
      %v4446 = vld [vmem:[%s3291 + $0xa8] sm:$0xe]
      %v4447 = vld [vmem:[%s3291 + $0xb4] sm:$0xe]
      %v4496 = vrot.slane %v4432, 5
      %v4497 = vrot.slane %v4496, 4
      %v4498 = vrot.slane %v3679, 5
      %v4499 = vsel %vm2856, %v4497, %v4498
      %v4500 = vrot.slane %v4498, 4
      %v4501 = vrot.slane %v3680, 5
      %v4502 = vsel %vm2856, %v4500, %v4501
      %v4503 = vrot.slane %v4433, 5
      %v4504 = vrot.slane %v4503, 4
      %v4505 = vrot.slane %v3682, 5
      %v4506 = vsel %vm2856, %v4504, %v4505
      %v4507 = vrot.slane %v4505, 4
      %v4508 = vrot.slane %v3683, 5
      %v4509 = vsel %vm2856, %v4507, %v4508
      %v4510 = vrot.slane %v4434, 5
      %v4511 = vrot.slane %v4510, 4
      %v4512 = vrot.slane %v3685, 5
      %v4513 = vsel %vm2856, %v4511, %v4512
      %v4514 = vrot.slane %v4512, 4
      %v4515 = vrot.slane %v3686, 5
      %v4516 = vsel %vm2856, %v4514, %v4515
      %v4517 = vrot.slane %v4435, 5
      %v4518 = vrot.slane %v4517, 4
      %v4519 = vrot.slane %v3688, 5
      %v4520 = vsel %vm2856, %v4518, %v4519
      %v4521 = vrot.slane %v4519, 4
      %v4522 = vrot.slane %v3689, 5
      %v4523 = vsel %vm2856, %v4521, %v4522
      %v4524 = vrot.slane %v4436, 5
      %v4525 = vrot.slane %v4524, 4
      %v4526 = vrot.slane %v3691, 5
      %v4527 = vsel %vm2856, %v4525, %v4526
      %v4528 = vrot.slane %v4526, 4
      %v4529 = vrot.slane %v3692, 5
      %v4530 = vsel %vm2856, %v4528, %v4529
      %v4531 = vrot.slane %v4437, 5
      %v4532 = vrot.slane %v4531, 4
      %v4533 = vrot.slane %v3694, 5
      %v4534 = vsel %vm2856, %v4532, %v4533
      %v4535 = vrot.slane %v4533, 4
      %v4536 = vrot.slane %v3695, 5
      %v4537 = vsel %vm2856, %v4535, %v4536
      %v4538 = vrot.slane %v4438, 5
      %v4539 = vrot.slane %v4538, 4
      %v4540 = vrot.slane %v3697, 5
      %v4541 = vsel %vm2856, %v4539, %v4540
      %v4542 = vrot.slane %v4540, 4
      %v4543 = vrot.slane %v3698, 5
      %v4544 = vsel %vm2856, %v4542, %v4543
      %v4545 = vrot.slane %v4439, 5
      %v4546 = vrot.slane %v4545, 4
      %v4547 = vrot.slane %v3700, 5
      %v4548 = vsel %vm2856, %v4546, %v4547
      %v4549 = vrot.slane %v4547, 4
      %v4550 = vrot.slane %v3701, 5
      %v4551 = vsel %vm2856, %v4549, %v4550
      %v4552 = vrot.slane %v4440, 5
      %v4553 = vrot.slane %v4552, 4
      %v4554 = vrot.slane %v3703, 5
      %v4555 = vsel %vm2856, %v4553, %v4554
      %v4556 = vrot.slane %v4554, 4
      %v4557 = vrot.slane %v3704, 5
      %v4558 = vsel %vm2856, %v4556, %v4557
      %v4559 = vrot.slane %v4441, 5
      %v4560 = vrot.slane %v4559, 4
      %v4561 = vrot.slane %v3706, 5
      %v4562 = vsel %vm2856, %v4560, %v4561
      %v4563 = vrot.slane %v4561, 4
      %v4564 = vrot.slane %v3707, 5
      %v4565 = vsel %vm2856, %v4563, %v4564
      %v4566 = vrot.slane %v4442, 5
      %v4567 = vrot.slane %v4566, 4
      %v4568 = vrot.slane %v3709, 5
      %v4569 = vsel %vm2856, %v4567, %v4568
      %v4570 = vrot.slane %v4568, 4
      %v4571 = vrot.slane %v3710, 5
      %v4572 = vsel %vm2856, %v4570, %v4571
      %v4573 = vrot.slane %v4443, 5
      %v4574 = vrot.slane %v4573, 4
      %v4575 = vrot.slane %v3712, 5
      %v4576 = vsel %vm2856, %v4574, %v4575
      %v4577 = vrot.slane %v4575, 4
      %v4578 = vrot.slane %v3713, 5
      %v4579 = vsel %vm2856, %v4577, %v4578
      %v4580 = vrot.slane %v4444, 5
      %v4581 = vrot.slane %v4580, 4
      %v4582 = vrot.slane %v3715, 5
      %v4583 = vsel %vm2856, %v4581, %v4582
      %v4584 = vrot.slane %v4582, 4
      %v4585 = vrot.slane %v3716, 5
      %v4586 = vsel %vm2856, %v4584, %v4585
      %v4587 = vrot.slane %v4445, 5
      %v4588 = vrot.slane %v4587, 4
      %v4589 = vrot.slane %v3718, 5
      %v4590 = vsel %vm2856, %v4588, %v4589
      %v4591 = vrot.slane %v4589, 4
      %v4592 = vrot.slane %v3719, 5
      %v4593 = vsel %vm2856, %v4591, %v4592
      %v4594 = vrot.slane %v4446, 5
      %v4595 = vrot.slane %v4594, 4
      %v4596 = vrot.slane %v3721, 5
      %v4597 = vsel %vm2856, %v4595, %v4596
      %v4598 = vrot.slane %v4596, 4
      %v4599 = vrot.slane %v3722, 5
      %v4600 = vsel %vm2856, %v4598, %v4599
      %v4601 = vrot.slane %v4447, 5
      %v4602 = vrot.slane %v4601, 4
      %v4603 = vrot.slane %v3724, 5
      %v4604 = vsel %vm2856, %v4602, %v4603
      %v4605 = vrot.slane %v4603, 4
      %v4606 = vrot.slane %v3725, 5
      %v4607 = vsel %vm2856, %v4605, %v4606
      %s4608 = scalar_lea.vmem %s2, 320
      %v4609 = vld [vmem:[%s4608] sm:$0xf]
      %v4610 = vld [vmem:[%s4608 + $0x4] sm:$0xf]
      %v4611 = vld [vmem:[%s4608 + $0x8] sm:$0xf]
      %v4612 = vld [vmem:[%s4608 + $0xc] sm:$0xf]
      %v4613 = vld [vmem:[%s4608 + $0x10] sm:$0xf]
      %v4614 = vld [vmem:[%s4608 + $0x14] sm:$0xf]
      %v4615 = vld [vmem:[%s4608 + $0x18] sm:$0xf]
      %v4616 = vld [vmem:[%s4608 + $0x1c] sm:$0xf]
      %v4617 = vld [vmem:[%s4608 + $0x20] sm:$0xf]
      %v4618 = vld [vmem:[%s4608 + $0x24] sm:$0xf]
      %v4619 = vld [vmem:[%s4608 + $0x28] sm:$0xf]
      %v4620 = vld [vmem:[%s4608 + $0x2c] sm:$0xf]
      %v4621 = vld [vmem:[%s4608 + $0x30] sm:$0xf]
      %v4622 = vld [vmem:[%s4608 + $0x34] sm:$0xf]
      %v4623 = vld [vmem:[%s4608 + $0x38] sm:$0xf]
      %v4624 = vld [vmem:[%s4608 + $0x3c] sm:$0xf]
      %v4625 = vunpack.c.l.b16 %v4499
      %v4626 = vunpack.c.l.b16 %v4502
      %v4627 = vunpack.c.l.b16 %v4506
      %v4628 = vunpack.c.l.b16 %v4509
      %v4629 = vunpack.c.l.b16 %v4513
      %v4630 = vunpack.c.l.b16 %v4516
      %v4631 = vunpack.c.l.b16 %v4520
      %v4632 = vunpack.c.l.b16 %v4523
      %v4633 = vunpack.c.l.b16 %v4527
      %v4634 = vunpack.c.l.b16 %v4530
      %v4635 = vunpack.c.l.b16 %v4534
      %v4636 = vunpack.c.l.b16 %v4537
      %v4637 = vunpack.c.l.b16 %v4541
      %v4638 = vunpack.c.l.b16 %v4544
      %v4639 = vunpack.c.l.b16 %v4548
      %v4640 = vunpack.c.l.b16 %v4551
      %v4641 = vunpack.c.l.b16 %v4555
      %v4642 = vunpack.c.l.b16 %v4558
      %v4643 = vunpack.c.l.b16 %v4562
      %v4644 = vunpack.c.l.b16 %v4565
      %v4645 = vunpack.c.l.b16 %v4569
      %v4646 = vunpack.c.l.b16 %v4572
      %v4647 = vunpack.c.l.b16 %v4576
      %v4648 = vunpack.c.l.b16 %v4579
      %v4649 = vunpack.c.l.b16 %v4583
      %v4650 = vunpack.c.l.b16 %v4586
      %v4651 = vunpack.c.l.b16 %v4590
      %v4652 = vunpack.c.l.b16 %v4593
      %v4653 = vunpack.c.l.b16 %v4597
      %v4654 = vunpack.c.l.b16 %v4600
      %v4655 = vunpack.c.l.b16 %v4604
      %v4656 = vunpack.c.l.b16 %v4607
      %v4657 = vpack.c.b16 %v4626, %v4625
      %v4658 = vpack.c.b16 %v4628, %v4627
      %v4659 = vpack.c.b16 %v4630, %v4629
      %v4660 = vpack.c.b16 %v4632, %v4631
      %v4661 = vpack.c.b16 %v4634, %v4633
      %v4662 = vpack.c.b16 %v4636, %v4635
      %v4663 = vpack.c.b16 %v4638, %v4637
      %v4664 = vpack.c.b16 %v4640, %v4639
      %v4665 = vpack.c.b16 %v4642, %v4641
      %v4666 = vpack.c.b16 %v4644, %v4643
      %v4667 = vpack.c.b16 %v4646, %v4645
      %v4668 = vpack.c.b16 %v4648, %v4647
      %v4669 = vpack.c.b16 %v4650, %v4649
      %v4670 = vpack.c.b16 %v4652, %v4651
      %v4671 = vpack.c.b16 %v4654, %v4653
      %v4672 = vpack.c.b16 %v4656, %v4655
      %v4705 = vunpack.c.l.b16 %v4609
      %v4706 = vunpack.c.l.b16 %v4610
      %v4707 = vunpack.c.l.b16 %v4611
      %v4708 = vunpack.c.l.b16 %v4612
      %v4709 = vunpack.c.l.b16 %v4613
      %v4710 = vunpack.c.l.b16 %v4614
      %v4711 = vunpack.c.l.b16 %v4615
      %v4712 = vunpack.c.l.b16 %v4616
      %v4713 = vunpack.c.l.b16 %v4617
      %v4714 = vunpack.c.l.b16 %v4618
      %v4715 = vunpack.c.l.b16 %v4619
      %v4716 = vunpack.c.l.b16 %v4620
      %v4717 = vunpack.c.l.b16 %v4621
      %v4718 = vunpack.c.l.b16 %v4622
      %v4719 = vunpack.c.l.b16 %v4623
      %v4720 = vunpack.c.l.b16 %v4624
      %v4721 = vpack.c.b16 %v4706, %v4705
      %v4722 = vpack.c.b16 %v4708, %v4707
      %v4723 = vpack.c.b16 %v4710, %v4709
      %v4724 = vpack.c.b16 %v4712, %v4711
      %v4725 = vpack.c.b16 %v4714, %v4713
      %v4726 = vpack.c.b16 %v4716, %v4715
      %v4727 = vpack.c.b16 %v4718, %v4717
      %v4728 = vpack.c.b16 %v4720, %v4719
      %4737 = vmatprep.subr.bf16.mxu0 0
      %4738 = vmatpush1.bf16.msra.mxu0 %v4728
      %4739 = vmatprep.subr.bf16.mxu0 0
      %4740 = vmatpush1.bf16.msra.mxu0 %v4727
      %4741 = vmatprep.subr.bf16.mxu0 0
      %4742 = vmatpush1.bf16.msra.mxu0 %v4726
      %4743 = vmatprep.subr.bf16.mxu0 0
      %4744 = vmatpush1.bf16.msra.mxu0 %v4725
      %4745 = vmatprep.subr.bf16.mxu0 0
      %4746 = vmatpush1.bf16.msra.mxu0 %v4724
      %4747 = vmatprep.subr.bf16.mxu0 0
      %4748 = vmatpush1.bf16.msra.mxu0 %v4723
      %4749 = vmatprep.subr.bf16.mxu0 0
      %4750 = vmatpush1.bf16.msra.mxu0 %v4722
      %4751 = vmatprep.subr.bf16.mxu0 0
      %4752 = vmatpush1.bf16.msra.mxu0 %v4721
      %4753 = vmatprep.subr.bf16.mxu0 0
      %4754 = vmatpush2.bf16.msra.mxu0 0
      %4755 = vmatprep.subr.bf16.mxu0 0
      %4756 = vmatpush2.bf16.msra.mxu0 0
      %4757 = vmatprep.subr.bf16.mxu0 0
      %4758 = vmatpush2.bf16.msra.mxu0 0
      %4759 = vmatprep.subr.bf16.mxu0 0
      %4760 = vmatpush2.bf16.msra.mxu0 0
      %4761 = vmatprep.subr.bf16.mxu0 0
      %4762 = vmatpush2.bf16.msra.mxu0 0
      %4763 = vmatprep.subr.bf16.mxu0 0
      %4764 = vmatpush2.bf16.msra.mxu0 0
      %4765 = vmatprep.subr.bf16.mxu0 0
      %4766 = vmatpush2.bf16.msra.mxu0 0
      %4767 = vmatprep.subr.bf16.mxu0 0
      %4768 = vmatpush2.bf16.msra.mxu0 0
      %4769 = vmatprep.mubr.bf16.mxu0 0
      %4770 = vmatmul.mubr.bf16.gmra.mxu0 %v4657
      %v4771 = vpop.f32.mrf.mxu0
      %v4772 = vadd.f32 0.0, %v4771
      %v4773 = vpop.f32.mrf.mxu0
      %v4774 = vpop.f32.mrf.mxu0
      %v4775 = vadd.f32 0.0, %v4774
      %v4776 = vpop.f32.mrf.mxu0
      %4777 = vmatprep.mubr.bf16.mxu0 0
      %4778 = vmatmul.mubr.bf16.gmra.mxu0 %v4658
      %v4779 = vpop.f32.mrf.mxu0
      %v4780 = vadd.f32 0.0, %v4779
      %v4781 = vpop.f32.mrf.mxu0
      %v4782 = vpop.f32.mrf.mxu0
      %v4783 = vadd.f32 0.0, %v4782
      %v4784 = vpop.f32.mrf.mxu0
      %4785 = vmatprep.mubr.bf16.mxu0 0
      %4786 = vmatmul.mubr.bf16.gmra.mxu0 %v4659
      %v4787 = vpop.f32.mrf.mxu0
      %v4788 = vadd.f32 0.0, %v4787
      %v4789 = vpop.f32.mrf.mxu0
      %v4790 = vpop.f32.mrf.mxu0
      %v4791 = vadd.f32 0.0, %v4790
      %v4792 = vpop.f32.mrf.mxu0
      %4793 = vmatprep.mubr.bf16.mxu0 0
      %4794 = vmatmul.mubr.bf16.gmra.mxu0 %v4660
      %v4795 = vpop.f32.mrf.mxu0
      %v4796 = vadd.f32 0.0, %v4795
      %v4797 = vpop.f32.mrf.mxu0
      %v4798 = vpop.f32.mrf.mxu0
      %v4799 = vadd.f32 0.0, %v4798
      %v4800 = vpop.f32.mrf.mxu0
      %4801 = vmatprep.mubr.bf16.mxu0 0
      %4802 = vmatmul.mubr.bf16.gmra.mxu0 %v4661
      %v4803 = vpop.f32.mrf.mxu0
      %v4804 = vadd.f32 0.0, %v4803
      %v4805 = vpop.f32.mrf.mxu0
      %v4806 = vpop.f32.mrf.mxu0
      %v4807 = vadd.f32 0.0, %v4806
      %v4808 = vpop.f32.mrf.mxu0
      %4809 = vmatprep.mubr.bf16.mxu0 0
      %4810 = vmatmul.mubr.bf16.gmra.mxu0 %v4662
      %v4811 = vpop.f32.mrf.mxu0
      %v4812 = vadd.f32 0.0, %v4811
      %v4813 = vpop.f32.mrf.mxu0
      %v4814 = vpop.f32.mrf.mxu0
      %v4815 = vadd.f32 0.0, %v4814
      %v4816 = vpop.f32.mrf.mxu0
      %4817 = vmatprep.mubr.bf16.mxu0 0
      %4818 = vmatmul.mubr.bf16.gmra.mxu0 %v4663
      %v4819 = vpop.f32.mrf.mxu0
      %v4820 = vadd.f32 0.0, %v4819
      %v4821 = vpop.f32.mrf.mxu0
      %v4822 = vpop.f32.mrf.mxu0
      %v4823 = vadd.f32 0.0, %v4822
      %v4824 = vpop.f32.mrf.mxu0
      %4825 = vmatprep.mubr.bf16.mxu0 0
      %4826 = vmatmul.mubr.bf16.gmra.mxu0 %v4664
      %v4827 = vpop.f32.mrf.mxu0
      %v4828 = vadd.f32 0.0, %v4827
      %v4829 = vpop.f32.mrf.mxu0
      %v4830 = vpop.f32.mrf.mxu0
      %v4831 = vadd.f32 0.0, %v4830
      %v4832 = vpop.f32.mrf.mxu0
      %4833 = vmatprep.mubr.bf16.mxu0 0
      %4834 = vmatmul.mubr.bf16.gmra.mxu0 %v4665
      %v4835 = vpop.f32.mrf.mxu0
      %v4836 = vadd.f32 0.0, %v4835
      %v4837 = vpop.f32.mrf.mxu0
      %v4838 = vpop.f32.mrf.mxu0
      %v4839 = vadd.f32 0.0, %v4838
      %v4840 = vpop.f32.mrf.mxu0
      %4841 = vmatprep.mubr.bf16.mxu0 0
      %4842 = vmatmul.mubr.bf16.gmra.mxu0 %v4666
      %v4843 = vpop.f32.mrf.mxu0
      %v4844 = vadd.f32 0.0, %v4843
      %v4845 = vpop.f32.mrf.mxu0
      %v4846 = vpop.f32.mrf.mxu0
      %v4847 = vadd.f32 0.0, %v4846
      %v4848 = vpop.f32.mrf.mxu0
      %4849 = vmatprep.mubr.bf16.mxu0 0
      %4850 = vmatmul.mubr.bf16.gmra.mxu0 %v4667
      %v4851 = vpop.f32.mrf.mxu0
      %v4852 = vadd.f32 0.0, %v4851
      %v4853 = vpop.f32.mrf.mxu0
      %v4854 = vpop.f32.mrf.mxu0
      %v4855 = vadd.f32 0.0, %v4854
      %v4856 = vpop.f32.mrf.mxu0
      %4857 = vmatprep.mubr.bf16.mxu0 0
      %4858 = vmatmul.mubr.bf16.gmra.mxu0 %v4668
      %v4859 = vpop.f32.mrf.mxu0
      %v4860 = vadd.f32 0.0, %v4859
      %v4861 = vpop.f32.mrf.mxu0
      %v4862 = vpop.f32.mrf.mxu0
      %v4863 = vadd.f32 0.0, %v4862
      %v4864 = vpop.f32.mrf.mxu0
      %4865 = vmatprep.mubr.bf16.mxu0 0
      %4866 = vmatmul.mubr.bf16.gmra.mxu0 %v4669
      %v4867 = vpop.f32.mrf.mxu0
      %v4868 = vadd.f32 0.0, %v4867
      %v4869 = vpop.f32.mrf.mxu0
      %v4870 = vpop.f32.mrf.mxu0
      %v4871 = vadd.f32 0.0, %v4870
      %v4872 = vpop.f32.mrf.mxu0
      %4873 = vmatprep.mubr.bf16.mxu0 0
      %4874 = vmatmul.mubr.bf16.gmra.mxu0 %v4670
      %v4875 = vpop.f32.mrf.mxu0
      %v4876 = vadd.f32 0.0, %v4875
      %v4877 = vpop.f32.mrf.mxu0
      %v4878 = vpop.f32.mrf.mxu0
      %v4879 = vadd.f32 0.0, %v4878
      %v4880 = vpop.f32.mrf.mxu0
      %4881 = vmatprep.mubr.bf16.mxu0 0
      %4882 = vmatmul.mubr.bf16.gmra.mxu0 %v4671
      %v4883 = vpop.f32.mrf.mxu0
      %v4884 = vadd.f32 0.0, %v4883
      %v4885 = vpop.f32.mrf.mxu0
      %v4886 = vpop.f32.mrf.mxu0
      %v4887 = vadd.f32 0.0, %v4886
      %v4888 = vpop.f32.mrf.mxu0
      %4889 = vmatprep.mubr.bf16.mxu0 0
      %4890 = vmatmul.mubr.bf16.gmra.mxu0 %v4672
      %v4891 = vpop.f32.mrf.mxu0
      %v4892 = vadd.f32 0.0, %v4891
      %v4893 = vpop.f32.mrf.mxu0
      %v4894 = vpop.f32.mrf.mxu0
      %v4895 = vadd.f32 0.0, %v4894
      %v4896 = vpop.f32.mrf.mxu0
      %4897 = vdwg.mxu0
      %v4898 = vadd.f32 %v4400, %v4772
      %v4899 = vadd.f32 %v4401, %v4775
      %v4900 = vadd.f32 %v4402, %v4780
      %v4901 = vadd.f32 %v4403, %v4783
      %v4902 = vadd.f32 %v4404, %v4788
      %v4903 = vadd.f32 %v4405, %v4791
      %v4904 = vadd.f32 %v4406, %v4796
      %v4905 = vadd.f32 %v4407, %v4799
      %v4906 = vadd.f32 %v4408, %v4804
      %v4907 = vadd.f32 %v4409, %v4807
      %v4908 = vadd.f32 %v4410, %v4812
      %v4909 = vadd.f32 %v4411, %v4815
      %v4910 = vadd.f32 %v4412, %v4820
      %v4911 = vadd.f32 %v4413, %v4823
      %v4912 = vadd.f32 %v4414, %v4828
      %v4913 = vadd.f32 %v4415, %v4831
      %v4914 = vadd.f32 %v4416, %v4836
      %v4915 = vadd.f32 %v4417, %v4839
      %v4916 = vadd.f32 %v4418, %v4844
      %v4917 = vadd.f32 %v4419, %v4847
      %v4918 = vadd.f32 %v4420, %v4852
      %v4919 = vadd.f32 %v4421, %v4855
      %v4920 = vadd.f32 %v4422, %v4860
      %v4921 = vadd.f32 %v4423, %v4863
      %v4922 = vadd.f32 %v4424, %v4868
      %v4923 = vadd.f32 %v4425, %v4871
      %v4924 = vadd.f32 %v4426, %v4876
      %v4925 = vadd.f32 %v4427, %v4879
      %v4926 = vadd.f32 %v4428, %v4884
      %v4927 = vadd.f32 %v4429, %v4887
      %v4928 = vadd.f32 %v4430, %v4892
      %v4929 = vadd.f32 %v4431, %v4895
      %s4930 = scalar_lea.vmem [#allocation4], 24
      %v4931 = vld [vmem:[%s4930] sm:$0xf]
      %v4932 = vld [vmem:[%s4930 + $0x4] sm:$0xf]
      %v4933 = vld [vmem:[%s4930 + $0xc] sm:$0xf]
      %v4934 = vld [vmem:[%s4930 + $0x10] sm:$0xf]
      %v4935 = vld [vmem:[%s4930 + $0x18] sm:$0xf]
      %v4936 = vld [vmem:[%s4930 + $0x1c] sm:$0xf]
      %v4937 = vld [vmem:[%s4930 + $0x24] sm:$0xf]
      %v4938 = vld [vmem:[%s4930 + $0x28] sm:$0xf]
      %v4939 = vld [vmem:[%s4930 + $0x30] sm:$0xf]
      %v4940 = vld [vmem:[%s4930 + $0x34] sm:$0xf]
      %v4941 = vld [vmem:[%s4930 + $0x3c] sm:$0xf]
      %v4942 = vld [vmem:[%s4930 + $0x40] sm:$0xf]
      %v4943 = vld [vmem:[%s4930 + $0x48] sm:$0xf]
      %v4944 = vld [vmem:[%s4930 + $0x4c] sm:$0xf]
      %v4945 = vld [vmem:[%s4930 + $0x54] sm:$0xf]
      %v4946 = vld [vmem:[%s4930 + $0x58] sm:$0xf]
      %v4947 = vld [vmem:[%s4930 + $0x60] sm:$0xf]
      %v4948 = vld [vmem:[%s4930 + $0x64] sm:$0xf]
      %v4949 = vld [vmem:[%s4930 + $0x6c] sm:$0xf]
      %v4950 = vld [vmem:[%s4930 + $0x70] sm:$0xf]
      %v4951 = vld [vmem:[%s4930 + $0x78] sm:$0xf]
      %v4952 = vld [vmem:[%s4930 + $0x7c] sm:$0xf]
      %v4953 = vld [vmem:[%s4930 + $0x84] sm:$0xf]
      %v4954 = vld [vmem:[%s4930 + $0x88] sm:$0xf]
      %v4955 = vld [vmem:[%s4930 + $0x90] sm:$0xf]
      %v4956 = vld [vmem:[%s4930 + $0x94] sm:$0xf]
      %v4957 = vld [vmem:[%s4930 + $0x9c] sm:$0xf]
      %v4958 = vld [vmem:[%s4930 + $0xa0] sm:$0xf]
      %v4959 = vld [vmem:[%s4930 + $0xa8] sm:$0xf]
      %v4960 = vld [vmem:[%s4930 + $0xac] sm:$0xf]
      %v4961 = vld [vmem:[%s4930 + $0xb4] sm:$0xf]
      %v4962 = vld [vmem:[%s4930 + $0xb8] sm:$0xf]
      %s4963 = scalar_lea.vmem %s2, 384
      %v4964 = vld [vmem:[%s4963] sm:$0xf]
      %v4965 = vld [vmem:[%s4963 + $0x4] sm:$0xf]
      %v4966 = vld [vmem:[%s4963 + $0x8] sm:$0xf]
      %v4967 = vld [vmem:[%s4963 + $0xc] sm:$0xf]
      %v4968 = vld [vmem:[%s4963 + $0x10] sm:$0xf]
      %v4969 = vld [vmem:[%s4963 + $0x14] sm:$0xf]
      %v4970 = vld [vmem:[%s4963 + $0x18] sm:$0xf]
      %v4971 = vld [vmem:[%s4963 + $0x1c] sm:$0xf]
      %v4972 = vld [vmem:[%s4963 + $0x20] sm:$0xf]
      %v4973 = vld [vmem:[%s4963 + $0x24] sm:$0xf]
      %v4974 = vld [vmem:[%s4963 + $0x28] sm:$0xf]
      %v4975 = vld [vmem:[%s4963 + $0x2c] sm:$0xf]
      %v4976 = vld [vmem:[%s4963 + $0x30] sm:$0xf]
      %v4977 = vld [vmem:[%s4963 + $0x34] sm:$0xf]
      %v4978 = vld [vmem:[%s4963 + $0x38] sm:$0xf]
      %v4979 = vld [vmem:[%s4963 + $0x3c] sm:$0xf]
      %v5012 = vunpack.c.l.b16 %v4931
      %v5013 = vunpack.c.l.b16 %v4932
      %v5014 = vunpack.c.l.b16 %v4933
      %v5015 = vunpack.c.l.b16 %v4934
      %v5016 = vunpack.c.l.b16 %v4935
      %v5017 = vunpack.c.l.b16 %v4936
      %v5018 = vunpack.c.l.b16 %v4937
      %v5019 = vunpack.c.l.b16 %v4938
      %v5020 = vunpack.c.l.b16 %v4939
      %v5021 = vunpack.c.l.b16 %v4940
      %v5022 = vunpack.c.l.b16 %v4941
      %v5023 = vunpack.c.l.b16 %v4942
      %v5024 = vunpack.c.l.b16 %v4943
      %v5025 = vunpack.c.l.b16 %v4944
      %v5026 = vunpack.c.l.b16 %v4945
      %v5027 = vunpack.c.l.b16 %v4946
      %v5028 = vunpack.c.l.b16 %v4947
      %v5029 = vunpack.c.l.b16 %v4948
      %v5030 = vunpack.c.l.b16 %v4949
      %v5031 = vunpack.c.l.b16 %v4950
      %v5032 = vunpack.c.l.b16 %v4951
      %v5033 = vunpack.c.l.b16 %v4952
      %v5034 = vunpack.c.l.b16 %v4953
      %v5035 = vunpack.c.l.b16 %v4954
      %v5036 = vunpack.c.l.b16 %v4955
      %v5037 = vunpack.c.l.b16 %v4956
      %v5038 = vunpack.c.l.b16 %v4957
      %v5039 = vunpack.c.l.b16 %v4958
      %v5040 = vunpack.c.l.b16 %v4959
      %v5041 = vunpack.c.l.b16 %v4960
      %v5042 = vunpack.c.l.b16 %v4961
      %v5043 = vunpack.c.l.b16 %v4962
      %v5044 = vpack.c.b16 %v5013, %v5012
      %v5045 = vpack.c.b16 %v5015, %v5014
      %v5046 = vpack.c.b16 %v5017, %v5016
      %v5047 = vpack.c.b16 %v5019, %v5018
      %v5048 = vpack.c.b16 %v5021, %v5020
      %v5049 = vpack.c.b16 %v5023, %v5022
      %v5050 = vpack.c.b16 %v5025, %v5024
      %v5051 = vpack.c.b16 %v5027, %v5026
      %v5052 = vpack.c.b16 %v5029, %v5028
      %v5053 = vpack.c.b16 %v5031, %v5030
      %v5054 = vpack.c.b16 %v5033, %v5032
      %v5055 = vpack.c.b16 %v5035, %v5034
      %v5056 = vpack.c.b16 %v5037, %v5036
      %v5057 = vpack.c.b16 %v5039, %v5038
      %v5058 = vpack.c.b16 %v5041, %v5040
      %v5059 = vpack.c.b16 %v5043, %v5042
      %v5092 = vunpack.c.l.b16 %v4964
      %v5093 = vunpack.c.l.b16 %v4965
      %v5094 = vunpack.c.l.b16 %v4966
      %v5095 = vunpack.c.l.b16 %v4967
      %v5096 = vunpack.c.l.b16 %v4968
      %v5097 = vunpack.c.l.b16 %v4969
      %v5098 = vunpack.c.l.b16 %v4970
      %v5099 = vunpack.c.l.b16 %v4971
      %v5100 = vunpack.c.l.b16 %v4972
      %v5101 = vunpack.c.l.b16 %v4973
      %v5102 = vunpack.c.l.b16 %v4974
      %v5103 = vunpack.c.l.b16 %v4975
      %v5104 = vunpack.c.l.b16 %v4976
      %v5105 = vunpack.c.l.b16 %v4977
      %v5106 = vunpack.c.l.b16 %v4978
      %v5107 = vunpack.c.l.b16 %v4979
      %v5108 = vpack.c.b16 %v5093, %v5092
      %v5109 = vpack.c.b16 %v5095, %v5094
      %v5110 = vpack.c.b16 %v5097, %v5096
      %v5111 = vpack.c.b16 %v5099, %v5098
      %v5112 = vpack.c.b16 %v5101, %v5100
      %v5113 = vpack.c.b16 %v5103, %v5102
      %v5114 = vpack.c.b16 %v5105, %v5104
      %v5115 = vpack.c.b16 %v5107, %v5106
      %5124 = vmatprep.subr.bf16.mxu0 0
      %5125 = vmatpush1.bf16.msra.mxu0 %v5115
      %5126 = vmatprep.subr.bf16.mxu0 0
      %5127 = vmatpush1.bf16.msra.mxu0 %v5114
      %5128 = vmatprep.subr.bf16.mxu0 0
      %5129 = vmatpush1.bf16.msra.mxu0 %v5113
      %5130 = vmatprep.subr.bf16.mxu0 0
      %5131 = vmatpush1.bf16.msra.mxu0 %v5112
      %5132 = vmatprep.subr.bf16.mxu0 0
      %5133 = vmatpush1.bf16.msra.mxu0 %v5111
      %5134 = vmatprep.subr.bf16.mxu0 0
      %5135 = vmatpush1.bf16.msra.mxu0 %v5110
      %5136 = vmatprep.subr.bf16.mxu0 0
      %5137 = vmatpush1.bf16.msra.mxu0 %v5109
      %5138 = vmatprep.subr.bf16.mxu0 0
      %5139 = vmatpush1.bf16.msra.mxu0 %v5108
      %5140 = vmatprep.subr.bf16.mxu0 0
      %5141 = vmatpush2.bf16.msra.mxu0 0
      %5142 = vmatprep.subr.bf16.mxu0 0
      %5143 = vmatpush2.bf16.msra.mxu0 0
      %5144 = vmatprep.subr.bf16.mxu0 0
      %5145 = vmatpush2.bf16.msra.mxu0 0
      %5146 = vmatprep.subr.bf16.mxu0 0
      %5147 = vmatpush2.bf16.msra.mxu0 0
      %5148 = vmatprep.subr.bf16.mxu0 0
      %5149 = vmatpush2.bf16.msra.mxu0 0
      %5150 = vmatprep.subr.bf16.mxu0 0
      %5151 = vmatpush2.bf16.msra.mxu0 0
      %5152 = vmatprep.subr.bf16.mxu0 0
      %5153 = vmatpush2.bf16.msra.mxu0 0
      %5154 = vmatprep.subr.bf16.mxu0 0
      %5155 = vmatpush2.bf16.msra.mxu0 0
      %5156 = vmatprep.mubr.bf16.mxu0 0
      %5157 = vmatmul.mubr.bf16.gmra.mxu0 %v5044
      %v5158 = vpop.f32.mrf.mxu0
      %v5159 = vadd.f32 0.0, %v5158
      %v5160 = vpop.f32.mrf.mxu0
      %v5161 = vpop.f32.mrf.mxu0
      %v5162 = vadd.f32 0.0, %v5161
      %v5163 = vpop.f32.mrf.mxu0
      %5164 = vmatprep.mubr.bf16.mxu0 0
      %5165 = vmatmul.mubr.bf16.gmra.mxu0 %v5045
      %v5166 = vpop.f32.mrf.mxu0
      %v5167 = vadd.f32 0.0, %v5166
      %v5168 = vpop.f32.mrf.mxu0
      %v5169 = vpop.f32.mrf.mxu0
      %v5170 = vadd.f32 0.0, %v5169
      %v5171 = vpop.f32.mrf.mxu0
      %5172 = vmatprep.mubr.bf16.mxu0 0
      %5173 = vmatmul.mubr.bf16.gmra.mxu0 %v5046
      %v5174 = vpop.f32.mrf.mxu0
      %v5175 = vadd.f32 0.0, %v5174
      %v5176 = vpop.f32.mrf.mxu0
      %v5177 = vpop.f32.mrf.mxu0
      %v5178 = vadd.f32 0.0, %v5177
      %v5179 = vpop.f32.mrf.mxu0
      %5180 = vmatprep.mubr.bf16.mxu0 0
      %5181 = vmatmul.mubr.bf16.gmra.mxu0 %v5047
      %v5182 = vpop.f32.mrf.mxu0
      %v5183 = vadd.f32 0.0, %v5182
      %v5184 = vpop.f32.mrf.mxu0
      %v5185 = vpop.f32.mrf.mxu0
      %v5186 = vadd.f32 0.0, %v5185
      %v5187 = vpop.f32.mrf.mxu0
      %5188 = vmatprep.mubr.bf16.mxu0 0
      %5189 = vmatmul.mubr.bf16.gmra.mxu0 %v5048
      %v5190 = vpop.f32.mrf.mxu0
      %v5191 = vadd.f32 0.0, %v5190
      %v5192 = vpop.f32.mrf.mxu0
      %v5193 = vpop.f32.mrf.mxu0
      %v5194 = vadd.f32 0.0, %v5193
      %v5195 = vpop.f32.mrf.mxu0
      %5196 = vmatprep.mubr.bf16.mxu0 0
      %5197 = vmatmul.mubr.bf16.gmra.mxu0 %v5049
      %v5198 = vpop.f32.mrf.mxu0
      %v5199 = vadd.f32 0.0, %v5198
      %v5200 = vpop.f32.mrf.mxu0
      %v5201 = vpop.f32.mrf.mxu0
      %v5202 = vadd.f32 0.0, %v5201
      %v5203 = vpop.f32.mrf.mxu0
      %5204 = vmatprep.mubr.bf16.mxu0 0
      %5205 = vmatmul.mubr.bf16.gmra.mxu0 %v5050
      %v5206 = vpop.f32.mrf.mxu0
      %v5207 = vadd.f32 0.0, %v5206
      %v5208 = vpop.f32.mrf.mxu0
      %v5209 = vpop.f32.mrf.mxu0
      %v5210 = vadd.f32 0.0, %v5209
      %v5211 = vpop.f32.mrf.mxu0
      %5212 = vmatprep.mubr.bf16.mxu0 0
      %5213 = vmatmul.mubr.bf16.gmra.mxu0 %v5051
      %v5214 = vpop.f32.mrf.mxu0
      %v5215 = vadd.f32 0.0, %v5214
      %v5216 = vpop.f32.mrf.mxu0
      %v5217 = vpop.f32.mrf.mxu0
      %v5218 = vadd.f32 0.0, %v5217
      %v5219 = vpop.f32.mrf.mxu0
      %5220 = vmatprep.mubr.bf16.mxu0 0
      %5221 = vmatmul.mubr.bf16.gmra.mxu0 %v5052
      %v5222 = vpop.f32.mrf.mxu0
      %v5223 = vadd.f32 0.0, %v5222
      %v5224 = vpop.f32.mrf.mxu0
      %v5225 = vpop.f32.mrf.mxu0
      %v5226 = vadd.f32 0.0, %v5225
      %v5227 = vpop.f32.mrf.mxu0
      %5228 = vmatprep.mubr.bf16.mxu0 0
      %5229 = vmatmul.mubr.bf16.gmra.mxu0 %v5053
      %v5230 = vpop.f32.mrf.mxu0
      %v5231 = vadd.f32 0.0, %v5230
      %v5232 = vpop.f32.mrf.mxu0
      %v5233 = vpop.f32.mrf.mxu0
      %v5234 = vadd.f32 0.0, %v5233
      %v5235 = vpop.f32.mrf.mxu0
      %5236 = vmatprep.mubr.bf16.mxu0 0
      %5237 = vmatmul.mubr.bf16.gmra.mxu0 %v5054
      %v5238 = vpop.f32.mrf.mxu0
      %v5239 = vadd.f32 0.0, %v5238
      %v5240 = vpop.f32.mrf.mxu0
      %v5241 = vpop.f32.mrf.mxu0
      %v5242 = vadd.f32 0.0, %v5241
      %v5243 = vpop.f32.mrf.mxu0
      %5244 = vmatprep.mubr.bf16.mxu0 0
      %5245 = vmatmul.mubr.bf16.gmra.mxu0 %v5055
      %v5246 = vpop.f32.mrf.mxu0
      %v5247 = vadd.f32 0.0, %v5246
      %v5248 = vpop.f32.mrf.mxu0
      %v5249 = vpop.f32.mrf.mxu0
      %v5250 = vadd.f32 0.0, %v5249
      %v5251 = vpop.f32.mrf.mxu0
      %5252 = vmatprep.mubr.bf16.mxu0 0
      %5253 = vmatmul.mubr.bf16.gmra.mxu0 %v5056
      %v5254 = vpop.f32.mrf.mxu0
      %v5255 = vadd.f32 0.0, %v5254
      %v5256 = vpop.f32.mrf.mxu0
      %v5257 = vpop.f32.mrf.mxu0
      %v5258 = vadd.f32 0.0, %v5257
      %v5259 = vpop.f32.mrf.mxu0
      %5260 = vmatprep.mubr.bf16.mxu0 0
      %5261 = vmatmul.mubr.bf16.gmra.mxu0 %v5057
      %v5262 = vpop.f32.mrf.mxu0
      %v5263 = vadd.f32 0.0, %v5262
      %v5264 = vpop.f32.mrf.mxu0
      %v5265 = vpop.f32.mrf.mxu0
      %v5266 = vadd.f32 0.0, %v5265
      %v5267 = vpop.f32.mrf.mxu0
      %5268 = vmatprep.mubr.bf16.mxu0 0
      %5269 = vmatmul.mubr.bf16.gmra.mxu0 %v5058
      %v5270 = vpop.f32.mrf.mxu0
      %v5271 = vadd.f32 0.0, %v5270
      %v5272 = vpop.f32.mrf.mxu0
      %v5273 = vpop.f32.mrf.mxu0
      %v5274 = vadd.f32 0.0, %v5273
      %v5275 = vpop.f32.mrf.mxu0
      %5276 = vmatprep.mubr.bf16.mxu0 0
      %5277 = vmatmul.mubr.bf16.gmra.mxu0 %v5059
      %v5278 = vpop.f32.mrf.mxu0
      %v5279 = vadd.f32 0.0, %v5278
      %v5280 = vpop.f32.mrf.mxu0
      %v5281 = vpop.f32.mrf.mxu0
      %v5282 = vadd.f32 0.0, %v5281
      %v5283 = vpop.f32.mrf.mxu0
      %5284 = vdwg.mxu0
      %v5285 = vadd.f32 %v4898, %v5159
      %v5286 = vadd.f32 %v4899, %v5162
      %v5287 = vadd.f32 %v4900, %v5167
      %v5288 = vadd.f32 %v4901, %v5170
      %v5289 = vadd.f32 %v4902, %v5175
      %v5290 = vadd.f32 %v4903, %v5178
      %v5291 = vadd.f32 %v4904, %v5183
      %v5292 = vadd.f32 %v4905, %v5186
      %v5293 = vadd.f32 %v4906, %v5191
      %v5294 = vadd.f32 %v4907, %v5194
      %v5295 = vadd.f32 %v4908, %v5199
      %v5296 = vadd.f32 %v4909, %v5202
      %v5297 = vadd.f32 %v4910, %v5207
      %v5298 = vadd.f32 %v4911, %v5210
      %v5299 = vadd.f32 %v4912, %v5215
      %v5300 = vadd.f32 %v4913, %v5218
      %v5301 = vadd.f32 %v4914, %v5223
      %v5302 = vadd.f32 %v4915, %v5226
      %v5303 = vadd.f32 %v4916, %v5231
      %v5304 = vadd.f32 %v4917, %v5234
      %v5305 = vadd.f32 %v4918, %v5239
      %v5306 = vadd.f32 %v4919, %v5242
      %v5307 = vadd.f32 %v4920, %v5247
      %v5308 = vadd.f32 %v4921, %v5250
      %v5309 = vadd.f32 %v4922, %v5255
      %v5310 = vadd.f32 %v4923, %v5258
      %v5311 = vadd.f32 %v4924, %v5263
      %v5312 = vadd.f32 %v4925, %v5266
      %v5313 = vadd.f32 %v4926, %v5271
      %v5314 = vadd.f32 %v4927, %v5274
      %v5315 = vadd.f32 %v4928, %v5279
      %v5316 = vadd.f32 %v4929, %v5282
      %v5317 = vld [vmem:[%s4930] sm:$0xf]
      %v5318 = vld [vmem:[%s4930 + $0x4] sm:$0xf]
      %v5319 = vld [vmem:[%s4930 + $0x8] sm:$0x1]
      %v5320 = vld [vmem:[%s4930 + $0xc] sm:$0xf]
      %v5321 = vld [vmem:[%s4930 + $0x10] sm:$0xf]
      %v5322 = vld [vmem:[%s4930 + $0x14] sm:$0x1]
      %v5323 = vld [vmem:[%s4930 + $0x18] sm:$0xf]
      %v5324 = vld [vmem:[%s4930 + $0x1c] sm:$0xf]
      %v5325 = vld [vmem:[%s4930 + $0x20] sm:$0x1]
      %v5326 = vld [vmem:[%s4930 + $0x24] sm:$0xf]
      %v5327 = vld [vmem:[%s4930 + $0x28] sm:$0xf]
      %v5328 = vld [vmem:[%s4930 + $0x2c] sm:$0x1]
      %v5329 = vld [vmem:[%s4930 + $0x30] sm:$0xf]
      %v5330 = vld [vmem:[%s4930 + $0x34] sm:$0xf]
      %v5331 = vld [vmem:[%s4930 + $0x38] sm:$0x1]
      %v5332 = vld [vmem:[%s4930 + $0x3c] sm:$0xf]
      %v5333 = vld [vmem:[%s4930 + $0x40] sm:$0xf]
      %v5334 = vld [vmem:[%s4930 + $0x44] sm:$0x1]
      %v5335 = vld [vmem:[%s4930 + $0x48] sm:$0xf]
      %v5336 = vld [vmem:[%s4930 + $0x4c] sm:$0xf]
      %v5337 = vld [vmem:[%s4930 + $0x50] sm:$0x1]
      %v5338 = vld [vmem:[%s4930 + $0x54] sm:$0xf]
      %v5339 = vld [vmem:[%s4930 + $0x58] sm:$0xf]
      %v5340 = vld [vmem:[%s4930 + $0x5c] sm:$0x1]
      %v5341 = vld [vmem:[%s4930 + $0x60] sm:$0xf]
      %v5342 = vld [vmem:[%s4930 + $0x64] sm:$0xf]
      %v5343 = vld [vmem:[%s4930 + $0x68] sm:$0x1]
      %v5344 = vld [vmem:[%s4930 + $0x6c] sm:$0xf]
      %v5345 = vld [vmem:[%s4930 + $0x70] sm:$0xf]
      %v5346 = vld [vmem:[%s4930 + $0x74] sm:$0x1]
      %v5347 = vld [vmem:[%s4930 + $0x78] sm:$0xf]
      %v5348 = vld [vmem:[%s4930 + $0x7c] sm:$0xf]
      %v5349 = vld [vmem:[%s4930 + $0x80] sm:$0x1]
      %v5350 = vld [vmem:[%s4930 + $0x84] sm:$0xf]
      %v5351 = vld [vmem:[%s4930 + $0x88] sm:$0xf]
      %v5352 = vld [vmem:[%s4930 + $0x8c] sm:$0x1]
      %v5353 = vld [vmem:[%s4930 + $0x90] sm:$0xf]
      %v5354 = vld [vmem:[%s4930 + $0x94] sm:$0xf]
      %v5355 = vld [vmem:[%s4930 + $0x98] sm:$0x1]
      %v5356 = vld [vmem:[%s4930 + $0x9c] sm:$0xf]
      %v5357 = vld [vmem:[%s4930 + $0xa0] sm:$0xf]
      %v5358 = vld [vmem:[%s4930 + $0xa4] sm:$0x1]
      %v5359 = vld [vmem:[%s4930 + $0xa8] sm:$0xf]
      %v5360 = vld [vmem:[%s4930 + $0xac] sm:$0xf]
      %v5361 = vld [vmem:[%s4930 + $0xb0] sm:$0x1]
      %v5362 = vld [vmem:[%s4930 + $0xb4] sm:$0xf]
      %v5363 = vld [vmem:[%s4930 + $0xb8] sm:$0xf]
      %v5364 = vld [vmem:[%s4930 + $0xbc] sm:$0x1]
      %v5366 = vshrl.u32 %v5317, 16
      %v5368 = vrot.slane %v5366, 4
      %v5369 = vshll.u32 %v5317, 16
      %v5371 = vrot.slane %v5369, 5
      %v5372 = vor.u32 %v5368, %v5371
      %v5373 = vrot.slane %v5372, 4
      %v5375 = vshll.u32 %v5318, 16
      %v5377 = vrot.slane %v5375, 5
      %v5378 = vsel %vm1826, %v5373, %v5377
      %v5379 = vshrl.u32 %v5318, 16
      %v5381 = vrot.slane %v5379, 4
      %v5382 = vor.u32 %v5381, %v5377
      %v5383 = vrot.slane %v5382, 4
      %v5385 = vshll.u32 %v5319, 16
      %v5387 = vrot.slane %v5385, 5
      %v5388 = vsel %vm1826, %v5383, %v5387
      %v5390 = vshrl.u32 %v5320, 16
      %v5392 = vrot.slane %v5390, 4
      %v5393 = vshll.u32 %v5320, 16
      %v5395 = vrot.slane %v5393, 5
      %v5396 = vor.u32 %v5392, %v5395
      %v5397 = vrot.slane %v5396, 4
      %v5399 = vshll.u32 %v5321, 16
      %v5401 = vrot.slane %v5399, 5
      %v5402 = vsel %vm1826, %v5397, %v5401
      %v5403 = vshrl.u32 %v5321, 16
      %v5405 = vrot.slane %v5403, 4
      %v5406 = vor.u32 %v5405, %v5401
      %v5407 = vrot.slane %v5406, 4
      %v5409 = vshll.u32 %v5322, 16
      %v5411 = vrot.slane %v5409, 5
      %v5412 = vsel %vm1826, %v5407, %v5411
      %v5414 = vshrl.u32 %v5323, 16
      %v5416 = vrot.slane %v5414, 4
      %v5417 = vshll.u32 %v5323, 16
      %v5419 = vrot.slane %v5417, 5
      %v5420 = vor.u32 %v5416, %v5419
      %v5421 = vrot.slane %v5420, 4
      %v5423 = vshll.u32 %v5324, 16
      %v5425 = vrot.slane %v5423, 5
      %v5426 = vsel %vm1826, %v5421, %v5425
      %v5427 = vshrl.u32 %v5324, 16
      %v5429 = vrot.slane %v5427, 4
      %v5430 = vor.u32 %v5429, %v5425
      %v5431 = vrot.slane %v5430, 4
      %v5433 = vshll.u32 %v5325, 16
      %v5435 = vrot.slane %v5433, 5
      %v5436 = vsel %vm1826, %v5431, %v5435
      %v5438 = vshrl.u32 %v5326, 16
      %v5440 = vrot.slane %v5438, 4
      %v5441 = vshll.u32 %v5326, 16
      %v5443 = vrot.slane %v5441, 5
      %v5444 = vor.u32 %v5440, %v5443
      %v5445 = vrot.slane %v5444, 4
      %v5447 = vshll.u32 %v5327, 16
      %v5449 = vrot.slane %v5447, 5
      %v5450 = vsel %vm1826, %v5445, %v5449
      %v5451 = vshrl.u32 %v5327, 16
      %v5453 = vrot.slane %v5451, 4
      %v5454 = vor.u32 %v5453, %v5449
      %v5455 = vrot.slane %v5454, 4
      %v5457 = vshll.u32 %v5328, 16
      %v5459 = vrot.slane %v5457, 5
      %v5460 = vsel %vm1826, %v5455, %v5459
      %v5462 = vshrl.u32 %v5329, 16
      %v5464 = vrot.slane %v5462, 4
      %v5465 = vshll.u32 %v5329, 16
      %v5467 = vrot.slane %v5465, 5
      %v5468 = vor.u32 %v5464, %v5467
      %v5469 = vrot.slane %v5468, 4
      %v5471 = vshll.u32 %v5330, 16
      %v5473 = vrot.slane %v5471, 5
      %v5474 = vsel %vm1826, %v5469, %v5473
      %v5475 = vshrl.u32 %v5330, 16
      %v5477 = vrot.slane %v5475, 4
      %v5478 = vor.u32 %v5477, %v5473
      %v5479 = vrot.slane %v5478, 4
      %v5481 = vshll.u32 %v5331, 16
      %v5483 = vrot.slane %v5481, 5
      %v5484 = vsel %vm1826, %v5479, %v5483
      %v5486 = vshrl.u32 %v5332, 16
      %v5488 = vrot.slane %v5486, 4
      %v5489 = vshll.u32 %v5332, 16
      %v5491 = vrot.slane %v5489, 5
      %v5492 = vor.u32 %v5488, %v5491
      %v5493 = vrot.slane %v5492, 4
      %v5495 = vshll.u32 %v5333, 16
      %v5497 = vrot.slane %v5495, 5
      %v5498 = vsel %vm1826, %v5493, %v5497
      %v5499 = vshrl.u32 %v5333, 16
      %v5501 = vrot.slane %v5499, 4
      %v5502 = vor.u32 %v5501, %v5497
      %v5503 = vrot.slane %v5502, 4
      %v5505 = vshll.u32 %v5334, 16
      %v5507 = vrot.slane %v5505, 5
      %v5508 = vsel %vm1826, %v5503, %v5507
      %v5510 = vshrl.u32 %v5335, 16
      %v5512 = vrot.slane %v5510, 4
      %v5513 = vshll.u32 %v5335, 16
      %v5515 = vrot.slane %v5513, 5
      %v5516 = vor.u32 %v5512, %v5515
      %v5517 = vrot.slane %v5516, 4
      %v5519 = vshll.u32 %v5336, 16
      %v5521 = vrot.slane %v5519, 5
      %v5522 = vsel %vm1826, %v5517, %v5521
      %v5523 = vshrl.u32 %v5336, 16
      %v5525 = vrot.slane %v5523, 4
      %v5526 = vor.u32 %v5525, %v5521
      %v5527 = vrot.slane %v5526, 4
      %v5529 = vshll.u32 %v5337, 16
      %v5531 = vrot.slane %v5529, 5
      %v5532 = vsel %vm1826, %v5527, %v5531
      %v5534 = vshrl.u32 %v5338, 16
      %v5536 = vrot.slane %v5534, 4
      %v5537 = vshll.u32 %v5338, 16
      %v5539 = vrot.slane %v5537, 5
      %v5540 = vor.u32 %v5536, %v5539
      %v5541 = vrot.slane %v5540, 4
      %v5543 = vshll.u32 %v5339, 16
      %v5545 = vrot.slane %v5543, 5
      %v5546 = vsel %vm1826, %v5541, %v5545
      %v5547 = vshrl.u32 %v5339, 16
      %v5549 = vrot.slane %v5547, 4
      %v5550 = vor.u32 %v5549, %v5545
      %v5551 = vrot.slane %v5550, 4
      %v5553 = vshll.u32 %v5340, 16
      %v5555 = vrot.slane %v5553, 5
      %v5556 = vsel %vm1826, %v5551, %v5555
      %v5558 = vshrl.u32 %v5341, 16
      %v5560 = vrot.slane %v5558, 4
      %v5561 = vshll.u32 %v5341, 16
      %v5563 = vrot.slane %v5561, 5
      %v5564 = vor.u32 %v5560, %v5563
      %v5565 = vrot.slane %v5564, 4
      %v5567 = vshll.u32 %v5342, 16
      %v5569 = vrot.slane %v5567, 5
      %v5570 = vsel %vm1826, %v5565, %v5569
      %v5571 = vshrl.u32 %v5342, 16
      %v5573 = vrot.slane %v5571, 4
      %v5574 = vor.u32 %v5573, %v5569
      %v5575 = vrot.slane %v5574, 4
      %v5577 = vshll.u32 %v5343, 16
      %v5579 = vrot.slane %v5577, 5
      %v5580 = vsel %vm1826, %v5575, %v5579
      %v5582 = vshrl.u32 %v5344, 16
      %v5584 = vrot.slane %v5582, 4
      %v5585 = vshll.u32 %v5344, 16
      %v5587 = vrot.slane %v5585, 5
      %v5588 = vor.u32 %v5584, %v5587
      %v5589 = vrot.slane %v5588, 4
      %v5591 = vshll.u32 %v5345, 16
      %v5593 = vrot.slane %v5591, 5
      %v5594 = vsel %vm1826, %v5589, %v5593
      %v5595 = vshrl.u32 %v5345, 16
      %v5597 = vrot.slane %v5595, 4
      %v5598 = vor.u32 %v5597, %v5593
      %v5599 = vrot.slane %v5598, 4
      %v5601 = vshll.u32 %v5346, 16
      %v5603 = vrot.slane %v5601, 5
      %v5604 = vsel %vm1826, %v5599, %v5603
      %v5606 = vshrl.u32 %v5347, 16
      %v5608 = vrot.slane %v5606, 4
      %v5609 = vshll.u32 %v5347, 16
      %v5611 = vrot.slane %v5609, 5
      %v5612 = vor.u32 %v5608, %v5611
      %v5613 = vrot.slane %v5612, 4
      %v5615 = vshll.u32 %v5348, 16
      %v5617 = vrot.slane %v5615, 5
      %v5618 = vsel %vm1826, %v5613, %v5617
      %v5619 = vshrl.u32 %v5348, 16
      %v5621 = vrot.slane %v5619, 4
      %v5622 = vor.u32 %v5621, %v5617
      %v5623 = vrot.slane %v5622, 4
      %v5625 = vshll.u32 %v5349, 16
      %v5627 = vrot.slane %v5625, 5
      %v5628 = vsel %vm1826, %v5623, %v5627
      %v5630 = vshrl.u32 %v5350, 16
      %v5632 = vrot.slane %v5630, 4
      %v5633 = vshll.u32 %v5350, 16
      %v5635 = vrot.slane %v5633, 5
      %v5636 = vor.u32 %v5632, %v5635
      %v5637 = vrot.slane %v5636, 4
      %v5639 = vshll.u32 %v5351, 16
      %v5641 = vrot.slane %v5639, 5
      %v5642 = vsel %vm1826, %v5637, %v5641
      %v5643 = vshrl.u32 %v5351, 16
      %v5645 = vrot.slane %v5643, 4
      %v5646 = vor.u32 %v5645, %v5641
      %v5647 = vrot.slane %v5646, 4
      %v5649 = vshll.u32 %v5352, 16
      %v5651 = vrot.slane %v5649, 5
      %v5652 = vsel %vm1826, %v5647, %v5651
      %v5654 = vshrl.u32 %v5353, 16
      %v5656 = vrot.slane %v5654, 4
      %v5657 = vshll.u32 %v5353, 16
      %v5659 = vrot.slane %v5657, 5
      %v5660 = vor.u32 %v5656, %v5659
      %v5661 = vrot.slane %v5660, 4
      %v5663 = vshll.u32 %v5354, 16
      %v5665 = vrot.slane %v5663, 5
      %v5666 = vsel %vm1826, %v5661, %v5665
      %v5667 = vshrl.u32 %v5354, 16
      %v5669 = vrot.slane %v5667, 4
      %v5670 = vor.u32 %v5669, %v5665
      %v5671 = vrot.slane %v5670, 4
      %v5673 = vshll.u32 %v5355, 16
      %v5675 = vrot.slane %v5673, 5
      %v5676 = vsel %vm1826, %v5671, %v5675
      %v5678 = vshrl.u32 %v5356, 16
      %v5680 = vrot.slane %v5678, 4
      %v5681 = vshll.u32 %v5356, 16
      %v5683 = vrot.slane %v5681, 5
      %v5684 = vor.u32 %v5680, %v5683
      %v5685 = vrot.slane %v5684, 4
      %v5687 = vshll.u32 %v5357, 16
      %v5689 = vrot.slane %v5687, 5
      %v5690 = vsel %vm1826, %v5685, %v5689
      %v5691 = vshrl.u32 %v5357, 16
      %v5693 = vrot.slane %v5691, 4
      %v5694 = vor.u32 %v5693, %v5689
      %v5695 = vrot.slane %v5694, 4
      %v5697 = vshll.u32 %v5358, 16
      %v5699 = vrot.slane %v5697, 5
      %v5700 = vsel %vm1826, %v5695, %v5699
      %v5702 = vshrl.u32 %v5359, 16
      %v5704 = vrot.slane %v5702, 4
      %v5705 = vshll.u32 %v5359, 16
      %v5707 = vrot.slane %v5705, 5
      %v5708 = vor.u32 %v5704, %v5707
      %v5709 = vrot.slane %v5708, 4
      %v5711 = vshll.u32 %v5360, 16
      %v5713 = vrot.slane %v5711, 5
      %v5714 = vsel %vm1826, %v5709, %v5713
      %v5715 = vshrl.u32 %v5360, 16
      %v5717 = vrot.slane %v5715, 4
      %v5718 = vor.u32 %v5717, %v5713
      %v5719 = vrot.slane %v5718, 4
      %v5721 = vshll.u32 %v5361, 16
      %v5723 = vrot.slane %v5721, 5
      %v5724 = vsel %vm1826, %v5719, %v5723
      %v5726 = vshrl.u32 %v5362, 16
      %v5728 = vrot.slane %v5726, 4
      %v5729 = vshll.u32 %v5362, 16
      %v5731 = vrot.slane %v5729, 5
      %v5732 = vor.u32 %v5728, %v5731
      %v5733 = vrot.slane %v5732, 4
      %v5735 = vshll.u32 %v5363, 16
      %v5737 = vrot.slane %v5735, 5
      %v5738 = vsel %vm1826, %v5733, %v5737
      %v5739 = vshrl.u32 %v5363, 16
      %v5741 = vrot.slane %v5739, 4
      %v5742 = vor.u32 %v5741, %v5737
      %v5743 = vrot.slane %v5742, 4
      %v5745 = vshll.u32 %v5364, 16
      %v5747 = vrot.slane %v5745, 5
      %v5748 = vsel %vm1826, %v5743, %v5747
      %s5749 = scalar_lea.vmem %s2, 448
      %v5750 = vld [vmem:[%s5749] sm:$0xf]
      %v5751 = vld [vmem:[%s5749 + $0x4] sm:$0xf]
      %v5752 = vld [vmem:[%s5749 + $0x8] sm:$0xf]
      %v5753 = vld [vmem:[%s5749 + $0xc] sm:$0xf]
      %v5754 = vld [vmem:[%s5749 + $0x10] sm:$0xf]
      %v5755 = vld [vmem:[%s5749 + $0x14] sm:$0xf]
      %v5756 = vld [vmem:[%s5749 + $0x18] sm:$0xf]
      %v5757 = vld [vmem:[%s5749 + $0x1c] sm:$0xf]
      %v5758 = vld [vmem:[%s5749 + $0x20] sm:$0xf]
      %v5759 = vld [vmem:[%s5749 + $0x24] sm:$0xf]
      %v5760 = vld [vmem:[%s5749 + $0x28] sm:$0xf]
      %v5761 = vld [vmem:[%s5749 + $0x2c] sm:$0xf]
      %v5762 = vld [vmem:[%s5749 + $0x30] sm:$0xf]
      %v5763 = vld [vmem:[%s5749 + $0x34] sm:$0xf]
      %v5764 = vld [vmem:[%s5749 + $0x38] sm:$0xf]
      %v5765 = vld [vmem:[%s5749 + $0x3c] sm:$0xf]
      %v5766 = vunpack.c.l.b16 %v5378
      %v5767 = vunpack.c.l.b16 %v5388
      %v5768 = vunpack.c.l.b16 %v5402
      %v5769 = vunpack.c.l.b16 %v5412
      %v5770 = vunpack.c.l.b16 %v5426
      %v5771 = vunpack.c.l.b16 %v5436
      %v5772 = vunpack.c.l.b16 %v5450
      %v5773 = vunpack.c.l.b16 %v5460
      %v5774 = vunpack.c.l.b16 %v5474
      %v5775 = vunpack.c.l.b16 %v5484
      %v5776 = vunpack.c.l.b16 %v5498
      %v5777 = vunpack.c.l.b16 %v5508
      %v5778 = vunpack.c.l.b16 %v5522
      %v5779 = vunpack.c.l.b16 %v5532
      %v5780 = vunpack.c.l.b16 %v5546
      %v5781 = vunpack.c.l.b16 %v5556
      %v5782 = vunpack.c.l.b16 %v5570
      %v5783 = vunpack.c.l.b16 %v5580
      %v5784 = vunpack.c.l.b16 %v5594
      %v5785 = vunpack.c.l.b16 %v5604
      %v5786 = vunpack.c.l.b16 %v5618
      %v5787 = vunpack.c.l.b16 %v5628
      %v5788 = vunpack.c.l.b16 %v5642
      %v5789 = vunpack.c.l.b16 %v5652
      %v5790 = vunpack.c.l.b16 %v5666
      %v5791 = vunpack.c.l.b16 %v5676
      %v5792 = vunpack.c.l.b16 %v5690
      %v5793 = vunpack.c.l.b16 %v5700
      %v5794 = vunpack.c.l.b16 %v5714
      %v5795 = vunpack.c.l.b16 %v5724
      %v5796 = vunpack.c.l.b16 %v5738
      %v5797 = vunpack.c.l.b16 %v5748
      %v5798 = vpack.c.b16 %v5767, %v5766
      %v5799 = vpack.c.b16 %v5769, %v5768
      %v5800 = vpack.c.b16 %v5771, %v5770
      %v5801 = vpack.c.b16 %v5773, %v5772
      %v5802 = vpack.c.b16 %v5775, %v5774
      %v5803 = vpack.c.b16 %v5777, %v5776
      %v5804 = vpack.c.b16 %v5779, %v5778
      %v5805 = vpack.c.b16 %v5781, %v5780
      %v5806 = vpack.c.b16 %v5783, %v5782
      %v5807 = vpack.c.b16 %v5785, %v5784
      %v5808 = vpack.c.b16 %v5787, %v5786
      %v5809 = vpack.c.b16 %v5789, %v5788
      %v5810 = vpack.c.b16 %v5791, %v5790
      %v5811 = vpack.c.b16 %v5793, %v5792
      %v5812 = vpack.c.b16 %v5795, %v5794
      %v5813 = vpack.c.b16 %v5797, %v5796
      %v5846 = vunpack.c.l.b16 %v5750
      %v5847 = vunpack.c.l.b16 %v5751
      %v5848 = vunpack.c.l.b16 %v5752
      %v5849 = vunpack.c.l.b16 %v5753
      %v5850 = vunpack.c.l.b16 %v5754
      %v5851 = vunpack.c.l.b16 %v5755
      %v5852 = vunpack.c.l.b16 %v5756
      %v5853 = vunpack.c.l.b16 %v5757
      %v5854 = vunpack.c.l.b16 %v5758
      %v5855 = vunpack.c.l.b16 %v5759
      %v5856 = vunpack.c.l.b16 %v5760
      %v5857 = vunpack.c.l.b16 %v5761
      %v5858 = vunpack.c.l.b16 %v5762
      %v5859 = vunpack.c.l.b16 %v5763
      %v5860 = vunpack.c.l.b16 %v5764
      %v5861 = vunpack.c.l.b16 %v5765
      %v5862 = vpack.c.b16 %v5847, %v5846
      %v5863 = vpack.c.b16 %v5849, %v5848
      %v5864 = vpack.c.b16 %v5851, %v5850
      %v5865 = vpack.c.b16 %v5853, %v5852
      %v5866 = vpack.c.b16 %v5855, %v5854
      %v5867 = vpack.c.b16 %v5857, %v5856
      %v5868 = vpack.c.b16 %v5859, %v5858
      %v5869 = vpack.c.b16 %v5861, %v5860
      %5878 = vmatprep.subr.bf16.mxu0 0
      %5879 = vmatpush1.bf16.msra.mxu0 %v5869
      %5880 = vmatprep.subr.bf16.mxu0 0
      %5881 = vmatpush1.bf16.msra.mxu0 %v5868
      %5882 = vmatprep.subr.bf16.mxu0 0
      %5883 = vmatpush1.bf16.msra.mxu0 %v5867
      %5884 = vmatprep.subr.bf16.mxu0 0
      %5885 = vmatpush1.bf16.msra.mxu0 %v5866
      %5886 = vmatprep.subr.bf16.mxu0 0
      %5887 = vmatpush1.bf16.msra.mxu0 %v5865
      %5888 = vmatprep.subr.bf16.mxu0 0
      %5889 = vmatpush1.bf16.msra.mxu0 %v5864
      %5890 = vmatprep.subr.bf16.mxu0 0
      %5891 = vmatpush1.bf16.msra.mxu0 %v5863
      %5892 = vmatprep.subr.bf16.mxu0 0
      %5893 = vmatpush1.bf16.msra.mxu0 %v5862
      %5894 = vmatprep.subr.bf16.mxu0 0
      %5895 = vmatpush2.bf16.msra.mxu0 0
      %5896 = vmatprep.subr.bf16.mxu0 0
      %5897 = vmatpush2.bf16.msra.mxu0 0
      %5898 = vmatprep.subr.bf16.mxu0 0
      %5899 = vmatpush2.bf16.msra.mxu0 0
      %5900 = vmatprep.subr.bf16.mxu0 0
      %5901 = vmatpush2.bf16.msra.mxu0 0
      %5902 = vmatprep.subr.bf16.mxu0 0
      %5903 = vmatpush2.bf16.msra.mxu0 0
      %5904 = vmatprep.subr.bf16.mxu0 0
      %5905 = vmatpush2.bf16.msra.mxu0 0
      %5906 = vmatprep.subr.bf16.mxu0 0
      %5907 = vmatpush2.bf16.msra.mxu0 0
      %5908 = vmatprep.subr.bf16.mxu0 0
      %5909 = vmatpush2.bf16.msra.mxu0 0
      %5910 = vmatprep.mubr.bf16.mxu0 0
      %5911 = vmatmul.mubr.bf16.gmra.mxu0 %v5798
      %v5912 = vpop.f32.mrf.mxu0
      %v5913 = vadd.f32 0.0, %v5912
      %v5914 = vpop.f32.mrf.mxu0
      %v5915 = vpop.f32.mrf.mxu0
      %v5916 = vadd.f32 0.0, %v5915
      %v5917 = vpop.f32.mrf.mxu0
      %5918 = vmatprep.mubr.bf16.mxu0 0
      %5919 = vmatmul.mubr.bf16.gmra.mxu0 %v5799
      %v5920 = vpop.f32.mrf.mxu0
      %v5921 = vadd.f32 0.0, %v5920
      %v5922 = vpop.f32.mrf.mxu0
      %v5923 = vpop.f32.mrf.mxu0
      %v5924 = vadd.f32 0.0, %v5923
      %v5925 = vpop.f32.mrf.mxu0
      %5926 = vmatprep.mubr.bf16.mxu0 0
      %5927 = vmatmul.mubr.bf16.gmra.mxu0 %v5800
      %v5928 = vpop.f32.mrf.mxu0
      %v5929 = vadd.f32 0.0, %v5928
      %v5930 = vpop.f32.mrf.mxu0
      %v5931 = vpop.f32.mrf.mxu0
      %v5932 = vadd.f32 0.0, %v5931
      %v5933 = vpop.f32.mrf.mxu0
      %5934 = vmatprep.mubr.bf16.mxu0 0
      %5935 = vmatmul.mubr.bf16.gmra.mxu0 %v5801
      %v5936 = vpop.f32.mrf.mxu0
      %v5937 = vadd.f32 0.0, %v5936
      %v5938 = vpop.f32.mrf.mxu0
      %v5939 = vpop.f32.mrf.mxu0
      %v5940 = vadd.f32 0.0, %v5939
      %v5941 = vpop.f32.mrf.mxu0
      %5942 = vmatprep.mubr.bf16.mxu0 0
      %5943 = vmatmul.mubr.bf16.gmra.mxu0 %v5802
      %v5944 = vpop.f32.mrf.mxu0
      %v5945 = vadd.f32 0.0, %v5944
      %v5946 = vpop.f32.mrf.mxu0
      %v5947 = vpop.f32.mrf.mxu0
      %v5948 = vadd.f32 0.0, %v5947
      %v5949 = vpop.f32.mrf.mxu0
      %5950 = vmatprep.mubr.bf16.mxu0 0
      %5951 = vmatmul.mubr.bf16.gmra.mxu0 %v5803
      %v5952 = vpop.f32.mrf.mxu0
      %v5953 = vadd.f32 0.0, %v5952
      %v5954 = vpop.f32.mrf.mxu0
      %v5955 = vpop.f32.mrf.mxu0
      %v5956 = vadd.f32 0.0, %v5955
      %v5957 = vpop.f32.mrf.mxu0
      %5958 = vmatprep.mubr.bf16.mxu0 0
      %5959 = vmatmul.mubr.bf16.gmra.mxu0 %v5804
      %v5960 = vpop.f32.mrf.mxu0
      %v5961 = vadd.f32 0.0, %v5960
      %v5962 = vpop.f32.mrf.mxu0
      %v5963 = vpop.f32.mrf.mxu0
      %v5964 = vadd.f32 0.0, %v5963
      %v5965 = vpop.f32.mrf.mxu0
      %5966 = vmatprep.mubr.bf16.mxu0 0
      %5967 = vmatmul.mubr.bf16.gmra.mxu0 %v5805
      %v5968 = vpop.f32.mrf.mxu0
      %v5969 = vadd.f32 0.0, %v5968
      %v5970 = vpop.f32.mrf.mxu0
      %v5971 = vpop.f32.mrf.mxu0
      %v5972 = vadd.f32 0.0, %v5971
      %v5973 = vpop.f32.mrf.mxu0
      %5974 = vmatprep.mubr.bf16.mxu0 0
      %5975 = vmatmul.mubr.bf16.gmra.mxu0 %v5806
      %v5976 = vpop.f32.mrf.mxu0
      %v5977 = vadd.f32 0.0, %v5976
      %v5978 = vpop.f32.mrf.mxu0
      %v5979 = vpop.f32.mrf.mxu0
      %v5980 = vadd.f32 0.0, %v5979
      %v5981 = vpop.f32.mrf.mxu0
      %5982 = vmatprep.mubr.bf16.mxu0 0
      %5983 = vmatmul.mubr.bf16.gmra.mxu0 %v5807
      %v5984 = vpop.f32.mrf.mxu0
      %v5985 = vadd.f32 0.0, %v5984
      %v5986 = vpop.f32.mrf.mxu0
      %v5987 = vpop.f32.mrf.mxu0
      %v5988 = vadd.f32 0.0, %v5987
      %v5989 = vpop.f32.mrf.mxu0
      %5990 = vmatprep.mubr.bf16.mxu0 0
      %5991 = vmatmul.mubr.bf16.gmra.mxu0 %v5808
      %v5992 = vpop.f32.mrf.mxu0
      %v5993 = vadd.f32 0.0, %v5992
      %v5994 = vpop.f32.mrf.mxu0
      %v5995 = vpop.f32.mrf.mxu0
      %v5996 = vadd.f32 0.0, %v5995
      %v5997 = vpop.f32.mrf.mxu0
      %5998 = vmatprep.mubr.bf16.mxu0 0
      %5999 = vmatmul.mubr.bf16.gmra.mxu0 %v5809
      %v6000 = vpop.f32.mrf.mxu0
      %v6001 = vadd.f32 0.0, %v6000
      %v6002 = vpop.f32.mrf.mxu0
      %v6003 = vpop.f32.mrf.mxu0
      %v6004 = vadd.f32 0.0, %v6003
      %v6005 = vpop.f32.mrf.mxu0
      %6006 = vmatprep.mubr.bf16.mxu0 0
      %6007 = vmatmul.mubr.bf16.gmra.mxu0 %v5810
      %v6008 = vpop.f32.mrf.mxu0
      %v6009 = vadd.f32 0.0, %v6008
      %v6010 = vpop.f32.mrf.mxu0
      %v6011 = vpop.f32.mrf.mxu0
      %v6012 = vadd.f32 0.0, %v6011
      %v6013 = vpop.f32.mrf.mxu0
      %6014 = vmatprep.mubr.bf16.mxu0 0
      %6015 = vmatmul.mubr.bf16.gmra.mxu0 %v5811
      %v6016 = vpop.f32.mrf.mxu0
      %v6017 = vadd.f32 0.0, %v6016
      %v6018 = vpop.f32.mrf.mxu0
      %v6019 = vpop.f32.mrf.mxu0
      %v6020 = vadd.f32 0.0, %v6019
      %v6021 = vpop.f32.mrf.mxu0
      %6022 = vmatprep.mubr.bf16.mxu0 0
      %6023 = vmatmul.mubr.bf16.gmra.mxu0 %v5812
      %v6024 = vpop.f32.mrf.mxu0
      %v6025 = vadd.f32 0.0, %v6024
      %v6026 = vpop.f32.mrf.mxu0
      %v6027 = vpop.f32.mrf.mxu0
      %v6028 = vadd.f32 0.0, %v6027
      %v6029 = vpop.f32.mrf.mxu0
      %6030 = vmatprep.mubr.bf16.mxu0 0
      %6031 = vmatmul.mubr.bf16.gmra.mxu0 %v5813
      %v6032 = vpop.f32.mrf.mxu0
      %v6033 = vadd.f32 0.0, %v6032
      %v6034 = vpop.f32.mrf.mxu0
      %v6035 = vpop.f32.mrf.mxu0
      %v6036 = vadd.f32 0.0, %v6035
      %v6037 = vpop.f32.mrf.mxu0
      %6038 = vdwg.mxu0
      %v6039 = vadd.f32 %v5285, %v5913
      %v6040 = vadd.f32 %v5286, %v5916
      %v6041 = vadd.f32 %v5287, %v5921
      %v6042 = vadd.f32 %v5288, %v5924
      %v6043 = vadd.f32 %v5289, %v5929
      %v6044 = vadd.f32 %v5290, %v5932
      %v6045 = vadd.f32 %v5291, %v5937
      %v6046 = vadd.f32 %v5292, %v5940
      %v6047 = vadd.f32 %v5293, %v5945
      %v6048 = vadd.f32 %v5294, %v5948
      %v6049 = vadd.f32 %v5295, %v5953
      %v6050 = vadd.f32 %v5296, %v5956
      %v6051 = vadd.f32 %v5297, %v5961
      %v6052 = vadd.f32 %v5298, %v5964
      %v6053 = vadd.f32 %v5299, %v5969
      %v6054 = vadd.f32 %v5300, %v5972
      %v6055 = vadd.f32 %v5301, %v5977
      %v6056 = vadd.f32 %v5302, %v5980
      %v6057 = vadd.f32 %v5303, %v5985
      %v6058 = vadd.f32 %v5304, %v5988
      %v6059 = vadd.f32 %v5305, %v5993
      %v6060 = vadd.f32 %v5306, %v5996
      %v6061 = vadd.f32 %v5307, %v6001
      %v6062 = vadd.f32 %v5308, %v6004
      %v6063 = vadd.f32 %v5309, %v6009
      %v6064 = vadd.f32 %v5310, %v6012
      %v6065 = vadd.f32 %v5311, %v6017
      %v6066 = vadd.f32 %v5312, %v6020
      %v6067 = vadd.f32 %v5313, %v6025
      %v6068 = vadd.f32 %v5314, %v6028
      %v6069 = vadd.f32 %v5315, %v6033
      %v6070 = vadd.f32 %v5316, %v6036
      %v6071 = vld [vmem:[%s4930] sm:$0xe]
      %v6072 = vld [vmem:[%s4930 + $0xc] sm:$0xe]
      %v6073 = vld [vmem:[%s4930 + $0x18] sm:$0xe]
      %v6074 = vld [vmem:[%s4930 + $0x24] sm:$0xe]
      %v6075 = vld [vmem:[%s4930 + $0x30] sm:$0xe]
      %v6076 = vld [vmem:[%s4930 + $0x3c] sm:$0xe]
      %v6077 = vld [vmem:[%s4930 + $0x48] sm:$0xe]
      %v6078 = vld [vmem:[%s4930 + $0x54] sm:$0xe]
      %v6079 = vld [vmem:[%s4930 + $0x60] sm:$0xe]
      %v6080 = vld [vmem:[%s4930 + $0x6c] sm:$0xe]
      %v6081 = vld [vmem:[%s4930 + $0x78] sm:$0xe]
      %v6082 = vld [vmem:[%s4930 + $0x84] sm:$0xe]
      %v6083 = vld [vmem:[%s4930 + $0x90] sm:$0xe]
      %v6084 = vld [vmem:[%s4930 + $0x9c] sm:$0xe]
      %v6085 = vld [vmem:[%s4930 + $0xa8] sm:$0xe]
      %v6086 = vld [vmem:[%s4930 + $0xb4] sm:$0xe]
      %v6135 = vrot.slane %v6071, 5
      %v6136 = vrot.slane %v6135, 4
      %v6137 = vrot.slane %v5318, 5
      %v6138 = vsel %vm2856, %v6136, %v6137
      %v6139 = vrot.slane %v6137, 4
      %v6140 = vrot.slane %v5319, 5
      %v6141 = vsel %vm2856, %v6139, %v6140
      %v6142 = vrot.slane %v6072, 5
      %v6143 = vrot.slane %v6142, 4
      %v6144 = vrot.slane %v5321, 5
      %v6145 = vsel %vm2856, %v6143, %v6144
      %v6146 = vrot.slane %v6144, 4
      %v6147 = vrot.slane %v5322, 5
      %v6148 = vsel %vm2856, %v6146, %v6147
      %v6149 = vrot.slane %v6073, 5
      %v6150 = vrot.slane %v6149, 4
      %v6151 = vrot.slane %v5324, 5
      %v6152 = vsel %vm2856, %v6150, %v6151
      %v6153 = vrot.slane %v6151, 4
      %v6154 = vrot.slane %v5325, 5
      %v6155 = vsel %vm2856, %v6153, %v6154
      %v6156 = vrot.slane %v6074, 5
      %v6157 = vrot.slane %v6156, 4
      %v6158 = vrot.slane %v5327, 5
      %v6159 = vsel %vm2856, %v6157, %v6158
      %v6160 = vrot.slane %v6158, 4
      %v6161 = vrot.slane %v5328, 5
      %v6162 = vsel %vm2856, %v6160, %v6161
      %v6163 = vrot.slane %v6075, 5
      %v6164 = vrot.slane %v6163, 4
      %v6165 = vrot.slane %v5330, 5
      %v6166 = vsel %vm2856, %v6164, %v6165
      %v6167 = vrot.slane %v6165, 4
      %v6168 = vrot.slane %v5331, 5
      %v6169 = vsel %vm2856, %v6167, %v6168
      %v6170 = vrot.slane %v6076, 5
      %v6171 = vrot.slane %v6170, 4
      %v6172 = vrot.slane %v5333, 5
      %v6173 = vsel %vm2856, %v6171, %v6172
      %v6174 = vrot.slane %v6172, 4
      %v6175 = vrot.slane %v5334, 5
      %v6176 = vsel %vm2856, %v6174, %v6175
      %v6177 = vrot.slane %v6077, 5
      %v6178 = vrot.slane %v6177, 4
      %v6179 = vrot.slane %v5336, 5
      %v6180 = vsel %vm2856, %v6178, %v6179
      %v6181 = vrot.slane %v6179, 4
      %v6182 = vrot.slane %v5337, 5
      %v6183 = vsel %vm2856, %v6181, %v6182
      %v6184 = vrot.slane %v6078, 5
      %v6185 = vrot.slane %v6184, 4
      %v6186 = vrot.slane %v5339, 5
      %v6187 = vsel %vm2856, %v6185, %v6186
      %v6188 = vrot.slane %v6186, 4
      %v6189 = vrot.slane %v5340, 5
      %v6190 = vsel %vm2856, %v6188, %v6189
      %v6191 = vrot.slane %v6079, 5
      %v6192 = vrot.slane %v6191, 4
      %v6193 = vrot.slane %v5342, 5
      %v6194 = vsel %vm2856, %v6192, %v6193
      %v6195 = vrot.slane %v6193, 4
      %v6196 = vrot.slane %v5343, 5
      %v6197 = vsel %vm2856, %v6195, %v6196
      %v6198 = vrot.slane %v6080, 5
      %v6199 = vrot.slane %v6198, 4
      %v6200 = vrot.slane %v5345, 5
      %v6201 = vsel %vm2856, %v6199, %v6200
      %v6202 = vrot.slane %v6200, 4
      %v6203 = vrot.slane %v5346, 5
      %v6204 = vsel %vm2856, %v6202, %v6203
      %v6205 = vrot.slane %v6081, 5
      %v6206 = vrot.slane %v6205, 4
      %v6207 = vrot.slane %v5348, 5
      %v6208 = vsel %vm2856, %v6206, %v6207
      %v6209 = vrot.slane %v6207, 4
      %v6210 = vrot.slane %v5349, 5
      %v6211 = vsel %vm2856, %v6209, %v6210
      %v6212 = vrot.slane %v6082, 5
      %v6213 = vrot.slane %v6212, 4
      %v6214 = vrot.slane %v5351, 5
      %v6215 = vsel %vm2856, %v6213, %v6214
      %v6216 = vrot.slane %v6214, 4
      %v6217 = vrot.slane %v5352, 5
      %v6218 = vsel %vm2856, %v6216, %v6217
      %v6219 = vrot.slane %v6083, 5
      %v6220 = vrot.slane %v6219, 4
      %v6221 = vrot.slane %v5354, 5
      %v6222 = vsel %vm2856, %v6220, %v6221
      %v6223 = vrot.slane %v6221, 4
      %v6224 = vrot.slane %v5355, 5
      %v6225 = vsel %vm2856, %v6223, %v6224
      %v6226 = vrot.slane %v6084, 5
      %v6227 = vrot.slane %v6226, 4
      %v6228 = vrot.slane %v5357, 5
      %v6229 = vsel %vm2856, %v6227, %v6228
      %v6230 = vrot.slane %v6228, 4
      %v6231 = vrot.slane %v5358, 5
      %v6232 = vsel %vm2856, %v6230, %v6231
      %v6233 = vrot.slane %v6085, 5
      %v6234 = vrot.slane %v6233, 4
      %v6235 = vrot.slane %v5360, 5
      %v6236 = vsel %vm2856, %v6234, %v6235
      %v6237 = vrot.slane %v6235, 4
      %v6238 = vrot.slane %v5361, 5
      %v6239 = vsel %vm2856, %v6237, %v6238
      %v6240 = vrot.slane %v6086, 5
      %v6241 = vrot.slane %v6240, 4
      %v6242 = vrot.slane %v5363, 5
      %v6243 = vsel %vm2856, %v6241, %v6242
      %v6244 = vrot.slane %v6242, 4
      %v6245 = vrot.slane %v5364, 5
      %v6246 = vsel %vm2856, %v6244, %v6245
      %s6247 = scalar_lea.vmem %s2, 512
      %v6248 = vld [vmem:[%s6247] sm:$0xf]
      %v6249 = vld [vmem:[%s6247 + $0x4] sm:$0xf]
      %v6250 = vld [vmem:[%s6247 + $0x8] sm:$0xf]
      %v6251 = vld [vmem:[%s6247 + $0xc] sm:$0xf]
      %v6252 = vld [vmem:[%s6247 + $0x10] sm:$0xf]
      %v6253 = vld [vmem:[%s6247 + $0x14] sm:$0xf]
      %v6254 = vld [vmem:[%s6247 + $0x18] sm:$0xf]
      %v6255 = vld [vmem:[%s6247 + $0x1c] sm:$0xf]
      %v6256 = vld [vmem:[%s6247 + $0x20] sm:$0xf]
      %v6257 = vld [vmem:[%s6247 + $0x24] sm:$0xf]
      %v6258 = vld [vmem:[%s6247 + $0x28] sm:$0xf]
      %v6259 = vld [vmem:[%s6247 + $0x2c] sm:$0xf]
      %v6260 = vld [vmem:[%s6247 + $0x30] sm:$0xf]
      %v6261 = vld [vmem:[%s6247 + $0x34] sm:$0xf]
      %v6262 = vld [vmem:[%s6247 + $0x38] sm:$0xf]
      %v6263 = vld [vmem:[%s6247 + $0x3c] sm:$0xf]
      %v6264 = vunpack.c.l.b16 %v6138
      %v6265 = vunpack.c.l.b16 %v6141
      %v6266 = vunpack.c.l.b16 %v6145
      %v6267 = vunpack.c.l.b16 %v6148
      %v6268 = vunpack.c.l.b16 %v6152
      %v6269 = vunpack.c.l.b16 %v6155
      %v6270 = vunpack.c.l.b16 %v6159
      %v6271 = vunpack.c.l.b16 %v6162
      %v6272 = vunpack.c.l.b16 %v6166
      %v6273 = vunpack.c.l.b16 %v6169
      %v6274 = vunpack.c.l.b16 %v6173
      %v6275 = vunpack.c.l.b16 %v6176
      %v6276 = vunpack.c.l.b16 %v6180
      %v6277 = vunpack.c.l.b16 %v6183
      %v6278 = vunpack.c.l.b16 %v6187
      %v6279 = vunpack.c.l.b16 %v6190
      %v6280 = vunpack.c.l.b16 %v6194
      %v6281 = vunpack.c.l.b16 %v6197
      %v6282 = vunpack.c.l.b16 %v6201
      %v6283 = vunpack.c.l.b16 %v6204
      %v6284 = vunpack.c.l.b16 %v6208
      %v6285 = vunpack.c.l.b16 %v6211
      %v6286 = vunpack.c.l.b16 %v6215
      %v6287 = vunpack.c.l.b16 %v6218
      %v6288 = vunpack.c.l.b16 %v6222
      %v6289 = vunpack.c.l.b16 %v6225
      %v6290 = vunpack.c.l.b16 %v6229
      %v6291 = vunpack.c.l.b16 %v6232
      %v6292 = vunpack.c.l.b16 %v6236
      %v6293 = vunpack.c.l.b16 %v6239
      %v6294 = vunpack.c.l.b16 %v6243
      %v6295 = vunpack.c.l.b16 %v6246
      %v6296 = vpack.c.b16 %v6265, %v6264
      %v6297 = vpack.c.b16 %v6267, %v6266
      %v6298 = vpack.c.b16 %v6269, %v6268
      %v6299 = vpack.c.b16 %v6271, %v6270
      %v6300 = vpack.c.b16 %v6273, %v6272
      %v6301 = vpack.c.b16 %v6275, %v6274
      %v6302 = vpack.c.b16 %v6277, %v6276
      %v6303 = vpack.c.b16 %v6279, %v6278
      %v6304 = vpack.c.b16 %v6281, %v6280
      %v6305 = vpack.c.b16 %v6283, %v6282
      %v6306 = vpack.c.b16 %v6285, %v6284
      %v6307 = vpack.c.b16 %v6287, %v6286
      %v6308 = vpack.c.b16 %v6289, %v6288
      %v6309 = vpack.c.b16 %v6291, %v6290
      %v6310 = vpack.c.b16 %v6293, %v6292
      %v6311 = vpack.c.b16 %v6295, %v6294
      %v6344 = vunpack.c.l.b16 %v6248
      %v6345 = vunpack.c.l.b16 %v6249
      %v6346 = vunpack.c.l.b16 %v6250
      %v6347 = vunpack.c.l.b16 %v6251
      %v6348 = vunpack.c.l.b16 %v6252
      %v6349 = vunpack.c.l.b16 %v6253
      %v6350 = vunpack.c.l.b16 %v6254
      %v6351 = vunpack.c.l.b16 %v6255
      %v6352 = vunpack.c.l.b16 %v6256
      %v6353 = vunpack.c.l.b16 %v6257
      %v6354 = vunpack.c.l.b16 %v6258
      %v6355 = vunpack.c.l.b16 %v6259
      %v6356 = vunpack.c.l.b16 %v6260
      %v6357 = vunpack.c.l.b16 %v6261
      %v6358 = vunpack.c.l.b16 %v6262
      %v6359 = vunpack.c.l.b16 %v6263
      %v6360 = vpack.c.b16 %v6345, %v6344
      %v6361 = vpack.c.b16 %v6347, %v6346
      %v6362 = vpack.c.b16 %v6349, %v6348
      %v6363 = vpack.c.b16 %v6351, %v6350
      %v6364 = vpack.c.b16 %v6353, %v6352
      %v6365 = vpack.c.b16 %v6355, %v6354
      %v6366 = vpack.c.b16 %v6357, %v6356
      %v6367 = vpack.c.b16 %v6359, %v6358
      %6376 = vmatprep.subr.bf16.mxu0 0
      %6377 = vmatpush1.bf16.msra.mxu0 %v6367
      %6378 = vmatprep.subr.bf16.mxu0 0
      %6379 = vmatpush1.bf16.msra.mxu0 %v6366
      %6380 = vmatprep.subr.bf16.mxu0 0
      %6381 = vmatpush1.bf16.msra.mxu0 %v6365
      %6382 = vmatprep.subr.bf16.mxu0 0
      %6383 = vmatpush1.bf16.msra.mxu0 %v6364
      %6384 = vmatprep.subr.bf16.mxu0 0
      %6385 = vmatpush1.bf16.msra.mxu0 %v6363
      %6386 = vmatprep.subr.bf16.mxu0 0
      %6387 = vmatpush1.bf16.msra.mxu0 %v6362
      %6388 = vmatprep.subr.bf16.mxu0 0
      %6389 = vmatpush1.bf16.msra.mxu0 %v6361
      %6390 = vmatprep.subr.bf16.mxu0 0
      %6391 = vmatpush1.bf16.msra.mxu0 %v6360
      %6392 = vmatprep.subr.bf16.mxu0 0
      %6393 = vmatpush2.bf16.msra.mxu0 0
      %6394 = vmatprep.subr.bf16.mxu0 0
      %6395 = vmatpush2.bf16.msra.mxu0 0
      %6396 = vmatprep.subr.bf16.mxu0 0
      %6397 = vmatpush2.bf16.msra.mxu0 0
      %6398 = vmatprep.subr.bf16.mxu0 0
      %6399 = vmatpush2.bf16.msra.mxu0 0
      %6400 = vmatprep.subr.bf16.mxu0 0
      %6401 = vmatpush2.bf16.msra.mxu0 0
      %6402 = vmatprep.subr.bf16.mxu0 0
      %6403 = vmatpush2.bf16.msra.mxu0 0
      %6404 = vmatprep.subr.bf16.mxu0 0
      %6405 = vmatpush2.bf16.msra.mxu0 0
      %6406 = vmatprep.subr.bf16.mxu0 0
      %6407 = vmatpush2.bf16.msra.mxu0 0
      %6408 = vmatprep.mubr.bf16.mxu0 0
      %6409 = vmatmul.mubr.bf16.gmra.mxu0 %v6296
      %v6410 = vpop.f32.mrf.mxu0
      %v6411 = vadd.f32 0.0, %v6410
      %v6412 = vpop.f32.mrf.mxu0
      %v6413 = vpop.f32.mrf.mxu0
      %v6414 = vadd.f32 0.0, %v6413
      %v6415 = vpop.f32.mrf.mxu0
      %6416 = vmatprep.mubr.bf16.mxu0 0
      %6417 = vmatmul.mubr.bf16.gmra.mxu0 %v6297
      %v6418 = vpop.f32.mrf.mxu0
      %v6419 = vadd.f32 0.0, %v6418
      %v6420 = vpop.f32.mrf.mxu0
      %v6421 = vpop.f32.mrf.mxu0
      %v6422 = vadd.f32 0.0, %v6421
      %v6423 = vpop.f32.mrf.mxu0
      %6424 = vmatprep.mubr.bf16.mxu0 0
      %6425 = vmatmul.mubr.bf16.gmra.mxu0 %v6298
      %v6426 = vpop.f32.mrf.mxu0
      %v6427 = vadd.f32 0.0, %v6426
      %v6428 = vpop.f32.mrf.mxu0
      %v6429 = vpop.f32.mrf.mxu0
      %v6430 = vadd.f32 0.0, %v6429
      %v6431 = vpop.f32.mrf.mxu0
      %6432 = vmatprep.mubr.bf16.mxu0 0
      %6433 = vmatmul.mubr.bf16.gmra.mxu0 %v6299
      %v6434 = vpop.f32.mrf.mxu0
      %v6435 = vadd.f32 0.0, %v6434
      %v6436 = vpop.f32.mrf.mxu0
      %v6437 = vpop.f32.mrf.mxu0
      %v6438 = vadd.f32 0.0, %v6437
      %v6439 = vpop.f32.mrf.mxu0
      %6440 = vmatprep.mubr.bf16.mxu0 0
      %6441 = vmatmul.mubr.bf16.gmra.mxu0 %v6300
      %v6442 = vpop.f32.mrf.mxu0
      %v6443 = vadd.f32 0.0, %v6442
      %v6444 = vpop.f32.mrf.mxu0
      %v6445 = vpop.f32.mrf.mxu0
      %v6446 = vadd.f32 0.0, %v6445
      %v6447 = vpop.f32.mrf.mxu0
      %6448 = vmatprep.mubr.bf16.mxu0 0
      %6449 = vmatmul.mubr.bf16.gmra.mxu0 %v6301
      %v6450 = vpop.f32.mrf.mxu0
      %v6451 = vadd.f32 0.0, %v6450
      %v6452 = vpop.f32.mrf.mxu0
      %v6453 = vpop.f32.mrf.mxu0
      %v6454 = vadd.f32 0.0, %v6453
      %v6455 = vpop.f32.mrf.mxu0
      %6456 = vmatprep.mubr.bf16.mxu0 0
      %6457 = vmatmul.mubr.bf16.gmra.mxu0 %v6302
      %v6458 = vpop.f32.mrf.mxu0
      %v6459 = vadd.f32 0.0, %v6458
      %v6460 = vpop.f32.mrf.mxu0
      %v6461 = vpop.f32.mrf.mxu0
      %v6462 = vadd.f32 0.0, %v6461
      %v6463 = vpop.f32.mrf.mxu0
      %6464 = vmatprep.mubr.bf16.mxu0 0
      %6465 = vmatmul.mubr.bf16.gmra.mxu0 %v6303
      %v6466 = vpop.f32.mrf.mxu0
      %v6467 = vadd.f32 0.0, %v6466
      %v6468 = vpop.f32.mrf.mxu0
      %v6469 = vpop.f32.mrf.mxu0
      %v6470 = vadd.f32 0.0, %v6469
      %v6471 = vpop.f32.mrf.mxu0
      %6472 = vmatprep.mubr.bf16.mxu0 0
      %6473 = vmatmul.mubr.bf16.gmra.mxu0 %v6304
      %v6474 = vpop.f32.mrf.mxu0
      %v6475 = vadd.f32 0.0, %v6474
      %v6476 = vpop.f32.mrf.mxu0
      %v6477 = vpop.f32.mrf.mxu0
      %v6478 = vadd.f32 0.0, %v6477
      %v6479 = vpop.f32.mrf.mxu0
      %6480 = vmatprep.mubr.bf16.mxu0 0
      %6481 = vmatmul.mubr.bf16.gmra.mxu0 %v6305
      %v6482 = vpop.f32.mrf.mxu0
      %v6483 = vadd.f32 0.0, %v6482
      %v6484 = vpop.f32.mrf.mxu0
      %v6485 = vpop.f32.mrf.mxu0
      %v6486 = vadd.f32 0.0, %v6485
      %v6487 = vpop.f32.mrf.mxu0
      %6488 = vmatprep.mubr.bf16.mxu0 0
      %6489 = vmatmul.mubr.bf16.gmra.mxu0 %v6306
      %v6490 = vpop.f32.mrf.mxu0
      %v6491 = vadd.f32 0.0, %v6490
      %v6492 = vpop.f32.mrf.mxu0
      %v6493 = vpop.f32.mrf.mxu0
      %v6494 = vadd.f32 0.0, %v6493
      %v6495 = vpop.f32.mrf.mxu0
      %6496 = vmatprep.mubr.bf16.mxu0 0
      %6497 = vmatmul.mubr.bf16.gmra.mxu0 %v6307
      %v6498 = vpop.f32.mrf.mxu0
      %v6499 = vadd.f32 0.0, %v6498
      %v6500 = vpop.f32.mrf.mxu0
      %v6501 = vpop.f32.mrf.mxu0
      %v6502 = vadd.f32 0.0, %v6501
      %v6503 = vpop.f32.mrf.mxu0
      %6504 = vmatprep.mubr.bf16.mxu0 0
      %6505 = vmatmul.mubr.bf16.gmra.mxu0 %v6308
      %v6506 = vpop.f32.mrf.mxu0
      %v6507 = vadd.f32 0.0, %v6506
      %v6508 = vpop.f32.mrf.mxu0
      %v6509 = vpop.f32.mrf.mxu0
      %v6510 = vadd.f32 0.0, %v6509
      %v6511 = vpop.f32.mrf.mxu0
      %6512 = vmatprep.mubr.bf16.mxu0 0
      %6513 = vmatmul.mubr.bf16.gmra.mxu0 %v6309
      %v6514 = vpop.f32.mrf.mxu0
      %v6515 = vadd.f32 0.0, %v6514
      %v6516 = vpop.f32.mrf.mxu0
      %v6517 = vpop.f32.mrf.mxu0
      %v6518 = vadd.f32 0.0, %v6517
      %v6519 = vpop.f32.mrf.mxu0
      %6520 = vmatprep.mubr.bf16.mxu0 0
      %6521 = vmatmul.mubr.bf16.gmra.mxu0 %v6310
      %v6522 = vpop.f32.mrf.mxu0
      %v6523 = vadd.f32 0.0, %v6522
      %v6524 = vpop.f32.mrf.mxu0
      %v6525 = vpop.f32.mrf.mxu0
      %v6526 = vadd.f32 0.0, %v6525
      %v6527 = vpop.f32.mrf.mxu0
      %6528 = vmatprep.mubr.bf16.mxu0 0
      %6529 = vmatmul.mubr.bf16.gmra.mxu0 %v6311
      %v6530 = vpop.f32.mrf.mxu0
      %v6531 = vadd.f32 0.0, %v6530
      %v6532 = vpop.f32.mrf.mxu0
      %v6533 = vpop.f32.mrf.mxu0
      %v6534 = vadd.f32 0.0, %v6533
      %v6535 = vpop.f32.mrf.mxu0
      %6536 = vdwg.mxu0
      %v6537 = vadd.f32 %v6039, %v6411
      %v6538 = vadd.f32 %v6040, %v6414
      %v6539 = vadd.f32 %v6041, %v6419
      %v6540 = vadd.f32 %v6042, %v6422
      %v6541 = vadd.f32 %v6043, %v6427
      %v6542 = vadd.f32 %v6044, %v6430
      %v6543 = vadd.f32 %v6045, %v6435
      %v6544 = vadd.f32 %v6046, %v6438
      %v6545 = vadd.f32 %v6047, %v6443
      %v6546 = vadd.f32 %v6048, %v6446
      %v6547 = vadd.f32 %v6049, %v6451
      %v6548 = vadd.f32 %v6050, %v6454
      %v6549 = vadd.f32 %v6051, %v6459
      %v6550 = vadd.f32 %v6052, %v6462
      %v6551 = vadd.f32 %v6053, %v6467
      %v6552 = vadd.f32 %v6054, %v6470
      %v6553 = vadd.f32 %v6055, %v6475
      %v6554 = vadd.f32 %v6056, %v6478
      %v6555 = vadd.f32 %v6057, %v6483
      %v6556 = vadd.f32 %v6058, %v6486
      %v6557 = vadd.f32 %v6059, %v6491
      %v6558 = vadd.f32 %v6060, %v6494
      %v6559 = vadd.f32 %v6061, %v6499
      %v6560 = vadd.f32 %v6062, %v6502
      %v6561 = vadd.f32 %v6063, %v6507
      %v6562 = vadd.f32 %v6064, %v6510
      %v6563 = vadd.f32 %v6065, %v6515
      %v6564 = vadd.f32 %v6066, %v6518
      %v6565 = vadd.f32 %v6067, %v6523
      %v6566 = vadd.f32 %v6068, %v6526
      %v6567 = vadd.f32 %v6069, %v6531
      %v6568 = vadd.f32 %v6070, %v6534
      %v6569 = vld [vmem:[%s4 + $0x2] sm:$0x1]
      %v6570 = vld [vmem:[%s4 + $0x3] sm:$0x1]
      %v6571 = vlaneseq
      %v6572 = vshrl.u32 %v6571, 7
      %v6573 = vsub.s32 0, %v6572
      %v6574 = vrot.slane %v6569, %v6573
      %v6575 = vmul.f32 %v6537, %v6574
      %v6576 = vmul.f32 %v6538, %v6574
      %v6577 = vmul.f32 %v6539, %v6574
      %v6578 = vmul.f32 %v6540, %v6574
      %v6579 = vmul.f32 %v6541, %v6574
      %v6580 = vmul.f32 %v6542, %v6574
      %v6581 = vmul.f32 %v6543, %v6574
      %v6582 = vmul.f32 %v6544, %v6574
      %v6583 = vmul.f32 %v6545, %v6574
      %v6584 = vmul.f32 %v6546, %v6574
      %v6585 = vmul.f32 %v6547, %v6574
      %v6586 = vmul.f32 %v6548, %v6574
      %v6587 = vmul.f32 %v6549, %v6574
      %v6588 = vmul.f32 %v6550, %v6574
      %v6589 = vmul.f32 %v6551, %v6574
      %v6590 = vmul.f32 %v6552, %v6574
      %v6591 = vmul.f32 %v6553, %v6574
      %v6592 = vmul.f32 %v6554, %v6574
      %v6593 = vmul.f32 %v6555, %v6574
      %v6594 = vmul.f32 %v6556, %v6574
      %v6595 = vmul.f32 %v6557, %v6574
      %v6596 = vmul.f32 %v6558, %v6574
      %v6597 = vmul.f32 %v6559, %v6574
      %v6598 = vmul.f32 %v6560, %v6574
      %v6599 = vmul.f32 %v6561, %v6574
      %v6600 = vmul.f32 %v6562, %v6574
      %v6601 = vmul.f32 %v6563, %v6574
      %v6602 = vmul.f32 %v6564, %v6574
      %v6603 = vmul.f32 %v6565, %v6574
      %v6604 = vmul.f32 %v6566, %v6574
      %v6605 = vmul.f32 %v6567, %v6574
      %v6606 = vmul.f32 %v6568, %v6574
      %v6607 = vlaneseq
      %v6608 = vshrl.u32 %v6607, 7
      %v6609 = vsub.s32 0, %v6608
      %v6610 = vrot.slane %v6570, %v6609
      %v6611 = vadd.f32 %v6575, %v6610
      %v6612 = vadd.f32 %v6576, %v6610
      %v6613 = vadd.f32 %v6577, %v6610
      %v6614 = vadd.f32 %v6578, %v6610
      %v6615 = vadd.f32 %v6579, %v6610
      %v6616 = vadd.f32 %v6580, %v6610
      %v6617 = vadd.f32 %v6581, %v6610
      %v6618 = vadd.f32 %v6582, %v6610
      %v6619 = vadd.f32 %v6583, %v6610
      %v6620 = vadd.f32 %v6584, %v6610
      %v6621 = vadd.f32 %v6585, %v6610
      %v6622 = vadd.f32 %v6586, %v6610
      %v6623 = vadd.f32 %v6587, %v6610
      %v6624 = vadd.f32 %v6588, %v6610
      %v6625 = vadd.f32 %v6589, %v6610
      %v6626 = vadd.f32 %v6590, %v6610
      %v6627 = vadd.f32 %v6591, %v6610
      %v6628 = vadd.f32 %v6592, %v6610
      %v6629 = vadd.f32 %v6593, %v6610
      %v6630 = vadd.f32 %v6594, %v6610
      %v6631 = vadd.f32 %v6595, %v6610
      %v6632 = vadd.f32 %v6596, %v6610
      %v6633 = vadd.f32 %v6597, %v6610
      %v6634 = vadd.f32 %v6598, %v6610
      %v6635 = vadd.f32 %v6599, %v6610
      %v6636 = vadd.f32 %v6600, %v6610
      %v6637 = vadd.f32 %v6601, %v6610
      %v6638 = vadd.f32 %v6602, %v6610
      %v6639 = vadd.f32 %v6603, %v6610
      %v6640 = vadd.f32 %v6604, %v6610
      %v6641 = vadd.f32 %v6605, %v6610
      %v6642 = vadd.f32 %v6606, %v6610
      %v6643 = vmax.f32 %v6611, 0.0
      %v6644 = vmax.f32 %v6612, 0.0
      %v6645 = vmax.f32 %v6613, 0.0
      %v6646 = vmax.f32 %v6614, 0.0
      %v6647 = vmax.f32 %v6615, 0.0
      %v6648 = vmax.f32 %v6616, 0.0
      %v6649 = vmax.f32 %v6617, 0.0
      %v6650 = vmax.f32 %v6618, 0.0
      %v6651 = vmax.f32 %v6619, 0.0
      %v6652 = vmax.f32 %v6620, 0.0
      %v6653 = vmax.f32 %v6621, 0.0
      %v6654 = vmax.f32 %v6622, 0.0
      %v6655 = vmax.f32 %v6623, 0.0
      %v6656 = vmax.f32 %v6624, 0.0
      %v6657 = vmax.f32 %v6625, 0.0
      %v6658 = vmax.f32 %v6626, 0.0
      %v6659 = vmax.f32 %v6627, 0.0
      %v6660 = vmax.f32 %v6628, 0.0
      %v6661 = vmax.f32 %v6629, 0.0
      %v6662 = vmax.f32 %v6630, 0.0
      %v6663 = vmax.f32 %v6631, 0.0
      %v6664 = vmax.f32 %v6632, 0.0
      %v6665 = vmax.f32 %v6633, 0.0
      %v6666 = vmax.f32 %v6634, 0.0
      %v6667 = vmax.f32 %v6635, 0.0
      %v6668 = vmax.f32 %v6636, 0.0
      %v6669 = vmax.f32 %v6637, 0.0
      %v6670 = vmax.f32 %v6638, 0.0
      %v6671 = vmax.f32 %v6639, 0.0
      %v6672 = vmax.f32 %v6640, 0.0
      %v6673 = vmax.f32 %v6641, 0.0
      %v6674 = vmax.f32 %v6642, 0.0
      %v6675 = vpack.c.bf16 %v6644, %v6643
      %v6676 = vpack.c.bf16 %v6646, %v6645
      %v6677 = vpack.c.bf16 %v6648, %v6647
      %v6678 = vpack.c.bf16 %v6650, %v6649
      %v6679 = vpack.c.bf16 %v6652, %v6651
      %v6680 = vpack.c.bf16 %v6654, %v6653
      %v6681 = vpack.c.bf16 %v6656, %v6655
      %v6682 = vpack.c.bf16 %v6658, %v6657
      %v6683 = vpack.c.bf16 %v6660, %v6659
      %v6684 = vpack.c.bf16 %v6662, %v6661
      %v6685 = vpack.c.bf16 %v6664, %v6663
      %v6686 = vpack.c.bf16 %v6666, %v6665
      %v6687 = vpack.c.bf16 %v6668, %v6667
      %v6688 = vpack.c.bf16 %v6670, %v6669
      %v6689 = vpack.c.bf16 %v6672, %v6671
      %v6690 = vpack.c.bf16 %v6674, %v6673
      %v6691 = vld [vmem:[%s3] sm:$0xf]
      %v6692 = vld [vmem:[%s3 + $0x4] sm:$0xf]
      %v6693 = vld [vmem:[%s3 + $0x8] sm:$0xf]
      %v6694 = vld [vmem:[%s3 + $0xc] sm:$0xf]
      %v6695 = vld [vmem:[%s3 + $0x10] sm:$0xf]
      %v6696 = vld [vmem:[%s3 + $0x14] sm:$0xf]
      %v6697 = vld [vmem:[%s3 + $0x18] sm:$0xf]
      %v6698 = vld [vmem:[%s3 + $0x1c] sm:$0xf]
      %v6699 = vld [vmem:[%s3 + $0x20] sm:$0xf]
      %v6700 = vld [vmem:[%s3 + $0x24] sm:$0xf]
      %v6701 = vld [vmem:[%s3 + $0x28] sm:$0xf]
      %v6702 = vld [vmem:[%s3 + $0x2c] sm:$0xf]
      %v6703 = vld [vmem:[%s3 + $0x30] sm:$0xf]
      %v6704 = vld [vmem:[%s3 + $0x34] sm:$0xf]
      %v6705 = vld [vmem:[%s3 + $0x38] sm:$0xf]
      %v6706 = vld [vmem:[%s3 + $0x3c] sm:$0xf]
      %v6723 = vunpack.c.l.b16 %v6691
      %v6724 = vunpack.c.l.b16 %v6692
      %v6725 = vunpack.c.l.b16 %v6693
      %v6726 = vunpack.c.l.b16 %v6694
      %v6727 = vunpack.c.l.b16 %v6695
      %v6728 = vunpack.c.l.b16 %v6696
      %v6729 = vunpack.c.l.b16 %v6697
      %v6730 = vunpack.c.l.b16 %v6698
      %v6731 = vunpack.c.l.b16 %v6699
      %v6732 = vunpack.c.l.b16 %v6700
      %v6733 = vunpack.c.l.b16 %v6701
      %v6734 = vunpack.c.l.b16 %v6702
      %v6735 = vunpack.c.l.b16 %v6703
      %v6736 = vunpack.c.l.b16 %v6704
      %v6737 = vunpack.c.l.b16 %v6705
      %v6738 = vunpack.c.l.b16 %v6706
      %v6739 = vpack.c.b16 %v6724, %v6723
      %v6740 = vpack.c.b16 %v6726, %v6725
      %v6741 = vpack.c.b16 %v6728, %v6727
      %v6742 = vpack.c.b16 %v6730, %v6729
      %v6743 = vpack.c.b16 %v6732, %v6731
      %v6744 = vpack.c.b16 %v6734, %v6733
      %v6745 = vpack.c.b16 %v6736, %v6735
      %v6746 = vpack.c.b16 %v6738, %v6737
      %6755 = vmatprep.subr.bf16.mxu0 0
      %6756 = vmatpush1.bf16.msra.mxu0 %v6746
      %6757 = vmatprep.subr.bf16.mxu0 0
      %6758 = vmatpush1.bf16.msra.mxu0 %v6745
      %6759 = vmatprep.subr.bf16.mxu0 0
      %6760 = vmatpush1.bf16.msra.mxu0 %v6744
      %6761 = vmatprep.subr.bf16.mxu0 0
      %6762 = vmatpush1.bf16.msra.mxu0 %v6743
      %6763 = vmatprep.subr.bf16.mxu0 0
      %6764 = vmatpush1.bf16.msra.mxu0 %v6742
      %6765 = vmatprep.subr.bf16.mxu0 0
      %6766 = vmatpush1.bf16.msra.mxu0 %v6741
      %6767 = vmatprep.subr.bf16.mxu0 0
      %6768 = vmatpush1.bf16.msra.mxu0 %v6740
      %6769 = vmatprep.subr.bf16.mxu0 0
      %6770 = vmatpush1.bf16.msra.mxu0 %v6739
      %6771 = vmatprep.subr.bf16.mxu0 0
      %6772 = vmatpush2.bf16.msra.mxu0 0
      %6773 = vmatprep.subr.bf16.mxu0 0
      %6774 = vmatpush2.bf16.msra.mxu0 0
      %6775 = vmatprep.subr.bf16.mxu0 0
      %6776 = vmatpush2.bf16.msra.mxu0 0
      %6777 = vmatprep.subr.bf16.mxu0 0
      %6778 = vmatpush2.bf16.msra.mxu0 0
      %6779 = vmatprep.subr.bf16.mxu0 0
      %6780 = vmatpush2.bf16.msra.mxu0 0
      %6781 = vmatprep.subr.bf16.mxu0 0
      %6782 = vmatpush2.bf16.msra.mxu0 0
      %6783 = vmatprep.subr.bf16.mxu0 0
      %6784 = vmatpush2.bf16.msra.mxu0 0
      %6785 = vmatprep.subr.bf16.mxu0 0
      %6786 = vmatpush2.bf16.msra.mxu0 0
      %6787 = vmatprep.mubr.bf16.mxu0 0
      %6788 = vmatmul.mubr.bf16.gmra.mxu0 %v6675
      %v6789 = vpop.f32.mrf.mxu0
      %v6790 = vadd.f32 0.0, %v6789
      %v6791 = vpop.f32.mrf.mxu0
      %v6792 = vpop.f32.mrf.mxu0
      %v6793 = vadd.f32 0.0, %v6792
      %v6794 = vpop.f32.mrf.mxu0
      %6795 = vmatprep.mubr.bf16.mxu0 0
      %6796 = vmatmul.mubr.bf16.gmra.mxu0 %v6676
      %v6797 = vpop.f32.mrf.mxu0
      %v6798 = vadd.f32 0.0, %v6797
      %v6799 = vpop.f32.mrf.mxu0
      %v6800 = vpop.f32.mrf.mxu0
      %v6801 = vadd.f32 0.0, %v6800
      %v6802 = vpop.f32.mrf.mxu0
      %6803 = vmatprep.mubr.bf16.mxu0 0
      %6804 = vmatmul.mubr.bf16.gmra.mxu0 %v6677
      %v6805 = vpop.f32.mrf.mxu0
      %v6806 = vadd.f32 0.0, %v6805
      %v6807 = vpop.f32.mrf.mxu0
      %v6808 = vpop.f32.mrf.mxu0
      %v6809 = vadd.f32 0.0, %v6808
      %v6810 = vpop.f32.mrf.mxu0
      %6811 = vmatprep.mubr.bf16.mxu0 0
      %6812 = vmatmul.mubr.bf16.gmra.mxu0 %v6678
      %v6813 = vpop.f32.mrf.mxu0
      %v6814 = vadd.f32 0.0, %v6813
      %v6815 = vpop.f32.mrf.mxu0
      %v6816 = vpop.f32.mrf.mxu0
      %v6817 = vadd.f32 0.0, %v6816
      %v6818 = vpop.f32.mrf.mxu0
      %6819 = vmatprep.mubr.bf16.mxu0 0
      %6820 = vmatmul.mubr.bf16.gmra.mxu0 %v6679
      %v6821 = vpop.f32.mrf.mxu0
      %v6822 = vadd.f32 0.0, %v6821
      %v6823 = vpop.f32.mrf.mxu0
      %v6824 = vpop.f32.mrf.mxu0
      %v6825 = vadd.f32 0.0, %v6824
      %v6826 = vpop.f32.mrf.mxu0
      %6827 = vmatprep.mubr.bf16.mxu0 0
      %6828 = vmatmul.mubr.bf16.gmra.mxu0 %v6680
      %v6829 = vpop.f32.mrf.mxu0
      %v6830 = vadd.f32 0.0, %v6829
      %v6831 = vpop.f32.mrf.mxu0
      %v6832 = vpop.f32.mrf.mxu0
      %v6833 = vadd.f32 0.0, %v6832
      %v6834 = vpop.f32.mrf.mxu0
      %6835 = vmatprep.mubr.bf16.mxu0 0
      %6836 = vmatmul.mubr.bf16.gmra.mxu0 %v6681
      %v6837 = vpop.f32.mrf.mxu0
      %v6838 = vadd.f32 0.0, %v6837
      %v6839 = vpop.f32.mrf.mxu0
      %v6840 = vpop.f32.mrf.mxu0
      %v6841 = vadd.f32 0.0, %v6840
      %v6842 = vpop.f32.mrf.mxu0
      %6843 = vmatprep.mubr.bf16.mxu0 0
      %6844 = vmatmul.mubr.bf16.gmra.mxu0 %v6682
      %v6845 = vpop.f32.mrf.mxu0
      %v6846 = vadd.f32 0.0, %v6845
      %v6847 = vpop.f32.mrf.mxu0
      %v6848 = vpop.f32.mrf.mxu0
      %v6849 = vadd.f32 0.0, %v6848
      %v6850 = vpop.f32.mrf.mxu0
      %6851 = vmatprep.mubr.bf16.mxu0 0
      %6852 = vmatmul.mubr.bf16.gmra.mxu0 %v6683
      %v6853 = vpop.f32.mrf.mxu0
      %v6854 = vadd.f32 0.0, %v6853
      %v6855 = vpop.f32.mrf.mxu0
      %v6856 = vpop.f32.mrf.mxu0
      %v6857 = vadd.f32 0.0, %v6856
      %v6858 = vpop.f32.mrf.mxu0
      %6859 = vmatprep.mubr.bf16.mxu0 0
      %6860 = vmatmul.mubr.bf16.gmra.mxu0 %v6684
      %v6861 = vpop.f32.mrf.mxu0
      %v6862 = vadd.f32 0.0, %v6861
      %v6863 = vpop.f32.mrf.mxu0
      %v6864 = vpop.f32.mrf.mxu0
      %v6865 = vadd.f32 0.0, %v6864
      %v6866 = vpop.f32.mrf.mxu0
      %6867 = vmatprep.mubr.bf16.mxu0 0
      %6868 = vmatmul.mubr.bf16.gmra.mxu0 %v6685
      %v6869 = vpop.f32.mrf.mxu0
      %v6870 = vadd.f32 0.0, %v6869
      %v6871 = vpop.f32.mrf.mxu0
      %v6872 = vpop.f32.mrf.mxu0
      %v6873 = vadd.f32 0.0, %v6872
      %v6874 = vpop.f32.mrf.mxu0
      %6875 = vmatprep.mubr.bf16.mxu0 0
      %6876 = vmatmul.mubr.bf16.gmra.mxu0 %v6686
      %v6877 = vpop.f32.mrf.mxu0
      %v6878 = vadd.f32 0.0, %v6877
      %v6879 = vpop.f32.mrf.mxu0
      %v6880 = vpop.f32.mrf.mxu0
      %v6881 = vadd.f32 0.0, %v6880
      %v6882 = vpop.f32.mrf.mxu0
      %6883 = vmatprep.mubr.bf16.mxu0 0
      %6884 = vmatmul.mubr.bf16.gmra.mxu0 %v6687
      %v6885 = vpop.f32.mrf.mxu0
      %v6886 = vadd.f32 0.0, %v6885
      %v6887 = vpop.f32.mrf.mxu0
      %v6888 = vpop.f32.mrf.mxu0
      %v6889 = vadd.f32 0.0, %v6888
      %v6890 = vpop.f32.mrf.mxu0
      %6891 = vmatprep.mubr.bf16.mxu0 0
      %6892 = vmatmul.mubr.bf16.gmra.mxu0 %v6688
      %v6893 = vpop.f32.mrf.mxu0
      %v6894 = vadd.f32 0.0, %v6893
      %v6895 = vpop.f32.mrf.mxu0
      %v6896 = vpop.f32.mrf.mxu0
      %v6897 = vadd.f32 0.0, %v6896
      %v6898 = vpop.f32.mrf.mxu0
      %6899 = vmatprep.mubr.bf16.mxu0 0
      %6900 = vmatmul.mubr.bf16.gmra.mxu0 %v6689
      %v6901 = vpop.f32.mrf.mxu0
      %v6902 = vadd.f32 0.0, %v6901
      %v6903 = vpop.f32.mrf.mxu0
      %v6904 = vpop.f32.mrf.mxu0
      %v6905 = vadd.f32 0.0, %v6904
      %v6906 = vpop.f32.mrf.mxu0
      %6907 = vmatprep.mubr.bf16.mxu0 0
      %6908 = vmatmul.mubr.bf16.gmra.mxu0 %v6690
      %v6909 = vpop.f32.mrf.mxu0
      %v6910 = vadd.f32 0.0, %v6909
      %v6911 = vpop.f32.mrf.mxu0
      %v6912 = vpop.f32.mrf.mxu0
      %v6913 = vadd.f32 0.0, %v6912
      %v6914 = vpop.f32.mrf.mxu0
      %6915 = vdwg.mxu0
      %v6916 = vld [vmem:[%s4 + $0x4] sm:$0x1]
      %v6917 = vld [vmem:[%s4 + $0x5] sm:$0x1]
      %v6918 = vlaneseq
      %v6919 = vshrl.u32 %v6918, 7
      %v6920 = vsub.s32 0, %v6919
      %v6921 = vrot.slane %v6916, %v6920
      %v6922 = vmul.f32 %v6790, %v6921
      %v6923 = vmul.f32 %v6793, %v6921
      %v6924 = vmul.f32 %v6798, %v6921
      %v6925 = vmul.f32 %v6801, %v6921
      %v6926 = vmul.f32 %v6806, %v6921
      %v6927 = vmul.f32 %v6809, %v6921
      %v6928 = vmul.f32 %v6814, %v6921
      %v6929 = vmul.f32 %v6817, %v6921
      %v6930 = vmul.f32 %v6822, %v6921
      %v6931 = vmul.f32 %v6825, %v6921
      %v6932 = vmul.f32 %v6830, %v6921
      %v6933 = vmul.f32 %v6833, %v6921
      %v6934 = vmul.f32 %v6838, %v6921
      %v6935 = vmul.f32 %v6841, %v6921
      %v6936 = vmul.f32 %v6846, %v6921
      %v6937 = vmul.f32 %v6849, %v6921
      %v6938 = vmul.f32 %v6854, %v6921
      %v6939 = vmul.f32 %v6857, %v6921
      %v6940 = vmul.f32 %v6862, %v6921
      %v6941 = vmul.f32 %v6865, %v6921
      %v6942 = vmul.f32 %v6870, %v6921
      %v6943 = vmul.f32 %v6873, %v6921
      %v6944 = vmul.f32 %v6878, %v6921
      %v6945 = vmul.f32 %v6881, %v6921
      %v6946 = vmul.f32 %v6886, %v6921
      %v6947 = vmul.f32 %v6889, %v6921
      %v6948 = vmul.f32 %v6894, %v6921
      %v6949 = vmul.f32 %v6897, %v6921
      %v6950 = vmul.f32 %v6902, %v6921
      %v6951 = vmul.f32 %v6905, %v6921
      %v6952 = vmul.f32 %v6910, %v6921
      %v6953 = vmul.f32 %v6913, %v6921
      %v6954 = vlaneseq
      %v6955 = vshrl.u32 %v6954, 7
      %v6956 = vsub.s32 0, %v6955
      %v6957 = vrot.slane %v6917, %v6956
      %v6958 = vadd.f32 %v6922, %v6957
      %v6959 = vadd.f32 %v6923, %v6957
      %v6960 = vadd.f32 %v6924, %v6957
      %v6961 = vadd.f32 %v6925, %v6957
      %v6962 = vadd.f32 %v6926, %v6957
      %v6963 = vadd.f32 %v6927, %v6957
      %v6964 = vadd.f32 %v6928, %v6957
      %v6965 = vadd.f32 %v6929, %v6957
      %v6966 = vadd.f32 %v6930, %v6957
      %v6967 = vadd.f32 %v6931, %v6957
      %v6968 = vadd.f32 %v6932, %v6957
      %v6969 = vadd.f32 %v6933, %v6957
      %v6970 = vadd.f32 %v6934, %v6957
      %v6971 = vadd.f32 %v6935, %v6957
      %v6972 = vadd.f32 %v6936, %v6957
      %v6973 = vadd.f32 %v6937, %v6957
      %v6974 = vadd.f32 %v6938, %v6957
      %v6975 = vadd.f32 %v6939, %v6957
      %v6976 = vadd.f32 %v6940, %v6957
      %v6977 = vadd.f32 %v6941, %v6957
      %v6978 = vadd.f32 %v6942, %v6957
      %v6979 = vadd.f32 %v6943, %v6957
      %v6980 = vadd.f32 %v6944, %v6957
      %v6981 = vadd.f32 %v6945, %v6957
      %v6982 = vadd.f32 %v6946, %v6957
      %v6983 = vadd.f32 %v6947, %v6957
      %v6984 = vadd.f32 %v6948, %v6957
      %v6985 = vadd.f32 %v6949, %v6957
      %v6986 = vadd.f32 %v6950, %v6957
      %v6987 = vadd.f32 %v6951, %v6957
      %v6988 = vadd.f32 %v6952, %v6957
      %v6989 = vadd.f32 %v6953, %v6957
      %v6990 = vld [vmem:[#allocation5] sm:$0xff]
      %v6991 = vld [vmem:[#allocation5 + $0x8] sm:$0xff]
      %v6992 = vld [vmem:[#allocation5 + $0x10] sm:$0xff]
      %v6993 = vld [vmem:[#allocation5 + $0x18] sm:$0xff]
      %v6994 = vld [vmem:[#allocation5 + $0x20] sm:$0xff]
      %v6995 = vld [vmem:[#allocation5 + $0x28] sm:$0xff]
      %v6996 = vld [vmem:[#allocation5 + $0x30] sm:$0xff]
      %v6997 = vld [vmem:[#allocation5 + $0x38] sm:$0xff]
      %v6998 = vld [vmem:[#allocation5 + $0x40] sm:$0xff]
      %v6999 = vld [vmem:[#allocation5 + $0x48] sm:$0xff]
      %v7000 = vld [vmem:[#allocation5 + $0x50] sm:$0xff]
      %v7001 = vld [vmem:[#allocation5 + $0x58] sm:$0xff]
      %v7002 = vld [vmem:[#allocation5 + $0x60] sm:$0xff]
      %v7003 = vld [vmem:[#allocation5 + $0x68] sm:$0xff]
      %v7004 = vld [vmem:[#allocation5 + $0x70] sm:$0xff]
      %v7005 = vld [vmem:[#allocation5 + $0x78] sm:$0xff]
      %v7006 = vld [vmem:[#allocation5 + $0x80] sm:$0xff]
      %v7007 = vld [vmem:[#allocation5 + $0x88] sm:$0xff]
      %v7008 = vld [vmem:[#allocation5 + $0x90] sm:$0xff]
      %v7009 = vld [vmem:[#allocation5 + $0x98] sm:$0xff]
      %v7010 = vld [vmem:[#allocation5 + $0xa0] sm:$0xff]
      %v7011 = vld [vmem:[#allocation5 + $0xa8] sm:$0xff]
      %v7012 = vld [vmem:[#allocation5 + $0xb0] sm:$0xff]
      %v7013 = vld [vmem:[#allocation5 + $0xb8] sm:$0xff]
      %v7014 = vld [vmem:[#allocation5 + $0xc0] sm:$0xff]
      %v7015 = vld [vmem:[#allocation5 + $0xc8] sm:$0xff]
      %v7016 = vld [vmem:[#allocation5 + $0xd0] sm:$0xff]
      %v7017 = vld [vmem:[#allocation5 + $0xd8] sm:$0xff]
      %v7018 = vld [vmem:[#allocation5 + $0xe0] sm:$0xff]
      %v7019 = vld [vmem:[#allocation5 + $0xe8] sm:$0xff]
      %v7020 = vld [vmem:[#allocation5 + $0xf0] sm:$0xff]
      %v7021 = vld [vmem:[#allocation5 + $0xf8] sm:$0xff]
      %v7022 = vadd.f32 %v6958, %v6990
      %v7023 = vadd.f32 %v6959, %v6991
      %v7024 = vadd.f32 %v6960, %v6992
      %v7025 = vadd.f32 %v6961, %v6993
      %v7026 = vadd.f32 %v6962, %v6994
      %v7027 = vadd.f32 %v6963, %v6995
      %v7028 = vadd.f32 %v6964, %v6996
      %v7029 = vadd.f32 %v6965, %v6997
      %v7030 = vadd.f32 %v6966, %v6998
      %v7031 = vadd.f32 %v6967, %v6999
      %v7032 = vadd.f32 %v6968, %v7000
      %v7033 = vadd.f32 %v6969, %v7001
      %v7034 = vadd.f32 %v6970, %v7002
      %v7035 = vadd.f32 %v6971, %v7003
      %v7036 = vadd.f32 %v6972, %v7004
      %v7037 = vadd.f32 %v6973, %v7005
      %v7038 = vadd.f32 %v6974, %v7006
      %v7039 = vadd.f32 %v6975, %v7007
      %v7040 = vadd.f32 %v6976, %v7008
      %v7041 = vadd.f32 %v6977, %v7009
      %v7042 = vadd.f32 %v6978, %v7010
      %v7043 = vadd.f32 %v6979, %v7011
      %v7044 = vadd.f32 %v6980, %v7012
      %v7045 = vadd.f32 %v6981, %v7013
      %v7046 = vadd.f32 %v6982, %v7014
      %v7047 = vadd.f32 %v6983, %v7015
      %v7048 = vadd.f32 %v6984, %v7016
      %v7049 = vadd.f32 %v6985, %v7017
      %v7050 = vadd.f32 %v6986, %v7018
      %v7051 = vadd.f32 %v6987, %v7019
      %v7052 = vadd.f32 %v6988, %v7020
      %v7053 = vadd.f32 %v6989, %v7021
      %v7054 = vmax.f32 %v7022, 0.0
      %v7055 = vmax.f32 %v7023, 0.0
      %v7056 = vmax.f32 %v7024, 0.0
      %v7057 = vmax.f32 %v7025, 0.0
      %v7058 = vmax.f32 %v7026, 0.0
      %v7059 = vmax.f32 %v7027, 0.0
      %v7060 = vmax.f32 %v7028, 0.0
      %v7061 = vmax.f32 %v7029, 0.0
      %v7062 = vmax.f32 %v7030, 0.0
      %v7063 = vmax.f32 %v7031, 0.0
      %v7064 = vmax.f32 %v7032, 0.0
      %v7065 = vmax.f32 %v7033, 0.0
      %v7066 = vmax.f32 %v7034, 0.0
      %v7067 = vmax.f32 %v7035, 0.0
      %v7068 = vmax.f32 %v7036, 0.0
      %v7069 = vmax.f32 %v7037, 0.0
      %v7070 = vmax.f32 %v7038, 0.0
      %v7071 = vmax.f32 %v7039, 0.0
      %v7072 = vmax.f32 %v7040, 0.0
      %v7073 = vmax.f32 %v7041, 0.0
      %v7074 = vmax.f32 %v7042, 0.0
      %v7075 = vmax.f32 %v7043, 0.0
      %v7076 = vmax.f32 %v7044, 0.0
      %v7077 = vmax.f32 %v7045, 0.0
      %v7078 = vmax.f32 %v7046, 0.0
      %v7079 = vmax.f32 %v7047, 0.0
      %v7080 = vmax.f32 %v7048, 0.0
      %v7081 = vmax.f32 %v7049, 0.0
      %v7082 = vmax.f32 %v7050, 0.0
      %v7083 = vmax.f32 %v7051, 0.0
      %v7084 = vmax.f32 %v7052, 0.0
      %v7085 = vmax.f32 %v7053, 0.0
      %v7086 = vpack.c.bf16 %v7055, %v7054
      %v7087 = vpack.c.bf16 %v7057, %v7056
      %v7088 = vpack.c.bf16 %v7059, %v7058
      %v7089 = vpack.c.bf16 %v7061, %v7060
      %v7090 = vpack.c.bf16 %v7063, %v7062
      %v7091 = vpack.c.bf16 %v7065, %v7064
      %v7092 = vpack.c.bf16 %v7067, %v7066
      %v7093 = vpack.c.bf16 %v7069, %v7068
      %v7094 = vpack.c.bf16 %v7071, %v7070
      %v7095 = vpack.c.bf16 %v7073, %v7072
      %v7096 = vpack.c.bf16 %v7075, %v7074
      %v7097 = vpack.c.bf16 %v7077, %v7076
      %v7098 = vpack.c.bf16 %v7079, %v7078
      %v7099 = vpack.c.bf16 %v7081, %v7080
      %v7100 = vpack.c.bf16 %v7083, %v7082
      %v7101 = vpack.c.bf16 %v7085, %v7084
      %v7118 = vunpack.c.l.b16 %v7086
      %v7119 = vunpack.c.h.b16 %v7086
      %v7120 = vunpack.c.l.b16 %v7087
      %v7121 = vunpack.c.h.b16 %v7087
      %v7122 = vunpack.c.l.b16 %v7088
      %v7123 = vunpack.c.h.b16 %v7088
      %v7124 = vunpack.c.l.b16 %v7089
      %v7125 = vunpack.c.h.b16 %v7089
      %v7126 = vunpack.c.l.b16 %v7090
      %v7127 = vunpack.c.h.b16 %v7090
      %v7128 = vunpack.c.l.b16 %v7091
      %v7129 = vunpack.c.h.b16 %v7091
      %v7130 = vunpack.c.l.b16 %v7092
      %v7131 = vunpack.c.h.b16 %v7092
      %v7132 = vunpack.c.l.b16 %v7093
      %v7133 = vunpack.c.h.b16 %v7093
      %v7134 = vunpack.c.l.b16 %v7094
      %v7135 = vunpack.c.h.b16 %v7094
      %v7136 = vunpack.c.l.b16 %v7095
      %v7137 = vunpack.c.h.b16 %v7095
      %v7138 = vunpack.c.l.b16 %v7096
      %v7139 = vunpack.c.h.b16 %v7096
      %v7140 = vunpack.c.l.b16 %v7097
      %v7141 = vunpack.c.h.b16 %v7097
      %v7142 = vunpack.c.l.b16 %v7098
      %v7143 = vunpack.c.h.b16 %v7098
      %v7144 = vunpack.c.l.b16 %v7099
      %v7145 = vunpack.c.h.b16 %v7099
      %v7146 = vunpack.c.l.b16 %v7100
      %v7147 = vunpack.c.h.b16 %v7100
      %v7148 = vunpack.c.l.b16 %v7101
      %v7149 = vunpack.c.h.b16 %v7101
      %v7150 = vpack.c.b16 %v7118, %v7118
      %v7151 = vpack.c.b16 %v7119, %v7119
      %v7152 = vpack.c.b16 %v7120, %v7120
      %v7153 = vpack.c.b16 %v7121, %v7121
      %v7154 = vpack.c.b16 %v7122, %v7122
      %v7155 = vpack.c.b16 %v7123, %v7123
      %v7156 = vpack.c.b16 %v7124, %v7124
      %v7157 = vpack.c.b16 %v7125, %v7125
      %v7158 = vpack.c.b16 %v7126, %v7126
      %v7159 = vpack.c.b16 %v7127, %v7127
      %v7160 = vpack.c.b16 %v7128, %v7128
      %v7161 = vpack.c.b16 %v7129, %v7129
      %v7162 = vpack.c.b16 %v7130, %v7130
      %v7163 = vpack.c.b16 %v7131, %v7131
      %v7164 = vpack.c.b16 %v7132, %v7132
      %v7165 = vpack.c.b16 %v7133, %v7133
      %v7166 = vpack.c.b16 %v7134, %v7134
      %v7167 = vpack.c.b16 %v7135, %v7135
      %v7168 = vpack.c.b16 %v7136, %v7136
      %v7169 = vpack.c.b16 %v7137, %v7137
      %v7170 = vpack.c.b16 %v7138, %v7138
      %v7171 = vpack.c.b16 %v7139, %v7139
      %v7172 = vpack.c.b16 %v7140, %v7140
      %v7173 = vpack.c.b16 %v7141, %v7141
      %v7174 = vpack.c.b16 %v7142, %v7142
      %v7175 = vpack.c.b16 %v7143, %v7143
      %v7176 = vpack.c.b16 %v7144, %v7144
      %v7177 = vpack.c.b16 %v7145, %v7145
      %v7178 = vpack.c.b16 %v7146, %v7146
      %v7179 = vpack.c.b16 %v7147, %v7147
      %v7180 = vpack.c.b16 %v7148, %v7148
      %v7181 = vpack.c.b16 %v7149, %v7149
      %7214 = vst [vmem:[%s202] sm:$0xf] %v7150
      %7215 = vst [vmem:[%s202 + $0x4] sm:$0xf] %v7151
      %7216 = vst [vmem:[%s202 + $0x8] sm:$0xf] %v7152
      %7217 = vst [vmem:[%s202 + $0xc] sm:$0xf] %v7153
      %7218 = vst [vmem:[%s202 + $0x10] sm:$0xf] %v7154
      %7219 = vst [vmem:[%s202 + $0x14] sm:$0xf] %v7155
      %7220 = vst [vmem:[%s202 + $0x18] sm:$0xf] %v7156
      %7221 = vst [vmem:[%s202 + $0x1c] sm:$0xf] %v7157
      %7222 = vst [vmem:[%s202 + $0x20] sm:$0xf] %v7158
      %7223 = vst [vmem:[%s202 + $0x24] sm:$0xf] %v7159
      %7224 = vst [vmem:[%s202 + $0x28] sm:$0xf] %v7160
      %7225 = vst [vmem:[%s202 + $0x2c] sm:$0xf] %v7161
      %7226 = vst [vmem:[%s202 + $0x30] sm:$0xf] %v7162
      %7227 = vst [vmem:[%s202 + $0x34] sm:$0xf] %v7163
      %7228 = vst [vmem:[%s202 + $0x38] sm:$0xf] %v7164
      %7229 = vst [vmem:[%s202 + $0x3c] sm:$0xf] %v7165
      %7230 = vst [vmem:[%s202 + $0x40] sm:$0xf] %v7166
      %7231 = vst [vmem:[%s202 + $0x44] sm:$0xf] %v7167
      %7232 = vst [vmem:[%s202 + $0x48] sm:$0xf] %v7168
      %7233 = vst [vmem:[%s202 + $0x4c] sm:$0xf] %v7169
      %7234 = vst [vmem:[%s202 + $0x50] sm:$0xf] %v7170
      %7235 = vst [vmem:[%s202 + $0x54] sm:$0xf] %v7171
      %7236 = vst [vmem:[%s202 + $0x58] sm:$0xf] %v7172
      %7237 = vst [vmem:[%s202 + $0x5c] sm:$0xf] %v7173
      %7238 = vst [vmem:[%s202 + $0x60] sm:$0xf] %v7174
      %7239 = vst [vmem:[%s202 + $0x64] sm:$0xf] %v7175
      %7240 = vst [vmem:[%s202 + $0x68] sm:$0xf] %v7176
      %7241 = vst [vmem:[%s202 + $0x6c] sm:$0xf] %v7177
      %7242 = vst [vmem:[%s202 + $0x70] sm:$0xf] %v7178
      %7243 = vst [vmem:[%s202 + $0x74] sm:$0xf] %v7179
      %7244 = vst [vmem:[%s202 + $0x78] sm:$0xf] %v7180
      %7245 = vst [vmem:[%s202 + $0x7c] sm:$0xf] %v7181
      %s7246 = smul.u32 16, %s21
      %p7247 = scmp.lt.s32.totalorder %s20, 1
      %s7248 = scalar_select %p7247, %s20, 1
      %p7249 = scmp.lt.s32.totalorder %s7246, 15
      %s7250 = scalar_select %p7249, %s7246, 15
      %s7251 = smul.addr %s7250, 2
      %s7252 = smul.addr %s7248, 32
      %s7253 = sadd.s32 %s7251, %s7252
      %s7254 = smul.addr %s7253, 4
      %s7255 = scalar_lea.vmem %s5, %s7254
      // Predicated region
      $region117: #{residual_bottle_pallas.1} parent=35 // pred_check
        %p7256 = pneg %p132
      $region118: #{residual_bottle_pallas.1} parent=35 // pred_check_branch
        %7258 = sbr.rel (%p7256) target = $region120
      $region119: #{residual_bottle_pallas.1} parent=35 // pred_region
        %s7259 = smul.u32 16, %s21
      $region120: #{residual_bottle_pallas.1} parent=35 // pred_fallthru
        _
    $region36: #{residual_bottle_pallas.1} parent=5 // pred_fallthru
      _
    %p7260 = scmp.le.s32.totalorder 2, %s11
    // Predicated region
    $region121: #{residual_bottle_pallas.1} parent=5 // pred_check
      %p7261 = pneg %p7260
    $region122: #{residual_bottle_pallas.1} parent=5 // pred_check_branch
      %7263 = sbr.rel (%p7261) target = $region124
    $region123: #{residual_bottle_pallas.1} parent=5 // pred_region
      %s7264 = ssub.s32 %s11, 2
      // Predicated region
      $region125: #{residual_bottle_pallas.1} parent=123 // pred_check
        %p7265 = pneg %p138
      $region126: #{residual_bottle_pallas.1} parent=123 // pred_check_branch
        %7267 = sbr.rel (%p7265) target = $region128
      $region127: #{residual_bottle_pallas.1} parent=123 // pred_region
        %s7268 = smul.u32 16, %s23
        %p7269 = scmp.lt.s32.totalorder %s22, 1
        %s7270 = scalar_select %p7269, %s22, 1
        %p7271 = scmp.lt.s32.totalorder %s7268, 15
        %s7272 = scalar_select %p7271, %s7268, 15
        %s7273 = smul.addr %s7272, 2
        %s7274 = smul.addr %s7270, 32
        %s7275 = sadd.s32 %s7273, %s7274
        %s7276 = smul.addr %s7275, 4
        %s7277 = scalar_lea.vmem %s5, %s7276
      $region128: #{residual_bottle_pallas.1} parent=123 // pred_fallthru
        _
    $region124: #{residual_bottle_pallas.1} parent=5 // pred_fallthru
      _
  $region6: #{residual_bottle_pallas.1} parent=0 // loop_footer
    %s15 = sadd.s32 1, %s11
  $region7: #{residual_bottle_pallas.1} parent=0 // loop_footer_branch
    %10 = sbr.rel target = $region3
  $region8: #{residual_bottle_pallas.1} parent=0 // loop_exit
    _
  %7278 = vsyncmov [#allocation3]
  %s7279 = vpop.sfrf %7278
  %p7280 = scmp.eq.s32.totalorder %s7279, 0
  %p7281 = pneg %p7280
  %7283 = shalt.err (%p7281)
  %s7284 = scalar_lea.sflag [#allocation3], 1
  %7285 = vsyncmov %s7284
  %s7286 = vpop.sfrf %7285
  %p7287 = scmp.eq.s32.totalorder %s7286, 0
  %p7288 = pneg %p7287
  %7290 = shalt.err (%p7288)

</llo_original>
